<compile_context>
chip_gen: v7x
topology: tpu7x:2x2x1
jax: 0.10.0
libtpu: 0.0.40
codegen_flags: <defaults>
</compile_context>

<pallas_src>
import math

import jax
import jax.numpy as jnp
from jax.experimental import pallas as pl
from jax.experimental.pallas import tpu as pltpu

# ----- config (mirrors the PyTorch module's constructor defaults) -----------
INPUT_DIM = 4
GLOBAL_LATENT_DIM = 16
NUM_ENCODER_LAYERS = 2
NUM_HEADS = 4
OUTPUT_DIM = 8
SEQ_LEN = 64                   # desired_seq_length == d_model
D_MODEL = SEQ_LEN
HEAD_DIM = D_MODEL // NUM_HEADS
DIM_FEEDFORWARD = 2048         # nn.TransformerEncoderLayer default
LN_EPS = 1e-5
OUT_PAD = 128                  # lane-padded output width (sliced back to 8)

# TODO(synk): nn.TransformerEncoderLayer has dropout=0.1; implemented as
# identity (eval-mode), since the module is only used as a sequence sampler.


# ----------------------------- fused kernel ---------------------------------
def _fused_forward_kernel(
        inp_ref, gfc_w_ref, gfc_b_ref, time_ref,
        inproj_wg_ref, inproj_wt_ref, inproj_b_ref,
        wq_ref, bq_ref, wkT_ref, bkT_ref, wv_ref, bv_ref, wo_ref, bo_ref,
        ln1_w_ref, ln1_b_ref, lin1_w_ref, lin1_b_ref,
        lin2_w_ref, lin2_b_ref, ln2_w_ref, ln2_b_ref,
        noise_ref, outp_w_ref, outp_b_ref,
        o_ref):
    f32, bf16 = jnp.float32, jnp.bfloat16

    def layer_norm(y, w, b):
        mu = jnp.mean(y, axis=-1, keepdims=True)
        var = jnp.mean((y - mu) * (y - mu), axis=-1, keepdims=True)
        return (y - mu) * jax.lax.rsqrt(var + LN_EPS) * w + b

    # ---- preprocess: global_fc -> concat([latent, time_emb]) -> input_proj
    # (tiny matmuls; kept in f32, concat expressed as a split matmul)
    g = (jnp.dot(inp_ref[...], gfc_w_ref[...], preferred_element_type=f32)
         + gfc_b_ref[...])                                                   # (1, G)
    combined = (jnp.dot(time_ref[...], inproj_wt_ref[...],
                        preferred_element_type=f32)
                + jnp.dot(g, inproj_wg_ref[...], preferred_element_type=f32)
                + inproj_b_ref[...])                                         # (S, E)

    # ---- transformer encoder operates on combined.T (in-kernel transpose) --
    x = combined.T                       # (seq=E rows, d_model=S lanes)
    xT = combined                        # free transpose for layer 0's K path
    for l in range(NUM_ENCODER_LAYERS):
        if l > 0:
            xT = x.T
        x_bf = x.astype(bf16)
        xT_bf = xT.astype(bf16)

        # Multi-head self-attention. scale folded into wq/bq; per-head
        # weights with head axis leading; out-proj accumulated per head.
        attn = jnp.zeros_like(x)
        for h in range(NUM_HEADS):
            q_h = (jnp.dot(x_bf, wq_ref[l, h], preferred_element_type=f32)
                   + bq_ref[l, h])                                           # (S, hd)
            kT_h = (jnp.dot(wkT_ref[l, h], xT_bf, preferred_element_type=f32)
                    + bkT_ref[l, h])                                         # (hd, S)
            v_h = (jnp.dot(x_bf, wv_ref[l, h], preferred_element_type=f32)
                   + bv_ref[l, h])                                           # (S, hd)
            s = jnp.dot(q_h.astype(bf16), kT_h.astype(bf16),
                        preferred_element_type=f32)                          # (S, S)
            s = s - jnp.max(s, axis=-1, keepdims=True)
            p = jnp.exp(s)
            p = p * pl.reciprocal(jnp.sum(p, axis=-1, keepdims=True),
                                  approx=True)
            o_h = jnp.dot(p.astype(bf16), v_h.astype(bf16),
                          preferred_element_type=f32)                        # (S, hd)
            attn = attn + jnp.dot(o_h.astype(bf16), wo_ref[l, h],
                                  preferred_element_type=f32)                # (S, E)
        attn = attn + bo_ref[l]

        # post-norm residual blocks (norm_first=False); dropout == identity
        y = layer_norm(x + attn, ln1_w_ref[l], ln1_b_ref[l])
        h1 = jnp.maximum(
            jnp.dot(y.astype(bf16), lin1_w_ref[l], preferred_element_type=f32)
            + lin1_b_ref[l], 0.0)                                            # (S, FF)
        ff = (jnp.dot(h1.astype(bf16), lin2_w_ref[l],
                      preferred_element_type=f32)
              + lin2_b_ref[l])                                               # (S, E)
        x = layer_norm(y + ff, ln2_w_ref[l], ln2_b_ref[l])

    # ---- transpose back, add noise, lane-padded output projection ----------
    t = x.T + noise_ref[...]                                                 # (S, E)
    o_ref[...] = (jnp.dot(t, outp_w_ref[...], preferred_element_type=f32)
                  + outp_b_ref[...])                                         # (S, 128)


# ----------------------------- init (plain JAX, one-time) -------------------
def cosine_positional_embeddings(seq_len, input_size):
    position = jnp.arange(seq_len, dtype=jnp.float32)[:, None]
    div_term = jnp.exp(jnp.arange(0, input_size, 2, dtype=jnp.float32)
                       * (-math.log(10000.0) / input_size))
    pe = jnp.zeros((seq_len, input_size), dtype=jnp.float32)
    pe = pe.at[:, 0::2].set(jnp.sin(position * div_term))
    pe = pe.at[:, 1::2].set(jnp.cos(position * div_term))
    return pe


def linear_params(key, in_features, out_features):
    """nn.Linear-style deterministic init; weight stored pre-transposed."""
    kw, kb = jax.random.split(key)
    bound = 1.0 / math.sqrt(in_features)
    w_t = jax.random.uniform(kw, (in_features, out_features), jnp.float32,
                             -bound, bound)
    b = jax.random.uniform(kb, (1, out_features), jnp.float32, -bound, bound)
    return w_t, b


def init_params(key):
    E, H, hd = D_MODEL, NUM_HEADS, HEAD_DIM
    keys = jax.random.split(key, 3 + NUM_ENCODER_LAYERS)

    gfc_w, gfc_b = linear_params(keys[0], INPUT_DIM, GLOBAL_LATENT_DIM)
    inproj_w, inproj_b = linear_params(keys[1], GLOBAL_LATENT_DIM + SEQ_LEN,
                                       SEQ_LEN)
    outp_w, outp_b = linear_params(keys[2], SEQ_LEN, OUTPUT_DIM)

    # lane-pad the output projection to 128 (unmasked final store)
    outp_w_pad = jnp.zeros((SEQ_LEN, OUT_PAD), jnp.float32)
    outp_w_pad = outp_w_pad.at[:, :OUTPUT_DIM].set(outp_w)
    outp_b_pad = jnp.zeros((1, OUT_PAD), jnp.float32)
    outp_b_pad = outp_b_pad.at[:, :OUTPUT_DIM].set(outp_b)

    scale = 1.0 / math.sqrt(hd)
    stacks = {name: [] for name in
              ("wq", "bq", "wkT", "bkT", "wv", "bv", "wo", "bo",
               "ln1_w", "ln1_b", "lin1_w", "lin1_b",
               "lin2_w", "lin2_b", "ln2_w", "ln2_b")}

    for i in range(NUM_ENCODER_LAYERS):
        lk = jax.random.split(keys[3 + i], 4)
        in_w, in_b = linear_params(lk[0], E, 3 * E)      # MHA fused in_proj
        out_w, out_b = linear_params(lk[1], E, E)        # MHA out_proj
        lin1_w, lin1_b = linear_params(lk[2], E, DIM_FEEDFORWARD)
        lin2_w, lin2_b = linear_params(lk[3], DIM_FEEDFORWARD, E)

        wq_full, wk_full, wv_full = in_w[:, :E], in_w[:, E:2 * E], in_w[:, 2 * E:]
        bq_full, bk_full, bv_full = in_b[:, :E], in_b[:, E:2 * E], in_b[:, 2 * E:]

        # fold 1/sqrt(head_dim) into the q projection
        wq_full = wq_full * scale
        bq_full = bq_full * scale

        # per-head layouts (head axis leading -> no lane-slicing in kernel)
        stacks["wq"].append(wq_full.reshape(E, H, hd).transpose(1, 0, 2))   # (H,E,hd)
        stacks["bq"].append(bq_full.reshape(1, H, hd).transpose(1, 0, 2))   # (H,1,hd)
        stacks["wv"].append(wv_full.reshape(E, H, hd).transpose(1, 0, 2))   # (H,E,hd)
        stacks["bv"].append(bv_full.reshape(1, H, hd).transpose(1, 0, 2))   # (H,1,hd)
        # K pre-transposed: k_h^T = Wk_h^T @ x^T + bk_h^T
        stacks["wkT"].append(wk_full.reshape(E, H, hd).transpose(1, 2, 0))  # (H,hd,E)
        stacks["bkT"].append(bk_full.reshape(1, H, hd).transpose(1, 2, 0))  # (H,hd,1)
        # out-proj split per head along its input rows (accumulated in-kernel)
        stacks["wo"].append(out_w.reshape(H, hd, E))                        # (H,hd,E)
        stacks["bo"].append(out_b)                                          # (1,E)

        stacks["ln1_w"].append(jnp.ones((1, E), jnp.float32))
        stacks["ln1_b"].append(jnp.zeros((1, E), jnp.float32))
        stacks["lin1_w"].append(lin1_w)                                     # (E,FF)
        stacks["lin1_b"].append(lin1_b)                                     # (1,FF)
        stacks["lin2_w"].append(lin2_w)                                     # (FF,E)
        stacks["lin2_b"].append(lin2_b)                                     # (1,E)
        stacks["ln2_w"].append(jnp.ones((1, E), jnp.float32))
        stacks["ln2_b"].append(jnp.zeros((1, E), jnp.float32))

    stacked = {k: jnp.stack(v) for k, v in stacks.items()}
    # bf16 matmul weights (halves weight DMA + MXU passes); biases/LN stay f32
    for name in ("wq", "wkT", "wv", "wo", "lin1_w", "lin2_w"):
        stacked[name] = stacked[name].astype(jnp.bfloat16)

    return dict(
        gfc_w=gfc_w, gfc_b=gfc_b,
        inproj_wg=inproj_w[:GLOBAL_LATENT_DIM, :],
        inproj_wt=inproj_w[GLOBAL_LATENT_DIM:, :],
        inproj_b=inproj_b,
        time_emb=cosine_positional_embeddings(SEQ_LEN, SEQ_LEN),
        outp_w=outp_w_pad, outp_b=outp_b_pad,
        **stacked)


# ----------------------------- wrapper ---------------------------------------
def hierarchical_transformer_generator(params, inputs, noise):
    """forward(): returns (SEQ_LEN, OUTPUT_DIM)."""
    args = (
        inputs.reshape(1, INPUT_DIM).astype(jnp.float32),
        params["gfc_w"], params["gfc_b"], params["time_emb"],
        params["inproj_wg"], params["inproj_wt"], params["inproj_b"],
        params["wq"], params["bq"], params["wkT"], params["bkT"],
        params["wv"], params["bv"], params["wo"], params["bo"],
        params["ln1_w"], params["ln1_b"], params["lin1_w"], params["lin1_b"],
        params["lin2_w"], params["lin2_b"], params["ln2_w"], params["ln2_b"],
        noise, params["outp_w"], params["outp_b"],
    )
    out_pad = pl.pallas_call(
        _fused_forward_kernel,
        out_shape=jax.ShapeDtypeStruct((SEQ_LEN, OUT_PAD), jnp.float32),
        in_specs=[pl.BlockSpec(memory_space=pltpu.MemorySpace.VMEM)
                  for _ in args],
        out_specs=pl.BlockSpec(memory_space=pltpu.MemorySpace.VMEM),
    )(*args)
    return out_pad[:, :OUTPUT_DIM]


if __name__ == "__main__":
    key = jax.random.PRNGKey(0)
    k_param, k_in, k_noise = jax.random.split(key, 3)

    params = init_params(k_param)
    inputs = jax.random.normal(k_in, (INPUT_DIM,), dtype=jnp.float32)
    # torch.randn_like(transformer_out) * 0.05 (deterministic JAX equivalent)
    noise = jax.random.normal(k_noise, (SEQ_LEN, SEQ_LEN),
                              dtype=jnp.float32) * 0.05

    fwd = jax.jit(hierarchical_transformer_generator)
    out = fwd(params, inputs, noise)
    jax.block_until_ready(out)
    assert out.shape == (SEQ_LEN, OUTPUT_DIM) and out.dtype == jnp.float32
    print("KERNEL_OK")
</pallas_src>

<mosaic_0001>
module attributes {stable_mosaic.version = 11 : i64} {
  func.func @_fused_forward_kernel(%arg0: memref<1x4xf32, #tpu.memory_space<vmem>>, %arg1: memref<4x16xf32, #tpu.memory_space<vmem>>, %arg2: memref<1x16xf32, #tpu.memory_space<vmem>>, %arg3: memref<64x64xf32, #tpu.memory_space<vmem>>, %arg4: memref<16x64xf32, #tpu.memory_space<vmem>>, %arg5: memref<64x64xf32, #tpu.memory_space<vmem>>, %arg6: memref<1x64xf32, #tpu.memory_space<vmem>>, %arg7: memref<2x4x64x16xbf16, #tpu.memory_space<vmem>>, %arg8: memref<2x4x1x16xf32, #tpu.memory_space<vmem>>, %arg9: memref<2x4x16x64xbf16, #tpu.memory_space<vmem>>, %arg10: memref<2x4x16x1xf32, #tpu.memory_space<vmem>>, %arg11: memref<2x4x64x16xbf16, #tpu.memory_space<vmem>>, %arg12: memref<2x4x1x16xf32, #tpu.memory_space<vmem>>, %arg13: memref<2x4x16x64xbf16, #tpu.memory_space<vmem>>, %arg14: memref<2x1x64xf32, #tpu.memory_space<vmem>>, %arg15: memref<2x1x64xf32, #tpu.memory_space<vmem>>, %arg16: memref<2x1x64xf32, #tpu.memory_space<vmem>>, %arg17: memref<2x64x2048xbf16, #tpu.memory_space<vmem>>, %arg18: memref<2x1x2048xf32, #tpu.memory_space<vmem>>, %arg19: memref<2x2048x64xbf16, #tpu.memory_space<vmem>>, %arg20: memref<2x1x64xf32, #tpu.memory_space<vmem>>, %arg21: memref<2x1x64xf32, #tpu.memory_space<vmem>>, %arg22: memref<2x1x64xf32, #tpu.memory_space<vmem>>, %arg23: memref<64x64xf32, #tpu.memory_space<vmem>>, %arg24: memref<64x128xf32, #tpu.memory_space<vmem>>, %arg25: memref<1x128xf32, #tpu.memory_space<vmem>>, %arg26: memref<64x128xf32, #tpu.memory_space<vmem>>) attributes {dimension_semantics = [], scalar_prefetch = 0 : i64, scratch_operands = 0 : i64, tpu.core_type = #tpu.core_type<tc>} {
    %c0 = arith.constant 0 : index
    %c0_0 = arith.constant 0 : index
    %0 = vector.load %arg0[%c0, %c0_0] : memref<1x4xf32, #tpu.memory_space<vmem>>, vector<1x4xf32>
    %c0_1 = arith.constant 0 : index
    %c0_2 = arith.constant 0 : index
    %1 = vector.load %arg1[%c0_1, %c0_2] : memref<4x16xf32, #tpu.memory_space<vmem>>, vector<4x16xf32>
    %cst = arith.constant dense<0.000000e+00> : vector<1x16xf32>
    %2 = tpu.matmul %0, %1, %cst {dimension_numbers = #tpu.dot_dimension_numbers<[1], [0], [0], [1], [0, 0, 1, 1], [], []>} : vector<1x4xf32>, vector<4x16xf32>, vector<1x16xf32> -> vector<1x16xf32>
    %c0_3 = arith.constant 0 : index
    %c0_4 = arith.constant 0 : index
    %3 = vector.load %arg2[%c0_3, %c0_4] : memref<1x16xf32, #tpu.memory_space<vmem>>, vector<1x16xf32>
    %4 = arith.addf %2, %3 : vector<1x16xf32>
    %c0_5 = arith.constant 0 : index
    %c0_6 = arith.constant 0 : index
    %5 = vector.load %arg3[%c0_5, %c0_6] : memref<64x64xf32, #tpu.memory_space<vmem>>, vector<64x64xf32>
    %c0_7 = arith.constant 0 : index
    %c0_8 = arith.constant 0 : index
    %6 = vector.load %arg5[%c0_7, %c0_8] : memref<64x64xf32, #tpu.memory_space<vmem>>, vector<64x64xf32>
    %cst_9 = arith.constant dense<0.000000e+00> : vector<64x64xf32>
    %7 = tpu.matmul %5, %6, %cst_9 {dimension_numbers = #tpu.dot_dimension_numbers<[1], [0], [0], [1], [0, 0, 1, 1], [], []>} : vector<64x64xf32>, vector<64x64xf32>, vector<64x64xf32> -> vector<64x64xf32>
    %c0_10 = arith.constant 0 : index
    %c0_11 = arith.constant 0 : index
    %8 = vector.load %arg4[%c0_10, %c0_11] : memref<16x64xf32, #tpu.memory_space<vmem>>, vector<16x64xf32>
    %cst_12 = arith.constant dense<0.000000e+00> : vector<1x64xf32>
    %9 = tpu.matmul %4, %8, %cst_12 {dimension_numbers = #tpu.dot_dimension_numbers<[1], [0], [0], [1], [0, 0, 1, 1], [], []>} : vector<1x16xf32>, vector<16x64xf32>, vector<1x64xf32> -> vector<1x64xf32>
    %10 = vector.broadcast %9 : vector<1x64xf32> to vector<64x64xf32>
    %11 = arith.addf %7, %10 : vector<64x64xf32>
    %c0_13 = arith.constant 0 : index
    %c0_14 = arith.constant 0 : index
    %12 = vector.load %arg6[%c0_13, %c0_14] : memref<1x64xf32, #tpu.memory_space<vmem>>, vector<1x64xf32>
    %13 = vector.broadcast %12 : vector<1x64xf32> to vector<64x64xf32>
    %14 = arith.addf %11, %13 : vector<64x64xf32>
    %15 = tpu.transpose %14, [1, 0] : vector<64x64xf32> -> vector<64x64xf32>
    %16 = arith.truncf %15 : vector<64x64xf32> to vector<64x64xbf16>
    %17 = arith.truncf %14 : vector<64x64xf32> to vector<64x64xbf16>
    %cst_15 = arith.constant 0.000000e+00 : f32
    %18 = vector.broadcast %cst_15 : f32 to vector<64x64xf32>
    %c0_16 = arith.constant 0 : index
    %c0_17 = arith.constant 0 : index
    %c0_18 = arith.constant 0 : index
    %c0_19 = arith.constant 0 : index
    %19 = vector.load %arg7[%c0_16, %c0_17, %c0_18, %c0_19] : memref<2x4x64x16xbf16, #tpu.memory_space<vmem>>, vector<1x1x64x16xbf16>
    %20 = vector.shape_cast %19 : vector<1x1x64x16xbf16> to vector<64x16xbf16>
    %cst_20 = arith.constant dense<0.000000e+00> : vector<64x16xf32>
    %21 = tpu.matmul %16, %20, %cst_20 {dimension_numbers = #tpu.dot_dimension_numbers<[1], [0], [0], [1], [0, 0, 1, 1], [], []>} : vector<64x64xbf16>, vector<64x16xbf16>, vector<64x16xf32> -> vector<64x16xf32>
    %c0_21 = arith.constant 0 : index
    %c0_22 = arith.constant 0 : index
    %c0_23 = arith.constant 0 : index
    %c0_24 = arith.constant 0 : index
    %22 = vector.load %arg8[%c0_21, %c0_22, %c0_23, %c0_24] : memref<2x4x1x16xf32, #tpu.memory_space<vmem>>, vector<1x1x1x16xf32>
    %23 = vector.shape_cast %22 : vector<1x1x1x16xf32> to vector<1x16xf32>
    %24 = vector.broadcast %23 : vector<1x16xf32> to vector<64x16xf32>
    %25 = arith.addf %21, %24 : vector<64x16xf32>
    %c0_25 = arith.constant 0 : index
    %c0_26 = arith.constant 0 : index
    %c0_27 = arith.constant 0 : index
    %c0_28 = arith.constant 0 : index
    %26 = vector.load %arg9[%c0_25, %c0_26, %c0_27, %c0_28] : memref<2x4x16x64xbf16, #tpu.memory_space<vmem>>, vector<1x1x16x64xbf16>
    %27 = vector.shape_cast %26 : vector<1x1x16x64xbf16> to vector<16x64xbf16>
    %cst_29 = arith.constant dense<0.000000e+00> : vector<16x64xf32>
    %28 = tpu.matmul %27, %17, %cst_29 {dimension_numbers = #tpu.dot_dimension_numbers<[1], [0], [0], [1], [0, 0, 1, 1], [], []>} : vector<16x64xbf16>, vector<64x64xbf16>, vector<16x64xf32> -> vector<16x64xf32>
    %c0_30 = arith.constant 0 : index
    %c0_31 = arith.constant 0 : index
    %c0_32 = arith.constant 0 : index
    %c0_33 = arith.constant 0 : index
    %29 = vector.load %arg10[%c0_30, %c0_31, %c0_32, %c0_33] : memref<2x4x16x1xf32, #tpu.memory_space<vmem>>, vector<1x1x16x1xf32>
    %30 = vector.shape_cast %29 : vector<1x1x16x1xf32> to vector<16x1xf32>
    %31 = vector.broadcast %30 : vector<16x1xf32> to vector<16x64xf32>
    %32 = arith.addf %28, %31 : vector<16x64xf32>
    %c0_34 = arith.constant 0 : index
    %c0_35 = arith.constant 0 : index
    %c0_36 = arith.constant 0 : index
    %c0_37 = arith.constant 0 : index
    %33 = vector.load %arg11[%c0_34, %c0_35, %c0_36, %c0_37] : memref<2x4x64x16xbf16, #tpu.memory_space<vmem>>, vector<1x1x64x16xbf16>
    %34 = vector.shape_cast %33 : vector<1x1x64x16xbf16> to vector<64x16xbf16>
    %cst_38 = arith.constant dense<0.000000e+00> : vector<64x16xf32>
    %35 = tpu.matmul %16, %34, %cst_38 {dimension_numbers = #tpu.dot_dimension_numbers<[1], [0], [0], [1], [0, 0, 1, 1], [], []>} : vector<64x64xbf16>, vector<64x16xbf16>, vector<64x16xf32> -> vector<64x16xf32>
    %c0_39 = arith.constant 0 : index
    %c0_40 = arith.constant 0 : index
    %c0_41 = arith.constant 0 : index
    %c0_42 = arith.constant 0 : index
    %36 = vector.load %arg12[%c0_39, %c0_40, %c0_41, %c0_42] : memref<2x4x1x16xf32, #tpu.memory_space<vmem>>, vector<1x1x1x16xf32>
    %37 = vector.shape_cast %36 : vector<1x1x1x16xf32> to vector<1x16xf32>
    %38 = vector.broadcast %37 : vector<1x16xf32> to vector<64x16xf32>
    %39 = arith.addf %35, %38 : vector<64x16xf32>
    %40 = arith.truncf %25 : vector<64x16xf32> to vector<64x16xbf16>
    %41 = arith.truncf %32 : vector<16x64xf32> to vector<16x64xbf16>
    %cst_43 = arith.constant dense<0.000000e+00> : vector<64x64xf32>
    %42 = tpu.matmul %40, %41, %cst_43 {dimension_numbers = #tpu.dot_dimension_numbers<[1], [0], [0], [1], [0, 0, 1, 1], [], []>} : vector<64x16xbf16>, vector<16x64xbf16>, vector<64x64xf32> -> vector<64x64xf32>
    %cst_44 = arith.constant dense<0xFF800000> : vector<64xf32>
    %43 = vector.multi_reduction <maximumf>, %42, %cst_44 [1] : vector<64x64xf32> to vector<64xf32>
    %44 = vector.shape_cast %43 : vector<64xf32> to vector<64x1xf32>
    %45 = vector.broadcast %44 : vector<64x1xf32> to vector<64x64xf32>
    %46 = arith.subf %42, %45 : vector<64x64xf32>
    %47 = math.exp %46 : vector<64x64xf32>
    %cst_45 = arith.constant dense<0.000000e+00> : vector<64xf32>
    %48 = vector.multi_reduction <add>, %47, %cst_45 [1] : vector<64x64xf32> to vector<64xf32>
    %49 = vector.shape_cast %48 : vector<64xf32> to vector<64x1xf32>
    %50 = tpu.reciprocal %49 {approx = true} : vector<64x1xf32> -> vector<64x1xf32>
    %51 = vector.broadcast %50 : vector<64x1xf32> to vector<64x64xf32>
    %52 = arith.mulf %47, %51 : vector<64x64xf32>
    %53 = arith.truncf %52 : vector<64x64xf32> to vector<64x64xbf16>
    %54 = arith.truncf %39 : vector<64x16xf32> to vector<64x16xbf16>
    %cst_46 = arith.constant dense<0.000000e+00> : vector<64x16xf32>
    %55 = tpu.matmul %53, %54, %cst_46 {dimension_numbers = #tpu.dot_dimension_numbers<[1], [0], [0], [1], [0, 0, 1, 1], [], []>} : vector<64x64xbf16>, vector<64x16xbf16>, vector<64x16xf32> -> vector<64x16xf32>
    %56 = arith.truncf %55 : vector<64x16xf32> to vector<64x16xbf16>
    %c0_47 = arith.constant 0 : index
    %c0_48 = arith.constant 0 : index
    %c0_49 = arith.constant 0 : index
    %c0_50 = arith.constant 0 : index
    %57 = vector.load %arg13[%c0_47, %c0_48, %c0_49, %c0_50] : memref<2x4x16x64xbf16, #tpu.memory_space<vmem>>, vector<1x1x16x64xbf16>
    %58 = vector.shape_cast %57 : vector<1x1x16x64xbf16> to vector<16x64xbf16>
    %cst_51 = arith.constant dense<0.000000e+00> : vector<64x64xf32>
    %59 = tpu.matmul %56, %58, %cst_51 {dimension_numbers = #tpu.dot_dimension_numbers<[1], [0], [0], [1], [0, 0, 1, 1], [], []>} : vector<64x16xbf16>, vector<16x64xbf16>, vector<64x64xf32> -> vector<64x64xf32>
    %60 = arith.addf %18, %59 : vector<64x64xf32>
    %c0_52 = arith.constant 0 : index
    %c1 = arith.constant 1 : index
    %c0_53 = arith.constant 0 : index
    %c0_54 = arith.constant 0 : index
    %61 = vector.load %arg7[%c0_52, %c1, %c0_53, %c0_54] : memref<2x4x64x16xbf16, #tpu.memory_space<vmem>>, vector<1x1x64x16xbf16>
    %62 = vector.shape_cast %61 : vector<1x1x64x16xbf16> to vector<64x16xbf16>
    %cst_55 = arith.constant dense<0.000000e+00> : vector<64x16xf32>
    %63 = tpu.matmul %16, %62, %cst_55 {dimension_numbers = #tpu.dot_dimension_numbers<[1], [0], [0], [1], [0, 0, 1, 1], [], []>} : vector<64x64xbf16>, vector<64x16xbf16>, vector<64x16xf32> -> vector<64x16xf32>
    %c0_56 = arith.constant 0 : index
    %c1_57 = arith.constant 1 : index
    %c0_58 = arith.constant 0 : index
    %c0_59 = arith.constant 0 : index
    %64 = vector.load %arg8[%c0_56, %c1_57, %c0_58, %c0_59] : memref<2x4x1x16xf32, #tpu.memory_space<vmem>>, vector<1x1x1x16xf32>
    %65 = vector.shape_cast %64 : vector<1x1x1x16xf32> to vector<1x16xf32>
    %66 = vector.broadcast %65 : vector<1x16xf32> to vector<64x16xf32>
    %67 = arith.addf %63, %66 : vector<64x16xf32>
    %c0_60 = arith.constant 0 : index
    %c1_61 = arith.constant 1 : index
    %c0_62 = arith.constant 0 : index
    %c0_63 = arith.constant 0 : index
    %68 = vector.load %arg9[%c0_60, %c1_61, %c0_62, %c0_63] : memref<2x4x16x64xbf16, #tpu.memory_space<vmem>>, vector<1x1x16x64xbf16>
    %69 = vector.shape_cast %68 : vector<1x1x16x64xbf16> to vector<16x64xbf16>
    %cst_64 = arith.constant dense<0.000000e+00> : vector<16x64xf32>
    %70 = tpu.matmul %69, %17, %cst_64 {dimension_numbers = #tpu.dot_dimension_numbers<[1], [0], [0], [1], [0, 0, 1, 1], [], []>} : vector<16x64xbf16>, vector<64x64xbf16>, vector<16x64xf32> -> vector<16x64xf32>
    %c0_65 = arith.constant 0 : index
    %c1_66 = arith.constant 1 : index
    %c0_67 = arith.constant 0 : index
    %c0_68 = arith.constant 0 : index
    %71 = vector.load %arg10[%c0_65, %c1_66, %c0_67, %c0_68] : memref<2x4x16x1xf32, #tpu.memory_space<vmem>>, vector<1x1x16x1xf32>
    %72 = vector.shape_cast %71 : vector<1x1x16x1xf32> to vector<16x1xf32>
    %73 = vector.broadcast %72 : vector<16x1xf32> to vector<16x64xf32>
    %74 = arith.addf %70, %73 : vector<16x64xf32>
    %c0_69 = arith.constant 0 : index
    %c1_70 = arith.constant 1 : index
    %c0_71 = arith.constant 0 : index
    %c0_72 = arith.constant 0 : index
    %75 = vector.load %arg11[%c0_69, %c1_70, %c0_71, %c0_72] : memref<2x4x64x16xbf16, #tpu.memory_space<vmem>>, vector<1x1x64x16xbf16>
    %76 = vector.shape_cast %75 : vector<1x1x64x16xbf16> to vector<64x16xbf16>
    %cst_73 = arith.constant dense<0.000000e+00> : vector<64x16xf32>
    %77 = tpu.matmul %16, %76, %cst_73 {dimension_numbers = #tpu.dot_dimension_numbers<[1], [0], [0], [1], [0, 0, 1, 1], [], []>} : vector<64x64xbf16>, vector<64x16xbf16>, vector<64x16xf32> -> vector<64x16xf32>
    %c0_74 = arith.constant 0 : index
    %c1_75 = arith.constant 1 : index
    %c0_76 = arith.constant 0 : index
    %c0_77 = arith.constant 0 : index
    %78 = vector.load %arg12[%c0_74, %c1_75, %c0_76, %c0_77] : memref<2x4x1x16xf32, #tpu.memory_space<vmem>>, vector<1x1x1x16xf32>
    %79 = vector.shape_cast %78 : vector<1x1x1x16xf32> to vector<1x16xf32>
    %80 = vector.broadcast %79 : vector<1x16xf32> to vector<64x16xf32>
    %81 = arith.addf %77, %80 : vector<64x16xf32>
    %82 = arith.truncf %67 : vector<64x16xf32> to vector<64x16xbf16>
    %83 = arith.truncf %74 : vector<16x64xf32> to vector<16x64xbf16>
    %cst_78 = arith.constant dense<0.000000e+00> : vector<64x64xf32>
    %84 = tpu.matmul %82, %83, %cst_78 {dimension_numbers = #tpu.dot_dimension_numbers<[1], [0], [0], [1], [0, 0, 1, 1], [], []>} : vector<64x16xbf16>, vector<16x64xbf16>, vector<64x64xf32> -> vector<64x64xf32>
    %cst_79 = arith.constant dense<0xFF800000> : vector<64xf32>
    %85 = vector.multi_reduction <maximumf>, %84, %cst_79 [1] : vector<64x64xf32> to vector<64xf32>
    %86 = vector.shape_cast %85 : vector<64xf32> to vector<64x1xf32>
    %87 = vector.broadcast %86 : vector<64x1xf32> to vector<64x64xf32>
    %88 = arith.subf %84, %87 : vector<64x64xf32>
    %89 = math.exp %88 : vector<64x64xf32>
    %cst_80 = arith.constant dense<0.000000e+00> : vector<64xf32>
    %90 = vector.multi_reduction <add>, %89, %cst_80 [1] : vector<64x64xf32> to vector<64xf32>
    %91 = vector.shape_cast %90 : vector<64xf32> to vector<64x1xf32>
    %92 = tpu.reciprocal %91 {approx = true} : vector<64x1xf32> -> vector<64x1xf32>
    %93 = vector.broadcast %92 : vector<64x1xf32> to vector<64x64xf32>
    %94 = arith.mulf %89, %93 : vector<64x64xf32>
    %95 = arith.truncf %94 : vector<64x64xf32> to vector<64x64xbf16>
    %96 = arith.truncf %81 : vector<64x16xf32> to vector<64x16xbf16>
    %cst_81 = arith.constant dense<0.000000e+00> : vector<64x16xf32>
    %97 = tpu.matmul %95, %96, %cst_81 {dimension_numbers = #tpu.dot_dimension_numbers<[1], [0], [0], [1], [0, 0, 1, 1], [], []>} : vector<64x64xbf16>, vector<64x16xbf16>, vector<64x16xf32> -> vector<64x16xf32>
    %98 = arith.truncf %97 : vector<64x16xf32> to vector<64x16xbf16>
    %c0_82 = arith.constant 0 : index
    %c1_83 = arith.constant 1 : index
    %c0_84 = arith.constant 0 : index
    %c0_85 = arith.constant 0 : index
    %99 = vector.load %arg13[%c0_82, %c1_83, %c0_84, %c0_85] : memref<2x4x16x64xbf16, #tpu.memory_space<vmem>>, vector<1x1x16x64xbf16>
    %100 = vector.shape_cast %99 : vector<1x1x16x64xbf16> to vector<16x64xbf16>
    %cst_86 = arith.constant dense<0.000000e+00> : vector<64x64xf32>
    %101 = tpu.matmul %98, %100, %cst_86 {dimension_numbers = #tpu.dot_dimension_numbers<[1], [0], [0], [1], [0, 0, 1, 1], [], []>} : vector<64x16xbf16>, vector<16x64xbf16>, vector<64x64xf32> -> vector<64x64xf32>
    %102 = arith.addf %60, %101 : vector<64x64xf32>
    %c0_87 = arith.constant 0 : index
    %c2 = arith.constant 2 : index
    %c0_88 = arith.constant 0 : index
    %c0_89 = arith.constant 0 : index
    %103 = vector.load %arg7[%c0_87, %c2, %c0_88, %c0_89] : memref<2x4x64x16xbf16, #tpu.memory_space<vmem>>, vector<1x1x64x16xbf16>
    %104 = vector.shape_cast %103 : vector<1x1x64x16xbf16> to vector<64x16xbf16>
    %cst_90 = arith.constant dense<0.000000e+00> : vector<64x16xf32>
    %105 = tpu.matmul %16, %104, %cst_90 {dimension_numbers = #tpu.dot_dimension_numbers<[1], [0], [0], [1], [0, 0, 1, 1], [], []>} : vector<64x64xbf16>, vector<64x16xbf16>, vector<64x16xf32> -> vector<64x16xf32>
    %c0_91 = arith.constant 0 : index
    %c2_92 = arith.constant 2 : index
    %c0_93 = arith.constant 0 : index
    %c0_94 = arith.constant 0 : index
    %106 = vector.load %arg8[%c0_91, %c2_92, %c0_93, %c0_94] : memref<2x4x1x16xf32, #tpu.memory_space<vmem>>, vector<1x1x1x16xf32>
    %107 = vector.shape_cast %106 : vector<1x1x1x16xf32> to vector<1x16xf32>
    %108 = vector.broadcast %107 : vector<1x16xf32> to vector<64x16xf32>
    %109 = arith.addf %105, %108 : vector<64x16xf32>
    %c0_95 = arith.constant 0 : index
    %c2_96 = arith.constant 2 : index
    %c0_97 = arith.constant 0 : index
    %c0_98 = arith.constant 0 : index
    %110 = vector.load %arg9[%c0_95, %c2_96, %c0_97, %c0_98] : memref<2x4x16x64xbf16, #tpu.memory_space<vmem>>, vector<1x1x16x64xbf16>
    %111 = vector.shape_cast %110 : vector<1x1x16x64xbf16> to vector<16x64xbf16>
    %cst_99 = arith.constant dense<0.000000e+00> : vector<16x64xf32>
    %112 = tpu.matmul %111, %17, %cst_99 {dimension_numbers = #tpu.dot_dimension_numbers<[1], [0], [0], [1], [0, 0, 1, 1], [], []>} : vector<16x64xbf16>, vector<64x64xbf16>, vector<16x64xf32> -> vector<16x64xf32>
    %c0_100 = arith.constant 0 : index
    %c2_101 = arith.constant 2 : index
    %c0_102 = arith.constant 0 : index
    %c0_103 = arith.constant 0 : index
    %113 = vector.load %arg10[%c0_100, %c2_101, %c0_102, %c0_103] : memref<2x4x16x1xf32, #tpu.memory_space<vmem>>, vector<1x1x16x1xf32>
    %114 = vector.shape_cast %113 : vector<1x1x16x1xf32> to vector<16x1xf32>
    %115 = vector.broadcast %114 : vector<16x1xf32> to vector<16x64xf32>
    %116 = arith.addf %112, %115 : vector<16x64xf32>
    %c0_104 = arith.constant 0 : index
    %c2_105 = arith.constant 2 : index
    %c0_106 = arith.constant 0 : index
    %c0_107 = arith.constant 0 : index
    %117 = vector.load %arg11[%c0_104, %c2_105, %c0_106, %c0_107] : memref<2x4x64x16xbf16, #tpu.memory_space<vmem>>, vector<1x1x64x16xbf16>
    %118 = vector.shape_cast %117 : vector<1x1x64x16xbf16> to vector<64x16xbf16>
    %cst_108 = arith.constant dense<0.000000e+00> : vector<64x16xf32>
    %119 = tpu.matmul %16, %118, %cst_108 {dimension_numbers = #tpu.dot_dimension_numbers<[1], [0], [0], [1], [0, 0, 1, 1], [], []>} : vector<64x64xbf16>, vector<64x16xbf16>, vector<64x16xf32> -> vector<64x16xf32>
    %c0_109 = arith.constant 0 : index
    %c2_110 = arith.constant 2 : index
    %c0_111 = arith.constant 0 : index
    %c0_112 = arith.constant 0 : index
    %120 = vector.load %arg12[%c0_109, %c2_110, %c0_111, %c0_112] : memref<2x4x1x16xf32, #tpu.memory_space<vmem>>, vector<1x1x1x16xf32>
    %121 = vector.shape_cast %120 : vector<1x1x1x16xf32> to vector<1x16xf32>
    %122 = vector.broadcast %121 : vector<1x16xf32> to vector<64x16xf32>
    %123 = arith.addf %119, %122 : vector<64x16xf32>
    %124 = arith.truncf %109 : vector<64x16xf32> to vector<64x16xbf16>
    %125 = arith.truncf %116 : vector<16x64xf32> to vector<16x64xbf16>
    %cst_113 = arith.constant dense<0.000000e+00> : vector<64x64xf32>
    %126 = tpu.matmul %124, %125, %cst_113 {dimension_numbers = #tpu.dot_dimension_numbers<[1], [0], [0], [1], [0, 0, 1, 1], [], []>} : vector<64x16xbf16>, vector<16x64xbf16>, vector<64x64xf32> -> vector<64x64xf32>
    %cst_114 = arith.constant dense<0xFF800000> : vector<64xf32>
    %127 = vector.multi_reduction <maximumf>, %126, %cst_114 [1] : vector<64x64xf32> to vector<64xf32>
    %128 = vector.shape_cast %127 : vector<64xf32> to vector<64x1xf32>
    %129 = vector.broadcast %128 : vector<64x1xf32> to vector<64x64xf32>
    %130 = arith.subf %126, %129 : vector<64x64xf32>
    %131 = math.exp %130 : vector<64x64xf32>
    %cst_115 = arith.constant dense<0.000000e+00> : vector<64xf32>
    %132 = vector.multi_reduction <add>, %131, %cst_115 [1] : vector<64x64xf32> to vector<64xf32>
    %133 = vector.shape_cast %132 : vector<64xf32> to vector<64x1xf32>
    %134 = tpu.reciprocal %133 {approx = true} : vector<64x1xf32> -> vector<64x1xf32>
    %135 = vector.broadcast %134 : vector<64x1xf32> to vector<64x64xf32>
    %136 = arith.mulf %131, %135 : vector<64x64xf32>
    %137 = arith.truncf %136 : vector<64x64xf32> to vector<64x64xbf16>
    %138 = arith.truncf %123 : vector<64x16xf32> to vector<64x16xbf16>
    %cst_116 = arith.constant dense<0.000000e+00> : vector<64x16xf32>
    %139 = tpu.matmul %137, %138, %cst_116 {dimension_numbers = #tpu.dot_dimension_numbers<[1], [0], [0], [1], [0, 0, 1, 1], [], []>} : vector<64x64xbf16>, vector<64x16xbf16>, vector<64x16xf32> -> vector<64x16xf32>
    %140 = arith.truncf %139 : vector<64x16xf32> to vector<64x16xbf16>
    %c0_117 = arith.constant 0 : index
    %c2_118 = arith.constant 2 : index
    %c0_119 = arith.constant 0 : index
    %c0_120 = arith.constant 0 : index
    %141 = vector.load %arg13[%c0_117, %c2_118, %c0_119, %c0_120] : memref<2x4x16x64xbf16, #tpu.memory_space<vmem>>, vector<1x1x16x64xbf16>
    %142 = vector.shape_cast %141 : vector<1x1x16x64xbf16> to vector<16x64xbf16>
    %cst_121 = arith.constant dense<0.000000e+00> : vector<64x64xf32>
    %143 = tpu.matmul %140, %142, %cst_121 {dimension_numbers = #tpu.dot_dimension_numbers<[1], [0], [0], [1], [0, 0, 1, 1], [], []>} : vector<64x16xbf16>, vector<16x64xbf16>, vector<64x64xf32> -> vector<64x64xf32>
    %144 = arith.addf %102, %143 : vector<64x64xf32>
    %c0_122 = arith.constant 0 : index
    %c3 = arith.constant 3 : index
    %c0_123 = arith.constant 0 : index
    %c0_124 = arith.constant 0 : index
    %145 = vector.load %arg7[%c0_122, %c3, %c0_123, %c0_124] : memref<2x4x64x16xbf16, #tpu.memory_space<vmem>>, vector<1x1x64x16xbf16>
    %146 = vector.shape_cast %145 : vector<1x1x64x16xbf16> to vector<64x16xbf16>
    %cst_125 = arith.constant dense<0.000000e+00> : vector<64x16xf32>
    %147 = tpu.matmul %16, %146, %cst_125 {dimension_numbers = #tpu.dot_dimension_numbers<[1], [0], [0], [1], [0, 0, 1, 1], [], []>} : vector<64x64xbf16>, vector<64x16xbf16>, vector<64x16xf32> -> vector<64x16xf32>
    %c0_126 = arith.constant 0 : index
    %c3_127 = arith.constant 3 : index
    %c0_128 = arith.constant 0 : index
    %c0_129 = arith.constant 0 : index
    %148 = vector.load %arg8[%c0_126, %c3_127, %c0_128, %c0_129] : memref<2x4x1x16xf32, #tpu.memory_space<vmem>>, vector<1x1x1x16xf32>
    %149 = vector.shape_cast %148 : vector<1x1x1x16xf32> to vector<1x16xf32>
    %150 = vector.broadcast %149 : vector<1x16xf32> to vector<64x16xf32>
    %151 = arith.addf %147, %150 : vector<64x16xf32>
    %c0_130 = arith.constant 0 : index
    %c3_131 = arith.constant 3 : index
    %c0_132 = arith.constant 0 : index
    %c0_133 = arith.constant 0 : index
    %152 = vector.load %arg9[%c0_130, %c3_131, %c0_132, %c0_133] : memref<2x4x16x64xbf16, #tpu.memory_space<vmem>>, vector<1x1x16x64xbf16>
    %153 = vector.shape_cast %152 : vector<1x1x16x64xbf16> to vector<16x64xbf16>
    %cst_134 = arith.constant dense<0.000000e+00> : vector<16x64xf32>
    %154 = tpu.matmul %153, %17, %cst_134 {dimension_numbers = #tpu.dot_dimension_numbers<[1], [0], [0], [1], [0, 0, 1, 1], [], []>} : vector<16x64xbf16>, vector<64x64xbf16>, vector<16x64xf32> -> vector<16x64xf32>
    %c0_135 = arith.constant 0 : index
    %c3_136 = arith.constant 3 : index
    %c0_137 = arith.constant 0 : index
    %c0_138 = arith.constant 0 : index
    %155 = vector.load %arg10[%c0_135, %c3_136, %c0_137, %c0_138] : memref<2x4x16x1xf32, #tpu.memory_space<vmem>>, vector<1x1x16x1xf32>
    %156 = vector.shape_cast %155 : vector<1x1x16x1xf32> to vector<16x1xf32>
    %157 = vector.broadcast %156 : vector<16x1xf32> to vector<16x64xf32>
    %158 = arith.addf %154, %157 : vector<16x64xf32>
    %c0_139 = arith.constant 0 : index
    %c3_140 = arith.constant 3 : index
    %c0_141 = arith.constant 0 : index
    %c0_142 = arith.constant 0 : index
    %159 = vector.load %arg11[%c0_139, %c3_140, %c0_141, %c0_142] : memref<2x4x64x16xbf16, #tpu.memory_space<vmem>>, vector<1x1x64x16xbf16>
    %160 = vector.shape_cast %159 : vector<1x1x64x16xbf16> to vector<64x16xbf16>
    %cst_143 = arith.constant dense<0.000000e+00> : vector<64x16xf32>
    %161 = tpu.matmul %16, %160, %cst_143 {dimension_numbers = #tpu.dot_dimension_numbers<[1], [0], [0], [1], [0, 0, 1, 1], [], []>} : vector<64x64xbf16>, vector<64x16xbf16>, vector<64x16xf32> -> vector<64x16xf32>
    %c0_144 = arith.constant 0 : index
    %c3_145 = arith.constant 3 : index
    %c0_146 = arith.constant 0 : index
    %c0_147 = arith.constant 0 : index
    %162 = vector.load %arg12[%c0_144, %c3_145, %c0_146, %c0_147] : memref<2x4x1x16xf32, #tpu.memory_space<vmem>>, vector<1x1x1x16xf32>
    %163 = vector.shape_cast %162 : vector<1x1x1x16xf32> to vector<1x16xf32>
    %164 = vector.broadcast %163 : vector<1x16xf32> to vector<64x16xf32>
    %165 = arith.addf %161, %164 : vector<64x16xf32>
    %166 = arith.truncf %151 : vector<64x16xf32> to vector<64x16xbf16>
    %167 = arith.truncf %158 : vector<16x64xf32> to vector<16x64xbf16>
    %cst_148 = arith.constant dense<0.000000e+00> : vector<64x64xf32>
    %168 = tpu.matmul %166, %167, %cst_148 {dimension_numbers = #tpu.dot_dimension_numbers<[1], [0], [0], [1], [0, 0, 1, 1], [], []>} : vector<64x16xbf16>, vector<16x64xbf16>, vector<64x64xf32> -> vector<64x64xf32>
    %cst_149 = arith.constant dense<0xFF800000> : vector<64xf32>
    %169 = vector.multi_reduction <maximumf>, %168, %cst_149 [1] : vector<64x64xf32> to vector<64xf32>
    %170 = vector.shape_cast %169 : vector<64xf32> to vector<64x1xf32>
    %171 = vector.broadcast %170 : vector<64x1xf32> to vector<64x64xf32>
    %172 = arith.subf %168, %171 : vector<64x64xf32>
    %173 = math.exp %172 : vector<64x64xf32>
    %cst_150 = arith.constant dense<0.000000e+00> : vector<64xf32>
    %174 = vector.multi_reduction <add>, %173, %cst_150 [1] : vector<64x64xf32> to vector<64xf32>
    %175 = vector.shape_cast %174 : vector<64xf32> to vector<64x1xf32>
    %176 = tpu.reciprocal %175 {approx = true} : vector<64x1xf32> -> vector<64x1xf32>
    %177 = vector.broadcast %176 : vector<64x1xf32> to vector<64x64xf32>
    %178 = arith.mulf %173, %177 : vector<64x64xf32>
    %179 = arith.truncf %178 : vector<64x64xf32> to vector<64x64xbf16>
    %180 = arith.truncf %165 : vector<64x16xf32> to vector<64x16xbf16>
    %cst_151 = arith.constant dense<0.000000e+00> : vector<64x16xf32>
    %181 = tpu.matmul %179, %180, %cst_151 {dimension_numbers = #tpu.dot_dimension_numbers<[1], [0], [0], [1], [0, 0, 1, 1], [], []>} : vector<64x64xbf16>, vector<64x16xbf16>, vector<64x16xf32> -> vector<64x16xf32>
    %182 = arith.truncf %181 : vector<64x16xf32> to vector<64x16xbf16>
    %c0_152 = arith.constant 0 : index
    %c3_153 = arith.constant 3 : index
    %c0_154 = arith.constant 0 : index
    %c0_155 = arith.constant 0 : index
    %183 = vector.load %arg13[%c0_152, %c3_153, %c0_154, %c0_155] : memref<2x4x16x64xbf16, #tpu.memory_space<vmem>>, vector<1x1x16x64xbf16>
    %184 = vector.shape_cast %183 : vector<1x1x16x64xbf16> to vector<16x64xbf16>
    %cst_156 = arith.constant dense<0.000000e+00> : vector<64x64xf32>
    %185 = tpu.matmul %182, %184, %cst_156 {dimension_numbers = #tpu.dot_dimension_numbers<[1], [0], [0], [1], [0, 0, 1, 1], [], []>} : vector<64x16xbf16>, vector<16x64xbf16>, vector<64x64xf32> -> vector<64x64xf32>
    %186 = arith.addf %144, %185 : vector<64x64xf32>
    %c0_157 = arith.constant 0 : index
    %c0_158 = arith.constant 0 : index
    %c0_159 = arith.constant 0 : index
    %187 = vector.load %arg14[%c0_157, %c0_158, %c0_159] : memref<2x1x64xf32, #tpu.memory_space<vmem>>, vector<1x1x64xf32>
    %188 = vector.shape_cast %187 : vector<1x1x64xf32> to vector<1x64xf32>
    %189 = vector.broadcast %188 : vector<1x64xf32> to vector<64x64xf32>
    %190 = arith.addf %186, %189 : vector<64x64xf32>
    %191 = arith.addf %15, %190 : vector<64x64xf32>
    %c0_160 = arith.constant 0 : index
    %c0_161 = arith.constant 0 : index
    %c0_162 = arith.constant 0 : index
    %192 = vector.load %arg15[%c0_160, %c0_161, %c0_162] : memref<2x1x64xf32, #tpu.memory_space<vmem>>, vector<1x1x64xf32>
    %193 = vector.shape_cast %192 : vector<1x1x64xf32> to vector<1x64xf32>
    %c0_163 = arith.constant 0 : index
    %c0_164 = arith.constant 0 : index
    %c0_165 = arith.constant 0 : index
    %194 = vector.load %arg16[%c0_163, %c0_164, %c0_165] : memref<2x1x64xf32, #tpu.memory_space<vmem>>, vector<1x1x64xf32>
    %195 = vector.shape_cast %194 : vector<1x1x64xf32> to vector<1x64xf32>
    %cst_166 = arith.constant dense<0.000000e+00> : vector<64xf32>
    %196 = vector.multi_reduction <add>, %191, %cst_166 [1] : vector<64x64xf32> to vector<64xf32>
    %197 = vector.shape_cast %196 : vector<64xf32> to vector<64x1xf32>
    %cst_167 = arith.constant 6.400000e+01 : f32
    %198 = vector.broadcast %cst_167 : f32 to vector<64x1xf32>
    %199 = arith.divf %197, %198 : vector<64x1xf32>
    %200 = vector.broadcast %199 : vector<64x1xf32> to vector<64x64xf32>
    %201 = arith.subf %191, %200 : vector<64x64xf32>
    %202 = vector.broadcast %199 : vector<64x1xf32> to vector<64x64xf32>
    %203 = arith.subf %191, %202 : vector<64x64xf32>
    %204 = arith.mulf %201, %203 : vector<64x64xf32>
    %cst_168 = arith.constant dense<0.000000e+00> : vector<64xf32>
    %205 = vector.multi_reduction <add>, %204, %cst_168 [1] : vector<64x64xf32> to vector<64xf32>
    %206 = vector.shape_cast %205 : vector<64xf32> to vector<64x1xf32>
    %cst_169 = arith.constant 6.400000e+01 : f32
    %207 = vector.broadcast %cst_169 : f32 to vector<64x1xf32>
    %208 = arith.divf %206, %207 : vector<64x1xf32>
    %209 = vector.broadcast %199 : vector<64x1xf32> to vector<64x64xf32>
    %210 = arith.subf %191, %209 : vector<64x64xf32>
    %cst_170 = arith.constant 9.99999974E-6 : f32
    %211 = vector.broadcast %cst_170 : f32 to vector<64x1xf32>
    %212 = arith.addf %208, %211 : vector<64x1xf32>
    %213 = math.rsqrt %212 : vector<64x1xf32>
    %214 = vector.broadcast %213 : vector<64x1xf32> to vector<64x64xf32>
    %215 = arith.mulf %210, %214 : vector<64x64xf32>
    %216 = vector.broadcast %193 : vector<1x64xf32> to vector<64x64xf32>
    %217 = arith.mulf %215, %216 : vector<64x64xf32>
    %218 = vector.broadcast %195 : vector<1x64xf32> to vector<64x64xf32>
    %219 = arith.addf %217, %218 : vector<64x64xf32>
    %220 = arith.truncf %219 : vector<64x64xf32> to vector<64x64xbf16>
    %c0_171 = arith.constant 0 : index
    %c0_172 = arith.constant 0 : index
    %c0_173 = arith.constant 0 : index
    %221 = vector.load %arg17[%c0_171, %c0_172, %c0_173] : memref<2x64x2048xbf16, #tpu.memory_space<vmem>>, vector<1x64x2048xbf16>
    %222 = vector.shape_cast %221 : vector<1x64x2048xbf16> to vector<64x2048xbf16>
    %cst_174 = arith.constant dense<0.000000e+00> : vector<64x2048xf32>
    %223 = tpu.matmul %220, %222, %cst_174 {dimension_numbers = #tpu.dot_dimension_numbers<[1], [0], [0], [1], [0, 0, 1, 1], [], []>} : vector<64x64xbf16>, vector<64x2048xbf16>, vector<64x2048xf32> -> vector<64x2048xf32>
    %c0_175 = arith.constant 0 : index
    %c0_176 = arith.constant 0 : index
    %c0_177 = arith.constant 0 : index
    %224 = vector.load %arg18[%c0_175, %c0_176, %c0_177] : memref<2x1x2048xf32, #tpu.memory_space<vmem>>, vector<1x1x2048xf32>
    %225 = vector.shape_cast %224 : vector<1x1x2048xf32> to vector<1x2048xf32>
    %226 = vector.broadcast %225 : vector<1x2048xf32> to vector<64x2048xf32>
    %227 = arith.addf %223, %226 : vector<64x2048xf32>
    %cst_178 = arith.constant 0.000000e+00 : f32
    %228 = vector.broadcast %cst_178 : f32 to vector<64x2048xf32>
    %229 = arith.maximumf %227, %228 : vector<64x2048xf32>
    %230 = arith.truncf %229 : vector<64x2048xf32> to vector<64x2048xbf16>
    %c0_179 = arith.constant 0 : index
    %c0_180 = arith.constant 0 : index
    %c0_181 = arith.constant 0 : index
    %231 = vector.load %arg19[%c0_179, %c0_180, %c0_181] : memref<2x2048x64xbf16, #tpu.memory_space<vmem>>, vector<1x2048x64xbf16>
    %232 = vector.shape_cast %231 : vector<1x2048x64xbf16> to vector<2048x64xbf16>
    %cst_182 = arith.constant dense<0.000000e+00> : vector<64x64xf32>
    %233 = tpu.matmul %230, %232, %cst_182 {dimension_numbers = #tpu.dot_dimension_numbers<[1], [0], [0], [1], [0, 0, 1, 1], [], []>} : vector<64x2048xbf16>, vector<2048x64xbf16>, vector<64x64xf32> -> vector<64x64xf32>
    %c0_183 = arith.constant 0 : index
    %c0_184 = arith.constant 0 : index
    %c0_185 = arith.constant 0 : index
    %234 = vector.load %arg20[%c0_183, %c0_184, %c0_185] : memref<2x1x64xf32, #tpu.memory_space<vmem>>, vector<1x1x64xf32>
    %235 = vector.shape_cast %234 : vector<1x1x64xf32> to vector<1x64xf32>
    %236 = vector.broadcast %235 : vector<1x64xf32> to vector<64x64xf32>
    %237 = arith.addf %233, %236 : vector<64x64xf32>
    %238 = arith.addf %219, %237 : vector<64x64xf32>
    %c0_186 = arith.constant 0 : index
    %c0_187 = arith.constant 0 : index
    %c0_188 = arith.constant 0 : index
    %239 = vector.load %arg21[%c0_186, %c0_187, %c0_188] : memref<2x1x64xf32, #tpu.memory_space<vmem>>, vector<1x1x64xf32>
    %240 = vector.shape_cast %239 : vector<1x1x64xf32> to vector<1x64xf32>
    %c0_189 = arith.constant 0 : index
    %c0_190 = arith.constant 0 : index
    %c0_191 = arith.constant 0 : index
    %241 = vector.load %arg22[%c0_189, %c0_190, %c0_191] : memref<2x1x64xf32, #tpu.memory_space<vmem>>, vector<1x1x64xf32>
    %242 = vector.shape_cast %241 : vector<1x1x64xf32> to vector<1x64xf32>
    %cst_192 = arith.constant dense<0.000000e+00> : vector<64xf32>
    %243 = vector.multi_reduction <add>, %238, %cst_192 [1] : vector<64x64xf32> to vector<64xf32>
    %244 = vector.shape_cast %243 : vector<64xf32> to vector<64x1xf32>
    %cst_193 = arith.constant 6.400000e+01 : f32
    %245 = vector.broadcast %cst_193 : f32 to vector<64x1xf32>
    %246 = arith.divf %244, %245 : vector<64x1xf32>
    %247 = vector.broadcast %246 : vector<64x1xf32> to vector<64x64xf32>
    %248 = arith.subf %238, %247 : vector<64x64xf32>
    %249 = vector.broadcast %246 : vector<64x1xf32> to vector<64x64xf32>
    %250 = arith.subf %238, %249 : vector<64x64xf32>
    %251 = arith.mulf %248, %250 : vector<64x64xf32>
    %cst_194 = arith.constant dense<0.000000e+00> : vector<64xf32>
    %252 = vector.multi_reduction <add>, %251, %cst_194 [1] : vector<64x64xf32> to vector<64xf32>
    %253 = vector.shape_cast %252 : vector<64xf32> to vector<64x1xf32>
    %cst_195 = arith.constant 6.400000e+01 : f32
    %254 = vector.broadcast %cst_195 : f32 to vector<64x1xf32>
    %255 = arith.divf %253, %254 : vector<64x1xf32>
    %256 = vector.broadcast %246 : vector<64x1xf32> to vector<64x64xf32>
    %257 = arith.subf %238, %256 : vector<64x64xf32>
    %cst_196 = arith.constant 9.99999974E-6 : f32
    %258 = vector.broadcast %cst_196 : f32 to vector<64x1xf32>
    %259 = arith.addf %255, %258 : vector<64x1xf32>
    %260 = math.rsqrt %259 : vector<64x1xf32>
    %261 = vector.broadcast %260 : vector<64x1xf32> to vector<64x64xf32>
    %262 = arith.mulf %257, %261 : vector<64x64xf32>
    %263 = vector.broadcast %240 : vector<1x64xf32> to vector<64x64xf32>
    %264 = arith.mulf %262, %263 : vector<64x64xf32>
    %265 = vector.broadcast %242 : vector<1x64xf32> to vector<64x64xf32>
    %266 = arith.addf %264, %265 : vector<64x64xf32>
    %267 = tpu.transpose %266, [1, 0] : vector<64x64xf32> -> vector<64x64xf32>
    %268 = arith.truncf %266 : vector<64x64xf32> to vector<64x64xbf16>
    %269 = arith.truncf %267 : vector<64x64xf32> to vector<64x64xbf16>
    %cst_197 = arith.constant 0.000000e+00 : f32
    %270 = vector.broadcast %cst_197 : f32 to vector<64x64xf32>
    %c1_198 = arith.constant 1 : index
    %c0_199 = arith.constant 0 : index
    %c0_200 = arith.constant 0 : index
    %c0_201 = arith.constant 0 : index
    %271 = vector.load %arg7[%c1_198, %c0_199, %c0_200, %c0_201] : memref<2x4x64x16xbf16, #tpu.memory_space<vmem>>, vector<1x1x64x16xbf16>
    %272 = vector.shape_cast %271 : vector<1x1x64x16xbf16> to vector<64x16xbf16>
    %cst_202 = arith.constant dense<0.000000e+00> : vector<64x16xf32>
    %273 = tpu.matmul %268, %272, %cst_202 {dimension_numbers = #tpu.dot_dimension_numbers<[1], [0], [0], [1], [0, 0, 1, 1], [], []>} : vector<64x64xbf16>, vector<64x16xbf16>, vector<64x16xf32> -> vector<64x16xf32>
    %c1_203 = arith.constant 1 : index
    %c0_204 = arith.constant 0 : index
    %c0_205 = arith.constant 0 : index
    %c0_206 = arith.constant 0 : index
    %274 = vector.load %arg8[%c1_203, %c0_204, %c0_205, %c0_206] : memref<2x4x1x16xf32, #tpu.memory_space<vmem>>, vector<1x1x1x16xf32>
    %275 = vector.shape_cast %274 : vector<1x1x1x16xf32> to vector<1x16xf32>
    %276 = vector.broadcast %275 : vector<1x16xf32> to vector<64x16xf32>
    %277 = arith.addf %273, %276 : vector<64x16xf32>
    %c1_207 = arith.constant 1 : index
    %c0_208 = arith.constant 0 : index
    %c0_209 = arith.constant 0 : index
    %c0_210 = arith.constant 0 : index
    %278 = vector.load %arg9[%c1_207, %c0_208, %c0_209, %c0_210] : memref<2x4x16x64xbf16, #tpu.memory_space<vmem>>, vector<1x1x16x64xbf16>
    %279 = vector.shape_cast %278 : vector<1x1x16x64xbf16> to vector<16x64xbf16>
    %cst_211 = arith.constant dense<0.000000e+00> : vector<16x64xf32>
    %280 = tpu.matmul %279, %269, %cst_211 {dimension_numbers = #tpu.dot_dimension_numbers<[1], [0], [0], [1], [0, 0, 1, 1], [], []>} : vector<16x64xbf16>, vector<64x64xbf16>, vector<16x64xf32> -> vector<16x64xf32>
    %c1_212 = arith.constant 1 : index
    %c0_213 = arith.constant 0 : index
    %c0_214 = arith.constant 0 : index
    %c0_215 = arith.constant 0 : index
    %281 = vector.load %arg10[%c1_212, %c0_213, %c0_214, %c0_215] : memref<2x4x16x1xf32, #tpu.memory_space<vmem>>, vector<1x1x16x1xf32>
    %282 = vector.shape_cast %281 : vector<1x1x16x1xf32> to vector<16x1xf32>
    %283 = vector.broadcast %282 : vector<16x1xf32> to vector<16x64xf32>
    %284 = arith.addf %280, %283 : vector<16x64xf32>
    %c1_216 = arith.constant 1 : index
    %c0_217 = arith.constant 0 : index
    %c0_218 = arith.constant 0 : index
    %c0_219 = arith.constant 0 : index
    %285 = vector.load %arg11[%c1_216, %c0_217, %c0_218, %c0_219] : memref<2x4x64x16xbf16, #tpu.memory_space<vmem>>, vector<1x1x64x16xbf16>
    %286 = vector.shape_cast %285 : vector<1x1x64x16xbf16> to vector<64x16xbf16>
    %cst_220 = arith.constant dense<0.000000e+00> : vector<64x16xf32>
    %287 = tpu.matmul %268, %286, %cst_220 {dimension_numbers = #tpu.dot_dimension_numbers<[1], [0], [0], [1], [0, 0, 1, 1], [], []>} : vector<64x64xbf16>, vector<64x16xbf16>, vector<64x16xf32> -> vector<64x16xf32>
    %c1_221 = arith.constant 1 : index
    %c0_222 = arith.constant 0 : index
    %c0_223 = arith.constant 0 : index
    %c0_224 = arith.constant 0 : index
    %288 = vector.load %arg12[%c1_221, %c0_222, %c0_223, %c0_224] : memref<2x4x1x16xf32, #tpu.memory_space<vmem>>, vector<1x1x1x16xf32>
    %289 = vector.shape_cast %288 : vector<1x1x1x16xf32> to vector<1x16xf32>
    %290 = vector.broadcast %289 : vector<1x16xf32> to vector<64x16xf32>
    %291 = arith.addf %287, %290 : vector<64x16xf32>
    %292 = arith.truncf %277 : vector<64x16xf32> to vector<64x16xbf16>
    %293 = arith.truncf %284 : vector<16x64xf32> to vector<16x64xbf16>
    %cst_225 = arith.constant dense<0.000000e+00> : vector<64x64xf32>
    %294 = tpu.matmul %292, %293, %cst_225 {dimension_numbers = #tpu.dot_dimension_numbers<[1], [0], [0], [1], [0, 0, 1, 1], [], []>} : vector<64x16xbf16>, vector<16x64xbf16>, vector<64x64xf32> -> vector<64x64xf32>
    %cst_226 = arith.constant dense<0xFF800000> : vector<64xf32>
    %295 = vector.multi_reduction <maximumf>, %294, %cst_226 [1] : vector<64x64xf32> to vector<64xf32>
    %296 = vector.shape_cast %295 : vector<64xf32> to vector<64x1xf32>
    %297 = vector.broadcast %296 : vector<64x1xf32> to vector<64x64xf32>
    %298 = arith.subf %294, %297 : vector<64x64xf32>
    %299 = math.exp %298 : vector<64x64xf32>
    %cst_227 = arith.constant dense<0.000000e+00> : vector<64xf32>
    %300 = vector.multi_reduction <add>, %299, %cst_227 [1] : vector<64x64xf32> to vector<64xf32>
    %301 = vector.shape_cast %300 : vector<64xf32> to vector<64x1xf32>
    %302 = tpu.reciprocal %301 {approx = true} : vector<64x1xf32> -> vector<64x1xf32>
    %303 = vector.broadcast %302 : vector<64x1xf32> to vector<64x64xf32>
    %304 = arith.mulf %299, %303 : vector<64x64xf32>
    %305 = arith.truncf %304 : vector<64x64xf32> to vector<64x64xbf16>
    %306 = arith.truncf %291 : vector<64x16xf32> to vector<64x16xbf16>
    %cst_228 = arith.constant dense<0.000000e+00> : vector<64x16xf32>
    %307 = tpu.matmul %305, %306, %cst_228 {dimension_numbers = #tpu.dot_dimension_numbers<[1], [0], [0], [1], [0, 0, 1, 1], [], []>} : vector<64x64xbf16>, vector<64x16xbf16>, vector<64x16xf32> -> vector<64x16xf32>
    %308 = arith.truncf %307 : vector<64x16xf32> to vector<64x16xbf16>
    %c1_229 = arith.constant 1 : index
    %c0_230 = arith.constant 0 : index
    %c0_231 = arith.constant 0 : index
    %c0_232 = arith.constant 0 : index
    %309 = vector.load %arg13[%c1_229, %c0_230, %c0_231, %c0_232] : memref<2x4x16x64xbf16, #tpu.memory_space<vmem>>, vector<1x1x16x64xbf16>
    %310 = vector.shape_cast %309 : vector<1x1x16x64xbf16> to vector<16x64xbf16>
    %cst_233 = arith.constant dense<0.000000e+00> : vector<64x64xf32>
    %311 = tpu.matmul %308, %310, %cst_233 {dimension_numbers = #tpu.dot_dimension_numbers<[1], [0], [0], [1], [0, 0, 1, 1], [], []>} : vector<64x16xbf16>, vector<16x64xbf16>, vector<64x64xf32> -> vector<64x64xf32>
    %312 = arith.addf %270, %311 : vector<64x64xf32>
    %c1_234 = arith.constant 1 : index
    %c1_235 = arith.constant 1 : index
    %c0_236 = arith.constant 0 : index
    %c0_237 = arith.constant 0 : index
    %313 = vector.load %arg7[%c1_234, %c1_235, %c0_236, %c0_237] : memref<2x4x64x16xbf16, #tpu.memory_space<vmem>>, vector<1x1x64x16xbf16>
    %314 = vector.shape_cast %313 : vector<1x1x64x16xbf16> to vector<64x16xbf16>
    %cst_238 = arith.constant dense<0.000000e+00> : vector<64x16xf32>
    %315 = tpu.matmul %268, %314, %cst_238 {dimension_numbers = #tpu.dot_dimension_numbers<[1], [0], [0], [1], [0, 0, 1, 1], [], []>} : vector<64x64xbf16>, vector<64x16xbf16>, vector<64x16xf32> -> vector<64x16xf32>
    %c1_239 = arith.constant 1 : index
    %c1_240 = arith.constant 1 : index
    %c0_241 = arith.constant 0 : index
    %c0_242 = arith.constant 0 : index
    %316 = vector.load %arg8[%c1_239, %c1_240, %c0_241, %c0_242] : memref<2x4x1x16xf32, #tpu.memory_space<vmem>>, vector<1x1x1x16xf32>
    %317 = vector.shape_cast %316 : vector<1x1x1x16xf32> to vector<1x16xf32>
    %318 = vector.broadcast %317 : vector<1x16xf32> to vector<64x16xf32>
    %319 = arith.addf %315, %318 : vector<64x16xf32>
    %c1_243 = arith.constant 1 : index
    %c1_244 = arith.constant 1 : index
    %c0_245 = arith.constant 0 : index
    %c0_246 = arith.constant 0 : index
    %320 = vector.load %arg9[%c1_243, %c1_244, %c0_245, %c0_246] : memref<2x4x16x64xbf16, #tpu.memory_space<vmem>>, vector<1x1x16x64xbf16>
    %321 = vector.shape_cast %320 : vector<1x1x16x64xbf16> to vector<16x64xbf16>
    %cst_247 = arith.constant dense<0.000000e+00> : vector<16x64xf32>
    %322 = tpu.matmul %321, %269, %cst_247 {dimension_numbers = #tpu.dot_dimension_numbers<[1], [0], [0], [1], [0, 0, 1, 1], [], []>} : vector<16x64xbf16>, vector<64x64xbf16>, vector<16x64xf32> -> vector<16x64xf32>
    %c1_248 = arith.constant 1 : index
    %c1_249 = arith.constant 1 : index
    %c0_250 = arith.constant 0 : index
    %c0_251 = arith.constant 0 : index
    %323 = vector.load %arg10[%c1_248, %c1_249, %c0_250, %c0_251] : memref<2x4x16x1xf32, #tpu.memory_space<vmem>>, vector<1x1x16x1xf32>
    %324 = vector.shape_cast %323 : vector<1x1x16x1xf32> to vector<16x1xf32>
    %325 = vector.broadcast %324 : vector<16x1xf32> to vector<16x64xf32>
    %326 = arith.addf %322, %325 : vector<16x64xf32>
    %c1_252 = arith.constant 1 : index
    %c1_253 = arith.constant 1 : index
    %c0_254 = arith.constant 0 : index
    %c0_255 = arith.constant 0 : index
    %327 = vector.load %arg11[%c1_252, %c1_253, %c0_254, %c0_255] : memref<2x4x64x16xbf16, #tpu.memory_space<vmem>>, vector<1x1x64x16xbf16>
    %328 = vector.shape_cast %327 : vector<1x1x64x16xbf16> to vector<64x16xbf16>
    %cst_256 = arith.constant dense<0.000000e+00> : vector<64x16xf32>
    %329 = tpu.matmul %268, %328, %cst_256 {dimension_numbers = #tpu.dot_dimension_numbers<[1], [0], [0], [1], [0, 0, 1, 1], [], []>} : vector<64x64xbf16>, vector<64x16xbf16>, vector<64x16xf32> -> vector<64x16xf32>
    %c1_257 = arith.constant 1 : index
    %c1_258 = arith.constant 1 : index
    %c0_259 = arith.constant 0 : index
    %c0_260 = arith.constant 0 : index
    %330 = vector.load %arg12[%c1_257, %c1_258, %c0_259, %c0_260] : memref<2x4x1x16xf32, #tpu.memory_space<vmem>>, vector<1x1x1x16xf32>
    %331 = vector.shape_cast %330 : vector<1x1x1x16xf32> to vector<1x16xf32>
    %332 = vector.broadcast %331 : vector<1x16xf32> to vector<64x16xf32>
    %333 = arith.addf %329, %332 : vector<64x16xf32>
    %334 = arith.truncf %319 : vector<64x16xf32> to vector<64x16xbf16>
    %335 = arith.truncf %326 : vector<16x64xf32> to vector<16x64xbf16>
    %cst_261 = arith.constant dense<0.000000e+00> : vector<64x64xf32>
    %336 = tpu.matmul %334, %335, %cst_261 {dimension_numbers = #tpu.dot_dimension_numbers<[1], [0], [0], [1], [0, 0, 1, 1], [], []>} : vector<64x16xbf16>, vector<16x64xbf16>, vector<64x64xf32> -> vector<64x64xf32>
    %cst_262 = arith.constant dense<0xFF800000> : vector<64xf32>
    %337 = vector.multi_reduction <maximumf>, %336, %cst_262 [1] : vector<64x64xf32> to vector<64xf32>
    %338 = vector.shape_cast %337 : vector<64xf32> to vector<64x1xf32>
    %339 = vector.broadcast %338 : vector<64x1xf32> to vector<64x64xf32>
    %340 = arith.subf %336, %339 : vector<64x64xf32>
    %341 = math.exp %340 : vector<64x64xf32>
    %cst_263 = arith.constant dense<0.000000e+00> : vector<64xf32>
    %342 = vector.multi_reduction <add>, %341, %cst_263 [1] : vector<64x64xf32> to vector<64xf32>
    %343 = vector.shape_cast %342 : vector<64xf32> to vector<64x1xf32>
    %344 = tpu.reciprocal %343 {approx = true} : vector<64x1xf32> -> vector<64x1xf32>
    %345 = vector.broadcast %344 : vector<64x1xf32> to vector<64x64xf32>
    %346 = arith.mulf %341, %345 : vector<64x64xf32>
    %347 = arith.truncf %346 : vector<64x64xf32> to vector<64x64xbf16>
    %348 = arith.truncf %333 : vector<64x16xf32> to vector<64x16xbf16>
    %cst_264 = arith.constant dense<0.000000e+00> : vector<64x16xf32>
    %349 = tpu.matmul %347, %348, %cst_264 {dimension_numbers = #tpu.dot_dimension_numbers<[1], [0], [0], [1], [0, 0, 1, 1], [], []>} : vector<64x64xbf16>, vector<64x16xbf16>, vector<64x16xf32> -> vector<64x16xf32>
    %350 = arith.truncf %349 : vector<64x16xf32> to vector<64x16xbf16>
    %c1_265 = arith.constant 1 : index
    %c1_266 = arith.constant 1 : index
    %c0_267 = arith.constant 0 : index
    %c0_268 = arith.constant 0 : index
    %351 = vector.load %arg13[%c1_265, %c1_266, %c0_267, %c0_268] : memref<2x4x16x64xbf16, #tpu.memory_space<vmem>>, vector<1x1x16x64xbf16>
    %352 = vector.shape_cast %351 : vector<1x1x16x64xbf16> to vector<16x64xbf16>
    %cst_269 = arith.constant dense<0.000000e+00> : vector<64x64xf32>
    %353 = tpu.matmul %350, %352, %cst_269 {dimension_numbers = #tpu.dot_dimension_numbers<[1], [0], [0], [1], [0, 0, 1, 1], [], []>} : vector<64x16xbf16>, vector<16x64xbf16>, vector<64x64xf32> -> vector<64x64xf32>
    %354 = arith.addf %312, %353 : vector<64x64xf32>
    %c1_270 = arith.constant 1 : index
    %c2_271 = arith.constant 2 : index
    %c0_272 = arith.constant 0 : index
    %c0_273 = arith.constant 0 : index
    %355 = vector.load %arg7[%c1_270, %c2_271, %c0_272, %c0_273] : memref<2x4x64x16xbf16, #tpu.memory_space<vmem>>, vector<1x1x64x16xbf16>
    %356 = vector.shape_cast %355 : vector<1x1x64x16xbf16> to vector<64x16xbf16>
    %cst_274 = arith.constant dense<0.000000e+00> : vector<64x16xf32>
    %357 = tpu.matmul %268, %356, %cst_274 {dimension_numbers = #tpu.dot_dimension_numbers<[1], [0], [0], [1], [0, 0, 1, 1], [], []>} : vector<64x64xbf16>, vector<64x16xbf16>, vector<64x16xf32> -> vector<64x16xf32>
    %c1_275 = arith.constant 1 : index
    %c2_276 = arith.constant 2 : index
    %c0_277 = arith.constant 0 : index
    %c0_278 = arith.constant 0 : index
    %358 = vector.load %arg8[%c1_275, %c2_276, %c0_277, %c0_278] : memref<2x4x1x16xf32, #tpu.memory_space<vmem>>, vector<1x1x1x16xf32>
    %359 = vector.shape_cast %358 : vector<1x1x1x16xf32> to vector<1x16xf32>
    %360 = vector.broadcast %359 : vector<1x16xf32> to vector<64x16xf32>
    %361 = arith.addf %357, %360 : vector<64x16xf32>
    %c1_279 = arith.constant 1 : index
    %c2_280 = arith.constant 2 : index
    %c0_281 = arith.constant 0 : index
    %c0_282 = arith.constant 0 : index
    %362 = vector.load %arg9[%c1_279, %c2_280, %c0_281, %c0_282] : memref<2x4x16x64xbf16, #tpu.memory_space<vmem>>, vector<1x1x16x64xbf16>
    %363 = vector.shape_cast %362 : vector<1x1x16x64xbf16> to vector<16x64xbf16>
    %cst_283 = arith.constant dense<0.000000e+00> : vector<16x64xf32>
    %364 = tpu.matmul %363, %269, %cst_283 {dimension_numbers = #tpu.dot_dimension_numbers<[1], [0], [0], [1], [0, 0, 1, 1], [], []>} : vector<16x64xbf16>, vector<64x64xbf16>, vector<16x64xf32> -> vector<16x64xf32>
    %c1_284 = arith.constant 1 : index
    %c2_285 = arith.constant 2 : index
    %c0_286 = arith.constant 0 : index
    %c0_287 = arith.constant 0 : index
    %365 = vector.load %arg10[%c1_284, %c2_285, %c0_286, %c0_287] : memref<2x4x16x1xf32, #tpu.memory_space<vmem>>, vector<1x1x16x1xf32>
    %366 = vector.shape_cast %365 : vector<1x1x16x1xf32> to vector<16x1xf32>
    %367 = vector.broadcast %366 : vector<16x1xf32> to vector<16x64xf32>
    %368 = arith.addf %364, %367 : vector<16x64xf32>
    %c1_288 = arith.constant 1 : index
    %c2_289 = arith.constant 2 : index
    %c0_290 = arith.constant 0 : index
    %c0_291 = arith.constant 0 : index
    %369 = vector.load %arg11[%c1_288, %c2_289, %c0_290, %c0_291] : memref<2x4x64x16xbf16, #tpu.memory_space<vmem>>, vector<1x1x64x16xbf16>
    %370 = vector.shape_cast %369 : vector<1x1x64x16xbf16> to vector<64x16xbf16>
    %cst_292 = arith.constant dense<0.000000e+00> : vector<64x16xf32>
    %371 = tpu.matmul %268, %370, %cst_292 {dimension_numbers = #tpu.dot_dimension_numbers<[1], [0], [0], [1], [0, 0, 1, 1], [], []>} : vector<64x64xbf16>, vector<64x16xbf16>, vector<64x16xf32> -> vector<64x16xf32>
    %c1_293 = arith.constant 1 : index
    %c2_294 = arith.constant 2 : index
    %c0_295 = arith.constant 0 : index
    %c0_296 = arith.constant 0 : index
    %372 = vector.load %arg12[%c1_293, %c2_294, %c0_295, %c0_296] : memref<2x4x1x16xf32, #tpu.memory_space<vmem>>, vector<1x1x1x16xf32>
    %373 = vector.shape_cast %372 : vector<1x1x1x16xf32> to vector<1x16xf32>
    %374 = vector.broadcast %373 : vector<1x16xf32> to vector<64x16xf32>
    %375 = arith.addf %371, %374 : vector<64x16xf32>
    %376 = arith.truncf %361 : vector<64x16xf32> to vector<64x16xbf16>
    %377 = arith.truncf %368 : vector<16x64xf32> to vector<16x64xbf16>
    %cst_297 = arith.constant dense<0.000000e+00> : vector<64x64xf32>
    %378 = tpu.matmul %376, %377, %cst_297 {dimension_numbers = #tpu.dot_dimension_numbers<[1], [0], [0], [1], [0, 0, 1, 1], [], []>} : vector<64x16xbf16>, vector<16x64xbf16>, vector<64x64xf32> -> vector<64x64xf32>
    %cst_298 = arith.constant dense<0xFF800000> : vector<64xf32>
    %379 = vector.multi_reduction <maximumf>, %378, %cst_298 [1] : vector<64x64xf32> to vector<64xf32>
    %380 = vector.shape_cast %379 : vector<64xf32> to vector<64x1xf32>
    %381 = vector.broadcast %380 : vector<64x1xf32> to vector<64x64xf32>
    %382 = arith.subf %378, %381 : vector<64x64xf32>
    %383 = math.exp %382 : vector<64x64xf32>
    %cst_299 = arith.constant dense<0.000000e+00> : vector<64xf32>
    %384 = vector.multi_reduction <add>, %383, %cst_299 [1] : vector<64x64xf32> to vector<64xf32>
    %385 = vector.shape_cast %384 : vector<64xf32> to vector<64x1xf32>
    %386 = tpu.reciprocal %385 {approx = true} : vector<64x1xf32> -> vector<64x1xf32>
    %387 = vector.broadcast %386 : vector<64x1xf32> to vector<64x64xf32>
    %388 = arith.mulf %383, %387 : vector<64x64xf32>
    %389 = arith.truncf %388 : vector<64x64xf32> to vector<64x64xbf16>
    %390 = arith.truncf %375 : vector<64x16xf32> to vector<64x16xbf16>
    %cst_300 = arith.constant dense<0.000000e+00> : vector<64x16xf32>
    %391 = tpu.matmul %389, %390, %cst_300 {dimension_numbers = #tpu.dot_dimension_numbers<[1], [0], [0], [1], [0, 0, 1, 1], [], []>} : vector<64x64xbf16>, vector<64x16xbf16>, vector<64x16xf32> -> vector<64x16xf32>
    %392 = arith.truncf %391 : vector<64x16xf32> to vector<64x16xbf16>
    %c1_301 = arith.constant 1 : index
    %c2_302 = arith.constant 2 : index
    %c0_303 = arith.constant 0 : index
    %c0_304 = arith.constant 0 : index
    %393 = vector.load %arg13[%c1_301, %c2_302, %c0_303, %c0_304] : memref<2x4x16x64xbf16, #tpu.memory_space<vmem>>, vector<1x1x16x64xbf16>
    %394 = vector.shape_cast %393 : vector<1x1x16x64xbf16> to vector<16x64xbf16>
    %cst_305 = arith.constant dense<0.000000e+00> : vector<64x64xf32>
    %395 = tpu.matmul %392, %394, %cst_305 {dimension_numbers = #tpu.dot_dimension_numbers<[1], [0], [0], [1], [0, 0, 1, 1], [], []>} : vector<64x16xbf16>, vector<16x64xbf16>, vector<64x64xf32> -> vector<64x64xf32>
    %396 = arith.addf %354, %395 : vector<64x64xf32>
    %c1_306 = arith.constant 1 : index
    %c3_307 = arith.constant 3 : index
    %c0_308 = arith.constant 0 : index
    %c0_309 = arith.constant 0 : index
    %397 = vector.load %arg7[%c1_306, %c3_307, %c0_308, %c0_309] : memref<2x4x64x16xbf16, #tpu.memory_space<vmem>>, vector<1x1x64x16xbf16>
    %398 = vector.shape_cast %397 : vector<1x1x64x16xbf16> to vector<64x16xbf16>
    %cst_310 = arith.constant dense<0.000000e+00> : vector<64x16xf32>
    %399 = tpu.matmul %268, %398, %cst_310 {dimension_numbers = #tpu.dot_dimension_numbers<[1], [0], [0], [1], [0, 0, 1, 1], [], []>} : vector<64x64xbf16>, vector<64x16xbf16>, vector<64x16xf32> -> vector<64x16xf32>
    %c1_311 = arith.constant 1 : index
    %c3_312 = arith.constant 3 : index
    %c0_313 = arith.constant 0 : index
    %c0_314 = arith.constant 0 : index
    %400 = vector.load %arg8[%c1_311, %c3_312, %c0_313, %c0_314] : memref<2x4x1x16xf32, #tpu.memory_space<vmem>>, vector<1x1x1x16xf32>
    %401 = vector.shape_cast %400 : vector<1x1x1x16xf32> to vector<1x16xf32>
    %402 = vector.broadcast %401 : vector<1x16xf32> to vector<64x16xf32>
    %403 = arith.addf %399, %402 : vector<64x16xf32>
    %c1_315 = arith.constant 1 : index
    %c3_316 = arith.constant 3 : index
    %c0_317 = arith.constant 0 : index
    %c0_318 = arith.constant 0 : index
    %404 = vector.load %arg9[%c1_315, %c3_316, %c0_317, %c0_318] : memref<2x4x16x64xbf16, #tpu.memory_space<vmem>>, vector<1x1x16x64xbf16>
    %405 = vector.shape_cast %404 : vector<1x1x16x64xbf16> to vector<16x64xbf16>
    %cst_319 = arith.constant dense<0.000000e+00> : vector<16x64xf32>
    %406 = tpu.matmul %405, %269, %cst_319 {dimension_numbers = #tpu.dot_dimension_numbers<[1], [0], [0], [1], [0, 0, 1, 1], [], []>} : vector<16x64xbf16>, vector<64x64xbf16>, vector<16x64xf32> -> vector<16x64xf32>
    %c1_320 = arith.constant 1 : index
    %c3_321 = arith.constant 3 : index
    %c0_322 = arith.constant 0 : index
    %c0_323 = arith.constant 0 : index
    %407 = vector.load %arg10[%c1_320, %c3_321, %c0_322, %c0_323] : memref<2x4x16x1xf32, #tpu.memory_space<vmem>>, vector<1x1x16x1xf32>
    %408 = vector.shape_cast %407 : vector<1x1x16x1xf32> to vector<16x1xf32>
    %409 = vector.broadcast %408 : vector<16x1xf32> to vector<16x64xf32>
    %410 = arith.addf %406, %409 : vector<16x64xf32>
    %c1_324 = arith.constant 1 : index
    %c3_325 = arith.constant 3 : index
    %c0_326 = arith.constant 0 : index
    %c0_327 = arith.constant 0 : index
    %411 = vector.load %arg11[%c1_324, %c3_325, %c0_326, %c0_327] : memref<2x4x64x16xbf16, #tpu.memory_space<vmem>>, vector<1x1x64x16xbf16>
    %412 = vector.shape_cast %411 : vector<1x1x64x16xbf16> to vector<64x16xbf16>
    %cst_328 = arith.constant dense<0.000000e+00> : vector<64x16xf32>
    %413 = tpu.matmul %268, %412, %cst_328 {dimension_numbers = #tpu.dot_dimension_numbers<[1], [0], [0], [1], [0, 0, 1, 1], [], []>} : vector<64x64xbf16>, vector<64x16xbf16>, vector<64x16xf32> -> vector<64x16xf32>
    %c1_329 = arith.constant 1 : index
    %c3_330 = arith.constant 3 : index
    %c0_331 = arith.constant 0 : index
    %c0_332 = arith.constant 0 : index
    %414 = vector.load %arg12[%c1_329, %c3_330, %c0_331, %c0_332] : memref<2x4x1x16xf32, #tpu.memory_space<vmem>>, vector<1x1x1x16xf32>
    %415 = vector.shape_cast %414 : vector<1x1x1x16xf32> to vector<1x16xf32>
    %416 = vector.broadcast %415 : vector<1x16xf32> to vector<64x16xf32>
    %417 = arith.addf %413, %416 : vector<64x16xf32>
    %418 = arith.truncf %403 : vector<64x16xf32> to vector<64x16xbf16>
    %419 = arith.truncf %410 : vector<16x64xf32> to vector<16x64xbf16>
    %cst_333 = arith.constant dense<0.000000e+00> : vector<64x64xf32>
    %420 = tpu.matmul %418, %419, %cst_333 {dimension_numbers = #tpu.dot_dimension_numbers<[1], [0], [0], [1], [0, 0, 1, 1], [], []>} : vector<64x16xbf16>, vector<16x64xbf16>, vector<64x64xf32> -> vector<64x64xf32>
    %cst_334 = arith.constant dense<0xFF800000> : vector<64xf32>
    %421 = vector.multi_reduction <maximumf>, %420, %cst_334 [1] : vector<64x64xf32> to vector<64xf32>
    %422 = vector.shape_cast %421 : vector<64xf32> to vector<64x1xf32>
    %423 = vector.broadcast %422 : vector<64x1xf32> to vector<64x64xf32>
    %424 = arith.subf %420, %423 : vector<64x64xf32>
    %425 = math.exp %424 : vector<64x64xf32>
    %cst_335 = arith.constant dense<0.000000e+00> : vector<64xf32>
    %426 = vector.multi_reduction <add>, %425, %cst_335 [1] : vector<64x64xf32> to vector<64xf32>
    %427 = vector.shape_cast %426 : vector<64xf32> to vector<64x1xf32>
    %428 = tpu.reciprocal %427 {approx = true} : vector<64x1xf32> -> vector<64x1xf32>
    %429 = vector.broadcast %428 : vector<64x1xf32> to vector<64x64xf32>
    %430 = arith.mulf %425, %429 : vector<64x64xf32>
    %431 = arith.truncf %430 : vector<64x64xf32> to vector<64x64xbf16>
    %432 = arith.truncf %417 : vector<64x16xf32> to vector<64x16xbf16>
    %cst_336 = arith.constant dense<0.000000e+00> : vector<64x16xf32>
    %433 = tpu.matmul %431, %432, %cst_336 {dimension_numbers = #tpu.dot_dimension_numbers<[1], [0], [0], [1], [0, 0, 1, 1], [], []>} : vector<64x64xbf16>, vector<64x16xbf16>, vector<64x16xf32> -> vector<64x16xf32>
    %434 = arith.truncf %433 : vector<64x16xf32> to vector<64x16xbf16>
    %c1_337 = arith.constant 1 : index
    %c3_338 = arith.constant 3 : index
    %c0_339 = arith.constant 0 : index
    %c0_340 = arith.constant 0 : index
    %435 = vector.load %arg13[%c1_337, %c3_338, %c0_339, %c0_340] : memref<2x4x16x64xbf16, #tpu.memory_space<vmem>>, vector<1x1x16x64xbf16>
    %436 = vector.shape_cast %435 : vector<1x1x16x64xbf16> to vector<16x64xbf16>
    %cst_341 = arith.constant dense<0.000000e+00> : vector<64x64xf32>
    %437 = tpu.matmul %434, %436, %cst_341 {dimension_numbers = #tpu.dot_dimension_numbers<[1], [0], [0], [1], [0, 0, 1, 1], [], []>} : vector<64x16xbf16>, vector<16x64xbf16>, vector<64x64xf32> -> vector<64x64xf32>
    %438 = arith.addf %396, %437 : vector<64x64xf32>
    %c1_342 = arith.constant 1 : index
    %c0_343 = arith.constant 0 : index
    %c0_344 = arith.constant 0 : index
    %439 = vector.load %arg14[%c1_342, %c0_343, %c0_344] : memref<2x1x64xf32, #tpu.memory_space<vmem>>, vector<1x1x64xf32>
    %440 = vector.shape_cast %439 : vector<1x1x64xf32> to vector<1x64xf32>
    %441 = vector.broadcast %440 : vector<1x64xf32> to vector<64x64xf32>
    %442 = arith.addf %438, %441 : vector<64x64xf32>
    %443 = arith.addf %266, %442 : vector<64x64xf32>
    %c1_345 = arith.constant 1 : index
    %c0_346 = arith.constant 0 : index
    %c0_347 = arith.constant 0 : index
    %444 = vector.load %arg15[%c1_345, %c0_346, %c0_347] : memref<2x1x64xf32, #tpu.memory_space<vmem>>, vector<1x1x64xf32>
    %445 = vector.shape_cast %444 : vector<1x1x64xf32> to vector<1x64xf32>
    %c1_348 = arith.constant 1 : index
    %c0_349 = arith.constant 0 : index
    %c0_350 = arith.constant 0 : index
    %446 = vector.load %arg16[%c1_348, %c0_349, %c0_350] : memref<2x1x64xf32, #tpu.memory_space<vmem>>, vector<1x1x64xf32>
    %447 = vector.shape_cast %446 : vector<1x1x64xf32> to vector<1x64xf32>
    %cst_351 = arith.constant dense<0.000000e+00> : vector<64xf32>
    %448 = vector.multi_reduction <add>, %443, %cst_351 [1] : vector<64x64xf32> to vector<64xf32>
    %449 = vector.shape_cast %448 : vector<64xf32> to vector<64x1xf32>
    %cst_352 = arith.constant 6.400000e+01 : f32
    %450 = vector.broadcast %cst_352 : f32 to vector<64x1xf32>
    %451 = arith.divf %449, %450 : vector<64x1xf32>
    %452 = vector.broadcast %451 : vector<64x1xf32> to vector<64x64xf32>
    %453 = arith.subf %443, %452 : vector<64x64xf32>
    %454 = vector.broadcast %451 : vector<64x1xf32> to vector<64x64xf32>
    %455 = arith.subf %443, %454 : vector<64x64xf32>
    %456 = arith.mulf %453, %455 : vector<64x64xf32>
    %cst_353 = arith.constant dense<0.000000e+00> : vector<64xf32>
    %457 = vector.multi_reduction <add>, %456, %cst_353 [1] : vector<64x64xf32> to vector<64xf32>
    %458 = vector.shape_cast %457 : vector<64xf32> to vector<64x1xf32>
    %cst_354 = arith.constant 6.400000e+01 : f32
    %459 = vector.broadcast %cst_354 : f32 to vector<64x1xf32>
    %460 = arith.divf %458, %459 : vector<64x1xf32>
    %461 = vector.broadcast %451 : vector<64x1xf32> to vector<64x64xf32>
    %462 = arith.subf %443, %461 : vector<64x64xf32>
    %cst_355 = arith.constant 9.99999974E-6 : f32
    %463 = vector.broadcast %cst_355 : f32 to vector<64x1xf32>
    %464 = arith.addf %460, %463 : vector<64x1xf32>
    %465 = math.rsqrt %464 : vector<64x1xf32>
    %466 = vector.broadcast %465 : vector<64x1xf32> to vector<64x64xf32>
    %467 = arith.mulf %462, %466 : vector<64x64xf32>
    %468 = vector.broadcast %445 : vector<1x64xf32> to vector<64x64xf32>
    %469 = arith.mulf %467, %468 : vector<64x64xf32>
    %470 = vector.broadcast %447 : vector<1x64xf32> to vector<64x64xf32>
    %471 = arith.addf %469, %470 : vector<64x64xf32>
    %472 = arith.truncf %471 : vector<64x64xf32> to vector<64x64xbf16>
    %c1_356 = arith.constant 1 : index
    %c0_357 = arith.constant 0 : index
    %c0_358 = arith.constant 0 : index
    %473 = vector.load %arg17[%c1_356, %c0_357, %c0_358] : memref<2x64x2048xbf16, #tpu.memory_space<vmem>>, vector<1x64x2048xbf16>
    %474 = vector.shape_cast %473 : vector<1x64x2048xbf16> to vector<64x2048xbf16>
    %cst_359 = arith.constant dense<0.000000e+00> : vector<64x2048xf32>
    %475 = tpu.matmul %472, %474, %cst_359 {dimension_numbers = #tpu.dot_dimension_numbers<[1], [0], [0], [1], [0, 0, 1, 1], [], []>} : vector<64x64xbf16>, vector<64x2048xbf16>, vector<64x2048xf32> -> vector<64x2048xf32>
    %c1_360 = arith.constant 1 : index
    %c0_361 = arith.constant 0 : index
    %c0_362 = arith.constant 0 : index
    %476 = vector.load %arg18[%c1_360, %c0_361, %c0_362] : memref<2x1x2048xf32, #tpu.memory_space<vmem>>, vector<1x1x2048xf32>
    %477 = vector.shape_cast %476 : vector<1x1x2048xf32> to vector<1x2048xf32>
    %478 = vector.broadcast %477 : vector<1x2048xf32> to vector<64x2048xf32>
    %479 = arith.addf %475, %478 : vector<64x2048xf32>
    %cst_363 = arith.constant 0.000000e+00 : f32
    %480 = vector.broadcast %cst_363 : f32 to vector<64x2048xf32>
    %481 = arith.maximumf %479, %480 : vector<64x2048xf32>
    %482 = arith.truncf %481 : vector<64x2048xf32> to vector<64x2048xbf16>
    %c1_364 = arith.constant 1 : index
    %c0_365 = arith.constant 0 : index
    %c0_366 = arith.constant 0 : index
    %483 = vector.load %arg19[%c1_364, %c0_365, %c0_366] : memref<2x2048x64xbf16, #tpu.memory_space<vmem>>, vector<1x2048x64xbf16>
    %484 = vector.shape_cast %483 : vector<1x2048x64xbf16> to vector<2048x64xbf16>
    %cst_367 = arith.constant dense<0.000000e+00> : vector<64x64xf32>
    %485 = tpu.matmul %482, %484, %cst_367 {dimension_numbers = #tpu.dot_dimension_numbers<[1], [0], [0], [1], [0, 0, 1, 1], [], []>} : vector<64x2048xbf16>, vector<2048x64xbf16>, vector<64x64xf32> -> vector<64x64xf32>
    %c1_368 = arith.constant 1 : index
    %c0_369 = arith.constant 0 : index
    %c0_370 = arith.constant 0 : index
    %486 = vector.load %arg20[%c1_368, %c0_369, %c0_370] : memref<2x1x64xf32, #tpu.memory_space<vmem>>, vector<1x1x64xf32>
    %487 = vector.shape_cast %486 : vector<1x1x64xf32> to vector<1x64xf32>
    %488 = vector.broadcast %487 : vector<1x64xf32> to vector<64x64xf32>
    %489 = arith.addf %485, %488 : vector<64x64xf32>
    %490 = arith.addf %471, %489 : vector<64x64xf32>
    %c1_371 = arith.constant 1 : index
    %c0_372 = arith.constant 0 : index
    %c0_373 = arith.constant 0 : index
    %491 = vector.load %arg21[%c1_371, %c0_372, %c0_373] : memref<2x1x64xf32, #tpu.memory_space<vmem>>, vector<1x1x64xf32>
    %492 = vector.shape_cast %491 : vector<1x1x64xf32> to vector<1x64xf32>
    %c1_374 = arith.constant 1 : index
    %c0_375 = arith.constant 0 : index
    %c0_376 = arith.constant 0 : index
    %493 = vector.load %arg22[%c1_374, %c0_375, %c0_376] : memref<2x1x64xf32, #tpu.memory_space<vmem>>, vector<1x1x64xf32>
    %494 = vector.shape_cast %493 : vector<1x1x64xf32> to vector<1x64xf32>
    %cst_377 = arith.constant dense<0.000000e+00> : vector<64xf32>
    %495 = vector.multi_reduction <add>, %490, %cst_377 [1] : vector<64x64xf32> to vector<64xf32>
    %496 = vector.shape_cast %495 : vector<64xf32> to vector<64x1xf32>
    %cst_378 = arith.constant 6.400000e+01 : f32
    %497 = vector.broadcast %cst_378 : f32 to vector<64x1xf32>
    %498 = arith.divf %496, %497 : vector<64x1xf32>
    %499 = vector.broadcast %498 : vector<64x1xf32> to vector<64x64xf32>
    %500 = arith.subf %490, %499 : vector<64x64xf32>
    %501 = vector.broadcast %498 : vector<64x1xf32> to vector<64x64xf32>
    %502 = arith.subf %490, %501 : vector<64x64xf32>
    %503 = arith.mulf %500, %502 : vector<64x64xf32>
    %cst_379 = arith.constant dense<0.000000e+00> : vector<64xf32>
    %504 = vector.multi_reduction <add>, %503, %cst_379 [1] : vector<64x64xf32> to vector<64xf32>
    %505 = vector.shape_cast %504 : vector<64xf32> to vector<64x1xf32>
    %cst_380 = arith.constant 6.400000e+01 : f32
    %506 = vector.broadcast %cst_380 : f32 to vector<64x1xf32>
    %507 = arith.divf %505, %506 : vector<64x1xf32>
    %508 = vector.broadcast %498 : vector<64x1xf32> to vector<64x64xf32>
    %509 = arith.subf %490, %508 : vector<64x64xf32>
    %cst_381 = arith.constant 9.99999974E-6 : f32
    %510 = vector.broadcast %cst_381 : f32 to vector<64x1xf32>
    %511 = arith.addf %507, %510 : vector<64x1xf32>
    %512 = math.rsqrt %511 : vector<64x1xf32>
    %513 = vector.broadcast %512 : vector<64x1xf32> to vector<64x64xf32>
    %514 = arith.mulf %509, %513 : vector<64x64xf32>
    %515 = vector.broadcast %492 : vector<1x64xf32> to vector<64x64xf32>
    %516 = arith.mulf %514, %515 : vector<64x64xf32>
    %517 = vector.broadcast %494 : vector<1x64xf32> to vector<64x64xf32>
    %518 = arith.addf %516, %517 : vector<64x64xf32>
    %519 = tpu.transpose %518, [1, 0] : vector<64x64xf32> -> vector<64x64xf32>
    %c0_382 = arith.constant 0 : index
    %c0_383 = arith.constant 0 : index
    %520 = vector.load %arg23[%c0_382, %c0_383] : memref<64x64xf32, #tpu.memory_space<vmem>>, vector<64x64xf32>
    %521 = arith.addf %519, %520 : vector<64x64xf32>
    %c0_384 = arith.constant 0 : index
    %c0_385 = arith.constant 0 : index
    %522 = vector.load %arg24[%c0_384, %c0_385] : memref<64x128xf32, #tpu.memory_space<vmem>>, vector<64x128xf32>
    %cst_386 = arith.constant dense<0.000000e+00> : vector<64x128xf32>
    %523 = tpu.matmul %521, %522, %cst_386 {dimension_numbers = #tpu.dot_dimension_numbers<[1], [0], [0], [1], [0, 0, 1, 1], [], []>} : vector<64x64xf32>, vector<64x128xf32>, vector<64x128xf32> -> vector<64x128xf32>
    %c0_387 = arith.constant 0 : index
    %c0_388 = arith.constant 0 : index
    %524 = vector.load %arg25[%c0_387, %c0_388] : memref<1x128xf32, #tpu.memory_space<vmem>>, vector<1x128xf32>
    %525 = vector.broadcast %524 : vector<1x128xf32> to vector<64x128xf32>
    %526 = arith.addf %523, %525 : vector<64x128xf32>
    %c0_389 = arith.constant 0 : index
    %c0_390 = arith.constant 0 : index
    %527 = vector.load %arg26[%c0_389, %c0_390] : memref<64x128xf32, #tpu.memory_space<vmem>>, vector<64x128xf32>
    tpu.vector_store %arg26[%c0_389, %c0_390], %526 {strides = array<i32>} : memref<64x128xf32, #tpu.memory_space<vmem>>, vector<64x128xf32>,
    return
  }
}

</mosaic_0001>

<llo_original>
// kernel: hierarchical_transformer_generator.1
$region0: #{hierarchical_transformer_generator.1}
  #allocation0 [shape = 'u32[]', space=smem, size = 0x4, offset = 0x4, fixed_abs, tag = 'smem constant byte address 0x4 - core index']
  #allocation1 [shape = 'u32[144,128]{1,0:T(1,128)}', space=vmem, size = 0x12000, scoped, tag = 'internal scratch']
  %s0 = inlined_call_operand.vmem [shape: f32[1,4], index: 0, kind: input, shape index: {}]
  %s1 = inlined_call_operand.vmem [shape: f32[4,16], index: 1, kind: input, shape index: {}]
  %s2 = inlined_call_operand.vmem [shape: f32[1,16], index: 2, kind: input, shape index: {}]
  %s3 = inlined_call_operand.vmem [shape: f32[64,64], index: 3, kind: input, shape index: {}]
  %s4 = inlined_call_operand.vmem [shape: f32[16,64], index: 4, kind: input, shape index: {}]
  %s5 = inlined_call_operand.vmem [shape: f32[64,64], index: 5, kind: input, shape index: {}]
  %s6 = inlined_call_operand.vmem [shape: f32[1,64], index: 6, kind: input, shape index: {}]
  %s7 = inlined_call_operand.vmem [shape: bf16[2,4,64,16], index: 7, kind: input, shape index: {}]
  %s8 = inlined_call_operand.vmem [shape: f32[2,4,1,16], index: 8, kind: input, shape index: {}]
  %s9 = inlined_call_operand.vmem [shape: bf16[2,4,16,64], index: 9, kind: input, shape index: {}]
  %s10 = inlined_call_operand.vmem [shape: f32[2,4,16,1], index: 10, kind: input, shape index: {}]
  %s11 = inlined_call_operand.vmem [shape: bf16[2,4,64,16], index: 11, kind: input, shape index: {}]
  %s12 = inlined_call_operand.vmem [shape: f32[2,4,1,16], index: 12, kind: input, shape index: {}]
  %s13 = inlined_call_operand.vmem [shape: bf16[2,4,16,64], index: 13, kind: input, shape index: {}]
  %s14 = inlined_call_operand.vmem [shape: f32[2,1,64], index: 14, kind: input, shape index: {}]
  %s15 = inlined_call_operand.vmem [shape: f32[2,1,64], index: 15, kind: input, shape index: {}]
  %s16 = inlined_call_operand.vmem [shape: f32[2,1,64], index: 16, kind: input, shape index: {}]
  %s17 = inlined_call_operand.vmem [shape: bf16[2,64,2048], index: 17, kind: input, shape index: {}]
  %s18 = inlined_call_operand.vmem [shape: f32[2,1,2048], index: 18, kind: input, shape index: {}]
  %s19 = inlined_call_operand.vmem [shape: bf16[2,2048,64], index: 19, kind: input, shape index: {}]
  %s20 = inlined_call_operand.vmem [shape: f32[2,1,64], index: 20, kind: input, shape index: {}]
  %s21 = inlined_call_operand.vmem [shape: f32[2,1,64], index: 21, kind: input, shape index: {}]
  %s22 = inlined_call_operand.vmem [shape: f32[2,1,64], index: 22, kind: input, shape index: {}]
  %s23 = inlined_call_operand.vmem [shape: f32[64,64], index: 23, kind: input, shape index: {}]
  %s24 = inlined_call_operand.vmem [shape: f32[64,128], index: 24, kind: input, shape index: {}]
  %s25 = inlined_call_operand.vmem [shape: f32[1,128], index: 25, kind: input, shape index: {}]
  %s26 = inlined_call_operand.vmem [shape: f32[64,128], index: 26, kind: output, shape index: {}]
  %s27 = sld [smem:[#allocation0]]
  $region114: #{hierarchical_transformer_generator.1} parent=0
    _
  %s29 = ssub.s32 1, %s27
  %s30 = scalar_select 0, %s29, %s27
  // Predicated region
  $region2: #{hierarchical_transformer_generator.1} parent=0 // pred_check
    _
  $region3: #{hierarchical_transformer_generator.1} parent=0 // pred_check_branch
    %32 = sbr.rel (0) target = $region5
  $region4: #{hierarchical_transformer_generator.1} parent=0 // pred_region
    _
  $region5: #{hierarchical_transformer_generator.1} parent=0 // pred_fallthru
    _
  // Predicated region
  $region6: #{hierarchical_transformer_generator.1} parent=0 // pred_check
    _
  $region7: #{hierarchical_transformer_generator.1} parent=0 // pred_check_branch
    %34 = sbr.rel (0) target = $region9
  $region8: #{hierarchical_transformer_generator.1} parent=0 // pred_region
    _
  $region9: #{hierarchical_transformer_generator.1} parent=0 // pred_fallthru
    _
  // Predicated region
  $region10: #{hierarchical_transformer_generator.1} parent=0 // pred_check
    _
  $region11: #{hierarchical_transformer_generator.1} parent=0 // pred_check_branch
    %36 = sbr.rel (0) target = $region13
  $region12: #{hierarchical_transformer_generator.1} parent=0 // pred_region
    _
  $region13: #{hierarchical_transformer_generator.1} parent=0 // pred_fallthru
    _
  // Predicated region
  $region14: #{hierarchical_transformer_generator.1} parent=0 // pred_check
    _
  $region15: #{hierarchical_transformer_generator.1} parent=0 // pred_check_branch
    %38 = sbr.rel (0) target = $region17
  $region16: #{hierarchical_transformer_generator.1} parent=0 // pred_region
    _
  $region17: #{hierarchical_transformer_generator.1} parent=0 // pred_fallthru
    _
  // Predicated region
  $region18: #{hierarchical_transformer_generator.1} parent=0 // pred_check
    _
  $region19: #{hierarchical_transformer_generator.1} parent=0 // pred_check_branch
    %40 = sbr.rel (0) target = $region21
  $region20: #{hierarchical_transformer_generator.1} parent=0 // pred_region
    _
  $region21: #{hierarchical_transformer_generator.1} parent=0 // pred_fallthru
    _
  // Predicated region
  $region22: #{hierarchical_transformer_generator.1} parent=0 // pred_check
    _
  $region23: #{hierarchical_transformer_generator.1} parent=0 // pred_check_branch
    %42 = sbr.rel (0) target = $region25
  $region24: #{hierarchical_transformer_generator.1} parent=0 // pred_region
    _
  $region25: #{hierarchical_transformer_generator.1} parent=0 // pred_fallthru
    _
  // Predicated region
  $region26: #{hierarchical_transformer_generator.1} parent=0 // pred_check
    _
  $region27: #{hierarchical_transformer_generator.1} parent=0 // pred_check_branch
    %44 = sbr.rel (0) target = $region29
  $region28: #{hierarchical_transformer_generator.1} parent=0 // pred_region
    _
  $region29: #{hierarchical_transformer_generator.1} parent=0 // pred_fallthru
    _
  // Predicated region
  $region30: #{hierarchical_transformer_generator.1} parent=0 // pred_check
    _
  $region31: #{hierarchical_transformer_generator.1} parent=0 // pred_check_branch
    %46 = sbr.rel (0) target = $region33
  $region32: #{hierarchical_transformer_generator.1} parent=0 // pred_region
    _
  $region33: #{hierarchical_transformer_generator.1} parent=0 // pred_fallthru
    _
  // Predicated region
  $region34: #{hierarchical_transformer_generator.1} parent=0 // pred_check
    _
  $region35: #{hierarchical_transformer_generator.1} parent=0 // pred_check_branch
    %48 = sbr.rel (0) target = $region37
  $region36: #{hierarchical_transformer_generator.1} parent=0 // pred_region
    _
  $region37: #{hierarchical_transformer_generator.1} parent=0 // pred_fallthru
    _
  // Predicated region
  $region38: #{hierarchical_transformer_generator.1} parent=0 // pred_check
    _
  $region39: #{hierarchical_transformer_generator.1} parent=0 // pred_check_branch
    %50 = sbr.rel (0) target = $region41
  $region40: #{hierarchical_transformer_generator.1} parent=0 // pred_region
    _
  $region41: #{hierarchical_transformer_generator.1} parent=0 // pred_fallthru
    _
  // Predicated region
  $region42: #{hierarchical_transformer_generator.1} parent=0 // pred_check
    _
  $region43: #{hierarchical_transformer_generator.1} parent=0 // pred_check_branch
    %52 = sbr.rel (0) target = $region45
  $region44: #{hierarchical_transformer_generator.1} parent=0 // pred_region
    _
  $region45: #{hierarchical_transformer_generator.1} parent=0 // pred_fallthru
    _
  // Predicated region
  $region46: #{hierarchical_transformer_generator.1} parent=0 // pred_check
    _
  $region47: #{hierarchical_transformer_generator.1} parent=0 // pred_check_branch
    %54 = sbr.rel (0) target = $region49
  $region48: #{hierarchical_transformer_generator.1} parent=0 // pred_region
    _
  $region49: #{hierarchical_transformer_generator.1} parent=0 // pred_fallthru
    _
  // Predicated region
  $region50: #{hierarchical_transformer_generator.1} parent=0 // pred_check
    _
  $region51: #{hierarchical_transformer_generator.1} parent=0 // pred_check_branch
    %56 = sbr.rel (0) target = $region53
  $region52: #{hierarchical_transformer_generator.1} parent=0 // pred_region
    _
  $region53: #{hierarchical_transformer_generator.1} parent=0 // pred_fallthru
    _
  // Predicated region
  $region54: #{hierarchical_transformer_generator.1} parent=0 // pred_check
    _
  $region55: #{hierarchical_transformer_generator.1} parent=0 // pred_check_branch
    %58 = sbr.rel (0) target = $region57
  $region56: #{hierarchical_transformer_generator.1} parent=0 // pred_region
    _
  $region57: #{hierarchical_transformer_generator.1} parent=0 // pred_fallthru
    _
  // Predicated region
  $region58: #{hierarchical_transformer_generator.1} parent=0 // pred_check
    _
  $region59: #{hierarchical_transformer_generator.1} parent=0 // pred_check_branch
    %60 = sbr.rel (0) target = $region61
  $region60: #{hierarchical_transformer_generator.1} parent=0 // pred_region
    _
  $region61: #{hierarchical_transformer_generator.1} parent=0 // pred_fallthru
    _
  // Predicated region
  $region62: #{hierarchical_transformer_generator.1} parent=0 // pred_check
    _
  $region63: #{hierarchical_transformer_generator.1} parent=0 // pred_check_branch
    %62 = sbr.rel (0) target = $region65
  $region64: #{hierarchical_transformer_generator.1} parent=0 // pred_region
    _
  $region65: #{hierarchical_transformer_generator.1} parent=0 // pred_fallthru
    _
  // Predicated region
  $region66: #{hierarchical_transformer_generator.1} parent=0 // pred_check
    _
  $region67: #{hierarchical_transformer_generator.1} parent=0 // pred_check_branch
    %64 = sbr.rel (0) target = $region69
  $region68: #{hierarchical_transformer_generator.1} parent=0 // pred_region
    _
  $region69: #{hierarchical_transformer_generator.1} parent=0 // pred_fallthru
    _
  // Predicated region
  $region70: #{hierarchical_transformer_generator.1} parent=0 // pred_check
    _
  $region71: #{hierarchical_transformer_generator.1} parent=0 // pred_check_branch
    %66 = sbr.rel (0) target = $region73
  $region72: #{hierarchical_transformer_generator.1} parent=0 // pred_region
    _
  $region73: #{hierarchical_transformer_generator.1} parent=0 // pred_fallthru
    _
  // Predicated region
  $region74: #{hierarchical_transformer_generator.1} parent=0 // pred_check
    _
  $region75: #{hierarchical_transformer_generator.1} parent=0 // pred_check_branch
    %68 = sbr.rel (0) target = $region77
  $region76: #{hierarchical_transformer_generator.1} parent=0 // pred_region
    _
  $region77: #{hierarchical_transformer_generator.1} parent=0 // pred_fallthru
    _
  // Predicated region
  $region78: #{hierarchical_transformer_generator.1} parent=0 // pred_check
    _
  $region79: #{hierarchical_transformer_generator.1} parent=0 // pred_check_branch
    %70 = sbr.rel (0) target = $region81
  $region80: #{hierarchical_transformer_generator.1} parent=0 // pred_region
    _
  $region81: #{hierarchical_transformer_generator.1} parent=0 // pred_fallthru
    _
  // Predicated region
  $region82: #{hierarchical_transformer_generator.1} parent=0 // pred_check
    _
  $region83: #{hierarchical_transformer_generator.1} parent=0 // pred_check_branch
    %72 = sbr.rel (0) target = $region85
  $region84: #{hierarchical_transformer_generator.1} parent=0 // pred_region
    _
  $region85: #{hierarchical_transformer_generator.1} parent=0 // pred_fallthru
    _
  // Predicated region
  $region86: #{hierarchical_transformer_generator.1} parent=0 // pred_check
    _
  $region87: #{hierarchical_transformer_generator.1} parent=0 // pred_check_branch
    %74 = sbr.rel (0) target = $region89
  $region88: #{hierarchical_transformer_generator.1} parent=0 // pred_region
    _
  $region89: #{hierarchical_transformer_generator.1} parent=0 // pred_fallthru
    _
  // Predicated region
  $region90: #{hierarchical_transformer_generator.1} parent=0 // pred_check
    _
  $region91: #{hierarchical_transformer_generator.1} parent=0 // pred_check_branch
    %76 = sbr.rel (0) target = $region93
  $region92: #{hierarchical_transformer_generator.1} parent=0 // pred_region
    _
  $region93: #{hierarchical_transformer_generator.1} parent=0 // pred_fallthru
    _
  // Predicated region
  $region94: #{hierarchical_transformer_generator.1} parent=0 // pred_check
    _
  $region95: #{hierarchical_transformer_generator.1} parent=0 // pred_check_branch
    %78 = sbr.rel (0) target = $region97
  $region96: #{hierarchical_transformer_generator.1} parent=0 // pred_region
    _
  $region97: #{hierarchical_transformer_generator.1} parent=0 // pred_fallthru
    _
  // Predicated region
  $region98: #{hierarchical_transformer_generator.1} parent=0 // pred_check
    _
  $region99: #{hierarchical_transformer_generator.1} parent=0 // pred_check_branch
    %80 = sbr.rel (0) target = $region101
  $region100: #{hierarchical_transformer_generator.1} parent=0 // pred_region
    _
  $region101: #{hierarchical_transformer_generator.1} parent=0 // pred_fallthru
    _
  // Predicated region
  $region102: #{hierarchical_transformer_generator.1} parent=0 // pred_check
    _
  $region103: #{hierarchical_transformer_generator.1} parent=0 // pred_check_branch
    %82 = sbr.rel (0) target = $region105
  $region104: #{hierarchical_transformer_generator.1} parent=0 // pred_region
    _
  $region105: #{hierarchical_transformer_generator.1} parent=0 // pred_fallthru
    _
  %v84 = vld [vmem:[%s0] sm:$0x1]
  %v85 = vld [vmem:[%s1] sm:$0xf]
  %v86 = vld [vmem:[%s2] sm:$0x1]
  %vm87 = vcmask 31744
  %v89 = vsel %vm87, %v84, 0
  %vm91 = vcmask 1043456
  %v93 = vsel %vm91, %v85, 0
  %95 = vmatprep.subr.mxu0 0.0
  %96 = vmatpush1.msra.mxu0 %v93
  %97 = vmatprep.subr.mxu0 0.0
  %98 = vmatpush1.msra.mxu0 0.0
  %99 = vmatprep.subr.mxu0 0.0
  %100 = vmatpush1.msra.mxu0 0.0
  %101 = vmatprep.subr.mxu0 0.0
  %102 = vmatpush1.msra.mxu0 0.0
  %103 = vmatprep.subr.mxu0 0.0
  %104 = vmatpush1.msra.mxu0 0.0
  %105 = vmatprep.subr.mxu0 0.0
  %106 = vmatpush1.msra.mxu0 0.0
  %107 = vmatprep.subr.mxu0 0.0
  %108 = vmatpush1.msra.mxu0 0.0
  %109 = vmatprep.subr.mxu0 0.0
  %110 = vmatpush1.msra.mxu0 0.0
  %111 = vmatprep.subr.mxu0 0.0
  %112 = vmatpush1.msra.mxu0 0.0
  %113 = vmatprep.subr.mxu0 0.0
  %114 = vmatpush1.msra.mxu0 0.0
  %115 = vmatprep.subr.mxu0 0.0
  %116 = vmatpush1.msra.mxu0 0.0
  %117 = vmatprep.subr.mxu0 0.0
  %118 = vmatpush1.msra.mxu0 0.0
  %119 = vmatprep.subr.mxu0 0.0
  %120 = vmatpush1.msra.mxu0 0.0
  %121 = vmatprep.subr.mxu0 0.0
  %122 = vmatpush1.msra.mxu0 0.0
  %123 = vmatprep.subr.mxu0 0.0
  %124 = vmatpush1.msra.mxu0 0.0
  %125 = vmatprep.subr.mxu0 0.0
  %126 = vmatpush1.msra.mxu0 0.0
  %127 = vmatprep.subr.mxu0 0.0
  %128 = vmatpush1.msra.mxu0 0.0
  %129 = vmatprep.subr.mxu0 0.0
  %130 = vmatpush1.msra.mxu0 0.0
  %131 = vmatprep.subr.mxu0 0.0
  %132 = vmatpush1.msra.mxu0 0.0
  %133 = vmatprep.subr.mxu0 0.0
  %134 = vmatpush1.msra.mxu0 0.0
  %135 = vmatprep.subr.mxu0 0.0
  %136 = vmatpush1.msra.mxu0 0.0
  %137 = vmatprep.subr.mxu0 0.0
  %138 = vmatpush1.msra.mxu0 0.0
  %139 = vmatprep.subr.mxu0 0.0
  %140 = vmatpush1.msra.mxu0 0.0
  %141 = vmatprep.subr.mxu0 0.0
  %142 = vmatpush1.msra.mxu0 0.0
  %143 = vmatprep.subr.mxu0 0.0
  %144 = vmatpush1.msra.mxu0 0.0
  %145 = vmatprep.subr.mxu0 0.0
  %146 = vmatpush1.msra.mxu0 0.0
  %147 = vmatprep.subr.mxu0 0.0
  %148 = vmatpush1.msra.mxu0 0.0
  %149 = vmatprep.subr.mxu0 0.0
  %150 = vmatpush1.msra.mxu0 0.0
  %151 = vmatprep.subr.mxu0 0.0
  %152 = vmatpush1.msra.mxu0 0.0
  %153 = vmatprep.subr.mxu0 0.0
  %154 = vmatpush1.msra.mxu0 0.0
  %155 = vmatprep.subr.mxu0 0.0
  %156 = vmatpush1.msra.mxu0 0.0
  %157 = vmatprep.subr.mxu0 0.0
  %158 = vmatpush1.msra.mxu0 0.0
  %159 = vmatprep.mubr.f32.mxu0 0.0
  %160 = vmatmul.mubr.f32.gmra.mrb[0].mxu0 %v89
  %v161 = vpop.f32.mrb[0].mxu0
  %v162 = vadd.f32 %v86, %v161
  %v163 = vpop.f32.mrb[0].mxu0
  %164 = vdwg.mxu0
  %v165 = vld [vmem:[%s3] sm:$0xff]
  %v166 = vld [vmem:[%s3 + $0x8] sm:$0xff]
  %v167 = vld [vmem:[%s3 + $0x10] sm:$0xff]
  %v168 = vld [vmem:[%s3 + $0x18] sm:$0xff]
  %v169 = vld [vmem:[%s3 + $0x20] sm:$0xff]
  %v170 = vld [vmem:[%s3 + $0x28] sm:$0xff]
  %v171 = vld [vmem:[%s3 + $0x30] sm:$0xff]
  %v172 = vld [vmem:[%s3 + $0x38] sm:$0xff]
  %v173 = vld [vmem:[%s5] sm:$0xff]
  %v174 = vld [vmem:[%s5 + $0x8] sm:$0xff]
  %v175 = vld [vmem:[%s5 + $0x10] sm:$0xff]
  %v176 = vld [vmem:[%s5 + $0x18] sm:$0xff]
  %v177 = vld [vmem:[%s5 + $0x20] sm:$0xff]
  %v178 = vld [vmem:[%s5 + $0x28] sm:$0xff]
  %v179 = vld [vmem:[%s5 + $0x30] sm:$0xff]
  %v180 = vld [vmem:[%s5 + $0x38] sm:$0xff]
  %v181 = vld [vmem:[%s4] sm:$0xff]
  %v182 = vld [vmem:[%s4 + $0x8] sm:$0xff]
  %vm183 = vcmask 130048
  %v185 = vsel %vm183, %v162, 0
  %187 = vmatprep.subr.mxu0 0.0
  %188 = vmatpush1.msra.mxu0 %v181
  %189 = vmatprep.subr.mxu0 0.0
  %190 = vmatpush1.msra.mxu0 %v182
  %191 = vmatprep.subr.mxu0 0.0
  %192 = vmatpush1.msra.mxu0 0.0
  %193 = vmatprep.subr.mxu0 0.0
  %194 = vmatpush1.msra.mxu0 0.0
  %195 = vmatprep.subr.mxu0 0.0
  %196 = vmatpush1.msra.mxu0 0.0
  %197 = vmatprep.subr.mxu0 0.0
  %198 = vmatpush1.msra.mxu0 0.0
  %199 = vmatprep.subr.mxu0 0.0
  %200 = vmatpush1.msra.mxu0 0.0
  %201 = vmatprep.subr.mxu0 0.0
  %202 = vmatpush1.msra.mxu0 0.0
  %203 = vmatprep.subr.mxu0 0.0
  %204 = vmatpush1.msra.mxu0 0.0
  %205 = vmatprep.subr.mxu0 0.0
  %206 = vmatpush1.msra.mxu0 0.0
  %207 = vmatprep.subr.mxu0 0.0
  %208 = vmatpush1.msra.mxu0 0.0
  %209 = vmatprep.subr.mxu0 0.0
  %210 = vmatpush1.msra.mxu0 0.0
  %211 = vmatprep.subr.mxu0 0.0
  %212 = vmatpush1.msra.mxu0 0.0
  %213 = vmatprep.subr.mxu0 0.0
  %214 = vmatpush1.msra.mxu0 0.0
  %215 = vmatprep.subr.mxu0 0.0
  %216 = vmatpush1.msra.mxu0 0.0
  %217 = vmatprep.subr.mxu0 0.0
  %218 = vmatpush1.msra.mxu0 0.0
  %219 = vmatprep.subr.mxu0 0.0
  %220 = vmatpush1.msra.mxu0 0.0
  %221 = vmatprep.subr.mxu0 0.0
  %222 = vmatpush1.msra.mxu0 0.0
  %223 = vmatprep.subr.mxu0 0.0
  %224 = vmatpush1.msra.mxu0 0.0
  %225 = vmatprep.subr.mxu0 0.0
  %226 = vmatpush1.msra.mxu0 0.0
  %227 = vmatprep.subr.mxu0 0.0
  %228 = vmatpush1.msra.mxu0 0.0
  %229 = vmatprep.subr.mxu0 0.0
  %230 = vmatpush1.msra.mxu0 0.0
  %231 = vmatprep.subr.mxu0 0.0
  %232 = vmatpush1.msra.mxu0 0.0
  %233 = vmatprep.subr.mxu0 0.0
  %234 = vmatpush1.msra.mxu0 0.0
  %235 = vmatprep.subr.mxu0 0.0
  %236 = vmatpush1.msra.mxu0 0.0
  %237 = vmatprep.subr.mxu0 0.0
  %238 = vmatpush1.msra.mxu0 0.0
  %239 = vmatprep.subr.mxu0 0.0
  %240 = vmatpush1.msra.mxu0 0.0
  %241 = vmatprep.subr.mxu0 0.0
  %242 = vmatpush1.msra.mxu0 0.0
  %243 = vmatprep.subr.mxu0 0.0
  %244 = vmatpush1.msra.mxu0 0.0
  %245 = vmatprep.subr.mxu0 0.0
  %246 = vmatpush1.msra.mxu0 0.0
  %247 = vmatprep.subr.mxu0 0.0
  %248 = vmatpush1.msra.mxu0 0.0
  %249 = vmatprep.subr.mxu0 0.0
  %250 = vmatpush1.msra.mxu0 0.0
  %251 = vmatprep.mubr.f32.mxu0 0.0
  %252 = vmatmul.mubr.f32.gmra.mrb[0].mxu0 %v185
  %v253 = vpop.f32.mrb[0].mxu0
  %v254 = vadd.f32 0.0, %v253
  %v255 = vpop.f32.mrb[0].mxu0
  %256 = vdwg.mxu0
  %v257 = vlaneseq
  %v258 = vshrl.u32 %v257, 7
  %v259 = vsub.s32 0, %v258
  %v260 = vrot.slane %v254, %v259
  %vm261 = vcmask 523264
  %v263 = vsel %vm261, %v165, 0
  %v266 = vsel %vm261, %v166, 0
  %v269 = vsel %vm261, %v167, 0
  %v272 = vsel %vm261, %v168, 0
  %v275 = vsel %vm261, %v169, 0
  %v278 = vsel %vm261, %v170, 0
  %v281 = vsel %vm261, %v171, 0
  %v284 = vsel %vm261, %v172, 0
  %286 = vmatprep.subr.mxu0 0.0
  %287 = vmatpush1.msra.mxu0 %v173
  %288 = vmatprep.subr.mxu0 0.0
  %289 = vmatpush1.msra.mxu0 %v174
  %290 = vmatprep.subr.mxu0 0.0
  %291 = vmatpush1.msra.mxu0 %v175
  %292 = vmatprep.subr.mxu0 0.0
  %293 = vmatpush1.msra.mxu0 %v176
  %294 = vmatprep.subr.mxu0 0.0
  %295 = vmatpush1.msra.mxu0 %v177
  %296 = vmatprep.subr.mxu0 0.0
  %297 = vmatpush1.msra.mxu0 %v178
  %298 = vmatprep.subr.mxu0 0.0
  %299 = vmatpush1.msra.mxu0 %v179
  %300 = vmatprep.subr.mxu0 0.0
  %301 = vmatpush1.msra.mxu0 %v180
  %302 = vmatprep.subr.mxu0 0.0
  %303 = vmatpush1.msra.mxu0 0.0
  %304 = vmatprep.subr.mxu0 0.0
  %305 = vmatpush1.msra.mxu0 0.0
  %306 = vmatprep.subr.mxu0 0.0
  %307 = vmatpush1.msra.mxu0 0.0
  %308 = vmatprep.subr.mxu0 0.0
  %309 = vmatpush1.msra.mxu0 0.0
  %310 = vmatprep.subr.mxu0 0.0
  %311 = vmatpush1.msra.mxu0 0.0
  %312 = vmatprep.subr.mxu0 0.0
  %313 = vmatpush1.msra.mxu0 0.0
  %314 = vmatprep.subr.mxu0 0.0
  %315 = vmatpush1.msra.mxu0 0.0
  %316 = vmatprep.subr.mxu0 0.0
  %317 = vmatpush1.msra.mxu0 0.0
  %318 = vmatprep.subr.mxu0 0.0
  %319 = vmatpush1.msra.mxu0 0.0
  %320 = vmatprep.subr.mxu0 0.0
  %321 = vmatpush1.msra.mxu0 0.0
  %322 = vmatprep.subr.mxu0 0.0
  %323 = vmatpush1.msra.mxu0 0.0
  %324 = vmatprep.subr.mxu0 0.0
  %325 = vmatpush1.msra.mxu0 0.0
  %326 = vmatprep.subr.mxu0 0.0
  %327 = vmatpush1.msra.mxu0 0.0
  %328 = vmatprep.subr.mxu0 0.0
  %329 = vmatpush1.msra.mxu0 0.0
  %330 = vmatprep.subr.mxu0 0.0
  %331 = vmatpush1.msra.mxu0 0.0
  %332 = vmatprep.subr.mxu0 0.0
  %333 = vmatpush1.msra.mxu0 0.0
  %334 = vmatprep.subr.mxu0 0.0
  %335 = vmatpush1.msra.mxu0 0.0
  %336 = vmatprep.subr.mxu0 0.0
  %337 = vmatpush1.msra.mxu0 0.0
  %338 = vmatprep.subr.mxu0 0.0
  %339 = vmatpush1.msra.mxu0 0.0
  %340 = vmatprep.subr.mxu0 0.0
  %341 = vmatpush1.msra.mxu0 0.0
  %342 = vmatprep.subr.mxu0 0.0
  %343 = vmatpush1.msra.mxu0 0.0
  %344 = vmatprep.subr.mxu0 0.0
  %345 = vmatpush1.msra.mxu0 0.0
  %346 = vmatprep.subr.mxu0 0.0
  %347 = vmatpush1.msra.mxu0 0.0
  %348 = vmatprep.subr.mxu0 0.0
  %349 = vmatpush1.msra.mxu0 0.0
  %350 = vmatprep.mubr.f32.mxu0 0.0
  %351 = vmatmul.mubr.f32.gmra.mrb[0].mxu0 %v263
  %v352 = vpop.f32.mrb[0].mxu0
  %v353 = vadd.f32 %v260, %v352
  %v354 = vpop.f32.mrb[0].mxu0
  %355 = vmatprep.mubr.f32.mxu0 0.0
  %356 = vmatmul.mubr.f32.gmra.mrb[0].mxu0 %v266
  %v357 = vpop.f32.mrb[0].mxu0
  %v358 = vadd.f32 %v260, %v357
  %v359 = vpop.f32.mrb[0].mxu0
  %360 = vmatprep.mubr.f32.mxu0 0.0
  %361 = vmatmul.mubr.f32.gmra.mrb[0].mxu0 %v269
  %v362 = vpop.f32.mrb[0].mxu0
  %v363 = vadd.f32 %v260, %v362
  %v364 = vpop.f32.mrb[0].mxu0
  %365 = vmatprep.mubr.f32.mxu0 0.0
  %366 = vmatmul.mubr.f32.gmra.mrb[0].mxu0 %v272
  %v367 = vpop.f32.mrb[0].mxu0
  %v368 = vadd.f32 %v260, %v367
  %v369 = vpop.f32.mrb[0].mxu0
  %370 = vmatprep.mubr.f32.mxu0 0.0
  %371 = vmatmul.mubr.f32.gmra.mrb[0].mxu0 %v275
  %v372 = vpop.f32.mrb[0].mxu0
  %v373 = vadd.f32 %v260, %v372
  %v374 = vpop.f32.mrb[0].mxu0
  %375 = vmatprep.mubr.f32.mxu0 0.0
  %376 = vmatmul.mubr.f32.gmra.mrb[0].mxu0 %v278
  %v377 = vpop.f32.mrb[0].mxu0
  %v378 = vadd.f32 %v260, %v377
  %v379 = vpop.f32.mrb[0].mxu0
  %380 = vmatprep.mubr.f32.mxu0 0.0
  %381 = vmatmul.mubr.f32.gmra.mrb[0].mxu0 %v281
  %v382 = vpop.f32.mrb[0].mxu0
  %v383 = vadd.f32 %v260, %v382
  %v384 = vpop.f32.mrb[0].mxu0
  %385 = vmatprep.mubr.f32.mxu0 0.0
  %386 = vmatmul.mubr.f32.gmra.mrb[0].mxu0 %v284
  %v387 = vpop.f32.mrb[0].mxu0
  %v388 = vadd.f32 %v260, %v387
  %v389 = vpop.f32.mrb[0].mxu0
  %390 = vdwg.mxu0
  %v391 = vld [vmem:[%s6] sm:$0x1]
  %v393 = vlaneseq
  %v394 = vshrl.u32 %v393, 7
  %v395 = vsub.s32 0, %v394
  %v396 = vrot.slane %v391, %v395
  %v398 = vadd.f32 %v353, %v396
  %v399 = vadd.f32 %v358, %v396
  %v400 = vadd.f32 %v363, %v396
  %v401 = vadd.f32 %v368, %v396
  %v402 = vadd.f32 %v373, %v396
  %v403 = vadd.f32 %v378, %v396
  %v404 = vadd.f32 %v383, %v396
  %v405 = vadd.f32 %v388, %v396
  %406 = vxpose.xlu0.b32.start [1/16] %v398, 128
  %407 = vxpose.xlu0.b32.cont [2/16] %v399, 128
  %408 = vxpose.xlu0.b32.cont [3/16] %v400, 128
  %409 = vxpose.xlu0.b32.cont [4/16] %v401, 128
  %410 = vxpose.xlu0.b32.cont [5/16] %v402, 128
  %411 = vxpose.xlu0.b32.cont [6/16] %v403, 128
  %412 = vxpose.xlu0.b32.cont [7/16] %v404, 128
  %413 = vxpose.xlu0.b32.cont [8/16] %v405, 128
  %414 = vxpose.xlu0.b32.cont [9/16] 0.0, 128
  %415 = vxpose.xlu0.b32.cont [10/16] 0.0, 128
  %416 = vxpose.xlu0.b32.cont [11/16] 0.0, 128
  %417 = vxpose.xlu0.b32.cont [12/16] 0.0, 128
  %418 = vxpose.xlu0.b32.cont [13/16] 0.0, 128
  %419 = vxpose.xlu0.b32.cont [14/16] 0.0, 128
  %420 = vxpose.xlu0.b32.cont [15/16] 0.0, 128
  %421 = vxpose.xlu0.b32.end [16/16] 0.0, 128
  %v422 = vpop.trf.xlu0
  %v423 = vpop.trf.xlu0
  %v424 = vpop.trf.xlu0
  %v425 = vpop.trf.xlu0
  %v426 = vpop.trf.xlu0
  %v427 = vpop.trf.xlu0
  %v428 = vpop.trf.xlu0
  %v429 = vpop.trf.xlu0
  %v430 = vpop.trf.xlu0
  %v431 = vpop.trf.xlu0
  %v432 = vpop.trf.xlu0
  %v433 = vpop.trf.xlu0
  %v434 = vpop.trf.xlu0
  %v435 = vpop.trf.xlu0
  %v436 = vpop.trf.xlu0
  %v437 = vpop.trf.xlu0
  %v438 = vpack.c.bf16 %v423, %v422
  %v439 = vpack.c.bf16 %v425, %v424
  %v440 = vpack.c.bf16 %v427, %v426
  %v441 = vpack.c.bf16 %v429, %v428
  %v442 = vpack.c.bf16 %v399, %v398
  %v443 = vpack.c.bf16 %v401, %v400
  %v444 = vpack.c.bf16 %v403, %v402
  %v445 = vpack.c.bf16 %v405, %v404
  %v446 = vld [vmem:[%s7] sm:$0xf]
  %v447 = vld [vmem:[%s7 + $0x4] sm:$0xf]
  %v448 = vld [vmem:[%s7 + $0x8] sm:$0xf]
  %v449 = vld [vmem:[%s7 + $0xc] sm:$0xf]
  %v450 = vld [vmem:[%s7 + $0x10] sm:$0xf]
  %v451 = vld [vmem:[%s7 + $0x14] sm:$0xf]
  %v452 = vld [vmem:[%s7 + $0x18] sm:$0xf]
  %v453 = vld [vmem:[%s7 + $0x1c] sm:$0xf]
  %v454 = vld [vmem:[%s8] sm:$0x1]
  %v456 = vlaneseq
  %v457 = vshrl.u32 %v456, 7
  %v458 = vsub.s32 0, %v457
  %v459 = vrot.slane %v454, %v458
  %v469 = vunpack.c.l.b16 %v446
  %v470 = vunpack.c.l.b16 %v447
  %v471 = vunpack.c.l.b16 %v448
  %v472 = vunpack.c.l.b16 %v449
  %v473 = vunpack.c.l.b16 %v450
  %v474 = vunpack.c.l.b16 %v451
  %v475 = vunpack.c.l.b16 %v452
  %v476 = vunpack.c.l.b16 %v453
  %v477 = vpack.c.b16 %v470, %v469
  %v478 = vpack.c.b16 %v472, %v471
  %v479 = vpack.c.b16 %v474, %v473
  %v480 = vpack.c.b16 %v476, %v475
  %v486 = vsel %vm261, %v438, 0
  %v489 = vsel %vm261, %v439, 0
  %v492 = vsel %vm261, %v440, 0
  %v495 = vsel %vm261, %v441, 0
  %497 = vmatprep.subr.bf16.mxu0 0
  %498 = vmatpush1.bf16.msra.mxu0 %v477
  %499 = vmatprep.subr.bf16.mxu0 0
  %500 = vmatpush1.bf16.msra.mxu0 %v478
  %501 = vmatprep.subr.bf16.mxu0 0
  %502 = vmatpush1.bf16.msra.mxu0 %v479
  %503 = vmatprep.subr.bf16.mxu0 0
  %504 = vmatpush1.bf16.msra.mxu0 %v480
  %505 = vmatprep.subr.bf16.mxu0 0
  %506 = vmatpush1.bf16.msra.mxu0 0
  %507 = vmatprep.subr.bf16.mxu0 0
  %508 = vmatpush1.bf16.msra.mxu0 0
  %509 = vmatprep.subr.bf16.mxu0 0
  %510 = vmatpush1.bf16.msra.mxu0 0
  %511 = vmatprep.subr.bf16.mxu0 0
  %512 = vmatpush1.bf16.msra.mxu0 0
  %513 = vmatprep.subr.bf16.mxu0 0
  %514 = vmatpush1.bf16.msra.mxu0 0
  %515 = vmatprep.subr.bf16.mxu0 0
  %516 = vmatpush1.bf16.msra.mxu0 0
  %517 = vmatprep.subr.bf16.mxu0 0
  %518 = vmatpush1.bf16.msra.mxu0 0
  %519 = vmatprep.subr.bf16.mxu0 0
  %520 = vmatpush1.bf16.msra.mxu0 0
  %521 = vmatprep.subr.bf16.mxu0 0
  %522 = vmatpush1.bf16.msra.mxu0 0
  %523 = vmatprep.subr.bf16.mxu0 0
  %524 = vmatpush1.bf16.msra.mxu0 0
  %525 = vmatprep.subr.bf16.mxu0 0
  %526 = vmatpush1.bf16.msra.mxu0 0
  %527 = vmatprep.subr.bf16.mxu0 0
  %528 = vmatpush1.bf16.msra.mxu0 0
  %529 = vmatprep.mubr.bf16.mxu0 0
  %530 = vmatmul.mubr.bf16.gmra.mrb[0].mxu0 %v486
  %v531 = vpop.f32.mrb[0].mxu0
  %v532 = vadd.f32 %v459, %v531
  %v533 = vpop.f32.mrb[0].mxu0
  %v534 = vpop.f32.mrb[0].mxu0
  %v535 = vadd.f32 %v459, %v534
  %v536 = vpop.f32.mrb[0].mxu0
  %537 = vmatprep.mubr.bf16.mxu0 0
  %538 = vmatmul.mubr.bf16.gmra.mrb[0].mxu0 %v489
  %v539 = vpop.f32.mrb[0].mxu0
  %v540 = vadd.f32 %v459, %v539
  %v541 = vpop.f32.mrb[0].mxu0
  %v542 = vpop.f32.mrb[0].mxu0
  %v543 = vadd.f32 %v459, %v542
  %v544 = vpop.f32.mrb[0].mxu0
  %545 = vmatprep.mubr.bf16.mxu0 0
  %546 = vmatmul.mubr.bf16.gmra.mrb[0].mxu0 %v492
  %v547 = vpop.f32.mrb[0].mxu0
  %v548 = vadd.f32 %v459, %v547
  %v549 = vpop.f32.mrb[0].mxu0
  %v550 = vpop.f32.mrb[0].mxu0
  %v551 = vadd.f32 %v459, %v550
  %v552 = vpop.f32.mrb[0].mxu0
  %553 = vmatprep.mubr.bf16.mxu0 0
  %554 = vmatmul.mubr.bf16.gmra.mrb[0].mxu0 %v495
  %v555 = vpop.f32.mrb[0].mxu0
  %v556 = vadd.f32 %v459, %v555
  %v557 = vpop.f32.mrb[0].mxu0
  %v558 = vpop.f32.mrb[0].mxu0
  %v559 = vadd.f32 %v459, %v558
  %v560 = vpop.f32.mrb[0].mxu0
  %561 = vdwg.mxu0
  %v562 = vld [vmem:[%s9] sm:$0xf]
  %v563 = vld [vmem:[%s9 + $0x4] sm:$0xf]
  %v564 = vld [vmem:[%s10] sm:$0xff]
  %v565 = vld [vmem:[%s10 + $0x8] sm:$0xff]
  %567 = vset.pattern.permute.xlu0 0
  %568 = vperm.xlu0 %567, %v564
  %v569 = vpop.permute.xlu0 %568
  %572 = vset.pattern.permute.xlu0 0
  %573 = vperm.xlu0 %572, %v565
  %v574 = vpop.permute.xlu0 %573
  %v578 = vunpack.c.l.b16 %v562
  %v579 = vunpack.c.l.b16 %v563
  %v580 = vpack.c.b16 %v579, %v578
  %v582 = vsel %vm261, %v580, 0
  %584 = vmatprep.subr.bf16.mxu0 0
  %585 = vmatpush1.bf16.msra.mxu0 %v442
  %586 = vmatprep.subr.bf16.mxu0 0
  %587 = vmatpush1.bf16.msra.mxu0 %v443
  %588 = vmatprep.subr.bf16.mxu0 0
  %589 = vmatpush1.bf16.msra.mxu0 %v444
  %590 = vmatprep.subr.bf16.mxu0 0
  %591 = vmatpush1.bf16.msra.mxu0 %v445
  %592 = vmatprep.subr.bf16.mxu0 0
  %593 = vmatpush1.bf16.msra.mxu0 0
  %594 = vmatprep.subr.bf16.mxu0 0
  %595 = vmatpush1.bf16.msra.mxu0 0
  %596 = vmatprep.subr.bf16.mxu0 0
  %597 = vmatpush1.bf16.msra.mxu0 0
  %598 = vmatprep.subr.bf16.mxu0 0
  %599 = vmatpush1.bf16.msra.mxu0 0
  %600 = vmatprep.subr.bf16.mxu0 0
  %601 = vmatpush1.bf16.msra.mxu0 0
  %602 = vmatprep.subr.bf16.mxu0 0
  %603 = vmatpush1.bf16.msra.mxu0 0
  %604 = vmatprep.subr.bf16.mxu0 0
  %605 = vmatpush1.bf16.msra.mxu0 0
  %606 = vmatprep.subr.bf16.mxu0 0
  %607 = vmatpush1.bf16.msra.mxu0 0
  %608 = vmatprep.subr.bf16.mxu0 0
  %609 = vmatpush1.bf16.msra.mxu0 0
  %610 = vmatprep.subr.bf16.mxu0 0
  %611 = vmatpush1.bf16.msra.mxu0 0
  %612 = vmatprep.subr.bf16.mxu0 0
  %613 = vmatpush1.bf16.msra.mxu0 0
  %614 = vmatprep.subr.bf16.mxu0 0
  %615 = vmatpush1.bf16.msra.mxu0 0
  %616 = vmatprep.mubr.bf16.mxu0 0
  %617 = vmatmul.mubr.bf16.gmra.mrb[0].mxu0 %v582
  %v618 = vpop.f32.mrb[0].mxu0
  %v619 = vadd.f32 %v569, %v618
  %v620 = vpop.f32.mrb[0].mxu0
  %v621 = vpop.f32.mrb[0].mxu0
  %v622 = vadd.f32 %v574, %v621
  %v623 = vpop.f32.mrb[0].mxu0
  %624 = vdwg.mxu0
  %v625 = vld [vmem:[%s11] sm:$0xf]
  %v626 = vld [vmem:[%s11 + $0x4] sm:$0xf]
  %v627 = vld [vmem:[%s11 + $0x8] sm:$0xf]
  %v628 = vld [vmem:[%s11 + $0xc] sm:$0xf]
  %v629 = vld [vmem:[%s11 + $0x10] sm:$0xf]
  %v630 = vld [vmem:[%s11 + $0x14] sm:$0xf]
  %v631 = vld [vmem:[%s11 + $0x18] sm:$0xf]
  %v632 = vld [vmem:[%s11 + $0x1c] sm:$0xf]
  %v633 = vld [vmem:[%s12] sm:$0x1]
  %v635 = vlaneseq
  %v636 = vshrl.u32 %v635, 7
  %v637 = vsub.s32 0, %v636
  %v638 = vrot.slane %v633, %v637
  %v648 = vunpack.c.l.b16 %v625
  %v649 = vunpack.c.l.b16 %v626
  %v650 = vunpack.c.l.b16 %v627
  %v651 = vunpack.c.l.b16 %v628
  %v652 = vunpack.c.l.b16 %v629
  %v653 = vunpack.c.l.b16 %v630
  %v654 = vunpack.c.l.b16 %v631
  %v655 = vunpack.c.l.b16 %v632
  %v656 = vpack.c.b16 %v649, %v648
  %v657 = vpack.c.b16 %v651, %v650
  %v658 = vpack.c.b16 %v653, %v652
  %v659 = vpack.c.b16 %v655, %v654
  %664 = vmatprep.subr.bf16.mxu0 0
  %665 = vmatpush1.bf16.msra.mxu0 %v656
  %666 = vmatprep.subr.bf16.mxu0 0
  %667 = vmatpush1.bf16.msra.mxu0 %v657
  %668 = vmatprep.subr.bf16.mxu0 0
  %669 = vmatpush1.bf16.msra.mxu0 %v658
  %670 = vmatprep.subr.bf16.mxu0 0
  %671 = vmatpush1.bf16.msra.mxu0 %v659
  %672 = vmatprep.subr.bf16.mxu0 0
  %673 = vmatpush1.bf16.msra.mxu0 0
  %674 = vmatprep.subr.bf16.mxu0 0
  %675 = vmatpush1.bf16.msra.mxu0 0
  %676 = vmatprep.subr.bf16.mxu0 0
  %677 = vmatpush1.bf16.msra.mxu0 0
  %678 = vmatprep.subr.bf16.mxu0 0
  %679 = vmatpush1.bf16.msra.mxu0 0
  %680 = vmatprep.subr.bf16.mxu0 0
  %681 = vmatpush1.bf16.msra.mxu0 0
  %682 = vmatprep.subr.bf16.mxu0 0
  %683 = vmatpush1.bf16.msra.mxu0 0
  %684 = vmatprep.subr.bf16.mxu0 0
  %685 = vmatpush1.bf16.msra.mxu0 0
  %686 = vmatprep.subr.bf16.mxu0 0
  %687 = vmatpush1.bf16.msra.mxu0 0
  %688 = vmatprep.subr.bf16.mxu0 0
  %689 = vmatpush1.bf16.msra.mxu0 0
  %690 = vmatprep.subr.bf16.mxu0 0
  %691 = vmatpush1.bf16.msra.mxu0 0
  %692 = vmatprep.subr.bf16.mxu0 0
  %693 = vmatpush1.bf16.msra.mxu0 0
  %694 = vmatprep.subr.bf16.mxu0 0
  %695 = vmatpush1.bf16.msra.mxu0 0
  %696 = vmatprep.mubr.bf16.mxu0 0
  %697 = vmatmul.mubr.bf16.gmra.mrb[0].mxu0 %v486
  %v698 = vpop.f32.mrb[0].mxu0
  %v699 = vadd.f32 %v638, %v698
  %v700 = vpop.f32.mrb[0].mxu0
  %v701 = vpop.f32.mrb[0].mxu0
  %v702 = vadd.f32 %v638, %v701
  %v703 = vpop.f32.mrb[0].mxu0
  %704 = vmatprep.mubr.bf16.mxu0 0
  %705 = vmatmul.mubr.bf16.gmra.mrb[0].mxu0 %v489
  %v706 = vpop.f32.mrb[0].mxu0
  %v707 = vadd.f32 %v638, %v706
  %v708 = vpop.f32.mrb[0].mxu0
  %v709 = vpop.f32.mrb[0].mxu0
  %v710 = vadd.f32 %v638, %v709
  %v711 = vpop.f32.mrb[0].mxu0
  %712 = vmatprep.mubr.bf16.mxu0 0
  %713 = vmatmul.mubr.bf16.gmra.mrb[0].mxu0 %v492
  %v714 = vpop.f32.mrb[0].mxu0
  %v715 = vadd.f32 %v638, %v714
  %v716 = vpop.f32.mrb[0].mxu0
  %v717 = vpop.f32.mrb[0].mxu0
  %v718 = vadd.f32 %v638, %v717
  %v719 = vpop.f32.mrb[0].mxu0
  %720 = vmatprep.mubr.bf16.mxu0 0
  %721 = vmatmul.mubr.bf16.gmra.mrb[0].mxu0 %v495
  %v722 = vpop.f32.mrb[0].mxu0
  %v723 = vadd.f32 %v638, %v722
  %v724 = vpop.f32.mrb[0].mxu0
  %v725 = vpop.f32.mrb[0].mxu0
  %v726 = vadd.f32 %v638, %v725
  %v727 = vpop.f32.mrb[0].mxu0
  %728 = vdwg.mxu0
  %v729 = vpack.c.bf16 %v535, %v532
  %v730 = vpack.c.bf16 %v543, %v540
  %v731 = vpack.c.bf16 %v551, %v548
  %v732 = vpack.c.bf16 %v559, %v556
  %v733 = vpack.c.bf16 %v622, %v619
  %v735 = vsel %vm183, %v729, 0
  %v738 = vsel %vm183, %v730, 0
  %v741 = vsel %vm183, %v731, 0
  %v744 = vsel %vm183, %v732, 0
  %746 = vmatprep.subr.bf16.mxu0 0
  %747 = vmatpush1.bf16.msra.mxu0 %v733
  %748 = vmatprep.subr.bf16.mxu0 0
  %749 = vmatpush1.bf16.msra.mxu0 0
  %750 = vmatprep.subr.bf16.mxu0 0
  %751 = vmatpush1.bf16.msra.mxu0 0
  %752 = vmatprep.subr.bf16.mxu0 0
  %753 = vmatpush1.bf16.msra.mxu0 0
  %754 = vmatprep.subr.bf16.mxu0 0
  %755 = vmatpush1.bf16.msra.mxu0 0
  %756 = vmatprep.subr.bf16.mxu0 0
  %757 = vmatpush1.bf16.msra.mxu0 0
  %758 = vmatprep.subr.bf16.mxu0 0
  %759 = vmatpush1.bf16.msra.mxu0 0
  %760 = vmatprep.subr.bf16.mxu0 0
  %761 = vmatpush1.bf16.msra.mxu0 0
  %762 = vmatprep.subr.bf16.mxu0 0
  %763 = vmatpush1.bf16.msra.mxu0 0
  %764 = vmatprep.subr.bf16.mxu0 0
  %765 = vmatpush1.bf16.msra.mxu0 0
  %766 = vmatprep.subr.bf16.mxu0 0
  %767 = vmatpush1.bf16.msra.mxu0 0
  %768 = vmatprep.subr.bf16.mxu0 0
  %769 = vmatpush1.bf16.msra.mxu0 0
  %770 = vmatprep.subr.bf16.mxu0 0
  %771 = vmatpush1.bf16.msra.mxu0 0
  %772 = vmatprep.subr.bf16.mxu0 0
  %773 = vmatpush1.bf16.msra.mxu0 0
  %774 = vmatprep.subr.bf16.mxu0 0
  %775 = vmatpush1.bf16.msra.mxu0 0
  %776 = vmatprep.subr.bf16.mxu0 0
  %777 = vmatpush1.bf16.msra.mxu0 0
  %778 = vmatprep.mubr.bf16.mxu0 0
  %779 = vmatmul.mubr.bf16.gmra.mrb[0].mxu0 %v735
  %v780 = vpop.f32.mrb[0].mxu0
  %v781 = vadd.f32 0.0, %v780
  %v782 = vpop.f32.mrb[0].mxu0
  %v783 = vpop.f32.mrb[0].mxu0
  %v784 = vadd.f32 0.0, %v783
  %v785 = vpop.f32.mrb[0].mxu0
  %786 = vmatprep.mubr.bf16.mxu0 0
  %787 = vmatmul.mubr.bf16.gmra.mrb[0].mxu0 %v738
  %v788 = vpop.f32.mrb[0].mxu0
  %v789 = vadd.f32 0.0, %v788
  %v790 = vpop.f32.mrb[0].mxu0
  %v791 = vpop.f32.mrb[0].mxu0
  %v792 = vadd.f32 0.0, %v791
  %v793 = vpop.f32.mrb[0].mxu0
  %794 = vmatprep.mubr.bf16.mxu0 0
  %795 = vmatmul.mubr.bf16.gmra.mrb[0].mxu0 %v741
  %v796 = vpop.f32.mrb[0].mxu0
  %v797 = vadd.f32 0.0, %v796
  %v798 = vpop.f32.mrb[0].mxu0
  %v799 = vpop.f32.mrb[0].mxu0
  %v800 = vadd.f32 0.0, %v799
  %v801 = vpop.f32.mrb[0].mxu0
  %802 = vmatprep.mubr.bf16.mxu0 0
  %803 = vmatmul.mubr.bf16.gmra.mrb[0].mxu0 %v744
  %v804 = vpop.f32.mrb[0].mxu0
  %v805 = vadd.f32 0.0, %v804
  %v806 = vpop.f32.mrb[0].mxu0
  %v807 = vpop.f32.mrb[0].mxu0
  %v808 = vadd.f32 0.0, %v807
  %v809 = vpop.f32.mrb[0].mxu0
  %810 = vdwg.mxu0
  %v811 = vsel %vm261, %v781, -inf
  %812 = vmax.xlane.f32.xlu0 %v811
  %v813 = vpop.xlane.xlu0 %812
  %v814 = vsel %vm261, %v784, -inf
  %815 = vmax.xlane.f32.xlu0 %v814
  %v816 = vpop.xlane.xlu0 %815
  %v817 = vsel %vm261, %v789, -inf
  %818 = vmax.xlane.f32.xlu0 %v817
  %v819 = vpop.xlane.xlu0 %818
  %v820 = vsel %vm261, %v792, -inf
  %821 = vmax.xlane.f32.xlu0 %v820
  %v822 = vpop.xlane.xlu0 %821
  %v823 = vsel %vm261, %v797, -inf
  %824 = vmax.xlane.f32.xlu0 %v823
  %v825 = vpop.xlane.xlu0 %824
  %v826 = vsel %vm261, %v800, -inf
  %827 = vmax.xlane.f32.xlu0 %v826
  %v828 = vpop.xlane.xlu0 %827
  %v829 = vsel %vm261, %v805, -inf
  %830 = vmax.xlane.f32.xlu0 %v829
  %v831 = vpop.xlane.xlu0 %830
  %v832 = vsel %vm261, %v808, -inf
  %833 = vmax.xlane.f32.xlu0 %v832
  %v834 = vpop.xlane.xlu0 %833
  %v835 = vsub.f32 %v781, %v813
  %v836 = vsub.f32 %v784, %v816
  %v837 = vsub.f32 %v789, %v819
  %v838 = vsub.f32 %v792, %v822
  %v839 = vsub.f32 %v797, %v825
  %v840 = vsub.f32 %v800, %v828
  %v841 = vsub.f32 %v805, %v831
  %v842 = vsub.f32 %v808, %v834
  %v843 = vmul.f32 %v835, 1.442695
  %v844 = vpow.pop %v843
  %v845 = vmul.f32 %v836, 1.442695
  %v846 = vpow.pop %v845
  %v847 = vmul.f32 %v837, 1.442695
  %v848 = vpow.pop %v847
  %v849 = vmul.f32 %v838, 1.442695
  %v850 = vpow.pop %v849
  %v851 = vmul.f32 %v839, 1.442695
  %v852 = vpow.pop %v851
  %v853 = vmul.f32 %v840, 1.442695
  %v854 = vpow.pop %v853
  %v855 = vmul.f32 %v841, 1.442695
  %v856 = vpow.pop %v855
  %v857 = vmul.f32 %v842, 1.442695
  %v858 = vpow.pop %v857
  %v859 = vsel %vm261, %v844, 0.0
  %860 = vadd.xlane.f32.xlu0 %v859
  %v861 = vpop.xlane.xlu0 %860
  %v862 = vsel %vm261, %v846, 0.0
  %863 = vadd.xlane.f32.xlu0 %v862
  %v864 = vpop.xlane.xlu0 %863
  %v865 = vsel %vm261, %v848, 0.0
  %866 = vadd.xlane.f32.xlu0 %v865
  %v867 = vpop.xlane.xlu0 %866
  %v868 = vsel %vm261, %v850, 0.0
  %869 = vadd.xlane.f32.xlu0 %v868
  %v870 = vpop.xlane.xlu0 %869
  %v871 = vsel %vm261, %v852, 0.0
  %872 = vadd.xlane.f32.xlu0 %v871
  %v873 = vpop.xlane.xlu0 %872
  %v874 = vsel %vm261, %v854, 0.0
  %875 = vadd.xlane.f32.xlu0 %v874
  %v876 = vpop.xlane.xlu0 %875
  %v877 = vsel %vm261, %v856, 0.0
  %878 = vadd.xlane.f32.xlu0 %v877
  %v879 = vpop.xlane.xlu0 %878
  %v880 = vsel %vm261, %v858, 0.0
  %881 = vadd.xlane.f32.xlu0 %v880
  %v882 = vpop.xlane.xlu0 %881
  %v883 = vrcp.pop %v861
  %v884 = vrcp.pop %v864
  %v885 = vrcp.pop %v867
  %v886 = vrcp.pop %v870
  %v887 = vrcp.pop %v873
  %v888 = vrcp.pop %v876
  %v889 = vrcp.pop %v879
  %v890 = vrcp.pop %v882
  %v891 = vmul.f32 %v844, %v883
  %v892 = vmul.f32 %v846, %v884
  %v893 = vmul.f32 %v848, %v885
  %v894 = vmul.f32 %v850, %v886
  %v895 = vmul.f32 %v852, %v887
  %v896 = vmul.f32 %v854, %v888
  %v897 = vmul.f32 %v856, %v889
  %v898 = vmul.f32 %v858, %v890
  %v899 = vpack.c.bf16 %v892, %v891
  %v900 = vpack.c.bf16 %v894, %v893
  %v901 = vpack.c.bf16 %v896, %v895
  %v902 = vpack.c.bf16 %v898, %v897
  %v903 = vpack.c.bf16 %v702, %v699
  %v904 = vpack.c.bf16 %v710, %v707
  %v905 = vpack.c.bf16 %v718, %v715
  %v906 = vpack.c.bf16 %v726, %v723
  %v908 = vsel %vm261, %v899, 0
  %v911 = vsel %vm261, %v900, 0
  %v914 = vsel %vm261, %v901, 0
  %v917 = vsel %vm261, %v902, 0
  %919 = vmatprep.subr.bf16.mxu0 0
  %920 = vmatpush1.bf16.msra.mxu0 %v903
  %921 = vmatprep.subr.bf16.mxu0 0
  %922 = vmatpush1.bf16.msra.mxu0 %v904
  %923 = vmatprep.subr.bf16.mxu0 0
  %924 = vmatpush1.bf16.msra.mxu0 %v905
  %925 = vmatprep.subr.bf16.mxu0 0
  %926 = vmatpush1.bf16.msra.mxu0 %v906
  %927 = vmatprep.subr.bf16.mxu0 0
  %928 = vmatpush1.bf16.msra.mxu0 0
  %929 = vmatprep.subr.bf16.mxu0 0
  %930 = vmatpush1.bf16.msra.mxu0 0
  %931 = vmatprep.subr.bf16.mxu0 0
  %932 = vmatpush1.bf16.msra.mxu0 0
  %933 = vmatprep.subr.bf16.mxu0 0
  %934 = vmatpush1.bf16.msra.mxu0 0
  %935 = vmatprep.subr.bf16.mxu0 0
  %936 = vmatpush1.bf16.msra.mxu0 0
  %937 = vmatprep.subr.bf16.mxu0 0
  %938 = vmatpush1.bf16.msra.mxu0 0
  %939 = vmatprep.subr.bf16.mxu0 0
  %940 = vmatpush1.bf16.msra.mxu0 0
  %941 = vmatprep.subr.bf16.mxu0 0
  %942 = vmatpush1.bf16.msra.mxu0 0
  %943 = vmatprep.subr.bf16.mxu0 0
  %944 = vmatpush1.bf16.msra.mxu0 0
  %945 = vmatprep.subr.bf16.mxu0 0
  %946 = vmatpush1.bf16.msra.mxu0 0
  %947 = vmatprep.subr.bf16.mxu0 0
  %948 = vmatpush1.bf16.msra.mxu0 0
  %949 = vmatprep.subr.bf16.mxu0 0
  %950 = vmatpush1.bf16.msra.mxu0 0
  %951 = vmatprep.mubr.bf16.mxu0 0
  %952 = vmatmul.mubr.bf16.gmra.mrb[0].mxu0 %v908
  %v953 = vpop.f32.mrb[0].mxu0
  %v954 = vadd.f32 0.0, %v953
  %v955 = vpop.f32.mrb[0].mxu0
  %v956 = vpop.f32.mrb[0].mxu0
  %v957 = vadd.f32 0.0, %v956
  %v958 = vpop.f32.mrb[0].mxu0
  %959 = vmatprep.mubr.bf16.mxu0 0
  %960 = vmatmul.mubr.bf16.gmra.mrb[0].mxu0 %v911
  %v961 = vpop.f32.mrb[0].mxu0
  %v962 = vadd.f32 0.0, %v961
  %v963 = vpop.f32.mrb[0].mxu0
  %v964 = vpop.f32.mrb[0].mxu0
  %v965 = vadd.f32 0.0, %v964
  %v966 = vpop.f32.mrb[0].mxu0
  %967 = vmatprep.mubr.bf16.mxu0 0
  %968 = vmatmul.mubr.bf16.gmra.mrb[0].mxu0 %v914
  %v969 = vpop.f32.mrb[0].mxu0
  %v970 = vadd.f32 0.0, %v969
  %v971 = vpop.f32.mrb[0].mxu0
  %v972 = vpop.f32.mrb[0].mxu0
  %v973 = vadd.f32 0.0, %v972
  %v974 = vpop.f32.mrb[0].mxu0
  %975 = vmatprep.mubr.bf16.mxu0 0
  %976 = vmatmul.mubr.bf16.gmra.mrb[0].mxu0 %v917
  %v977 = vpop.f32.mrb[0].mxu0
  %v978 = vadd.f32 0.0, %v977
  %v979 = vpop.f32.mrb[0].mxu0
  %v980 = vpop.f32.mrb[0].mxu0
  %v981 = vadd.f32 0.0, %v980
  %v982 = vpop.f32.mrb[0].mxu0
  %983 = vdwg.mxu0
  %v984 = vpack.c.bf16 %v957, %v954
  %v985 = vpack.c.bf16 %v965, %v962
  %v986 = vpack.c.bf16 %v973, %v970
  %v987 = vpack.c.bf16 %v981, %v978
  %v988 = vld [vmem:[%s13] sm:$0xf]
  %v989 = vld [vmem:[%s13 + $0x4] sm:$0xf]
  %s990 = scalar_lea.vmem %s7, 32
  %v991 = vld [vmem:[%s990] sm:$0xf]
  %v992 = vld [vmem:[%s990 + $0x4] sm:$0xf]
  %v993 = vld [vmem:[%s990 + $0x8] sm:$0xf]
  %v994 = vld [vmem:[%s990 + $0xc] sm:$0xf]
  %v995 = vld [vmem:[%s990 + $0x10] sm:$0xf]
  %v996 = vld [vmem:[%s990 + $0x14] sm:$0xf]
  %v997 = vld [vmem:[%s990 + $0x18] sm:$0xf]
  %v998 = vld [vmem:[%s990 + $0x1c] sm:$0xf]
  %s999 = scalar_lea.vmem %s8, 1
  %v1000 = vld [vmem:[%s999] sm:$0x1]
  %v1002 = vlaneseq
  %v1003 = vshrl.u32 %v1002, 7
  %v1004 = vsub.s32 0, %v1003
  %v1005 = vrot.slane %v1000, %v1004
  %v1015 = vunpack.c.l.b16 %v991
  %v1016 = vunpack.c.l.b16 %v992
  %v1017 = vunpack.c.l.b16 %v993
  %v1018 = vunpack.c.l.b16 %v994
  %v1019 = vunpack.c.l.b16 %v995
  %v1020 = vunpack.c.l.b16 %v996
  %v1021 = vunpack.c.l.b16 %v997
  %v1022 = vunpack.c.l.b16 %v998
  %v1023 = vpack.c.b16 %v1016, %v1015
  %v1024 = vpack.c.b16 %v1018, %v1017
  %v1025 = vpack.c.b16 %v1020, %v1019
  %v1026 = vpack.c.b16 %v1022, %v1021
  %1031 = vmatprep.subr.bf16.mxu0 0
  %1032 = vmatpush1.bf16.msra.mxu0 %v1023
  %1033 = vmatprep.subr.bf16.mxu0 0
  %1034 = vmatpush1.bf16.msra.mxu0 %v1024
  %1035 = vmatprep.subr.bf16.mxu0 0
  %1036 = vmatpush1.bf16.msra.mxu0 %v1025
  %1037 = vmatprep.subr.bf16.mxu0 0
  %1038 = vmatpush1.bf16.msra.mxu0 %v1026
  %1039 = vmatprep.subr.bf16.mxu0 0
  %1040 = vmatpush1.bf16.msra.mxu0 0
  %1041 = vmatprep.subr.bf16.mxu0 0
  %1042 = vmatpush1.bf16.msra.mxu0 0
  %1043 = vmatprep.subr.bf16.mxu0 0
  %1044 = vmatpush1.bf16.msra.mxu0 0
  %1045 = vmatprep.subr.bf16.mxu0 0
  %1046 = vmatpush1.bf16.msra.mxu0 0
  %1047 = vmatprep.subr.bf16.mxu0 0
  %1048 = vmatpush1.bf16.msra.mxu0 0
  %1049 = vmatprep.subr.bf16.mxu0 0
  %1050 = vmatpush1.bf16.msra.mxu0 0
  %1051 = vmatprep.subr.bf16.mxu0 0
  %1052 = vmatpush1.bf16.msra.mxu0 0
  %1053 = vmatprep.subr.bf16.mxu0 0
  %1054 = vmatpush1.bf16.msra.mxu0 0
  %1055 = vmatprep.subr.bf16.mxu0 0
  %1056 = vmatpush1.bf16.msra.mxu0 0
  %1057 = vmatprep.subr.bf16.mxu0 0
  %1058 = vmatpush1.bf16.msra.mxu0 0
  %1059 = vmatprep.subr.bf16.mxu0 0
  %1060 = vmatpush1.bf16.msra.mxu0 0
  %1061 = vmatprep.subr.bf16.mxu0 0
  %1062 = vmatpush1.bf16.msra.mxu0 0
  %1063 = vmatprep.mubr.bf16.mxu0 0
  %1064 = vmatmul.mubr.bf16.gmra.mrb[0].mxu0 %v486
  %v1065 = vpop.f32.mrb[0].mxu0
  %v1066 = vadd.f32 %v1005, %v1065
  %v1067 = vpop.f32.mrb[0].mxu0
  %v1068 = vpop.f32.mrb[0].mxu0
  %v1069 = vadd.f32 %v1005, %v1068
  %v1070 = vpop.f32.mrb[0].mxu0
  %1071 = vmatprep.mubr.bf16.mxu0 0
  %1072 = vmatmul.mubr.bf16.gmra.mrb[0].mxu0 %v489
  %v1073 = vpop.f32.mrb[0].mxu0
  %v1074 = vadd.f32 %v1005, %v1073
  %v1075 = vpop.f32.mrb[0].mxu0
  %v1076 = vpop.f32.mrb[0].mxu0
  %v1077 = vadd.f32 %v1005, %v1076
  %v1078 = vpop.f32.mrb[0].mxu0
  %1079 = vmatprep.mubr.bf16.mxu0 0
  %1080 = vmatmul.mubr.bf16.gmra.mrb[0].mxu0 %v492
  %v1081 = vpop.f32.mrb[0].mxu0
  %v1082 = vadd.f32 %v1005, %v1081
  %v1083 = vpop.f32.mrb[0].mxu0
  %v1084 = vpop.f32.mrb[0].mxu0
  %v1085 = vadd.f32 %v1005, %v1084
  %v1086 = vpop.f32.mrb[0].mxu0
  %1087 = vmatprep.mubr.bf16.mxu0 0
  %1088 = vmatmul.mubr.bf16.gmra.mrb[0].mxu0 %v495
  %v1089 = vpop.f32.mrb[0].mxu0
  %v1090 = vadd.f32 %v1005, %v1089
  %v1091 = vpop.f32.mrb[0].mxu0
  %v1092 = vpop.f32.mrb[0].mxu0
  %v1093 = vadd.f32 %v1005, %v1092
  %v1094 = vpop.f32.mrb[0].mxu0
  %1095 = vdwg.mxu0
  %s1096 = scalar_lea.vmem %s9, 8
  %v1097 = vld [vmem:[%s1096] sm:$0xf]
  %v1098 = vld [vmem:[%s1096 + $0x4] sm:$0xf]
  %s1099 = scalar_lea.vmem %s10, 16
  %v1100 = vld [vmem:[%s1099] sm:$0xff]
  %v1101 = vld [vmem:[%s1099 + $0x8] sm:$0xff]
  %1103 = vset.pattern.permute.xlu0 0
  %1104 = vperm.xlu0 %1103, %v1100
  %v1105 = vpop.permute.xlu0 %1104
  %1108 = vset.pattern.permute.xlu0 0
  %1109 = vperm.xlu0 %1108, %v1101
  %v1110 = vpop.permute.xlu0 %1109
  %v1114 = vunpack.c.l.b16 %v1097
  %v1115 = vunpack.c.l.b16 %v1098
  %v1116 = vpack.c.b16 %v1115, %v1114
  %v1118 = vsel %vm261, %v1116, 0
  %1120 = vmatprep.subr.bf16.mxu0 0
  %1121 = vmatpush1.bf16.msra.mxu0 %v442
  %1122 = vmatprep.subr.bf16.mxu0 0
  %1123 = vmatpush1.bf16.msra.mxu0 %v443
  %1124 = vmatprep.subr.bf16.mxu0 0
  %1125 = vmatpush1.bf16.msra.mxu0 %v444
  %1126 = vmatprep.subr.bf16.mxu0 0
  %1127 = vmatpush1.bf16.msra.mxu0 %v445
  %1128 = vmatprep.subr.bf16.mxu0 0
  %1129 = vmatpush1.bf16.msra.mxu0 0
  %1130 = vmatprep.subr.bf16.mxu0 0
  %1131 = vmatpush1.bf16.msra.mxu0 0
  %1132 = vmatprep.subr.bf16.mxu0 0
  %1133 = vmatpush1.bf16.msra.mxu0 0
  %1134 = vmatprep.subr.bf16.mxu0 0
  %1135 = vmatpush1.bf16.msra.mxu0 0
  %1136 = vmatprep.subr.bf16.mxu0 0
  %1137 = vmatpush1.bf16.msra.mxu0 0
  %1138 = vmatprep.subr.bf16.mxu0 0
  %1139 = vmatpush1.bf16.msra.mxu0 0
  %1140 = vmatprep.subr.bf16.mxu0 0
  %1141 = vmatpush1.bf16.msra.mxu0 0
  %1142 = vmatprep.subr.bf16.mxu0 0
  %1143 = vmatpush1.bf16.msra.mxu0 0
  %1144 = vmatprep.subr.bf16.mxu0 0
  %1145 = vmatpush1.bf16.msra.mxu0 0
  %1146 = vmatprep.subr.bf16.mxu0 0
  %1147 = vmatpush1.bf16.msra.mxu0 0
  %1148 = vmatprep.subr.bf16.mxu0 0
  %1149 = vmatpush1.bf16.msra.mxu0 0
  %1150 = vmatprep.subr.bf16.mxu0 0
  %1151 = vmatpush1.bf16.msra.mxu0 0
  %1152 = vmatprep.mubr.bf16.mxu0 0
  %1153 = vmatmul.mubr.bf16.gmra.mrb[0].mxu0 %v1118
  %v1154 = vpop.f32.mrb[0].mxu0
  %v1155 = vadd.f32 %v1105, %v1154
  %v1156 = vpop.f32.mrb[0].mxu0
  %v1157 = vpop.f32.mrb[0].mxu0
  %v1158 = vadd.f32 %v1110, %v1157
  %v1159 = vpop.f32.mrb[0].mxu0
  %1160 = vdwg.mxu0
  %s1161 = scalar_lea.vmem %s11, 32
  %v1162 = vld [vmem:[%s1161] sm:$0xf]
  %v1163 = vld [vmem:[%s1161 + $0x4] sm:$0xf]
  %v1164 = vld [vmem:[%s1161 + $0x8] sm:$0xf]
  %v1165 = vld [vmem:[%s1161 + $0xc] sm:$0xf]
  %v1166 = vld [vmem:[%s1161 + $0x10] sm:$0xf]
  %v1167 = vld [vmem:[%s1161 + $0x14] sm:$0xf]
  %v1168 = vld [vmem:[%s1161 + $0x18] sm:$0xf]
  %v1169 = vld [vmem:[%s1161 + $0x1c] sm:$0xf]
  %s1170 = scalar_lea.vmem %s12, 1
  %v1171 = vld [vmem:[%s1170] sm:$0x1]
  %v1173 = vlaneseq
  %v1174 = vshrl.u32 %v1173, 7
  %v1175 = vsub.s32 0, %v1174
  %v1176 = vrot.slane %v1171, %v1175
  %v1186 = vunpack.c.l.b16 %v1162
  %v1187 = vunpack.c.l.b16 %v1163
  %v1188 = vunpack.c.l.b16 %v1164
  %v1189 = vunpack.c.l.b16 %v1165
  %v1190 = vunpack.c.l.b16 %v1166
  %v1191 = vunpack.c.l.b16 %v1167
  %v1192 = vunpack.c.l.b16 %v1168
  %v1193 = vunpack.c.l.b16 %v1169
  %v1194 = vpack.c.b16 %v1187, %v1186
  %v1195 = vpack.c.b16 %v1189, %v1188
  %v1196 = vpack.c.b16 %v1191, %v1190
  %v1197 = vpack.c.b16 %v1193, %v1192
  %1202 = vmatprep.subr.bf16.mxu0 0
  %1203 = vmatpush1.bf16.msra.mxu0 %v1194
  %1204 = vmatprep.subr.bf16.mxu0 0
  %1205 = vmatpush1.bf16.msra.mxu0 %v1195
  %1206 = vmatprep.subr.bf16.mxu0 0
  %1207 = vmatpush1.bf16.msra.mxu0 %v1196
  %1208 = vmatprep.subr.bf16.mxu0 0
  %1209 = vmatpush1.bf16.msra.mxu0 %v1197
  %1210 = vmatprep.subr.bf16.mxu0 0
  %1211 = vmatpush1.bf16.msra.mxu0 0
  %1212 = vmatprep.subr.bf16.mxu0 0
  %1213 = vmatpush1.bf16.msra.mxu0 0
  %1214 = vmatprep.subr.bf16.mxu0 0
  %1215 = vmatpush1.bf16.msra.mxu0 0
  %1216 = vmatprep.subr.bf16.mxu0 0
  %1217 = vmatpush1.bf16.msra.mxu0 0
  %1218 = vmatprep.subr.bf16.mxu0 0
  %1219 = vmatpush1.bf16.msra.mxu0 0
  %1220 = vmatprep.subr.bf16.mxu0 0
  %1221 = vmatpush1.bf16.msra.mxu0 0
  %1222 = vmatprep.subr.bf16.mxu0 0
  %1223 = vmatpush1.bf16.msra.mxu0 0
  %1224 = vmatprep.subr.bf16.mxu0 0
  %1225 = vmatpush1.bf16.msra.mxu0 0
  %1226 = vmatprep.subr.bf16.mxu0 0
  %1227 = vmatpush1.bf16.msra.mxu0 0
  %1228 = vmatprep.subr.bf16.mxu0 0
  %1229 = vmatpush1.bf16.msra.mxu0 0
  %1230 = vmatprep.subr.bf16.mxu0 0
  %1231 = vmatpush1.bf16.msra.mxu0 0
  %1232 = vmatprep.subr.bf16.mxu0 0
  %1233 = vmatpush1.bf16.msra.mxu0 0
  %1234 = vmatprep.mubr.bf16.mxu0 0
  %1235 = vmatmul.mubr.bf16.gmra.mrb[0].mxu0 %v486
  %v1236 = vpop.f32.mrb[0].mxu0
  %v1237 = vadd.f32 %v1176, %v1236
  %v1238 = vpop.f32.mrb[0].mxu0
  %v1239 = vpop.f32.mrb[0].mxu0
  %v1240 = vadd.f32 %v1176, %v1239
  %v1241 = vpop.f32.mrb[0].mxu0
  %1242 = vmatprep.mubr.bf16.mxu0 0
  %1243 = vmatmul.mubr.bf16.gmra.mrb[0].mxu0 %v489
  %v1244 = vpop.f32.mrb[0].mxu0
  %v1245 = vadd.f32 %v1176, %v1244
  %v1246 = vpop.f32.mrb[0].mxu0
  %v1247 = vpop.f32.mrb[0].mxu0
  %v1248 = vadd.f32 %v1176, %v1247
  %v1249 = vpop.f32.mrb[0].mxu0
  %1250 = vmatprep.mubr.bf16.mxu0 0
  %1251 = vmatmul.mubr.bf16.gmra.mrb[0].mxu0 %v492
  %v1252 = vpop.f32.mrb[0].mxu0
  %v1253 = vadd.f32 %v1176, %v1252
  %v1254 = vpop.f32.mrb[0].mxu0
  %v1255 = vpop.f32.mrb[0].mxu0
  %v1256 = vadd.f32 %v1176, %v1255
  %v1257 = vpop.f32.mrb[0].mxu0
  %1258 = vmatprep.mubr.bf16.mxu0 0
  %1259 = vmatmul.mubr.bf16.gmra.mrb[0].mxu0 %v495
  %v1260 = vpop.f32.mrb[0].mxu0
  %v1261 = vadd.f32 %v1176, %v1260
  %v1262 = vpop.f32.mrb[0].mxu0
  %v1263 = vpop.f32.mrb[0].mxu0
  %v1264 = vadd.f32 %v1176, %v1263
  %v1265 = vpop.f32.mrb[0].mxu0
  %1266 = vdwg.mxu0
  %v1267 = vpack.c.bf16 %v1069, %v1066
  %v1268 = vpack.c.bf16 %v1077, %v1074
  %v1269 = vpack.c.bf16 %v1085, %v1082
  %v1270 = vpack.c.bf16 %v1093, %v1090
  %v1271 = vpack.c.bf16 %v1158, %v1155
  %v1273 = vsel %vm183, %v1267, 0
  %v1276 = vsel %vm183, %v1268, 0
  %v1279 = vsel %vm183, %v1269, 0
  %v1282 = vsel %vm183, %v1270, 0
  %1284 = vmatprep.subr.bf16.mxu0 0
  %1285 = vmatpush1.bf16.msra.mxu0 %v1271
  %1286 = vmatprep.subr.bf16.mxu0 0
  %1287 = vmatpush1.bf16.msra.mxu0 0
  %1288 = vmatprep.subr.bf16.mxu0 0
  %1289 = vmatpush1.bf16.msra.mxu0 0
  %1290 = vmatprep.subr.bf16.mxu0 0
  %1291 = vmatpush1.bf16.msra.mxu0 0
  %1292 = vmatprep.subr.bf16.mxu0 0
  %1293 = vmatpush1.bf16.msra.mxu0 0
  %1294 = vmatprep.subr.bf16.mxu0 0
  %1295 = vmatpush1.bf16.msra.mxu0 0
  %1296 = vmatprep.subr.bf16.mxu0 0
  %1297 = vmatpush1.bf16.msra.mxu0 0
  %1298 = vmatprep.subr.bf16.mxu0 0
  %1299 = vmatpush1.bf16.msra.mxu0 0
  %1300 = vmatprep.subr.bf16.mxu0 0
  %1301 = vmatpush1.bf16.msra.mxu0 0
  %1302 = vmatprep.subr.bf16.mxu0 0
  %1303 = vmatpush1.bf16.msra.mxu0 0
  %1304 = vmatprep.subr.bf16.mxu0 0
  %1305 = vmatpush1.bf16.msra.mxu0 0
  %1306 = vmatprep.subr.bf16.mxu0 0
  %1307 = vmatpush1.bf16.msra.mxu0 0
  %1308 = vmatprep.subr.bf16.mxu0 0
  %1309 = vmatpush1.bf16.msra.mxu0 0
  %1310 = vmatprep.subr.bf16.mxu0 0
  %1311 = vmatpush1.bf16.msra.mxu0 0
  %1312 = vmatprep.subr.bf16.mxu0 0
  %1313 = vmatpush1.bf16.msra.mxu0 0
  %1314 = vmatprep.subr.bf16.mxu0 0
  %1315 = vmatpush1.bf16.msra.mxu0 0
  %1316 = vmatprep.mubr.bf16.mxu0 0
  %1317 = vmatmul.mubr.bf16.gmra.mrb[0].mxu0 %v1273
  %v1318 = vpop.f32.mrb[0].mxu0
  %v1319 = vadd.f32 0.0, %v1318
  %v1320 = vpop.f32.mrb[0].mxu0
  %v1321 = vpop.f32.mrb[0].mxu0
  %v1322 = vadd.f32 0.0, %v1321
  %v1323 = vpop.f32.mrb[0].mxu0
  %1324 = vmatprep.mubr.bf16.mxu0 0
  %1325 = vmatmul.mubr.bf16.gmra.mrb[0].mxu0 %v1276
  %v1326 = vpop.f32.mrb[0].mxu0
  %v1327 = vadd.f32 0.0, %v1326
  %v1328 = vpop.f32.mrb[0].mxu0
  %v1329 = vpop.f32.mrb[0].mxu0
  %v1330 = vadd.f32 0.0, %v1329
  %v1331 = vpop.f32.mrb[0].mxu0
  %1332 = vmatprep.mubr.bf16.mxu0 0
  %1333 = vmatmul.mubr.bf16.gmra.mrb[0].mxu0 %v1279
  %v1334 = vpop.f32.mrb[0].mxu0
  %v1335 = vadd.f32 0.0, %v1334
  %v1336 = vpop.f32.mrb[0].mxu0
  %v1337 = vpop.f32.mrb[0].mxu0
  %v1338 = vadd.f32 0.0, %v1337
  %v1339 = vpop.f32.mrb[0].mxu0
  %1340 = vmatprep.mubr.bf16.mxu0 0
  %1341 = vmatmul.mubr.bf16.gmra.mrb[0].mxu0 %v1282
  %v1342 = vpop.f32.mrb[0].mxu0
  %v1343 = vadd.f32 0.0, %v1342
  %v1344 = vpop.f32.mrb[0].mxu0
  %v1345 = vpop.f32.mrb[0].mxu0
  %v1346 = vadd.f32 0.0, %v1345
  %v1347 = vpop.f32.mrb[0].mxu0
  %1348 = vdwg.mxu0
  %v1349 = vsel %vm261, %v1319, -inf
  %1350 = vmax.xlane.f32.xlu0 %v1349
  %v1351 = vpop.xlane.xlu0 %1350
  %v1352 = vsel %vm261, %v1322, -inf
  %1353 = vmax.xlane.f32.xlu0 %v1352
  %v1354 = vpop.xlane.xlu0 %1353
  %v1355 = vsel %vm261, %v1327, -inf
  %1356 = vmax.xlane.f32.xlu0 %v1355
  %v1357 = vpop.xlane.xlu0 %1356
  %v1358 = vsel %vm261, %v1330, -inf
  %1359 = vmax.xlane.f32.xlu0 %v1358
  %v1360 = vpop.xlane.xlu0 %1359
  %v1361 = vsel %vm261, %v1335, -inf
  %1362 = vmax.xlane.f32.xlu0 %v1361
  %v1363 = vpop.xlane.xlu0 %1362
  %v1364 = vsel %vm261, %v1338, -inf
  %1365 = vmax.xlane.f32.xlu0 %v1364
  %v1366 = vpop.xlane.xlu0 %1365
  %v1367 = vsel %vm261, %v1343, -inf
  %1368 = vmax.xlane.f32.xlu0 %v1367
  %v1369 = vpop.xlane.xlu0 %1368
  %v1370 = vsel %vm261, %v1346, -inf
  %1371 = vmax.xlane.f32.xlu0 %v1370
  %v1372 = vpop.xlane.xlu0 %1371
  %v1373 = vsub.f32 %v1319, %v1351
  %v1374 = vsub.f32 %v1322, %v1354
  %v1375 = vsub.f32 %v1327, %v1357
  %v1376 = vsub.f32 %v1330, %v1360
  %v1377 = vsub.f32 %v1335, %v1363
  %v1378 = vsub.f32 %v1338, %v1366
  %v1379 = vsub.f32 %v1343, %v1369
  %v1380 = vsub.f32 %v1346, %v1372
  %v1381 = vmul.f32 %v1373, 1.442695
  %v1382 = vpow.pop %v1381
  %v1383 = vmul.f32 %v1374, 1.442695
  %v1384 = vpow.pop %v1383
  %v1385 = vmul.f32 %v1375, 1.442695
  %v1386 = vpow.pop %v1385
  %v1387 = vmul.f32 %v1376, 1.442695
  %v1388 = vpow.pop %v1387
  %v1389 = vmul.f32 %v1377, 1.442695
  %v1390 = vpow.pop %v1389
  %v1391 = vmul.f32 %v1378, 1.442695
  %v1392 = vpow.pop %v1391
  %v1393 = vmul.f32 %v1379, 1.442695
  %v1394 = vpow.pop %v1393
  %v1395 = vmul.f32 %v1380, 1.442695
  %v1396 = vpow.pop %v1395
  %v1397 = vsel %vm261, %v1382, 0.0
  %1398 = vadd.xlane.f32.xlu0 %v1397
  %v1399 = vpop.xlane.xlu0 %1398
  %v1400 = vsel %vm261, %v1384, 0.0
  %1401 = vadd.xlane.f32.xlu0 %v1400
  %v1402 = vpop.xlane.xlu0 %1401
  %v1403 = vsel %vm261, %v1386, 0.0
  %1404 = vadd.xlane.f32.xlu0 %v1403
  %v1405 = vpop.xlane.xlu0 %1404
  %v1406 = vsel %vm261, %v1388, 0.0
  %1407 = vadd.xlane.f32.xlu0 %v1406
  %v1408 = vpop.xlane.xlu0 %1407
  %v1409 = vsel %vm261, %v1390, 0.0
  %1410 = vadd.xlane.f32.xlu0 %v1409
  %v1411 = vpop.xlane.xlu0 %1410
  %v1412 = vsel %vm261, %v1392, 0.0
  %1413 = vadd.xlane.f32.xlu0 %v1412
  %v1414 = vpop.xlane.xlu0 %1413
  %v1415 = vsel %vm261, %v1394, 0.0
  %1416 = vadd.xlane.f32.xlu0 %v1415
  %v1417 = vpop.xlane.xlu0 %1416
  %v1418 = vsel %vm261, %v1396, 0.0
  %1419 = vadd.xlane.f32.xlu0 %v1418
  %v1420 = vpop.xlane.xlu0 %1419
  %v1421 = vrcp.pop %v1399
  %v1422 = vrcp.pop %v1402
  %v1423 = vrcp.pop %v1405
  %v1424 = vrcp.pop %v1408
  %v1425 = vrcp.pop %v1411
  %v1426 = vrcp.pop %v1414
  %v1427 = vrcp.pop %v1417
  %v1428 = vrcp.pop %v1420
  %v1429 = vmul.f32 %v1382, %v1421
  %v1430 = vmul.f32 %v1384, %v1422
  %v1431 = vmul.f32 %v1386, %v1423
  %v1432 = vmul.f32 %v1388, %v1424
  %v1433 = vmul.f32 %v1390, %v1425
  %v1434 = vmul.f32 %v1392, %v1426
  %v1435 = vmul.f32 %v1394, %v1427
  %v1436 = vmul.f32 %v1396, %v1428
  %v1437 = vpack.c.bf16 %v1430, %v1429
  %v1438 = vpack.c.bf16 %v1432, %v1431
  %v1439 = vpack.c.bf16 %v1434, %v1433
  %v1440 = vpack.c.bf16 %v1436, %v1435
  %v1441 = vpack.c.bf16 %v1240, %v1237
  %v1442 = vpack.c.bf16 %v1248, %v1245
  %v1443 = vpack.c.bf16 %v1256, %v1253
  %v1444 = vpack.c.bf16 %v1264, %v1261
  %v1446 = vsel %vm261, %v1437, 0
  %v1449 = vsel %vm261, %v1438, 0
  %v1452 = vsel %vm261, %v1439, 0
  %v1455 = vsel %vm261, %v1440, 0
  %1457 = vmatprep.subr.bf16.mxu0 0
  %1458 = vmatpush1.bf16.msra.mxu0 %v1441
  %1459 = vmatprep.subr.bf16.mxu0 0
  %1460 = vmatpush1.bf16.msra.mxu0 %v1442
  %1461 = vmatprep.subr.bf16.mxu0 0
  %1462 = vmatpush1.bf16.msra.mxu0 %v1443
  %1463 = vmatprep.subr.bf16.mxu0 0
  %1464 = vmatpush1.bf16.msra.mxu0 %v1444
  %1465 = vmatprep.subr.bf16.mxu0 0
  %1466 = vmatpush1.bf16.msra.mxu0 0
  %1467 = vmatprep.subr.bf16.mxu0 0
  %1468 = vmatpush1.bf16.msra.mxu0 0
  %1469 = vmatprep.subr.bf16.mxu0 0
  %1470 = vmatpush1.bf16.msra.mxu0 0
  %1471 = vmatprep.subr.bf16.mxu0 0
  %1472 = vmatpush1.bf16.msra.mxu0 0
  %1473 = vmatprep.subr.bf16.mxu0 0
  %1474 = vmatpush1.bf16.msra.mxu0 0
  %1475 = vmatprep.subr.bf16.mxu0 0
  %1476 = vmatpush1.bf16.msra.mxu0 0
  %1477 = vmatprep.subr.bf16.mxu0 0
  %1478 = vmatpush1.bf16.msra.mxu0 0
  %1479 = vmatprep.subr.bf16.mxu0 0
  %1480 = vmatpush1.bf16.msra.mxu0 0
  %1481 = vmatprep.subr.bf16.mxu0 0
  %1482 = vmatpush1.bf16.msra.mxu0 0
  %1483 = vmatprep.subr.bf16.mxu0 0
  %1484 = vmatpush1.bf16.msra.mxu0 0
  %1485 = vmatprep.subr.bf16.mxu0 0
  %1486 = vmatpush1.bf16.msra.mxu0 0
  %1487 = vmatprep.subr.bf16.mxu0 0
  %1488 = vmatpush1.bf16.msra.mxu0 0
  %1489 = vmatprep.mubr.bf16.mxu0 0
  %1490 = vmatmul.mubr.bf16.gmra.mrb[0].mxu0 %v1446
  %v1491 = vpop.f32.mrb[0].mxu0
  %v1492 = vadd.f32 0.0, %v1491
  %v1493 = vpop.f32.mrb[0].mxu0
  %v1494 = vpop.f32.mrb[0].mxu0
  %v1495 = vadd.f32 0.0, %v1494
  %v1496 = vpop.f32.mrb[0].mxu0
  %1497 = vmatprep.mubr.bf16.mxu0 0
  %1498 = vmatmul.mubr.bf16.gmra.mrb[0].mxu0 %v1449
  %v1499 = vpop.f32.mrb[0].mxu0
  %v1500 = vadd.f32 0.0, %v1499
  %v1501 = vpop.f32.mrb[0].mxu0
  %v1502 = vpop.f32.mrb[0].mxu0
  %v1503 = vadd.f32 0.0, %v1502
  %v1504 = vpop.f32.mrb[0].mxu0
  %1505 = vmatprep.mubr.bf16.mxu0 0
  %1506 = vmatmul.mubr.bf16.gmra.mrb[0].mxu0 %v1452
  %v1507 = vpop.f32.mrb[0].mxu0
  %v1508 = vadd.f32 0.0, %v1507
  %v1509 = vpop.f32.mrb[0].mxu0
  %v1510 = vpop.f32.mrb[0].mxu0
  %v1511 = vadd.f32 0.0, %v1510
  %v1512 = vpop.f32.mrb[0].mxu0
  %1513 = vmatprep.mubr.bf16.mxu0 0
  %1514 = vmatmul.mubr.bf16.gmra.mrb[0].mxu0 %v1455
  %v1515 = vpop.f32.mrb[0].mxu0
  %v1516 = vadd.f32 0.0, %v1515
  %v1517 = vpop.f32.mrb[0].mxu0
  %v1518 = vpop.f32.mrb[0].mxu0
  %v1519 = vadd.f32 0.0, %v1518
  %v1520 = vpop.f32.mrb[0].mxu0
  %1521 = vdwg.mxu0
  %v1522 = vpack.c.bf16 %v1495, %v1492
  %v1523 = vpack.c.bf16 %v1503, %v1500
  %v1524 = vpack.c.bf16 %v1511, %v1508
  %v1525 = vpack.c.bf16 %v1519, %v1516
  %s1526 = scalar_lea.vmem %s13, 8
  %v1527 = vld [vmem:[%s1526] sm:$0xf]
  %v1528 = vld [vmem:[%s1526 + $0x4] sm:$0xf]
  %v1531 = vunpack.c.l.b16 %v1527
  %v1532 = vunpack.c.l.b16 %v1528
  %v1533 = vpack.c.b16 %v1532, %v1531
  %v1536 = vsel %vm183, %v1522, 0
  %v1539 = vsel %vm183, %v1523, 0
  %v1542 = vsel %vm183, %v1524, 0
  %v1545 = vsel %vm183, %v1525, 0
  %1547 = vmatprep.subr.bf16.mxu0 0
  %1548 = vmatpush1.bf16.msra.mxu0 %v1533
  %1549 = vmatprep.subr.bf16.mxu0 0
  %1550 = vmatpush1.bf16.msra.mxu0 0
  %1551 = vmatprep.subr.bf16.mxu0 0
  %1552 = vmatpush1.bf16.msra.mxu0 0
  %1553 = vmatprep.subr.bf16.mxu0 0
  %1554 = vmatpush1.bf16.msra.mxu0 0
  %1555 = vmatprep.subr.bf16.mxu0 0
  %1556 = vmatpush1.bf16.msra.mxu0 0
  %1557 = vmatprep.subr.bf16.mxu0 0
  %1558 = vmatpush1.bf16.msra.mxu0 0
  %1559 = vmatprep.subr.bf16.mxu0 0
  %1560 = vmatpush1.bf16.msra.mxu0 0
  %1561 = vmatprep.subr.bf16.mxu0 0
  %1562 = vmatpush1.bf16.msra.mxu0 0
  %1563 = vmatprep.subr.bf16.mxu0 0
  %1564 = vmatpush1.bf16.msra.mxu0 0
  %1565 = vmatprep.subr.bf16.mxu0 0
  %1566 = vmatpush1.bf16.msra.mxu0 0
  %1567 = vmatprep.subr.bf16.mxu0 0
  %1568 = vmatpush1.bf16.msra.mxu0 0
  %1569 = vmatprep.subr.bf16.mxu0 0
  %1570 = vmatpush1.bf16.msra.mxu0 0
  %1571 = vmatprep.subr.bf16.mxu0 0
  %1572 = vmatpush1.bf16.msra.mxu0 0
  %1573 = vmatprep.subr.bf16.mxu0 0
  %1574 = vmatpush1.bf16.msra.mxu0 0
  %1575 = vmatprep.subr.bf16.mxu0 0
  %1576 = vmatpush1.bf16.msra.mxu0 0
  %1577 = vmatprep.subr.bf16.mxu0 0
  %1578 = vmatpush1.bf16.msra.mxu0 0
  %1579 = vmatprep.mubr.bf16.mxu0 0
  %1580 = vmatmul.mubr.bf16.gmra.mrb[0].mxu0 %v1536
  %v1581 = vpop.f32.mrb[0].mxu0
  %v1582 = vadd.f32 0.0, %v1581
  %v1583 = vpop.f32.mrb[0].mxu0
  %v1584 = vpop.f32.mrb[0].mxu0
  %v1585 = vadd.f32 0.0, %v1584
  %v1586 = vpop.f32.mrb[0].mxu0
  %1587 = vmatprep.mubr.bf16.mxu0 0
  %1588 = vmatmul.mubr.bf16.gmra.mrb[0].mxu0 %v1539
  %v1589 = vpop.f32.mrb[0].mxu0
  %v1590 = vadd.f32 0.0, %v1589
  %v1591 = vpop.f32.mrb[0].mxu0
  %v1592 = vpop.f32.mrb[0].mxu0
  %v1593 = vadd.f32 0.0, %v1592
  %v1594 = vpop.f32.mrb[0].mxu0
  %1595 = vmatprep.mubr.bf16.mxu0 0
  %1596 = vmatmul.mubr.bf16.gmra.mrb[0].mxu0 %v1542
  %v1597 = vpop.f32.mrb[0].mxu0
  %v1598 = vadd.f32 0.0, %v1597
  %v1599 = vpop.f32.mrb[0].mxu0
  %v1600 = vpop.f32.mrb[0].mxu0
  %v1601 = vadd.f32 0.0, %v1600
  %v1602 = vpop.f32.mrb[0].mxu0
  %1603 = vmatprep.mubr.bf16.mxu0 0
  %1604 = vmatmul.mubr.bf16.gmra.mrb[0].mxu0 %v1545
  %v1605 = vpop.f32.mrb[0].mxu0
  %v1606 = vadd.f32 0.0, %v1605
  %v1607 = vpop.f32.mrb[0].mxu0
  %v1608 = vpop.f32.mrb[0].mxu0
  %v1609 = vadd.f32 0.0, %v1608
  %v1610 = vpop.f32.mrb[0].mxu0
  %1611 = vdwg.mxu0
  %v1614 = vunpack.c.l.b16 %v988
  %v1615 = vunpack.c.l.b16 %v989
  %v1616 = vpack.c.b16 %v1615, %v1614
  %v1619 = vsel %vm183, %v984, 0
  %v1622 = vsel %vm183, %v985, 0
  %v1625 = vsel %vm183, %v986, 0
  %v1628 = vsel %vm183, %v987, 0
  %1630 = vmatprep.subr.bf16.mxu0 0
  %1631 = vmatpush1.bf16.msra.mxu0 %v1616
  %1632 = vmatprep.subr.bf16.mxu0 0
  %1633 = vmatpush1.bf16.msra.mxu0 0
  %1634 = vmatprep.subr.bf16.mxu0 0
  %1635 = vmatpush1.bf16.msra.mxu0 0
  %1636 = vmatprep.subr.bf16.mxu0 0
  %1637 = vmatpush1.bf16.msra.mxu0 0
  %1638 = vmatprep.subr.bf16.mxu0 0
  %1639 = vmatpush1.bf16.msra.mxu0 0
  %1640 = vmatprep.subr.bf16.mxu0 0
  %1641 = vmatpush1.bf16.msra.mxu0 0
  %1642 = vmatprep.subr.bf16.mxu0 0
  %1643 = vmatpush1.bf16.msra.mxu0 0
  %1644 = vmatprep.subr.bf16.mxu0 0
  %1645 = vmatpush1.bf16.msra.mxu0 0
  %1646 = vmatprep.subr.bf16.mxu0 0
  %1647 = vmatpush1.bf16.msra.mxu0 0
  %1648 = vmatprep.subr.bf16.mxu0 0
  %1649 = vmatpush1.bf16.msra.mxu0 0
  %1650 = vmatprep.subr.bf16.mxu0 0
  %1651 = vmatpush1.bf16.msra.mxu0 0
  %1652 = vmatprep.subr.bf16.mxu0 0
  %1653 = vmatpush1.bf16.msra.mxu0 0
  %1654 = vmatprep.subr.bf16.mxu0 0
  %1655 = vmatpush1.bf16.msra.mxu0 0
  %1656 = vmatprep.subr.bf16.mxu0 0
  %1657 = vmatpush1.bf16.msra.mxu0 0
  %1658 = vmatprep.subr.bf16.mxu0 0
  %1659 = vmatpush1.bf16.msra.mxu0 0
  %1660 = vmatprep.subr.bf16.mxu0 0
  %1661 = vmatpush1.bf16.msra.mxu0 0
  %1662 = vmatprep.mubr.bf16.mxu0 0
  %1663 = vmatmul.mubr.bf16.gmra.mrb[0].mxu0 %v1619
  %v1664 = vpop.f32.mrb[0].mxu0
  %v1665 = vadd.f32 %v1582, %v1664
  %v1666 = vpop.f32.mrb[0].mxu0
  %v1667 = vpop.f32.mrb[0].mxu0
  %v1668 = vadd.f32 %v1585, %v1667
  %v1669 = vpop.f32.mrb[0].mxu0
  %1670 = vmatprep.mubr.bf16.mxu0 0
  %1671 = vmatmul.mubr.bf16.gmra.mrb[0].mxu0 %v1622
  %v1672 = vpop.f32.mrb[0].mxu0
  %v1673 = vadd.f32 %v1590, %v1672
  %v1674 = vpop.f32.mrb[0].mxu0
  %v1675 = vpop.f32.mrb[0].mxu0
  %v1676 = vadd.f32 %v1593, %v1675
  %v1677 = vpop.f32.mrb[0].mxu0
  %1678 = vmatprep.mubr.bf16.mxu0 0
  %1679 = vmatmul.mubr.bf16.gmra.mrb[0].mxu0 %v1625
  %v1680 = vpop.f32.mrb[0].mxu0
  %v1681 = vadd.f32 %v1598, %v1680
  %v1682 = vpop.f32.mrb[0].mxu0
  %v1683 = vpop.f32.mrb[0].mxu0
  %v1684 = vadd.f32 %v1601, %v1683
  %v1685 = vpop.f32.mrb[0].mxu0
  %1686 = vmatprep.mubr.bf16.mxu0 0
  %1687 = vmatmul.mubr.bf16.gmra.mrb[0].mxu0 %v1628
  %v1688 = vpop.f32.mrb[0].mxu0
  %v1689 = vadd.f32 %v1606, %v1688
  %v1690 = vpop.f32.mrb[0].mxu0
  %v1691 = vpop.f32.mrb[0].mxu0
  %v1692 = vadd.f32 %v1609, %v1691
  %v1693 = vpop.f32.mrb[0].mxu0
  %1694 = vdwg.mxu0
  %s1695 = scalar_lea.vmem %s7, 64
  %v1696 = vld [vmem:[%s1695] sm:$0xf]
  %v1697 = vld [vmem:[%s1695 + $0x4] sm:$0xf]
  %v1698 = vld [vmem:[%s1695 + $0x8] sm:$0xf]
  %v1699 = vld [vmem:[%s1695 + $0xc] sm:$0xf]
  %v1700 = vld [vmem:[%s1695 + $0x10] sm:$0xf]
  %v1701 = vld [vmem:[%s1695 + $0x14] sm:$0xf]
  %v1702 = vld [vmem:[%s1695 + $0x18] sm:$0xf]
  %v1703 = vld [vmem:[%s1695 + $0x1c] sm:$0xf]
  %s1704 = scalar_lea.vmem %s8, 2
  %v1705 = vld [vmem:[%s1704] sm:$0x1]
  %v1707 = vlaneseq
  %v1708 = vshrl.u32 %v1707, 7
  %v1709 = vsub.s32 0, %v1708
  %v1710 = vrot.slane %v1705, %v1709
  %v1720 = vunpack.c.l.b16 %v1696
  %v1721 = vunpack.c.l.b16 %v1697
  %v1722 = vunpack.c.l.b16 %v1698
  %v1723 = vunpack.c.l.b16 %v1699
  %v1724 = vunpack.c.l.b16 %v1700
  %v1725 = vunpack.c.l.b16 %v1701
  %v1726 = vunpack.c.l.b16 %v1702
  %v1727 = vunpack.c.l.b16 %v1703
  %v1728 = vpack.c.b16 %v1721, %v1720
  %v1729 = vpack.c.b16 %v1723, %v1722
  %v1730 = vpack.c.b16 %v1725, %v1724
  %v1731 = vpack.c.b16 %v1727, %v1726
  %1736 = vmatprep.subr.bf16.mxu0 0
  %1737 = vmatpush1.bf16.msra.mxu0 %v1728
  %1738 = vmatprep.subr.bf16.mxu0 0
  %1739 = vmatpush1.bf16.msra.mxu0 %v1729
  %1740 = vmatprep.subr.bf16.mxu0 0
  %1741 = vmatpush1.bf16.msra.mxu0 %v1730
  %1742 = vmatprep.subr.bf16.mxu0 0
  %1743 = vmatpush1.bf16.msra.mxu0 %v1731
  %1744 = vmatprep.subr.bf16.mxu0 0
  %1745 = vmatpush1.bf16.msra.mxu0 0
  %1746 = vmatprep.subr.bf16.mxu0 0
  %1747 = vmatpush1.bf16.msra.mxu0 0
  %1748 = vmatprep.subr.bf16.mxu0 0
  %1749 = vmatpush1.bf16.msra.mxu0 0
  %1750 = vmatprep.subr.bf16.mxu0 0
  %1751 = vmatpush1.bf16.msra.mxu0 0
  %1752 = vmatprep.subr.bf16.mxu0 0
  %1753 = vmatpush1.bf16.msra.mxu0 0
  %1754 = vmatprep.subr.bf16.mxu0 0
  %1755 = vmatpush1.bf16.msra.mxu0 0
  %1756 = vmatprep.subr.bf16.mxu0 0
  %1757 = vmatpush1.bf16.msra.mxu0 0
  %1758 = vmatprep.subr.bf16.mxu0 0
  %1759 = vmatpush1.bf16.msra.mxu0 0
  %1760 = vmatprep.subr.bf16.mxu0 0
  %1761 = vmatpush1.bf16.msra.mxu0 0
  %1762 = vmatprep.subr.bf16.mxu0 0
  %1763 = vmatpush1.bf16.msra.mxu0 0
  %1764 = vmatprep.subr.bf16.mxu0 0
  %1765 = vmatpush1.bf16.msra.mxu0 0
  %1766 = vmatprep.subr.bf16.mxu0 0
  %1767 = vmatpush1.bf16.msra.mxu0 0
  %1768 = vmatprep.mubr.bf16.mxu0 0
  %1769 = vmatmul.mubr.bf16.gmra.mrb[0].mxu0 %v486
  %v1770 = vpop.f32.mrb[0].mxu0
  %v1771 = vadd.f32 %v1710, %v1770
  %v1772 = vpop.f32.mrb[0].mxu0
  %v1773 = vpop.f32.mrb[0].mxu0
  %v1774 = vadd.f32 %v1710, %v1773
  %v1775 = vpop.f32.mrb[0].mxu0
  %1776 = vmatprep.mubr.bf16.mxu0 0
  %1777 = vmatmul.mubr.bf16.gmra.mrb[0].mxu0 %v489
  %v1778 = vpop.f32.mrb[0].mxu0
  %v1779 = vadd.f32 %v1710, %v1778
  %v1780 = vpop.f32.mrb[0].mxu0
  %v1781 = vpop.f32.mrb[0].mxu0
  %v1782 = vadd.f32 %v1710, %v1781
  %v1783 = vpop.f32.mrb[0].mxu0
  %1784 = vmatprep.mubr.bf16.mxu0 0
  %1785 = vmatmul.mubr.bf16.gmra.mrb[0].mxu0 %v492
  %v1786 = vpop.f32.mrb[0].mxu0
  %v1787 = vadd.f32 %v1710, %v1786
  %v1788 = vpop.f32.mrb[0].mxu0
  %v1789 = vpop.f32.mrb[0].mxu0
  %v1790 = vadd.f32 %v1710, %v1789
  %v1791 = vpop.f32.mrb[0].mxu0
  %1792 = vmatprep.mubr.bf16.mxu0 0
  %1793 = vmatmul.mubr.bf16.gmra.mrb[0].mxu0 %v495
  %v1794 = vpop.f32.mrb[0].mxu0
  %v1795 = vadd.f32 %v1710, %v1794
  %v1796 = vpop.f32.mrb[0].mxu0
  %v1797 = vpop.f32.mrb[0].mxu0
  %v1798 = vadd.f32 %v1710, %v1797
  %v1799 = vpop.f32.mrb[0].mxu0
  %1800 = vdwg.mxu0
  %s1801 = scalar_lea.vmem %s9, 16
  %v1802 = vld [vmem:[%s1801] sm:$0xf]
  %v1803 = vld [vmem:[%s1801 + $0x4] sm:$0xf]
  %s1804 = scalar_lea.vmem %s10, 32
  %v1805 = vld [vmem:[%s1804] sm:$0xff]
  %v1806 = vld [vmem:[%s1804 + $0x8] sm:$0xff]
  %1808 = vset.pattern.permute.xlu0 0
  %1809 = vperm.xlu0 %1808, %v1805
  %v1810 = vpop.permute.xlu0 %1809
  %1813 = vset.pattern.permute.xlu0 0
  %1814 = vperm.xlu0 %1813, %v1806
  %v1815 = vpop.permute.xlu0 %1814
  %v1819 = vunpack.c.l.b16 %v1802
  %v1820 = vunpack.c.l.b16 %v1803
  %v1821 = vpack.c.b16 %v1820, %v1819
  %v1823 = vsel %vm261, %v1821, 0
  %1825 = vmatprep.subr.bf16.mxu0 0
  %1826 = vmatpush1.bf16.msra.mxu0 %v442
  %1827 = vmatprep.subr.bf16.mxu0 0
  %1828 = vmatpush1.bf16.msra.mxu0 %v443
  %1829 = vmatprep.subr.bf16.mxu0 0
  %1830 = vmatpush1.bf16.msra.mxu0 %v444
  %1831 = vmatprep.subr.bf16.mxu0 0
  %1832 = vmatpush1.bf16.msra.mxu0 %v445
  %1833 = vmatprep.subr.bf16.mxu0 0
  %1834 = vmatpush1.bf16.msra.mxu0 0
  %1835 = vmatprep.subr.bf16.mxu0 0
  %1836 = vmatpush1.bf16.msra.mxu0 0
  %1837 = vmatprep.subr.bf16.mxu0 0
  %1838 = vmatpush1.bf16.msra.mxu0 0
  %1839 = vmatprep.subr.bf16.mxu0 0
  %1840 = vmatpush1.bf16.msra.mxu0 0
  %1841 = vmatprep.subr.bf16.mxu0 0
  %1842 = vmatpush1.bf16.msra.mxu0 0
  %1843 = vmatprep.subr.bf16.mxu0 0
  %1844 = vmatpush1.bf16.msra.mxu0 0
  %1845 = vmatprep.subr.bf16.mxu0 0
  %1846 = vmatpush1.bf16.msra.mxu0 0
  %1847 = vmatprep.subr.bf16.mxu0 0
  %1848 = vmatpush1.bf16.msra.mxu0 0
  %1849 = vmatprep.subr.bf16.mxu0 0
  %1850 = vmatpush1.bf16.msra.mxu0 0
  %1851 = vmatprep.subr.bf16.mxu0 0
  %1852 = vmatpush1.bf16.msra.mxu0 0
  %1853 = vmatprep.subr.bf16.mxu0 0
  %1854 = vmatpush1.bf16.msra.mxu0 0
  %1855 = vmatprep.subr.bf16.mxu0 0
  %1856 = vmatpush1.bf16.msra.mxu0 0
  %1857 = vmatprep.mubr.bf16.mxu0 0
  %1858 = vmatmul.mubr.bf16.gmra.mrb[0].mxu0 %v1823
  %v1859 = vpop.f32.mrb[0].mxu0
  %v1860 = vadd.f32 %v1810, %v1859
  %v1861 = vpop.f32.mrb[0].mxu0
  %v1862 = vpop.f32.mrb[0].mxu0
  %v1863 = vadd.f32 %v1815, %v1862
  %v1864 = vpop.f32.mrb[0].mxu0
  %1865 = vdwg.mxu0
  %s1866 = scalar_lea.vmem %s11, 64
  %v1867 = vld [vmem:[%s1866] sm:$0xf]
  %v1868 = vld [vmem:[%s1866 + $0x4] sm:$0xf]
  %v1869 = vld [vmem:[%s1866 + $0x8] sm:$0xf]
  %v1870 = vld [vmem:[%s1866 + $0xc] sm:$0xf]
  %v1871 = vld [vmem:[%s1866 + $0x10] sm:$0xf]
  %v1872 = vld [vmem:[%s1866 + $0x14] sm:$0xf]
  %v1873 = vld [vmem:[%s1866 + $0x18] sm:$0xf]
  %v1874 = vld [vmem:[%s1866 + $0x1c] sm:$0xf]
  %s1875 = scalar_lea.vmem %s12, 2
  %v1876 = vld [vmem:[%s1875] sm:$0x1]
  %v1878 = vlaneseq
  %v1879 = vshrl.u32 %v1878, 7
  %v1880 = vsub.s32 0, %v1879
  %v1881 = vrot.slane %v1876, %v1880
  %v1891 = vunpack.c.l.b16 %v1867
  %v1892 = vunpack.c.l.b16 %v1868
  %v1893 = vunpack.c.l.b16 %v1869
  %v1894 = vunpack.c.l.b16 %v1870
  %v1895 = vunpack.c.l.b16 %v1871
  %v1896 = vunpack.c.l.b16 %v1872
  %v1897 = vunpack.c.l.b16 %v1873
  %v1898 = vunpack.c.l.b16 %v1874
  %v1899 = vpack.c.b16 %v1892, %v1891
  %v1900 = vpack.c.b16 %v1894, %v1893
  %v1901 = vpack.c.b16 %v1896, %v1895
  %v1902 = vpack.c.b16 %v1898, %v1897
  %1907 = vmatprep.subr.bf16.mxu0 0
  %1908 = vmatpush1.bf16.msra.mxu0 %v1899
  %1909 = vmatprep.subr.bf16.mxu0 0
  %1910 = vmatpush1.bf16.msra.mxu0 %v1900
  %1911 = vmatprep.subr.bf16.mxu0 0
  %1912 = vmatpush1.bf16.msra.mxu0 %v1901
  %1913 = vmatprep.subr.bf16.mxu0 0
  %1914 = vmatpush1.bf16.msra.mxu0 %v1902
  %1915 = vmatprep.subr.bf16.mxu0 0
  %1916 = vmatpush1.bf16.msra.mxu0 0
  %1917 = vmatprep.subr.bf16.mxu0 0
  %1918 = vmatpush1.bf16.msra.mxu0 0
  %1919 = vmatprep.subr.bf16.mxu0 0
  %1920 = vmatpush1.bf16.msra.mxu0 0
  %1921 = vmatprep.subr.bf16.mxu0 0
  %1922 = vmatpush1.bf16.msra.mxu0 0
  %1923 = vmatprep.subr.bf16.mxu0 0
  %1924 = vmatpush1.bf16.msra.mxu0 0
  %1925 = vmatprep.subr.bf16.mxu0 0
  %1926 = vmatpush1.bf16.msra.mxu0 0
  %1927 = vmatprep.subr.bf16.mxu0 0
  %1928 = vmatpush1.bf16.msra.mxu0 0
  %1929 = vmatprep.subr.bf16.mxu0 0
  %1930 = vmatpush1.bf16.msra.mxu0 0
  %1931 = vmatprep.subr.bf16.mxu0 0
  %1932 = vmatpush1.bf16.msra.mxu0 0
  %1933 = vmatprep.subr.bf16.mxu0 0
  %1934 = vmatpush1.bf16.msra.mxu0 0
  %1935 = vmatprep.subr.bf16.mxu0 0
  %1936 = vmatpush1.bf16.msra.mxu0 0
  %1937 = vmatprep.subr.bf16.mxu0 0
  %1938 = vmatpush1.bf16.msra.mxu0 0
  %1939 = vmatprep.mubr.bf16.mxu0 0
  %1940 = vmatmul.mubr.bf16.gmra.mrb[0].mxu0 %v486
  %v1941 = vpop.f32.mrb[0].mxu0
  %v1942 = vadd.f32 %v1881, %v1941
  %v1943 = vpop.f32.mrb[0].mxu0
  %v1944 = vpop.f32.mrb[0].mxu0
  %v1945 = vadd.f32 %v1881, %v1944
  %v1946 = vpop.f32.mrb[0].mxu0
  %1947 = vmatprep.mubr.bf16.mxu0 0
  %1948 = vmatmul.mubr.bf16.gmra.mrb[0].mxu0 %v489
  %v1949 = vpop.f32.mrb[0].mxu0
  %v1950 = vadd.f32 %v1881, %v1949
  %v1951 = vpop.f32.mrb[0].mxu0
  %v1952 = vpop.f32.mrb[0].mxu0
  %v1953 = vadd.f32 %v1881, %v1952
  %v1954 = vpop.f32.mrb[0].mxu0
  %1955 = vmatprep.mubr.bf16.mxu0 0
  %1956 = vmatmul.mubr.bf16.gmra.mrb[0].mxu0 %v492
  %v1957 = vpop.f32.mrb[0].mxu0
  %v1958 = vadd.f32 %v1881, %v1957
  %v1959 = vpop.f32.mrb[0].mxu0
  %v1960 = vpop.f32.mrb[0].mxu0
  %v1961 = vadd.f32 %v1881, %v1960
  %v1962 = vpop.f32.mrb[0].mxu0
  %1963 = vmatprep.mubr.bf16.mxu0 0
  %1964 = vmatmul.mubr.bf16.gmra.mrb[0].mxu0 %v495
  %v1965 = vpop.f32.mrb[0].mxu0
  %v1966 = vadd.f32 %v1881, %v1965
  %v1967 = vpop.f32.mrb[0].mxu0
  %v1968 = vpop.f32.mrb[0].mxu0
  %v1969 = vadd.f32 %v1881, %v1968
  %v1970 = vpop.f32.mrb[0].mxu0
  %1971 = vdwg.mxu0
  %v1972 = vpack.c.bf16 %v1774, %v1771
  %v1973 = vpack.c.bf16 %v1782, %v1779
  %v1974 = vpack.c.bf16 %v1790, %v1787
  %v1975 = vpack.c.bf16 %v1798, %v1795
  %v1976 = vpack.c.bf16 %v1863, %v1860
  %v1978 = vsel %vm183, %v1972, 0
  %v1981 = vsel %vm183, %v1973, 0
  %v1984 = vsel %vm183, %v1974, 0
  %v1987 = vsel %vm183, %v1975, 0
  %1989 = vmatprep.subr.bf16.mxu0 0
  %1990 = vmatpush1.bf16.msra.mxu0 %v1976
  %1991 = vmatprep.subr.bf16.mxu0 0
  %1992 = vmatpush1.bf16.msra.mxu0 0
  %1993 = vmatprep.subr.bf16.mxu0 0
  %1994 = vmatpush1.bf16.msra.mxu0 0
  %1995 = vmatprep.subr.bf16.mxu0 0
  %1996 = vmatpush1.bf16.msra.mxu0 0
  %1997 = vmatprep.subr.bf16.mxu0 0
  %1998 = vmatpush1.bf16.msra.mxu0 0
  %1999 = vmatprep.subr.bf16.mxu0 0
  %2000 = vmatpush1.bf16.msra.mxu0 0
  %2001 = vmatprep.subr.bf16.mxu0 0
  %2002 = vmatpush1.bf16.msra.mxu0 0
  %2003 = vmatprep.subr.bf16.mxu0 0
  %2004 = vmatpush1.bf16.msra.mxu0 0
  %2005 = vmatprep.subr.bf16.mxu0 0
  %2006 = vmatpush1.bf16.msra.mxu0 0
  %2007 = vmatprep.subr.bf16.mxu0 0
  %2008 = vmatpush1.bf16.msra.mxu0 0
  %2009 = vmatprep.subr.bf16.mxu0 0
  %2010 = vmatpush1.bf16.msra.mxu0 0
  %2011 = vmatprep.subr.bf16.mxu0 0
  %2012 = vmatpush1.bf16.msra.mxu0 0
  %2013 = vmatprep.subr.bf16.mxu0 0
  %2014 = vmatpush1.bf16.msra.mxu0 0
  %2015 = vmatprep.subr.bf16.mxu0 0
  %2016 = vmatpush1.bf16.msra.mxu0 0
  %2017 = vmatprep.subr.bf16.mxu0 0
  %2018 = vmatpush1.bf16.msra.mxu0 0
  %2019 = vmatprep.subr.bf16.mxu0 0
  %2020 = vmatpush1.bf16.msra.mxu0 0
  %2021 = vmatprep.mubr.bf16.mxu0 0
  %2022 = vmatmul.mubr.bf16.gmra.mrb[0].mxu0 %v1978
  %v2023 = vpop.f32.mrb[0].mxu0
  %v2024 = vadd.f32 0.0, %v2023
  %v2025 = vpop.f32.mrb[0].mxu0
  %v2026 = vpop.f32.mrb[0].mxu0
  %v2027 = vadd.f32 0.0, %v2026
  %v2028 = vpop.f32.mrb[0].mxu0
  %2029 = vmatprep.mubr.bf16.mxu0 0
  %2030 = vmatmul.mubr.bf16.gmra.mrb[0].mxu0 %v1981
  %v2031 = vpop.f32.mrb[0].mxu0
  %v2032 = vadd.f32 0.0, %v2031
  %v2033 = vpop.f32.mrb[0].mxu0
  %v2034 = vpop.f32.mrb[0].mxu0
  %v2035 = vadd.f32 0.0, %v2034
  %v2036 = vpop.f32.mrb[0].mxu0
  %2037 = vmatprep.mubr.bf16.mxu0 0
  %2038 = vmatmul.mubr.bf16.gmra.mrb[0].mxu0 %v1984
  %v2039 = vpop.f32.mrb[0].mxu0
  %v2040 = vadd.f32 0.0, %v2039
  %v2041 = vpop.f32.mrb[0].mxu0
  %v2042 = vpop.f32.mrb[0].mxu0
  %v2043 = vadd.f32 0.0, %v2042
  %v2044 = vpop.f32.mrb[0].mxu0
  %2045 = vmatprep.mubr.bf16.mxu0 0
  %2046 = vmatmul.mubr.bf16.gmra.mrb[0].mxu0 %v1987
  %v2047 = vpop.f32.mrb[0].mxu0
  %v2048 = vadd.f32 0.0, %v2047
  %v2049 = vpop.f32.mrb[0].mxu0
  %v2050 = vpop.f32.mrb[0].mxu0
  %v2051 = vadd.f32 0.0, %v2050
  %v2052 = vpop.f32.mrb[0].mxu0
  %2053 = vdwg.mxu0
  %v2054 = vsel %vm261, %v2024, -inf
  %2055 = vmax.xlane.f32.xlu0 %v2054
  %v2056 = vpop.xlane.xlu0 %2055
  %v2057 = vsel %vm261, %v2027, -inf
  %2058 = vmax.xlane.f32.xlu0 %v2057
  %v2059 = vpop.xlane.xlu0 %2058
  %v2060 = vsel %vm261, %v2032, -inf
  %2061 = vmax.xlane.f32.xlu0 %v2060
  %v2062 = vpop.xlane.xlu0 %2061
  %v2063 = vsel %vm261, %v2035, -inf
  %2064 = vmax.xlane.f32.xlu0 %v2063
  %v2065 = vpop.xlane.xlu0 %2064
  %v2066 = vsel %vm261, %v2040, -inf
  %2067 = vmax.xlane.f32.xlu0 %v2066
  %v2068 = vpop.xlane.xlu0 %2067
  %v2069 = vsel %vm261, %v2043, -inf
  %2070 = vmax.xlane.f32.xlu0 %v2069
  %v2071 = vpop.xlane.xlu0 %2070
  %v2072 = vsel %vm261, %v2048, -inf
  %2073 = vmax.xlane.f32.xlu0 %v2072
  %v2074 = vpop.xlane.xlu0 %2073
  %v2075 = vsel %vm261, %v2051, -inf
  %2076 = vmax.xlane.f32.xlu0 %v2075
  %v2077 = vpop.xlane.xlu0 %2076
  %v2078 = vsub.f32 %v2024, %v2056
  %v2079 = vsub.f32 %v2027, %v2059
  %v2080 = vsub.f32 %v2032, %v2062
  %v2081 = vsub.f32 %v2035, %v2065
  %v2082 = vsub.f32 %v2040, %v2068
  %v2083 = vsub.f32 %v2043, %v2071
  %v2084 = vsub.f32 %v2048, %v2074
  %v2085 = vsub.f32 %v2051, %v2077
  %v2086 = vmul.f32 %v2078, 1.442695
  %v2087 = vpow.pop %v2086
  %v2088 = vmul.f32 %v2079, 1.442695
  %v2089 = vpow.pop %v2088
  %v2090 = vmul.f32 %v2080, 1.442695
  %v2091 = vpow.pop %v2090
  %v2092 = vmul.f32 %v2081, 1.442695
  %v2093 = vpow.pop %v2092
  %v2094 = vmul.f32 %v2082, 1.442695
  %v2095 = vpow.pop %v2094
  %v2096 = vmul.f32 %v2083, 1.442695
  %v2097 = vpow.pop %v2096
  %v2098 = vmul.f32 %v2084, 1.442695
  %v2099 = vpow.pop %v2098
  %v2100 = vmul.f32 %v2085, 1.442695
  %v2101 = vpow.pop %v2100
  %v2102 = vsel %vm261, %v2087, 0.0
  %2103 = vadd.xlane.f32.xlu0 %v2102
  %v2104 = vpop.xlane.xlu0 %2103
  %v2105 = vsel %vm261, %v2089, 0.0
  %2106 = vadd.xlane.f32.xlu0 %v2105
  %v2107 = vpop.xlane.xlu0 %2106
  %v2108 = vsel %vm261, %v2091, 0.0
  %2109 = vadd.xlane.f32.xlu0 %v2108
  %v2110 = vpop.xlane.xlu0 %2109
  %v2111 = vsel %vm261, %v2093, 0.0
  %2112 = vadd.xlane.f32.xlu0 %v2111
  %v2113 = vpop.xlane.xlu0 %2112
  %v2114 = vsel %vm261, %v2095, 0.0
  %2115 = vadd.xlane.f32.xlu0 %v2114
  %v2116 = vpop.xlane.xlu0 %2115
  %v2117 = vsel %vm261, %v2097, 0.0
  %2118 = vadd.xlane.f32.xlu0 %v2117
  %v2119 = vpop.xlane.xlu0 %2118
  %v2120 = vsel %vm261, %v2099, 0.0
  %2121 = vadd.xlane.f32.xlu0 %v2120
  %v2122 = vpop.xlane.xlu0 %2121
  %v2123 = vsel %vm261, %v2101, 0.0
  %2124 = vadd.xlane.f32.xlu0 %v2123
  %v2125 = vpop.xlane.xlu0 %2124
  %v2126 = vrcp.pop %v2104
  %v2127 = vrcp.pop %v2107
  %v2128 = vrcp.pop %v2110
  %v2129 = vrcp.pop %v2113
  %v2130 = vrcp.pop %v2116
  %v2131 = vrcp.pop %v2119
  %v2132 = vrcp.pop %v2122
  %v2133 = vrcp.pop %v2125
  %v2134 = vmul.f32 %v2087, %v2126
  %v2135 = vmul.f32 %v2089, %v2127
  %v2136 = vmul.f32 %v2091, %v2128
  %v2137 = vmul.f32 %v2093, %v2129
  %v2138 = vmul.f32 %v2095, %v2130
  %v2139 = vmul.f32 %v2097, %v2131
  %v2140 = vmul.f32 %v2099, %v2132
  %v2141 = vmul.f32 %v2101, %v2133
  %v2142 = vpack.c.bf16 %v2135, %v2134
  %v2143 = vpack.c.bf16 %v2137, %v2136
  %v2144 = vpack.c.bf16 %v2139, %v2138
  %v2145 = vpack.c.bf16 %v2141, %v2140
  %v2146 = vpack.c.bf16 %v1945, %v1942
  %v2147 = vpack.c.bf16 %v1953, %v1950
  %v2148 = vpack.c.bf16 %v1961, %v1958
  %v2149 = vpack.c.bf16 %v1969, %v1966
  %v2151 = vsel %vm261, %v2142, 0
  %v2154 = vsel %vm261, %v2143, 0
  %v2157 = vsel %vm261, %v2144, 0
  %v2160 = vsel %vm261, %v2145, 0
  %2162 = vmatprep.subr.bf16.mxu0 0
  %2163 = vmatpush1.bf16.msra.mxu0 %v2146
  %2164 = vmatprep.subr.bf16.mxu0 0
  %2165 = vmatpush1.bf16.msra.mxu0 %v2147
  %2166 = vmatprep.subr.bf16.mxu0 0
  %2167 = vmatpush1.bf16.msra.mxu0 %v2148
  %2168 = vmatprep.subr.bf16.mxu0 0
  %2169 = vmatpush1.bf16.msra.mxu0 %v2149
  %2170 = vmatprep.subr.bf16.mxu0 0
  %2171 = vmatpush1.bf16.msra.mxu0 0
  %2172 = vmatprep.subr.bf16.mxu0 0
  %2173 = vmatpush1.bf16.msra.mxu0 0
  %2174 = vmatprep.subr.bf16.mxu0 0
  %2175 = vmatpush1.bf16.msra.mxu0 0
  %2176 = vmatprep.subr.bf16.mxu0 0
  %2177 = vmatpush1.bf16.msra.mxu0 0
  %2178 = vmatprep.subr.bf16.mxu0 0
  %2179 = vmatpush1.bf16.msra.mxu0 0
  %2180 = vmatprep.subr.bf16.mxu0 0
  %2181 = vmatpush1.bf16.msra.mxu0 0
  %2182 = vmatprep.subr.bf16.mxu0 0
  %2183 = vmatpush1.bf16.msra.mxu0 0
  %2184 = vmatprep.subr.bf16.mxu0 0
  %2185 = vmatpush1.bf16.msra.mxu0 0
  %2186 = vmatprep.subr.bf16.mxu0 0
  %2187 = vmatpush1.bf16.msra.mxu0 0
  %2188 = vmatprep.subr.bf16.mxu0 0
  %2189 = vmatpush1.bf16.msra.mxu0 0
  %2190 = vmatprep.subr.bf16.mxu0 0
  %2191 = vmatpush1.bf16.msra.mxu0 0
  %2192 = vmatprep.subr.bf16.mxu0 0
  %2193 = vmatpush1.bf16.msra.mxu0 0
  %2194 = vmatprep.mubr.bf16.mxu0 0
  %2195 = vmatmul.mubr.bf16.gmra.mrb[0].mxu0 %v2151
  %v2196 = vpop.f32.mrb[0].mxu0
  %v2197 = vadd.f32 0.0, %v2196
  %v2198 = vpop.f32.mrb[0].mxu0
  %v2199 = vpop.f32.mrb[0].mxu0
  %v2200 = vadd.f32 0.0, %v2199
  %v2201 = vpop.f32.mrb[0].mxu0
  %2202 = vmatprep.mubr.bf16.mxu0 0
  %2203 = vmatmul.mubr.bf16.gmra.mrb[0].mxu0 %v2154
  %v2204 = vpop.f32.mrb[0].mxu0
  %v2205 = vadd.f32 0.0, %v2204
  %v2206 = vpop.f32.mrb[0].mxu0
  %v2207 = vpop.f32.mrb[0].mxu0
  %v2208 = vadd.f32 0.0, %v2207
  %v2209 = vpop.f32.mrb[0].mxu0
  %2210 = vmatprep.mubr.bf16.mxu0 0
  %2211 = vmatmul.mubr.bf16.gmra.mrb[0].mxu0 %v2157
  %v2212 = vpop.f32.mrb[0].mxu0
  %v2213 = vadd.f32 0.0, %v2212
  %v2214 = vpop.f32.mrb[0].mxu0
  %v2215 = vpop.f32.mrb[0].mxu0
  %v2216 = vadd.f32 0.0, %v2215
  %v2217 = vpop.f32.mrb[0].mxu0
  %2218 = vmatprep.mubr.bf16.mxu0 0
  %2219 = vmatmul.mubr.bf16.gmra.mrb[0].mxu0 %v2160
  %v2220 = vpop.f32.mrb[0].mxu0
  %v2221 = vadd.f32 0.0, %v2220
  %v2222 = vpop.f32.mrb[0].mxu0
  %v2223 = vpop.f32.mrb[0].mxu0
  %v2224 = vadd.f32 0.0, %v2223
  %v2225 = vpop.f32.mrb[0].mxu0
  %2226 = vdwg.mxu0
  %v2227 = vpack.c.bf16 %v2200, %v2197
  %v2228 = vpack.c.bf16 %v2208, %v2205
  %v2229 = vpack.c.bf16 %v2216, %v2213
  %v2230 = vpack.c.bf16 %v2224, %v2221
  %s2231 = scalar_lea.vmem %s13, 16
  %v2232 = vld [vmem:[%s2231] sm:$0xf]
  %v2233 = vld [vmem:[%s2231 + $0x4] sm:$0xf]
  %v2236 = vunpack.c.l.b16 %v2232
  %v2237 = vunpack.c.l.b16 %v2233
  %v2238 = vpack.c.b16 %v2237, %v2236
  %v2241 = vsel %vm183, %v2227, 0
  %v2244 = vsel %vm183, %v2228, 0
  %v2247 = vsel %vm183, %v2229, 0
  %v2250 = vsel %vm183, %v2230, 0
  %2252 = vmatprep.subr.bf16.mxu0 0
  %2253 = vmatpush1.bf16.msra.mxu0 %v2238
  %2254 = vmatprep.subr.bf16.mxu0 0
  %2255 = vmatpush1.bf16.msra.mxu0 0
  %2256 = vmatprep.subr.bf16.mxu0 0
  %2257 = vmatpush1.bf16.msra.mxu0 0
  %2258 = vmatprep.subr.bf16.mxu0 0
  %2259 = vmatpush1.bf16.msra.mxu0 0
  %2260 = vmatprep.subr.bf16.mxu0 0
  %2261 = vmatpush1.bf16.msra.mxu0 0
  %2262 = vmatprep.subr.bf16.mxu0 0
  %2263 = vmatpush1.bf16.msra.mxu0 0
  %2264 = vmatprep.subr.bf16.mxu0 0
  %2265 = vmatpush1.bf16.msra.mxu0 0
  %2266 = vmatprep.subr.bf16.mxu0 0
  %2267 = vmatpush1.bf16.msra.mxu0 0
  %2268 = vmatprep.subr.bf16.mxu0 0
  %2269 = vmatpush1.bf16.msra.mxu0 0
  %2270 = vmatprep.subr.bf16.mxu0 0
  %2271 = vmatpush1.bf16.msra.mxu0 0
  %2272 = vmatprep.subr.bf16.mxu0 0
  %2273 = vmatpush1.bf16.msra.mxu0 0
  %2274 = vmatprep.subr.bf16.mxu0 0
  %2275 = vmatpush1.bf16.msra.mxu0 0
  %2276 = vmatprep.subr.bf16.mxu0 0
  %2277 = vmatpush1.bf16.msra.mxu0 0
  %2278 = vmatprep.subr.bf16.mxu0 0
  %2279 = vmatpush1.bf16.msra.mxu0 0
  %2280 = vmatprep.subr.bf16.mxu0 0
  %2281 = vmatpush1.bf16.msra.mxu0 0
  %2282 = vmatprep.subr.bf16.mxu0 0
  %2283 = vmatpush1.bf16.msra.mxu0 0
  %2284 = vmatprep.mubr.bf16.mxu0 0
  %2285 = vmatmul.mubr.bf16.gmra.mrb[0].mxu0 %v2241
  %v2286 = vpop.f32.mrb[0].mxu0
  %v2287 = vadd.f32 0.0, %v2286
  %v2288 = vpop.f32.mrb[0].mxu0
  %v2289 = vpop.f32.mrb[0].mxu0
  %v2290 = vadd.f32 0.0, %v2289
  %v2291 = vpop.f32.mrb[0].mxu0
  %2292 = vmatprep.mubr.bf16.mxu0 0
  %2293 = vmatmul.mubr.bf16.gmra.mrb[0].mxu0 %v2244
  %v2294 = vpop.f32.mrb[0].mxu0
  %v2295 = vadd.f32 0.0, %v2294
  %v2296 = vpop.f32.mrb[0].mxu0
  %v2297 = vpop.f32.mrb[0].mxu0
  %v2298 = vadd.f32 0.0, %v2297
  %v2299 = vpop.f32.mrb[0].mxu0
  %2300 = vmatprep.mubr.bf16.mxu0 0
  %2301 = vmatmul.mubr.bf16.gmra.mrb[0].mxu0 %v2247
  %v2302 = vpop.f32.mrb[0].mxu0
  %v2303 = vadd.f32 0.0, %v2302
  %v2304 = vpop.f32.mrb[0].mxu0
  %v2305 = vpop.f32.mrb[0].mxu0
  %v2306 = vadd.f32 0.0, %v2305
  %v2307 = vpop.f32.mrb[0].mxu0
  %2308 = vmatprep.mubr.bf16.mxu0 0
  %2309 = vmatmul.mubr.bf16.gmra.mrb[0].mxu0 %v2250
  %v2310 = vpop.f32.mrb[0].mxu0
  %v2311 = vadd.f32 0.0, %v2310
  %v2312 = vpop.f32.mrb[0].mxu0
  %v2313 = vpop.f32.mrb[0].mxu0
  %v2314 = vadd.f32 0.0, %v2313
  %v2315 = vpop.f32.mrb[0].mxu0
  %2316 = vdwg.mxu0
  %v2317 = vadd.f32 %v1665, %v2287
  %v2318 = vadd.f32 %v1668, %v2290
  %v2319 = vadd.f32 %v1673, %v2295
  %v2320 = vadd.f32 %v1676, %v2298
  %v2321 = vadd.f32 %v1681, %v2303
  %v2322 = vadd.f32 %v1684, %v2306
  %v2323 = vadd.f32 %v1689, %v2311
  %v2324 = vadd.f32 %v1692, %v2314
  %s2325 = scalar_lea.vmem %s7, 96
  %v2326 = vld [vmem:[%s2325] sm:$0xf]
  %v2327 = vld [vmem:[%s2325 + $0x4] sm:$0xf]
  %v2328 = vld [vmem:[%s2325 + $0x8] sm:$0xf]
  %v2329 = vld [vmem:[%s2325 + $0xc] sm:$0xf]
  %v2330 = vld [vmem:[%s2325 + $0x10] sm:$0xf]
  %v2331 = vld [vmem:[%s2325 + $0x14] sm:$0xf]
  %v2332 = vld [vmem:[%s2325 + $0x18] sm:$0xf]
  %v2333 = vld [vmem:[%s2325 + $0x1c] sm:$0xf]
  %s2334 = scalar_lea.vmem %s8, 3
  %v2335 = vld [vmem:[%s2334] sm:$0x1]
  %v2337 = vlaneseq
  %v2338 = vshrl.u32 %v2337, 7
  %v2339 = vsub.s32 0, %v2338
  %v2340 = vrot.slane %v2335, %v2339
  %v2350 = vunpack.c.l.b16 %v2326
  %v2351 = vunpack.c.l.b16 %v2327
  %v2352 = vunpack.c.l.b16 %v2328
  %v2353 = vunpack.c.l.b16 %v2329
  %v2354 = vunpack.c.l.b16 %v2330
  %v2355 = vunpack.c.l.b16 %v2331
  %v2356 = vunpack.c.l.b16 %v2332
  %v2357 = vunpack.c.l.b16 %v2333
  %v2358 = vpack.c.b16 %v2351, %v2350
  %v2359 = vpack.c.b16 %v2353, %v2352
  %v2360 = vpack.c.b16 %v2355, %v2354
  %v2361 = vpack.c.b16 %v2357, %v2356
  %2366 = vmatprep.subr.bf16.mxu0 0
  %2367 = vmatpush1.bf16.msra.mxu0 %v2358
  %2368 = vmatprep.subr.bf16.mxu0 0
  %2369 = vmatpush1.bf16.msra.mxu0 %v2359
  %2370 = vmatprep.subr.bf16.mxu0 0
  %2371 = vmatpush1.bf16.msra.mxu0 %v2360
  %2372 = vmatprep.subr.bf16.mxu0 0
  %2373 = vmatpush1.bf16.msra.mxu0 %v2361
  %2374 = vmatprep.subr.bf16.mxu0 0
  %2375 = vmatpush1.bf16.msra.mxu0 0
  %2376 = vmatprep.subr.bf16.mxu0 0
  %2377 = vmatpush1.bf16.msra.mxu0 0
  %2378 = vmatprep.subr.bf16.mxu0 0
  %2379 = vmatpush1.bf16.msra.mxu0 0
  %2380 = vmatprep.subr.bf16.mxu0 0
  %2381 = vmatpush1.bf16.msra.mxu0 0
  %2382 = vmatprep.subr.bf16.mxu0 0
  %2383 = vmatpush1.bf16.msra.mxu0 0
  %2384 = vmatprep.subr.bf16.mxu0 0
  %2385 = vmatpush1.bf16.msra.mxu0 0
  %2386 = vmatprep.subr.bf16.mxu0 0
  %2387 = vmatpush1.bf16.msra.mxu0 0
  %2388 = vmatprep.subr.bf16.mxu0 0
  %2389 = vmatpush1.bf16.msra.mxu0 0
  %2390 = vmatprep.subr.bf16.mxu0 0
  %2391 = vmatpush1.bf16.msra.mxu0 0
  %2392 = vmatprep.subr.bf16.mxu0 0
  %2393 = vmatpush1.bf16.msra.mxu0 0
  %2394 = vmatprep.subr.bf16.mxu0 0
  %2395 = vmatpush1.bf16.msra.mxu0 0
  %2396 = vmatprep.subr.bf16.mxu0 0
  %2397 = vmatpush1.bf16.msra.mxu0 0
  %2398 = vmatprep.mubr.bf16.mxu0 0
  %2399 = vmatmul.mubr.bf16.gmra.mrb[0].mxu0 %v486
  %v2400 = vpop.f32.mrb[0].mxu0
  %v2401 = vadd.f32 %v2340, %v2400
  %v2402 = vpop.f32.mrb[0].mxu0
  %v2403 = vpop.f32.mrb[0].mxu0
  %v2404 = vadd.f32 %v2340, %v2403
  %v2405 = vpop.f32.mrb[0].mxu0
  %2406 = vmatprep.mubr.bf16.mxu0 0
  %2407 = vmatmul.mubr.bf16.gmra.mrb[0].mxu0 %v489
  %v2408 = vpop.f32.mrb[0].mxu0
  %v2409 = vadd.f32 %v2340, %v2408
  %v2410 = vpop.f32.mrb[0].mxu0
  %v2411 = vpop.f32.mrb[0].mxu0
  %v2412 = vadd.f32 %v2340, %v2411
  %v2413 = vpop.f32.mrb[0].mxu0
  %2414 = vmatprep.mubr.bf16.mxu0 0
  %2415 = vmatmul.mubr.bf16.gmra.mrb[0].mxu0 %v492
  %v2416 = vpop.f32.mrb[0].mxu0
  %v2417 = vadd.f32 %v2340, %v2416
  %v2418 = vpop.f32.mrb[0].mxu0
  %v2419 = vpop.f32.mrb[0].mxu0
  %v2420 = vadd.f32 %v2340, %v2419
  %v2421 = vpop.f32.mrb[0].mxu0
  %2422 = vmatprep.mubr.bf16.mxu0 0
  %2423 = vmatmul.mubr.bf16.gmra.mrb[0].mxu0 %v495
  %v2424 = vpop.f32.mrb[0].mxu0
  %v2425 = vadd.f32 %v2340, %v2424
  %v2426 = vpop.f32.mrb[0].mxu0
  %v2427 = vpop.f32.mrb[0].mxu0
  %v2428 = vadd.f32 %v2340, %v2427
  %v2429 = vpop.f32.mrb[0].mxu0
  %2430 = vdwg.mxu0
  %s2431 = scalar_lea.vmem %s9, 24
  %v2432 = vld [vmem:[%s2431] sm:$0xf]
  %v2433 = vld [vmem:[%s2431 + $0x4] sm:$0xf]
  %s2434 = scalar_lea.vmem %s10, 48
  %v2435 = vld [vmem:[%s2434] sm:$0xff]
  %v2436 = vld [vmem:[%s2434 + $0x8] sm:$0xff]
  %2438 = vset.pattern.permute.xlu0 0
  %2439 = vperm.xlu0 %2438, %v2435
  %v2440 = vpop.permute.xlu0 %2439
  %2443 = vset.pattern.permute.xlu0 0
  %2444 = vperm.xlu0 %2443, %v2436
  %v2445 = vpop.permute.xlu0 %2444
  %v2449 = vunpack.c.l.b16 %v2432
  %v2450 = vunpack.c.l.b16 %v2433
  %v2451 = vpack.c.b16 %v2450, %v2449
  %v2453 = vsel %vm261, %v2451, 0
  %2455 = vmatprep.subr.bf16.mxu0 0
  %2456 = vmatpush1.bf16.msra.mxu0 %v442
  %2457 = vmatprep.subr.bf16.mxu0 0
  %2458 = vmatpush1.bf16.msra.mxu0 %v443
  %2459 = vmatprep.subr.bf16.mxu0 0
  %2460 = vmatpush1.bf16.msra.mxu0 %v444
  %2461 = vmatprep.subr.bf16.mxu0 0
  %2462 = vmatpush1.bf16.msra.mxu0 %v445
  %2463 = vmatprep.subr.bf16.mxu0 0
  %2464 = vmatpush1.bf16.msra.mxu0 0
  %2465 = vmatprep.subr.bf16.mxu0 0
  %2466 = vmatpush1.bf16.msra.mxu0 0
  %2467 = vmatprep.subr.bf16.mxu0 0
  %2468 = vmatpush1.bf16.msra.mxu0 0
  %2469 = vmatprep.subr.bf16.mxu0 0
  %2470 = vmatpush1.bf16.msra.mxu0 0
  %2471 = vmatprep.subr.bf16.mxu0 0
  %2472 = vmatpush1.bf16.msra.mxu0 0
  %2473 = vmatprep.subr.bf16.mxu0 0
  %2474 = vmatpush1.bf16.msra.mxu0 0
  %2475 = vmatprep.subr.bf16.mxu0 0
  %2476 = vmatpush1.bf16.msra.mxu0 0
  %2477 = vmatprep.subr.bf16.mxu0 0
  %2478 = vmatpush1.bf16.msra.mxu0 0
  %2479 = vmatprep.subr.bf16.mxu0 0
  %2480 = vmatpush1.bf16.msra.mxu0 0
  %2481 = vmatprep.subr.bf16.mxu0 0
  %2482 = vmatpush1.bf16.msra.mxu0 0
  %2483 = vmatprep.subr.bf16.mxu0 0
  %2484 = vmatpush1.bf16.msra.mxu0 0
  %2485 = vmatprep.subr.bf16.mxu0 0
  %2486 = vmatpush1.bf16.msra.mxu0 0
  %2487 = vmatprep.mubr.bf16.mxu0 0
  %2488 = vmatmul.mubr.bf16.gmra.mrb[0].mxu0 %v2453
  %v2489 = vpop.f32.mrb[0].mxu0
  %v2490 = vadd.f32 %v2440, %v2489
  %v2491 = vpop.f32.mrb[0].mxu0
  %v2492 = vpop.f32.mrb[0].mxu0
  %v2493 = vadd.f32 %v2445, %v2492
  %v2494 = vpop.f32.mrb[0].mxu0
  %2495 = vdwg.mxu0
  %s2496 = scalar_lea.vmem %s11, 96
  %v2497 = vld [vmem:[%s2496] sm:$0xf]
  %v2498 = vld [vmem:[%s2496 + $0x4] sm:$0xf]
  %v2499 = vld [vmem:[%s2496 + $0x8] sm:$0xf]
  %v2500 = vld [vmem:[%s2496 + $0xc] sm:$0xf]
  %v2501 = vld [vmem:[%s2496 + $0x10] sm:$0xf]
  %v2502 = vld [vmem:[%s2496 + $0x14] sm:$0xf]
  %v2503 = vld [vmem:[%s2496 + $0x18] sm:$0xf]
  %v2504 = vld [vmem:[%s2496 + $0x1c] sm:$0xf]
  %s2505 = scalar_lea.vmem %s12, 3
  %v2506 = vld [vmem:[%s2505] sm:$0x1]
  %v2508 = vlaneseq
  %v2509 = vshrl.u32 %v2508, 7
  %v2510 = vsub.s32 0, %v2509
  %v2511 = vrot.slane %v2506, %v2510
  %v2521 = vunpack.c.l.b16 %v2497
  %v2522 = vunpack.c.l.b16 %v2498
  %v2523 = vunpack.c.l.b16 %v2499
  %v2524 = vunpack.c.l.b16 %v2500
  %v2525 = vunpack.c.l.b16 %v2501
  %v2526 = vunpack.c.l.b16 %v2502
  %v2527 = vunpack.c.l.b16 %v2503
  %v2528 = vunpack.c.l.b16 %v2504
  %v2529 = vpack.c.b16 %v2522, %v2521
  %v2530 = vpack.c.b16 %v2524, %v2523
  %v2531 = vpack.c.b16 %v2526, %v2525
  %v2532 = vpack.c.b16 %v2528, %v2527
  %2537 = vmatprep.subr.bf16.mxu0 0
  %2538 = vmatpush1.bf16.msra.mxu0 %v2529
  %2539 = vmatprep.subr.bf16.mxu0 0
  %2540 = vmatpush1.bf16.msra.mxu0 %v2530
  %2541 = vmatprep.subr.bf16.mxu0 0
  %2542 = vmatpush1.bf16.msra.mxu0 %v2531
  %2543 = vmatprep.subr.bf16.mxu0 0
  %2544 = vmatpush1.bf16.msra.mxu0 %v2532
  %2545 = vmatprep.subr.bf16.mxu0 0
  %2546 = vmatpush1.bf16.msra.mxu0 0
  %2547 = vmatprep.subr.bf16.mxu0 0
  %2548 = vmatpush1.bf16.msra.mxu0 0
  %2549 = vmatprep.subr.bf16.mxu0 0
  %2550 = vmatpush1.bf16.msra.mxu0 0
  %2551 = vmatprep.subr.bf16.mxu0 0
  %2552 = vmatpush1.bf16.msra.mxu0 0
  %2553 = vmatprep.subr.bf16.mxu0 0
  %2554 = vmatpush1.bf16.msra.mxu0 0
  %2555 = vmatprep.subr.bf16.mxu0 0
  %2556 = vmatpush1.bf16.msra.mxu0 0
  %2557 = vmatprep.subr.bf16.mxu0 0
  %2558 = vmatpush1.bf16.msra.mxu0 0
  %2559 = vmatprep.subr.bf16.mxu0 0
  %2560 = vmatpush1.bf16.msra.mxu0 0
  %2561 = vmatprep.subr.bf16.mxu0 0
  %2562 = vmatpush1.bf16.msra.mxu0 0
  %2563 = vmatprep.subr.bf16.mxu0 0
  %2564 = vmatpush1.bf16.msra.mxu0 0
  %2565 = vmatprep.subr.bf16.mxu0 0
  %2566 = vmatpush1.bf16.msra.mxu0 0
  %2567 = vmatprep.subr.bf16.mxu0 0
  %2568 = vmatpush1.bf16.msra.mxu0 0
  %2569 = vmatprep.mubr.bf16.mxu0 0
  %2570 = vmatmul.mubr.bf16.gmra.mrb[0].mxu0 %v486
  %v2571 = vpop.f32.mrb[0].mxu0
  %v2572 = vadd.f32 %v2511, %v2571
  %v2573 = vpop.f32.mrb[0].mxu0
  %v2574 = vpop.f32.mrb[0].mxu0
  %v2575 = vadd.f32 %v2511, %v2574
  %v2576 = vpop.f32.mrb[0].mxu0
  %2577 = vmatprep.mubr.bf16.mxu0 0
  %2578 = vmatmul.mubr.bf16.gmra.mrb[0].mxu0 %v489
  %v2579 = vpop.f32.mrb[0].mxu0
  %v2580 = vadd.f32 %v2511, %v2579
  %v2581 = vpop.f32.mrb[0].mxu0
  %v2582 = vpop.f32.mrb[0].mxu0
  %v2583 = vadd.f32 %v2511, %v2582
  %v2584 = vpop.f32.mrb[0].mxu0
  %2585 = vmatprep.mubr.bf16.mxu0 0
  %2586 = vmatmul.mubr.bf16.gmra.mrb[0].mxu0 %v492
  %v2587 = vpop.f32.mrb[0].mxu0
  %v2588 = vadd.f32 %v2511, %v2587
  %v2589 = vpop.f32.mrb[0].mxu0
  %v2590 = vpop.f32.mrb[0].mxu0
  %v2591 = vadd.f32 %v2511, %v2590
  %v2592 = vpop.f32.mrb[0].mxu0
  %2593 = vmatprep.mubr.bf16.mxu0 0
  %2594 = vmatmul.mubr.bf16.gmra.mrb[0].mxu0 %v495
  %v2595 = vpop.f32.mrb[0].mxu0
  %v2596 = vadd.f32 %v2511, %v2595
  %v2597 = vpop.f32.mrb[0].mxu0
  %v2598 = vpop.f32.mrb[0].mxu0
  %v2599 = vadd.f32 %v2511, %v2598
  %v2600 = vpop.f32.mrb[0].mxu0
  %2601 = vdwg.mxu0
  %v2602 = vpack.c.bf16 %v2404, %v2401
  %v2603 = vpack.c.bf16 %v2412, %v2409
  %v2604 = vpack.c.bf16 %v2420, %v2417
  %v2605 = vpack.c.bf16 %v2428, %v2425
  %v2606 = vpack.c.bf16 %v2493, %v2490
  %v2608 = vsel %vm183, %v2602, 0
  %v2611 = vsel %vm183, %v2603, 0
  %v2614 = vsel %vm183, %v2604, 0
  %v2617 = vsel %vm183, %v2605, 0
  %2619 = vmatprep.subr.bf16.mxu0 0
  %2620 = vmatpush1.bf16.msra.mxu0 %v2606
  %2621 = vmatprep.subr.bf16.mxu0 0
  %2622 = vmatpush1.bf16.msra.mxu0 0
  %2623 = vmatprep.subr.bf16.mxu0 0
  %2624 = vmatpush1.bf16.msra.mxu0 0
  %2625 = vmatprep.subr.bf16.mxu0 0
  %2626 = vmatpush1.bf16.msra.mxu0 0
  %2627 = vmatprep.subr.bf16.mxu0 0
  %2628 = vmatpush1.bf16.msra.mxu0 0
  %2629 = vmatprep.subr.bf16.mxu0 0
  %2630 = vmatpush1.bf16.msra.mxu0 0
  %2631 = vmatprep.subr.bf16.mxu0 0
  %2632 = vmatpush1.bf16.msra.mxu0 0
  %2633 = vmatprep.subr.bf16.mxu0 0
  %2634 = vmatpush1.bf16.msra.mxu0 0
  %2635 = vmatprep.subr.bf16.mxu0 0
  %2636 = vmatpush1.bf16.msra.mxu0 0
  %2637 = vmatprep.subr.bf16.mxu0 0
  %2638 = vmatpush1.bf16.msra.mxu0 0
  %2639 = vmatprep.subr.bf16.mxu0 0
  %2640 = vmatpush1.bf16.msra.mxu0 0
  %2641 = vmatprep.subr.bf16.mxu0 0
  %2642 = vmatpush1.bf16.msra.mxu0 0
  %2643 = vmatprep.subr.bf16.mxu0 0
  %2644 = vmatpush1.bf16.msra.mxu0 0
  %2645 = vmatprep.subr.bf16.mxu0 0
  %2646 = vmatpush1.bf16.msra.mxu0 0
  %2647 = vmatprep.subr.bf16.mxu0 0
  %2648 = vmatpush1.bf16.msra.mxu0 0
  %2649 = vmatprep.subr.bf16.mxu0 0
  %2650 = vmatpush1.bf16.msra.mxu0 0
  %2651 = vmatprep.mubr.bf16.mxu0 0
  %2652 = vmatmul.mubr.bf16.gmra.mrb[0].mxu0 %v2608
  %v2653 = vpop.f32.mrb[0].mxu0
  %v2654 = vadd.f32 0.0, %v2653
  %v2655 = vpop.f32.mrb[0].mxu0
  %v2656 = vpop.f32.mrb[0].mxu0
  %v2657 = vadd.f32 0.0, %v2656
  %v2658 = vpop.f32.mrb[0].mxu0
  %2659 = vmatprep.mubr.bf16.mxu0 0
  %2660 = vmatmul.mubr.bf16.gmra.mrb[0].mxu0 %v2611
  %v2661 = vpop.f32.mrb[0].mxu0
  %v2662 = vadd.f32 0.0, %v2661
  %v2663 = vpop.f32.mrb[0].mxu0
  %v2664 = vpop.f32.mrb[0].mxu0
  %v2665 = vadd.f32 0.0, %v2664
  %v2666 = vpop.f32.mrb[0].mxu0
  %2667 = vmatprep.mubr.bf16.mxu0 0
  %2668 = vmatmul.mubr.bf16.gmra.mrb[0].mxu0 %v2614
  %v2669 = vpop.f32.mrb[0].mxu0
  %v2670 = vadd.f32 0.0, %v2669
  %v2671 = vpop.f32.mrb[0].mxu0
  %v2672 = vpop.f32.mrb[0].mxu0
  %v2673 = vadd.f32 0.0, %v2672
  %v2674 = vpop.f32.mrb[0].mxu0
  %2675 = vmatprep.mubr.bf16.mxu0 0
  %2676 = vmatmul.mubr.bf16.gmra.mrb[0].mxu0 %v2617
  %v2677 = vpop.f32.mrb[0].mxu0
  %v2678 = vadd.f32 0.0, %v2677
  %v2679 = vpop.f32.mrb[0].mxu0
  %v2680 = vpop.f32.mrb[0].mxu0
  %v2681 = vadd.f32 0.0, %v2680
  %v2682 = vpop.f32.mrb[0].mxu0
  %2683 = vdwg.mxu0
  %v2684 = vsel %vm261, %v2654, -inf
  %2685 = vmax.xlane.f32.xlu0 %v2684
  %v2686 = vpop.xlane.xlu0 %2685
  %v2687 = vsel %vm261, %v2657, -inf
  %2688 = vmax.xlane.f32.xlu0 %v2687
  %v2689 = vpop.xlane.xlu0 %2688
  %v2690 = vsel %vm261, %v2662, -inf
  %2691 = vmax.xlane.f32.xlu0 %v2690
  %v2692 = vpop.xlane.xlu0 %2691
  %v2693 = vsel %vm261, %v2665, -inf
  %2694 = vmax.xlane.f32.xlu0 %v2693
  %v2695 = vpop.xlane.xlu0 %2694
  %v2696 = vsel %vm261, %v2670, -inf
  %2697 = vmax.xlane.f32.xlu0 %v2696
  %v2698 = vpop.xlane.xlu0 %2697
  %v2699 = vsel %vm261, %v2673, -inf
  %2700 = vmax.xlane.f32.xlu0 %v2699
  %v2701 = vpop.xlane.xlu0 %2700
  %v2702 = vsel %vm261, %v2678, -inf
  %2703 = vmax.xlane.f32.xlu0 %v2702
  %v2704 = vpop.xlane.xlu0 %2703
  %v2705 = vsel %vm261, %v2681, -inf
  %2706 = vmax.xlane.f32.xlu0 %v2705
  %v2707 = vpop.xlane.xlu0 %2706
  %v2708 = vsub.f32 %v2654, %v2686
  %v2709 = vsub.f32 %v2657, %v2689
  %v2710 = vsub.f32 %v2662, %v2692
  %v2711 = vsub.f32 %v2665, %v2695
  %v2712 = vsub.f32 %v2670, %v2698
  %v2713 = vsub.f32 %v2673, %v2701
  %v2714 = vsub.f32 %v2678, %v2704
  %v2715 = vsub.f32 %v2681, %v2707
  %v2716 = vmul.f32 %v2708, 1.442695
  %v2717 = vpow.pop %v2716
  %v2718 = vmul.f32 %v2709, 1.442695
  %v2719 = vpow.pop %v2718
  %v2720 = vmul.f32 %v2710, 1.442695
  %v2721 = vpow.pop %v2720
  %v2722 = vmul.f32 %v2711, 1.442695
  %v2723 = vpow.pop %v2722
  %v2724 = vmul.f32 %v2712, 1.442695
  %v2725 = vpow.pop %v2724
  %v2726 = vmul.f32 %v2713, 1.442695
  %v2727 = vpow.pop %v2726
  %v2728 = vmul.f32 %v2714, 1.442695
  %v2729 = vpow.pop %v2728
  %v2730 = vmul.f32 %v2715, 1.442695
  %v2731 = vpow.pop %v2730
  %v2732 = vsel %vm261, %v2717, 0.0
  %2733 = vadd.xlane.f32.xlu0 %v2732
  %v2734 = vpop.xlane.xlu0 %2733
  %v2735 = vsel %vm261, %v2719, 0.0
  %2736 = vadd.xlane.f32.xlu0 %v2735
  %v2737 = vpop.xlane.xlu0 %2736
  %v2738 = vsel %vm261, %v2721, 0.0
  %2739 = vadd.xlane.f32.xlu0 %v2738
  %v2740 = vpop.xlane.xlu0 %2739
  %v2741 = vsel %vm261, %v2723, 0.0
  %2742 = vadd.xlane.f32.xlu0 %v2741
  %v2743 = vpop.xlane.xlu0 %2742
  %v2744 = vsel %vm261, %v2725, 0.0
  %2745 = vadd.xlane.f32.xlu0 %v2744
  %v2746 = vpop.xlane.xlu0 %2745
  %v2747 = vsel %vm261, %v2727, 0.0
  %2748 = vadd.xlane.f32.xlu0 %v2747
  %v2749 = vpop.xlane.xlu0 %2748
  %v2750 = vsel %vm261, %v2729, 0.0
  %2751 = vadd.xlane.f32.xlu0 %v2750
  %v2752 = vpop.xlane.xlu0 %2751
  %v2753 = vsel %vm261, %v2731, 0.0
  %2754 = vadd.xlane.f32.xlu0 %v2753
  %v2755 = vpop.xlane.xlu0 %2754
  %v2756 = vrcp.pop %v2734
  %v2757 = vrcp.pop %v2737
  %v2758 = vrcp.pop %v2740
  %v2759 = vrcp.pop %v2743
  %v2760 = vrcp.pop %v2746
  %v2761 = vrcp.pop %v2749
  %v2762 = vrcp.pop %v2752
  %v2763 = vrcp.pop %v2755
  %v2764 = vmul.f32 %v2717, %v2756
  %v2765 = vmul.f32 %v2719, %v2757
  %v2766 = vmul.f32 %v2721, %v2758
  %v2767 = vmul.f32 %v2723, %v2759
  %v2768 = vmul.f32 %v2725, %v2760
  %v2769 = vmul.f32 %v2727, %v2761
  %v2770 = vmul.f32 %v2729, %v2762
  %v2771 = vmul.f32 %v2731, %v2763
  %v2772 = vpack.c.bf16 %v2765, %v2764
  %v2773 = vpack.c.bf16 %v2767, %v2766
  %v2774 = vpack.c.bf16 %v2769, %v2768
  %v2775 = vpack.c.bf16 %v2771, %v2770
  %v2776 = vpack.c.bf16 %v2575, %v2572
  %v2777 = vpack.c.bf16 %v2583, %v2580
  %v2778 = vpack.c.bf16 %v2591, %v2588
  %v2779 = vpack.c.bf16 %v2599, %v2596
  %v2781 = vsel %vm261, %v2772, 0
  %v2784 = vsel %vm261, %v2773, 0
  %v2787 = vsel %vm261, %v2774, 0
  %v2790 = vsel %vm261, %v2775, 0
  %2792 = vmatprep.subr.bf16.mxu0 0
  %2793 = vmatpush1.bf16.msra.mxu0 %v2776
  %2794 = vmatprep.subr.bf16.mxu0 0
  %2795 = vmatpush1.bf16.msra.mxu0 %v2777
  %2796 = vmatprep.subr.bf16.mxu0 0
  %2797 = vmatpush1.bf16.msra.mxu0 %v2778
  %2798 = vmatprep.subr.bf16.mxu0 0
  %2799 = vmatpush1.bf16.msra.mxu0 %v2779
  %2800 = vmatprep.subr.bf16.mxu0 0
  %2801 = vmatpush1.bf16.msra.mxu0 0
  %2802 = vmatprep.subr.bf16.mxu0 0
  %2803 = vmatpush1.bf16.msra.mxu0 0
  %2804 = vmatprep.subr.bf16.mxu0 0
  %2805 = vmatpush1.bf16.msra.mxu0 0
  %2806 = vmatprep.subr.bf16.mxu0 0
  %2807 = vmatpush1.bf16.msra.mxu0 0
  %2808 = vmatprep.subr.bf16.mxu0 0
  %2809 = vmatpush1.bf16.msra.mxu0 0
  %2810 = vmatprep.subr.bf16.mxu0 0
  %2811 = vmatpush1.bf16.msra.mxu0 0
  %2812 = vmatprep.subr.bf16.mxu0 0
  %2813 = vmatpush1.bf16.msra.mxu0 0
  %2814 = vmatprep.subr.bf16.mxu0 0
  %2815 = vmatpush1.bf16.msra.mxu0 0
  %2816 = vmatprep.subr.bf16.mxu0 0
  %2817 = vmatpush1.bf16.msra.mxu0 0
  %2818 = vmatprep.subr.bf16.mxu0 0
  %2819 = vmatpush1.bf16.msra.mxu0 0
  %2820 = vmatprep.subr.bf16.mxu0 0
  %2821 = vmatpush1.bf16.msra.mxu0 0
  %2822 = vmatprep.subr.bf16.mxu0 0
  %2823 = vmatpush1.bf16.msra.mxu0 0
  %2824 = vmatprep.mubr.bf16.mxu0 0
  %2825 = vmatmul.mubr.bf16.gmra.mrb[0].mxu0 %v2781
  %v2826 = vpop.f32.mrb[0].mxu0
  %v2827 = vadd.f32 0.0, %v2826
  %v2828 = vpop.f32.mrb[0].mxu0
  %v2829 = vpop.f32.mrb[0].mxu0
  %v2830 = vadd.f32 0.0, %v2829
  %v2831 = vpop.f32.mrb[0].mxu0
  %2832 = vmatprep.mubr.bf16.mxu0 0
  %2833 = vmatmul.mubr.bf16.gmra.mrb[0].mxu0 %v2784
  %v2834 = vpop.f32.mrb[0].mxu0
  %v2835 = vadd.f32 0.0, %v2834
  %v2836 = vpop.f32.mrb[0].mxu0
  %v2837 = vpop.f32.mrb[0].mxu0
  %v2838 = vadd.f32 0.0, %v2837
  %v2839 = vpop.f32.mrb[0].mxu0
  %2840 = vmatprep.mubr.bf16.mxu0 0
  %2841 = vmatmul.mubr.bf16.gmra.mrb[0].mxu0 %v2787
  %v2842 = vpop.f32.mrb[0].mxu0
  %v2843 = vadd.f32 0.0, %v2842
  %v2844 = vpop.f32.mrb[0].mxu0
  %v2845 = vpop.f32.mrb[0].mxu0
  %v2846 = vadd.f32 0.0, %v2845
  %v2847 = vpop.f32.mrb[0].mxu0
  %2848 = vmatprep.mubr.bf16.mxu0 0
  %2849 = vmatmul.mubr.bf16.gmra.mrb[0].mxu0 %v2790
  %v2850 = vpop.f32.mrb[0].mxu0
  %v2851 = vadd.f32 0.0, %v2850
  %v2852 = vpop.f32.mrb[0].mxu0
  %v2853 = vpop.f32.mrb[0].mxu0
  %v2854 = vadd.f32 0.0, %v2853
  %v2855 = vpop.f32.mrb[0].mxu0
  %2856 = vdwg.mxu0
  %v2857 = vpack.c.bf16 %v2830, %v2827
  %v2858 = vpack.c.bf16 %v2838, %v2835
  %v2859 = vpack.c.bf16 %v2846, %v2843
  %v2860 = vpack.c.bf16 %v2854, %v2851
  %s2861 = scalar_lea.vmem %s13, 24
  %v2862 = vld [vmem:[%s2861] sm:$0xf]
  %v2863 = vld [vmem:[%s2861 + $0x4] sm:$0xf]
  %v2866 = vunpack.c.l.b16 %v2862
  %v2867 = vunpack.c.l.b16 %v2863
  %v2868 = vpack.c.b16 %v2867, %v2866
  %v2871 = vsel %vm183, %v2857, 0
  %v2874 = vsel %vm183, %v2858, 0
  %v2877 = vsel %vm183, %v2859, 0
  %v2880 = vsel %vm183, %v2860, 0
  %2882 = vmatprep.subr.bf16.mxu0 0
  %2883 = vmatpush1.bf16.msra.mxu0 %v2868
  %2884 = vmatprep.subr.bf16.mxu0 0
  %2885 = vmatpush1.bf16.msra.mxu0 0
  %2886 = vmatprep.subr.bf16.mxu0 0
  %2887 = vmatpush1.bf16.msra.mxu0 0
  %2888 = vmatprep.subr.bf16.mxu0 0
  %2889 = vmatpush1.bf16.msra.mxu0 0
  %2890 = vmatprep.subr.bf16.mxu0 0
  %2891 = vmatpush1.bf16.msra.mxu0 0
  %2892 = vmatprep.subr.bf16.mxu0 0
  %2893 = vmatpush1.bf16.msra.mxu0 0
  %2894 = vmatprep.subr.bf16.mxu0 0
  %2895 = vmatpush1.bf16.msra.mxu0 0
  %2896 = vmatprep.subr.bf16.mxu0 0
  %2897 = vmatpush1.bf16.msra.mxu0 0
  %2898 = vmatprep.subr.bf16.mxu0 0
  %2899 = vmatpush1.bf16.msra.mxu0 0
  %2900 = vmatprep.subr.bf16.mxu0 0
  %2901 = vmatpush1.bf16.msra.mxu0 0
  %2902 = vmatprep.subr.bf16.mxu0 0
  %2903 = vmatpush1.bf16.msra.mxu0 0
  %2904 = vmatprep.subr.bf16.mxu0 0
  %2905 = vmatpush1.bf16.msra.mxu0 0
  %2906 = vmatprep.subr.bf16.mxu0 0
  %2907 = vmatpush1.bf16.msra.mxu0 0
  %2908 = vmatprep.subr.bf16.mxu0 0
  %2909 = vmatpush1.bf16.msra.mxu0 0
  %2910 = vmatprep.subr.bf16.mxu0 0
  %2911 = vmatpush1.bf16.msra.mxu0 0
  %2912 = vmatprep.subr.bf16.mxu0 0
  %2913 = vmatpush1.bf16.msra.mxu0 0
  %2914 = vmatprep.mubr.bf16.mxu0 0
  %2915 = vmatmul.mubr.bf16.gmra.mrb[0].mxu0 %v2871
  %v2916 = vpop.f32.mrb[0].mxu0
  %v2917 = vadd.f32 0.0, %v2916
  %v2918 = vpop.f32.mrb[0].mxu0
  %v2919 = vpop.f32.mrb[0].mxu0
  %v2920 = vadd.f32 0.0, %v2919
  %v2921 = vpop.f32.mrb[0].mxu0
  %2922 = vmatprep.mubr.bf16.mxu0 0
  %2923 = vmatmul.mubr.bf16.gmra.mrb[0].mxu0 %v2874
  %v2924 = vpop.f32.mrb[0].mxu0
  %v2925 = vadd.f32 0.0, %v2924
  %v2926 = vpop.f32.mrb[0].mxu0
  %v2927 = vpop.f32.mrb[0].mxu0
  %v2928 = vadd.f32 0.0, %v2927
  %v2929 = vpop.f32.mrb[0].mxu0
  %2930 = vmatprep.mubr.bf16.mxu0 0
  %2931 = vmatmul.mubr.bf16.gmra.mrb[0].mxu0 %v2877
  %v2932 = vpop.f32.mrb[0].mxu0
  %v2933 = vadd.f32 0.0, %v2932
  %v2934 = vpop.f32.mrb[0].mxu0
  %v2935 = vpop.f32.mrb[0].mxu0
  %v2936 = vadd.f32 0.0, %v2935
  %v2937 = vpop.f32.mrb[0].mxu0
  %2938 = vmatprep.mubr.bf16.mxu0 0
  %2939 = vmatmul.mubr.bf16.gmra.mrb[0].mxu0 %v2880
  %v2940 = vpop.f32.mrb[0].mxu0
  %v2941 = vadd.f32 0.0, %v2940
  %v2942 = vpop.f32.mrb[0].mxu0
  %v2943 = vpop.f32.mrb[0].mxu0
  %v2944 = vadd.f32 0.0, %v2943
  %v2945 = vpop.f32.mrb[0].mxu0
  %2946 = vdwg.mxu0
  %v2947 = vadd.f32 %v2317, %v2917
  %v2948 = vadd.f32 %v2318, %v2920
  %v2949 = vadd.f32 %v2319, %v2925
  %v2950 = vadd.f32 %v2320, %v2928
  %v2951 = vadd.f32 %v2321, %v2933
  %v2952 = vadd.f32 %v2322, %v2936
  %v2953 = vadd.f32 %v2323, %v2941
  %v2954 = vadd.f32 %v2324, %v2944
  %v2955 = vld [vmem:[%s14] sm:$0x1]
  %v2957 = vlaneseq
  %v2958 = vshrl.u32 %v2957, 7
  %v2959 = vsub.s32 0, %v2958
  %v2960 = vrot.slane %v2955, %v2959
  %v2962 = vadd.f32 %v2947, %v2960
  %v2963 = vadd.f32 %v2948, %v2960
  %v2964 = vadd.f32 %v2949, %v2960
  %v2965 = vadd.f32 %v2950, %v2960
  %v2966 = vadd.f32 %v2951, %v2960
  %v2967 = vadd.f32 %v2952, %v2960
  %v2968 = vadd.f32 %v2953, %v2960
  %v2969 = vadd.f32 %v2954, %v2960
  %v2970 = vadd.f32 %v422, %v2962
  %v2971 = vadd.f32 %v423, %v2963
  %v2972 = vadd.f32 %v424, %v2964
  %v2973 = vadd.f32 %v425, %v2965
  %v2974 = vadd.f32 %v426, %v2966
  %v2975 = vadd.f32 %v427, %v2967
  %v2976 = vadd.f32 %v428, %v2968
  %v2977 = vadd.f32 %v429, %v2969
  %v2978 = vld [vmem:[%s15] sm:$0x1]
  %v2979 = vld [vmem:[%s16] sm:$0x1]
  %v2980 = vsel %vm261, %v2970, 0.0
  %2981 = vadd.xlane.f32.xlu0 %v2980
  %v2982 = vpop.xlane.xlu0 %2981
  %v2983 = vsel %vm261, %v2971, 0.0
  %2984 = vadd.xlane.f32.xlu0 %v2983
  %v2985 = vpop.xlane.xlu0 %2984
  %v2986 = vsel %vm261, %v2972, 0.0
  %2987 = vadd.xlane.f32.xlu0 %v2986
  %v2988 = vpop.xlane.xlu0 %2987
  %v2989 = vsel %vm261, %v2973, 0.0
  %2990 = vadd.xlane.f32.xlu0 %v2989
  %v2991 = vpop.xlane.xlu0 %2990
  %v2992 = vsel %vm261, %v2974, 0.0
  %2993 = vadd.xlane.f32.xlu0 %v2992
  %v2994 = vpop.xlane.xlu0 %2993
  %v2995 = vsel %vm261, %v2975, 0.0
  %2996 = vadd.xlane.f32.xlu0 %v2995
  %v2997 = vpop.xlane.xlu0 %2996
  %v2998 = vsel %vm261, %v2976, 0.0
  %2999 = vadd.xlane.f32.xlu0 %v2998
  %v3000 = vpop.xlane.xlu0 %2999
  %v3001 = vsel %vm261, %v2977, 0.0
  %3002 = vadd.xlane.f32.xlu0 %v3001
  %v3003 = vpop.xlane.xlu0 %3002
  %v3004 = vrcp.pop 64.0
  %v3005 = vmul.f32 %v2982, %v3004
  %v3006 = vmul.f32 %v2985, %v3004
  %v3007 = vmul.f32 %v2988, %v3004
  %v3008 = vmul.f32 %v2991, %v3004
  %v3009 = vmul.f32 %v2994, %v3004
  %v3010 = vmul.f32 %v2997, %v3004
  %v3011 = vmul.f32 %v3000, %v3004
  %v3012 = vmul.f32 %v3003, %v3004
  %v3013 = vsub.f32 %v2970, %v3005
  %v3014 = vsub.f32 %v2971, %v3006
  %v3015 = vsub.f32 %v2972, %v3007
  %v3016 = vsub.f32 %v2973, %v3008
  %v3017 = vsub.f32 %v2974, %v3009
  %v3018 = vsub.f32 %v2975, %v3010
  %v3019 = vsub.f32 %v2976, %v3011
  %v3020 = vsub.f32 %v2977, %v3012
  %v3021 = vmul.f32 %v3013, %v3013
  %v3022 = vmul.f32 %v3014, %v3014
  %v3023 = vmul.f32 %v3015, %v3015
  %v3024 = vmul.f32 %v3016, %v3016
  %v3025 = vmul.f32 %v3017, %v3017
  %v3026 = vmul.f32 %v3018, %v3018
  %v3027 = vmul.f32 %v3019, %v3019
  %v3028 = vmul.f32 %v3020, %v3020
  %v3029 = vsel %vm261, %v3021, 0.0
  %3030 = vadd.xlane.f32.xlu0 %v3029
  %v3031 = vpop.xlane.xlu0 %3030
  %v3032 = vsel %vm261, %v3022, 0.0
  %3033 = vadd.xlane.f32.xlu0 %v3032
  %v3034 = vpop.xlane.xlu0 %3033
  %v3035 = vsel %vm261, %v3023, 0.0
  %3036 = vadd.xlane.f32.xlu0 %v3035
  %v3037 = vpop.xlane.xlu0 %3036
  %v3038 = vsel %vm261, %v3024, 0.0
  %3039 = vadd.xlane.f32.xlu0 %v3038
  %v3040 = vpop.xlane.xlu0 %3039
  %v3041 = vsel %vm261, %v3025, 0.0
  %3042 = vadd.xlane.f32.xlu0 %v3041
  %v3043 = vpop.xlane.xlu0 %3042
  %v3044 = vsel %vm261, %v3026, 0.0
  %3045 = vadd.xlane.f32.xlu0 %v3044
  %v3046 = vpop.xlane.xlu0 %3045
  %v3047 = vsel %vm261, %v3027, 0.0
  %3048 = vadd.xlane.f32.xlu0 %v3047
  %v3049 = vpop.xlane.xlu0 %3048
  %v3050 = vsel %vm261, %v3028, 0.0
  %3051 = vadd.xlane.f32.xlu0 %v3050
  %v3052 = vpop.xlane.xlu0 %3051
  %v3053 = vmul.f32 %v3031, %v3004
  %v3054 = vmul.f32 %v3034, %v3004
  %v3055 = vmul.f32 %v3037, %v3004
  %v3056 = vmul.f32 %v3040, %v3004
  %v3057 = vmul.f32 %v3043, %v3004
  %v3058 = vmul.f32 %v3046, %v3004
  %v3059 = vmul.f32 %v3049, %v3004
  %v3060 = vmul.f32 %v3052, %v3004
  %v3061 = vadd.f32 %v3053, 1e-05
  %v3062 = vadd.f32 %v3054, 1e-05
  %v3063 = vadd.f32 %v3055, 1e-05
  %v3064 = vadd.f32 %v3056, 1e-05
  %v3065 = vadd.f32 %v3057, 1e-05
  %v3066 = vadd.f32 %v3058, 1e-05
  %v3067 = vadd.f32 %v3059, 1e-05
  %v3068 = vadd.f32 %v3060, 1e-05
  %v3069 = vrsqrt.pop %v3061
  %v3070 = vrsqrt.pop %v3062
  %v3071 = vrsqrt.pop %v3063
  %v3072 = vrsqrt.pop %v3064
  %v3073 = vrsqrt.pop %v3065
  %v3074 = vrsqrt.pop %v3066
  %v3075 = vrsqrt.pop %v3067
  %v3076 = vrsqrt.pop %v3068
  %v3077 = vmul.f32 %v3013, %v3069
  %v3078 = vmul.f32 %v3014, %v3070
  %v3079 = vmul.f32 %v3015, %v3071
  %v3080 = vmul.f32 %v3016, %v3072
  %v3081 = vmul.f32 %v3017, %v3073
  %v3082 = vmul.f32 %v3018, %v3074
  %v3083 = vmul.f32 %v3019, %v3075
  %v3084 = vmul.f32 %v3020, %v3076
  %v3086 = vlaneseq
  %v3087 = vshrl.u32 %v3086, 7
  %v3088 = vsub.s32 0, %v3087
  %v3089 = vrot.slane %v2978, %v3088
  %v3091 = vmul.f32 %v3077, %v3089
  %v3092 = vmul.f32 %v3078, %v3089
  %v3093 = vmul.f32 %v3079, %v3089
  %v3094 = vmul.f32 %v3080, %v3089
  %v3095 = vmul.f32 %v3081, %v3089
  %v3096 = vmul.f32 %v3082, %v3089
  %v3097 = vmul.f32 %v3083, %v3089
  %v3098 = vmul.f32 %v3084, %v3089
  %v3100 = vlaneseq
  %v3101 = vshrl.u32 %v3100, 7
  %v3102 = vsub.s32 0, %v3101
  %v3103 = vrot.slane %v2979, %v3102
  %v3105 = vadd.f32 %v3091, %v3103
  %v3106 = vadd.f32 %v3092, %v3103
  %v3107 = vadd.f32 %v3093, %v3103
  %v3108 = vadd.f32 %v3094, %v3103
  %v3109 = vadd.f32 %v3095, %v3103
  %v3110 = vadd.f32 %v3096, %v3103
  %v3111 = vadd.f32 %v3097, %v3103
  %v3112 = vadd.f32 %v3098, %v3103
  %v3113 = vpack.c.bf16 %v3106, %v3105
  %v3114 = vpack.c.bf16 %v3108, %v3107
  %v3115 = vpack.c.bf16 %v3110, %v3109
  %v3116 = vpack.c.bf16 %v3112, %v3111
  %v3117 = vld [vmem:[%s17] sm:$0xff]
  %v3118 = vld [vmem:[%s17 + $0x8] sm:$0xff]
  %v3119 = vld [vmem:[%s17 + $0x10] sm:$0xff]
  %v3120 = vld [vmem:[%s17 + $0x18] sm:$0xff]
  %v3121 = vld [vmem:[%s17 + $0x20] sm:$0xff]
  %v3122 = vld [vmem:[%s17 + $0x28] sm:$0xff]
  %v3123 = vld [vmem:[%s17 + $0x30] sm:$0xff]
  %v3124 = vld [vmem:[%s17 + $0x38] sm:$0xff]
  %v3125 = vld [vmem:[%s17 + $0x40] sm:$0xff]
  %v3126 = vld [vmem:[%s17 + $0x48] sm:$0xff]
  %v3127 = vld [vmem:[%s17 + $0x50] sm:$0xff]
  %v3128 = vld [vmem:[%s17 + $0x58] sm:$0xff]
  %v3129 = vld [vmem:[%s17 + $0x60] sm:$0xff]
  %v3130 = vld [vmem:[%s17 + $0x68] sm:$0xff]
  %v3131 = vld [vmem:[%s17 + $0x70] sm:$0xff]
  %v3132 = vld [vmem:[%s17 + $0x78] sm:$0xff]
  %v3133 = vld [vmem:[%s17 + $0x80] sm:$0xff]
  %v3134 = vld [vmem:[%s17 + $0x88] sm:$0xff]
  %v3135 = vld [vmem:[%s17 + $0x90] sm:$0xff]
  %v3136 = vld [vmem:[%s17 + $0x98] sm:$0xff]
  %v3137 = vld [vmem:[%s17 + $0xa0] sm:$0xff]
  %v3138 = vld [vmem:[%s17 + $0xa8] sm:$0xff]
  %v3139 = vld [vmem:[%s17 + $0xb0] sm:$0xff]
  %v3140 = vld [vmem:[%s17 + $0xb8] sm:$0xff]
  %v3141 = vld [vmem:[%s17 + $0xc0] sm:$0xff]
  %v3142 = vld [vmem:[%s17 + $0xc8] sm:$0xff]
  %v3143 = vld [vmem:[%s17 + $0xd0] sm:$0xff]
  %v3144 = vld [vmem:[%s17 + $0xd8] sm:$0xff]
  %v3145 = vld [vmem:[%s17 + $0xe0] sm:$0xff]
  %v3146 = vld [vmem:[%s17 + $0xe8] sm:$0xff]
  %v3147 = vld [vmem:[%s17 + $0xf0] sm:$0xff]
  %v3148 = vld [vmem:[%s17 + $0xf8] sm:$0xff]
  %v3149 = vld [vmem:[%s17 + $0x100] sm:$0xff]
  %v3150 = vld [vmem:[%s17 + $0x108] sm:$0xff]
  %v3151 = vld [vmem:[%s17 + $0x110] sm:$0xff]
  %v3152 = vld [vmem:[%s17 + $0x118] sm:$0xff]
  %v3153 = vld [vmem:[%s17 + $0x120] sm:$0xff]
  %v3154 = vld [vmem:[%s17 + $0x128] sm:$0xff]
  %v3155 = vld [vmem:[%s17 + $0x130] sm:$0xff]
  %v3156 = vld [vmem:[%s17 + $0x138] sm:$0xff]
  %v3157 = vld [vmem:[%s17 + $0x140] sm:$0xff]
  %v3158 = vld [vmem:[%s17 + $0x148] sm:$0xff]
  %v3159 = vld [vmem:[%s17 + $0x150] sm:$0xff]
  %v3160 = vld [vmem:[%s17 + $0x158] sm:$0xff]
  %v3161 = vld [vmem:[%s17 + $0x160] sm:$0xff]
  %v3162 = vld [vmem:[%s17 + $0x168] sm:$0xff]
  %v3163 = vld [vmem:[%s17 + $0x170] sm:$0xff]
  %v3164 = vld [vmem:[%s17 + $0x178] sm:$0xff]
  %v3165 = vld [vmem:[%s17 + $0x180] sm:$0xff]
  %v3166 = vld [vmem:[%s17 + $0x188] sm:$0xff]
  %v3167 = vld [vmem:[%s17 + $0x190] sm:$0xff]
  %v3168 = vld [vmem:[%s17 + $0x198] sm:$0xff]
  %v3169 = vld [vmem:[%s17 + $0x1a0] sm:$0xff]
  %v3170 = vld [vmem:[%s17 + $0x1a8] sm:$0xff]
  %v3171 = vld [vmem:[%s17 + $0x1b0] sm:$0xff]
  %v3172 = vld [vmem:[%s17 + $0x1b8] sm:$0xff]
  %v3173 = vld [vmem:[%s17 + $0x1c0] sm:$0xff]
  %v3174 = vld [vmem:[%s17 + $0x1c8] sm:$0xff]
  %v3175 = vld [vmem:[%s17 + $0x1d0] sm:$0xff]
  %v3176 = vld [vmem:[%s17 + $0x1d8] sm:$0xff]
  %v3177 = vld [vmem:[%s17 + $0x1e0] sm:$0xff]
  %v3178 = vld [vmem:[%s17 + $0x1e8] sm:$0xff]
  %v3179 = vld [vmem:[%s17 + $0x1f0] sm:$0xff]
  %v3180 = vld [vmem:[%s17 + $0x1f8] sm:$0xff]
  %v3181 = vld [vmem:[%s18] sm:$0xff]
  %v3182 = vld [vmem:[%s18 + $0x8] sm:$0xff]
  %v3185 = vlaneseq
  %v3186 = vshrl.u32 %v3185, 7
  %v3187 = vsub.s32 0, %v3186
  %v3188 = vrot.slane %v3181, %v3187
  %v3189 = vlaneseq
  %v3190 = vshrl.u32 %v3189, 7
  %v3191 = vsub.s32 1, %v3190
  %v3192 = vrot.slane %v3181, %v3191
  %v3193 = vlaneseq
  %v3194 = vshrl.u32 %v3193, 7
  %v3195 = vsub.s32 2, %v3194
  %v3196 = vrot.slane %v3181, %v3195
  %v3197 = vlaneseq
  %v3198 = vshrl.u32 %v3197, 7
  %v3199 = vsub.s32 3, %v3198
  %v3200 = vrot.slane %v3181, %v3199
  %v3201 = vlaneseq
  %v3202 = vshrl.u32 %v3201, 7
  %v3203 = vsub.s32 4, %v3202
  %v3204 = vrot.slane %v3181, %v3203
  %v3205 = vlaneseq
  %v3206 = vshrl.u32 %v3205, 7
  %v3207 = vsub.s32 5, %v3206
  %v3208 = vrot.slane %v3181, %v3207
  %v3209 = vlaneseq
  %v3210 = vshrl.u32 %v3209, 7
  %v3211 = vsub.s32 6, %v3210
  %v3212 = vrot.slane %v3181, %v3211
  %v3213 = vlaneseq
  %v3214 = vshrl.u32 %v3213, 7
  %v3215 = vsub.s32 7, %v3214
  %v3216 = vrot.slane %v3181, %v3215
  %v3217 = vlaneseq
  %v3218 = vshrl.u32 %v3217, 7
  %v3219 = vsub.s32 0, %v3218
  %v3220 = vrot.slane %v3182, %v3219
  %v3221 = vlaneseq
  %v3222 = vshrl.u32 %v3221, 7
  %v3223 = vsub.s32 1, %v3222
  %v3224 = vrot.slane %v3182, %v3223
  %v3225 = vlaneseq
  %v3226 = vshrl.u32 %v3225, 7
  %v3227 = vsub.s32 2, %v3226
  %v3228 = vrot.slane %v3182, %v3227
  %v3229 = vlaneseq
  %v3230 = vshrl.u32 %v3229, 7
  %v3231 = vsub.s32 3, %v3230
  %v3232 = vrot.slane %v3182, %v3231
  %v3233 = vlaneseq
  %v3234 = vshrl.u32 %v3233, 7
  %v3235 = vsub.s32 4, %v3234
  %v3236 = vrot.slane %v3182, %v3235
  %v3237 = vlaneseq
  %v3238 = vshrl.u32 %v3237, 7
  %v3239 = vsub.s32 5, %v3238
  %v3240 = vrot.slane %v3182, %v3239
  %v3241 = vlaneseq
  %v3242 = vshrl.u32 %v3241, 7
  %v3243 = vsub.s32 6, %v3242
  %v3244 = vrot.slane %v3182, %v3243
  %v3245 = vlaneseq
  %v3246 = vshrl.u32 %v3245, 7
  %v3247 = vsub.s32 7, %v3246
  %v3248 = vrot.slane %v3182, %v3247
  %v3329 = vunpack.c.l.b16 %v3117
  %v3330 = vunpack.c.h.b16 %v3117
  %v3331 = vunpack.c.l.b16 %v3118
  %v3332 = vunpack.c.h.b16 %v3118
  %v3333 = vunpack.c.l.b16 %v3119
  %v3334 = vunpack.c.h.b16 %v3119
  %v3335 = vunpack.c.l.b16 %v3120
  %v3336 = vunpack.c.h.b16 %v3120
  %v3337 = vunpack.c.l.b16 %v3121
  %v3338 = vunpack.c.h.b16 %v3121
  %v3339 = vunpack.c.l.b16 %v3122
  %v3340 = vunpack.c.h.b16 %v3122
  %v3341 = vunpack.c.l.b16 %v3123
  %v3342 = vunpack.c.h.b16 %v3123
  %v3343 = vunpack.c.l.b16 %v3124
  %v3344 = vunpack.c.h.b16 %v3124
  %v3345 = vunpack.c.l.b16 %v3125
  %v3346 = vunpack.c.h.b16 %v3125
  %v3347 = vunpack.c.l.b16 %v3126
  %v3348 = vunpack.c.h.b16 %v3126
  %v3349 = vunpack.c.l.b16 %v3127
  %v3350 = vunpack.c.h.b16 %v3127
  %v3351 = vunpack.c.l.b16 %v3128
  %v3352 = vunpack.c.h.b16 %v3128
  %v3353 = vunpack.c.l.b16 %v3129
  %v3354 = vunpack.c.h.b16 %v3129
  %v3355 = vunpack.c.l.b16 %v3130
  %v3356 = vunpack.c.h.b16 %v3130
  %v3357 = vunpack.c.l.b16 %v3131
  %v3358 = vunpack.c.h.b16 %v3131
  %v3359 = vunpack.c.l.b16 %v3132
  %v3360 = vunpack.c.h.b16 %v3132
  %v3361 = vunpack.c.l.b16 %v3133
  %v3362 = vunpack.c.h.b16 %v3133
  %v3363 = vunpack.c.l.b16 %v3134
  %v3364 = vunpack.c.h.b16 %v3134
  %v3365 = vunpack.c.l.b16 %v3135
  %v3366 = vunpack.c.h.b16 %v3135
  %v3367 = vunpack.c.l.b16 %v3136
  %v3368 = vunpack.c.h.b16 %v3136
  %v3369 = vunpack.c.l.b16 %v3137
  %v3370 = vunpack.c.h.b16 %v3137
  %v3371 = vunpack.c.l.b16 %v3138
  %v3372 = vunpack.c.h.b16 %v3138
  %v3373 = vunpack.c.l.b16 %v3139
  %v3374 = vunpack.c.h.b16 %v3139
  %v3375 = vunpack.c.l.b16 %v3140
  %v3376 = vunpack.c.h.b16 %v3140
  %v3377 = vunpack.c.l.b16 %v3141
  %v3378 = vunpack.c.h.b16 %v3141
  %v3379 = vunpack.c.l.b16 %v3142
  %v3380 = vunpack.c.h.b16 %v3142
  %v3381 = vunpack.c.l.b16 %v3143
  %v3382 = vunpack.c.h.b16 %v3143
  %v3383 = vunpack.c.l.b16 %v3144
  %v3384 = vunpack.c.h.b16 %v3144
  %v3385 = vunpack.c.l.b16 %v3145
  %v3386 = vunpack.c.h.b16 %v3145
  %v3387 = vunpack.c.l.b16 %v3146
  %v3388 = vunpack.c.h.b16 %v3146
  %v3389 = vunpack.c.l.b16 %v3147
  %v3390 = vunpack.c.h.b16 %v3147
  %v3391 = vunpack.c.l.b16 %v3148
  %v3392 = vunpack.c.h.b16 %v3148
  %v3393 = vunpack.c.l.b16 %v3149
  %v3394 = vunpack.c.h.b16 %v3149
  %v3395 = vunpack.c.l.b16 %v3150
  %v3396 = vunpack.c.h.b16 %v3150
  %v3397 = vunpack.c.l.b16 %v3151
  %v3398 = vunpack.c.h.b16 %v3151
  %v3399 = vunpack.c.l.b16 %v3152
  %v3400 = vunpack.c.h.b16 %v3152
  %v3401 = vunpack.c.l.b16 %v3153
  %v3402 = vunpack.c.h.b16 %v3153
  %v3403 = vunpack.c.l.b16 %v3154
  %v3404 = vunpack.c.h.b16 %v3154
  %v3405 = vunpack.c.l.b16 %v3155
  %v3406 = vunpack.c.h.b16 %v3155
  %v3407 = vunpack.c.l.b16 %v3156
  %v3408 = vunpack.c.h.b16 %v3156
  %v3409 = vunpack.c.l.b16 %v3157
  %v3410 = vunpack.c.h.b16 %v3157
  %v3411 = vunpack.c.l.b16 %v3158
  %v3412 = vunpack.c.h.b16 %v3158
  %v3413 = vunpack.c.l.b16 %v3159
  %v3414 = vunpack.c.h.b16 %v3159
  %v3415 = vunpack.c.l.b16 %v3160
  %v3416 = vunpack.c.h.b16 %v3160
  %v3417 = vunpack.c.l.b16 %v3161
  %v3418 = vunpack.c.h.b16 %v3161
  %v3419 = vunpack.c.l.b16 %v3162
  %v3420 = vunpack.c.h.b16 %v3162
  %v3421 = vunpack.c.l.b16 %v3163
  %v3422 = vunpack.c.h.b16 %v3163
  %v3423 = vunpack.c.l.b16 %v3164
  %v3424 = vunpack.c.h.b16 %v3164
  %v3425 = vunpack.c.l.b16 %v3165
  %v3426 = vunpack.c.h.b16 %v3165
  %v3427 = vunpack.c.l.b16 %v3166
  %v3428 = vunpack.c.h.b16 %v3166
  %v3429 = vunpack.c.l.b16 %v3167
  %v3430 = vunpack.c.h.b16 %v3167
  %v3431 = vunpack.c.l.b16 %v3168
  %v3432 = vunpack.c.h.b16 %v3168
  %v3433 = vunpack.c.l.b16 %v3169
  %v3434 = vunpack.c.h.b16 %v3169
  %v3435 = vunpack.c.l.b16 %v3170
  %v3436 = vunpack.c.h.b16 %v3170
  %v3437 = vunpack.c.l.b16 %v3171
  %v3438 = vunpack.c.h.b16 %v3171
  %v3439 = vunpack.c.l.b16 %v3172
  %v3440 = vunpack.c.h.b16 %v3172
  %v3441 = vunpack.c.l.b16 %v3173
  %v3442 = vunpack.c.h.b16 %v3173
  %v3443 = vunpack.c.l.b16 %v3174
  %v3444 = vunpack.c.h.b16 %v3174
  %v3445 = vunpack.c.l.b16 %v3175
  %v3446 = vunpack.c.h.b16 %v3175
  %v3447 = vunpack.c.l.b16 %v3176
  %v3448 = vunpack.c.h.b16 %v3176
  %v3449 = vunpack.c.l.b16 %v3177
  %v3450 = vunpack.c.h.b16 %v3177
  %v3451 = vunpack.c.l.b16 %v3178
  %v3452 = vunpack.c.h.b16 %v3178
  %v3453 = vunpack.c.l.b16 %v3179
  %v3454 = vunpack.c.h.b16 %v3179
  %v3455 = vunpack.c.l.b16 %v3180
  %v3456 = vunpack.c.h.b16 %v3180
  %v3457 = vpack.c.b16 %v3345, %v3329
  %v3458 = vpack.c.b16 %v3346, %v3330
  %v3459 = vpack.c.b16 %v3347, %v3331
  %v3460 = vpack.c.b16 %v3348, %v3332
  %v3461 = vpack.c.b16 %v3349, %v3333
  %v3462 = vpack.c.b16 %v3350, %v3334
  %v3463 = vpack.c.b16 %v3351, %v3335
  %v3464 = vpack.c.b16 %v3352, %v3336
  %v3465 = vpack.c.b16 %v3353, %v3337
  %v3466 = vpack.c.b16 %v3354, %v3338
  %v3467 = vpack.c.b16 %v3355, %v3339
  %v3468 = vpack.c.b16 %v3356, %v3340
  %v3469 = vpack.c.b16 %v3357, %v3341
  %v3470 = vpack.c.b16 %v3358, %v3342
  %v3471 = vpack.c.b16 %v3359, %v3343
  %v3472 = vpack.c.b16 %v3360, %v3344
  %v3473 = vpack.c.b16 %v3377, %v3361
  %v3474 = vpack.c.b16 %v3378, %v3362
  %v3475 = vpack.c.b16 %v3379, %v3363
  %v3476 = vpack.c.b16 %v3380, %v3364
  %v3477 = vpack.c.b16 %v3381, %v3365
  %v3478 = vpack.c.b16 %v3382, %v3366
  %v3479 = vpack.c.b16 %v3383, %v3367
  %v3480 = vpack.c.b16 %v3384, %v3368
  %v3481 = vpack.c.b16 %v3385, %v3369
  %v3482 = vpack.c.b16 %v3386, %v3370
  %v3483 = vpack.c.b16 %v3387, %v3371
  %v3484 = vpack.c.b16 %v3388, %v3372
  %v3485 = vpack.c.b16 %v3389, %v3373
  %v3486 = vpack.c.b16 %v3390, %v3374
  %v3487 = vpack.c.b16 %v3391, %v3375
  %v3488 = vpack.c.b16 %v3392, %v3376
  %v3489 = vpack.c.b16 %v3409, %v3393
  %v3490 = vpack.c.b16 %v3410, %v3394
  %v3491 = vpack.c.b16 %v3411, %v3395
  %v3492 = vpack.c.b16 %v3412, %v3396
  %v3493 = vpack.c.b16 %v3413, %v3397
  %v3494 = vpack.c.b16 %v3414, %v3398
  %v3495 = vpack.c.b16 %v3415, %v3399
  %v3496 = vpack.c.b16 %v3416, %v3400
  %v3497 = vpack.c.b16 %v3417, %v3401
  %v3498 = vpack.c.b16 %v3418, %v3402
  %v3499 = vpack.c.b16 %v3419, %v3403
  %v3500 = vpack.c.b16 %v3420, %v3404
  %v3501 = vpack.c.b16 %v3421, %v3405
  %v3502 = vpack.c.b16 %v3422, %v3406
  %v3503 = vpack.c.b16 %v3423, %v3407
  %v3504 = vpack.c.b16 %v3424, %v3408
  %v3505 = vpack.c.b16 %v3441, %v3425
  %v3506 = vpack.c.b16 %v3442, %v3426
  %v3507 = vpack.c.b16 %v3443, %v3427
  %v3508 = vpack.c.b16 %v3444, %v3428
  %v3509 = vpack.c.b16 %v3445, %v3429
  %v3510 = vpack.c.b16 %v3446, %v3430
  %v3511 = vpack.c.b16 %v3447, %v3431
  %v3512 = vpack.c.b16 %v3448, %v3432
  %v3513 = vpack.c.b16 %v3449, %v3433
  %v3514 = vpack.c.b16 %v3450, %v3434
  %v3515 = vpack.c.b16 %v3451, %v3435
  %v3516 = vpack.c.b16 %v3452, %v3436
  %v3517 = vpack.c.b16 %v3453, %v3437
  %v3518 = vpack.c.b16 %v3454, %v3438
  %v3519 = vpack.c.b16 %v3455, %v3439
  %v3520 = vpack.c.b16 %v3456, %v3440
  %v3586 = vsel %vm261, %v3113, 0
  %v3589 = vsel %vm261, %v3114, 0
  %v3592 = vsel %vm261, %v3115, 0
  %v3595 = vsel %vm261, %v3116, 0
  %3597 = vmatprep.subr.bf16.mxu0 %v3458
  %3598 = vmatpush1.bf16.msra.mxu0 %v3457
  %3599 = vmatprep.subr.bf16.mxu0 %v3474
  %3600 = vmatpush1.bf16.msra.mxu0 %v3473
  %3601 = vmatprep.subr.bf16.mxu0 %v3490
  %3602 = vmatpush1.bf16.msra.mxu0 %v3489
  %3603 = vmatprep.subr.bf16.mxu0 %v3506
  %3604 = vmatpush1.bf16.msra.mxu0 %v3505
  %3605 = vmatprep.subr.bf16.mxu0 0
  %3606 = vmatpush1.bf16.msra.mxu0 0
  %3607 = vmatprep.subr.bf16.mxu0 0
  %3608 = vmatpush1.bf16.msra.mxu0 0
  %3609 = vmatprep.subr.bf16.mxu0 0
  %3610 = vmatpush1.bf16.msra.mxu0 0
  %3611 = vmatprep.subr.bf16.mxu0 0
  %3612 = vmatpush1.bf16.msra.mxu0 0
  %3613 = vmatprep.subr.bf16.mxu0 0
  %3614 = vmatpush1.bf16.msra.mxu0 0
  %3615 = vmatprep.subr.bf16.mxu0 0
  %3616 = vmatpush1.bf16.msra.mxu0 0
  %3617 = vmatprep.subr.bf16.mxu0 0
  %3618 = vmatpush1.bf16.msra.mxu0 0
  %3619 = vmatprep.subr.bf16.mxu0 0
  %3620 = vmatpush1.bf16.msra.mxu0 0
  %3621 = vmatprep.subr.bf16.mxu0 0
  %3622 = vmatpush1.bf16.msra.mxu0 0
  %3623 = vmatprep.subr.bf16.mxu0 0
  %3624 = vmatpush1.bf16.msra.mxu0 0
  %3625 = vmatprep.subr.bf16.mxu0 0
  %3626 = vmatpush1.bf16.msra.mxu0 0
  %3627 = vmatprep.subr.bf16.mxu0 0
  %3628 = vmatpush1.bf16.msra.mxu0 0
  %3629 = vmatprep.mubr.bf16.mxu0 0
  %3630 = vmatmul.mubr.bf16.gmra.mrb[0].mxu0 %v3586
  %v3631 = vpop.f32.mrb[0].mxu0
  %v3632 = vadd.f32 %v3188, %v3631
  %v3633 = vpop.f32.mrb[0].mxu0
  %v3634 = vadd.f32 %v3192, %v3633
  %v3635 = vpop.f32.mrb[0].mxu0
  %v3636 = vadd.f32 %v3188, %v3635
  %v3637 = vpop.f32.mrb[0].mxu0
  %v3638 = vadd.f32 %v3192, %v3637
  %3639 = vmatprep.mubr.bf16.mxu0 0
  %3640 = vmatmul.mubr.bf16.gmra.mrb[0].mxu0 %v3589
  %v3641 = vpop.f32.mrb[0].mxu0
  %v3642 = vadd.f32 %v3188, %v3641
  %v3643 = vpop.f32.mrb[0].mxu0
  %v3644 = vadd.f32 %v3192, %v3643
  %v3645 = vpop.f32.mrb[0].mxu0
  %v3646 = vadd.f32 %v3188, %v3645
  %v3647 = vpop.f32.mrb[0].mxu0
  %v3648 = vadd.f32 %v3192, %v3647
  %3649 = vmatprep.mubr.bf16.mxu0 0
  %3650 = vmatmul.mubr.bf16.gmra.mrb[0].mxu0 %v3592
  %v3651 = vpop.f32.mrb[0].mxu0
  %v3652 = vadd.f32 %v3188, %v3651
  %v3653 = vpop.f32.mrb[0].mxu0
  %v3654 = vadd.f32 %v3192, %v3653
  %v3655 = vpop.f32.mrb[0].mxu0
  %v3656 = vadd.f32 %v3188, %v3655
  %v3657 = vpop.f32.mrb[0].mxu0
  %v3658 = vadd.f32 %v3192, %v3657
  %3659 = vmatprep.mubr.bf16.mxu0 0
  %3660 = vmatmul.mubr.bf16.gmra.mrb[0].mxu0 %v3595
  %v3661 = vpop.f32.mrb[0].mxu0
  %v3662 = vadd.f32 %v3188, %v3661
  %v3663 = vpop.f32.mrb[0].mxu0
  %v3664 = vadd.f32 %v3192, %v3663
  %v3665 = vpop.f32.mrb[0].mxu0
  %v3666 = vadd.f32 %v3188, %v3665
  %v3667 = vpop.f32.mrb[0].mxu0
  %v3668 = vadd.f32 %v3192, %v3667
  %3669 = vdwg.mxu0
  %3670 = vmatprep.subr.bf16.mxu0 %v3460
  %3671 = vmatpush1.bf16.msra.mxu0 %v3459
  %3672 = vmatprep.subr.bf16.mxu0 %v3476
  %3673 = vmatpush1.bf16.msra.mxu0 %v3475
  %3674 = vmatprep.subr.bf16.mxu0 %v3492
  %3675 = vmatpush1.bf16.msra.mxu0 %v3491
  %3676 = vmatprep.subr.bf16.mxu0 %v3508
  %3677 = vmatpush1.bf16.msra.mxu0 %v3507
  %3678 = vmatprep.subr.bf16.mxu0 0
  %3679 = vmatpush1.bf16.msra.mxu0 0
  %3680 = vmatprep.subr.bf16.mxu0 0
  %3681 = vmatpush1.bf16.msra.mxu0 0
  %3682 = vmatprep.subr.bf16.mxu0 0
  %3683 = vmatpush1.bf16.msra.mxu0 0
  %3684 = vmatprep.subr.bf16.mxu0 0
  %3685 = vmatpush1.bf16.msra.mxu0 0
  %3686 = vmatprep.subr.bf16.mxu0 0
  %3687 = vmatpush1.bf16.msra.mxu0 0
  %3688 = vmatprep.subr.bf16.mxu0 0
  %3689 = vmatpush1.bf16.msra.mxu0 0
  %3690 = vmatprep.subr.bf16.mxu0 0
  %3691 = vmatpush1.bf16.msra.mxu0 0
  %3692 = vmatprep.subr.bf16.mxu0 0
  %3693 = vmatpush1.bf16.msra.mxu0 0
  %3694 = vmatprep.subr.bf16.mxu0 0
  %3695 = vmatpush1.bf16.msra.mxu0 0
  %3696 = vmatprep.subr.bf16.mxu0 0
  %3697 = vmatpush1.bf16.msra.mxu0 0
  %3698 = vmatprep.subr.bf16.mxu0 0
  %3699 = vmatpush1.bf16.msra.mxu0 0
  %3700 = vmatprep.subr.bf16.mxu0 0
  %3701 = vmatpush1.bf16.msra.mxu0 0
  %3702 = vmatprep.mubr.bf16.mxu0 0
  %3703 = vmatmul.mubr.bf16.gmra.mrb[0].mxu0 %v3586
  %v3704 = vpop.f32.mrb[0].mxu0
  %v3705 = vadd.f32 %v3196, %v3704
  %v3706 = vpop.f32.mrb[0].mxu0
  %v3707 = vadd.f32 %v3200, %v3706
  %v3708 = vpop.f32.mrb[0].mxu0
  %v3709 = vadd.f32 %v3196, %v3708
  %v3710 = vpop.f32.mrb[0].mxu0
  %v3711 = vadd.f32 %v3200, %v3710
  %3712 = vmatprep.mubr.bf16.mxu0 0
  %3713 = vmatmul.mubr.bf16.gmra.mrb[0].mxu0 %v3589
  %v3714 = vpop.f32.mrb[0].mxu0
  %v3715 = vadd.f32 %v3196, %v3714
  %v3716 = vpop.f32.mrb[0].mxu0
  %v3717 = vadd.f32 %v3200, %v3716
  %v3718 = vpop.f32.mrb[0].mxu0
  %v3719 = vadd.f32 %v3196, %v3718
  %v3720 = vpop.f32.mrb[0].mxu0
  %v3721 = vadd.f32 %v3200, %v3720
  %3722 = vmatprep.mubr.bf16.mxu0 0
  %3723 = vmatmul.mubr.bf16.gmra.mrb[0].mxu0 %v3592
  %v3724 = vpop.f32.mrb[0].mxu0
  %v3725 = vadd.f32 %v3196, %v3724
  %v3726 = vpop.f32.mrb[0].mxu0
  %v3727 = vadd.f32 %v3200, %v3726
  %v3728 = vpop.f32.mrb[0].mxu0
  %v3729 = vadd.f32 %v3196, %v3728
  %v3730 = vpop.f32.mrb[0].mxu0
  %v3731 = vadd.f32 %v3200, %v3730
  %3732 = vmatprep.mubr.bf16.mxu0 0
  %3733 = vmatmul.mubr.bf16.gmra.mrb[0].mxu0 %v3595
  %v3734 = vpop.f32.mrb[0].mxu0
  %v3735 = vadd.f32 %v3196, %v3734
  %v3736 = vpop.f32.mrb[0].mxu0
  %v3737 = vadd.f32 %v3200, %v3736
  %v3738 = vpop.f32.mrb[0].mxu0
  %v3739 = vadd.f32 %v3196, %v3738
  %v3740 = vpop.f32.mrb[0].mxu0
  %v3741 = vadd.f32 %v3200, %v3740
  %3742 = vdwg.mxu0
  %3743 = vmatprep.subr.bf16.mxu0 %v3462
  %3744 = vmatpush1.bf16.msra.mxu0 %v3461
  %3745 = vmatprep.subr.bf16.mxu0 %v3478
  %3746 = vmatpush1.bf16.msra.mxu0 %v3477
  %3747 = vmatprep.subr.bf16.mxu0 %v3494
  %3748 = vmatpush1.bf16.msra.mxu0 %v3493
  %3749 = vmatprep.subr.bf16.mxu0 %v3510
  %3750 = vmatpush1.bf16.msra.mxu0 %v3509
  %3751 = vmatprep.subr.bf16.mxu0 0
  %3752 = vmatpush1.bf16.msra.mxu0 0
  %3753 = vmatprep.subr.bf16.mxu0 0
  %3754 = vmatpush1.bf16.msra.mxu0 0
  %3755 = vmatprep.subr.bf16.mxu0 0
  %3756 = vmatpush1.bf16.msra.mxu0 0
  %3757 = vmatprep.subr.bf16.mxu0 0
  %3758 = vmatpush1.bf16.msra.mxu0 0
  %3759 = vmatprep.subr.bf16.mxu0 0
  %3760 = vmatpush1.bf16.msra.mxu0 0
  %3761 = vmatprep.subr.bf16.mxu0 0
  %3762 = vmatpush1.bf16.msra.mxu0 0
  %3763 = vmatprep.subr.bf16.mxu0 0
  %3764 = vmatpush1.bf16.msra.mxu0 0
  %3765 = vmatprep.subr.bf16.mxu0 0
  %3766 = vmatpush1.bf16.msra.mxu0 0
  %3767 = vmatprep.subr.bf16.mxu0 0
  %3768 = vmatpush1.bf16.msra.mxu0 0
  %3769 = vmatprep.subr.bf16.mxu0 0
  %3770 = vmatpush1.bf16.msra.mxu0 0
  %3771 = vmatprep.subr.bf16.mxu0 0
  %3772 = vmatpush1.bf16.msra.mxu0 0
  %3773 = vmatprep.subr.bf16.mxu0 0
  %3774 = vmatpush1.bf16.msra.mxu0 0
  %3775 = vmatprep.mubr.bf16.mxu0 0
  %3776 = vmatmul.mubr.bf16.gmra.mrb[0].mxu0 %v3586
  %v3777 = vpop.f32.mrb[0].mxu0
  %v3778 = vadd.f32 %v3204, %v3777
  %v3779 = vpop.f32.mrb[0].mxu0
  %v3780 = vadd.f32 %v3208, %v3779
  %v3781 = vpop.f32.mrb[0].mxu0
  %v3782 = vadd.f32 %v3204, %v3781
  %v3783 = vpop.f32.mrb[0].mxu0
  %v3784 = vadd.f32 %v3208, %v3783
  %3785 = vmatprep.mubr.bf16.mxu0 0
  %3786 = vmatmul.mubr.bf16.gmra.mrb[0].mxu0 %v3589
  %v3787 = vpop.f32.mrb[0].mxu0
  %v3788 = vadd.f32 %v3204, %v3787
  %v3789 = vpop.f32.mrb[0].mxu0
  %v3790 = vadd.f32 %v3208, %v3789
  %v3791 = vpop.f32.mrb[0].mxu0
  %v3792 = vadd.f32 %v3204, %v3791
  %v3793 = vpop.f32.mrb[0].mxu0
  %v3794 = vadd.f32 %v3208, %v3793
  %3795 = vmatprep.mubr.bf16.mxu0 0
  %3796 = vmatmul.mubr.bf16.gmra.mrb[0].mxu0 %v3592
  %v3797 = vpop.f32.mrb[0].mxu0
  %v3798 = vadd.f32 %v3204, %v3797
  %v3799 = vpop.f32.mrb[0].mxu0
  %v3800 = vadd.f32 %v3208, %v3799
  %v3801 = vpop.f32.mrb[0].mxu0
  %v3802 = vadd.f32 %v3204, %v3801
  %v3803 = vpop.f32.mrb[0].mxu0
  %v3804 = vadd.f32 %v3208, %v3803
  %3805 = vmatprep.mubr.bf16.mxu0 0
  %3806 = vmatmul.mubr.bf16.gmra.mrb[0].mxu0 %v3595
  %v3807 = vpop.f32.mrb[0].mxu0
  %v3808 = vadd.f32 %v3204, %v3807
  %v3809 = vpop.f32.mrb[0].mxu0
  %v3810 = vadd.f32 %v3208, %v3809
  %v3811 = vpop.f32.mrb[0].mxu0
  %v3812 = vadd.f32 %v3204, %v3811
  %v3813 = vpop.f32.mrb[0].mxu0
  %v3814 = vadd.f32 %v3208, %v3813
  %3815 = vdwg.mxu0
  %3816 = vmatprep.subr.bf16.mxu0 %v3464
  %3817 = vmatpush1.bf16.msra.mxu0 %v3463
  %3818 = vmatprep.subr.bf16.mxu0 %v3480
  %3819 = vmatpush1.bf16.msra.mxu0 %v3479
  %3820 = vmatprep.subr.bf16.mxu0 %v3496
  %3821 = vmatpush1.bf16.msra.mxu0 %v3495
  %3822 = vmatprep.subr.bf16.mxu0 %v3512
  %3823 = vmatpush1.bf16.msra.mxu0 %v3511
  %3824 = vmatprep.subr.bf16.mxu0 0
  %3825 = vmatpush1.bf16.msra.mxu0 0
  %3826 = vmatprep.subr.bf16.mxu0 0
  %3827 = vmatpush1.bf16.msra.mxu0 0
  %3828 = vmatprep.subr.bf16.mxu0 0
  %3829 = vmatpush1.bf16.msra.mxu0 0
  %3830 = vmatprep.subr.bf16.mxu0 0
  %3831 = vmatpush1.bf16.msra.mxu0 0
  %3832 = vmatprep.subr.bf16.mxu0 0
  %3833 = vmatpush1.bf16.msra.mxu0 0
  %3834 = vmatprep.subr.bf16.mxu0 0
  %3835 = vmatpush1.bf16.msra.mxu0 0
  %3836 = vmatprep.subr.bf16.mxu0 0
  %3837 = vmatpush1.bf16.msra.mxu0 0
  %3838 = vmatprep.subr.bf16.mxu0 0
  %3839 = vmatpush1.bf16.msra.mxu0 0
  %3840 = vmatprep.subr.bf16.mxu0 0
  %3841 = vmatpush1.bf16.msra.mxu0 0
  %3842 = vmatprep.subr.bf16.mxu0 0
  %3843 = vmatpush1.bf16.msra.mxu0 0
  %3844 = vmatprep.subr.bf16.mxu0 0
  %3845 = vmatpush1.bf16.msra.mxu0 0
  %3846 = vmatprep.subr.bf16.mxu0 0
  %3847 = vmatpush1.bf16.msra.mxu0 0
  %3848 = vmatprep.mubr.bf16.mxu0 0
  %3849 = vmatmul.mubr.bf16.gmra.mrb[0].mxu0 %v3586
  %v3850 = vpop.f32.mrb[0].mxu0
  %v3851 = vadd.f32 %v3212, %v3850
  %v3852 = vpop.f32.mrb[0].mxu0
  %v3853 = vadd.f32 %v3216, %v3852
  %v3854 = vpop.f32.mrb[0].mxu0
  %v3855 = vadd.f32 %v3212, %v3854
  %v3856 = vpop.f32.mrb[0].mxu0
  %v3857 = vadd.f32 %v3216, %v3856
  %3858 = vmatprep.mubr.bf16.mxu0 0
  %3859 = vmatmul.mubr.bf16.gmra.mrb[0].mxu0 %v3589
  %v3860 = vpop.f32.mrb[0].mxu0
  %v3861 = vadd.f32 %v3212, %v3860
  %v3862 = vpop.f32.mrb[0].mxu0
  %v3863 = vadd.f32 %v3216, %v3862
  %v3864 = vpop.f32.mrb[0].mxu0
  %v3865 = vadd.f32 %v3212, %v3864
  %v3866 = vpop.f32.mrb[0].mxu0
  %v3867 = vadd.f32 %v3216, %v3866
  %3868 = vmatprep.mubr.bf16.mxu0 0
  %3869 = vmatmul.mubr.bf16.gmra.mrb[0].mxu0 %v3592
  %v3870 = vpop.f32.mrb[0].mxu0
  %v3871 = vadd.f32 %v3212, %v3870
  %v3872 = vpop.f32.mrb[0].mxu0
  %v3873 = vadd.f32 %v3216, %v3872
  %v3874 = vpop.f32.mrb[0].mxu0
  %v3875 = vadd.f32 %v3212, %v3874
  %v3876 = vpop.f32.mrb[0].mxu0
  %v3877 = vadd.f32 %v3216, %v3876
  %3878 = vmatprep.mubr.bf16.mxu0 0
  %3879 = vmatmul.mubr.bf16.gmra.mrb[0].mxu0 %v3595
  %v3880 = vpop.f32.mrb[0].mxu0
  %v3881 = vadd.f32 %v3212, %v3880
  %v3882 = vpop.f32.mrb[0].mxu0
  %v3883 = vadd.f32 %v3216, %v3882
  %v3884 = vpop.f32.mrb[0].mxu0
  %v3885 = vadd.f32 %v3212, %v3884
  %v3886 = vpop.f32.mrb[0].mxu0
  %v3887 = vadd.f32 %v3216, %v3886
  %3888 = vdwg.mxu0
  %3889 = vmatprep.subr.bf16.mxu0 %v3466
  %3890 = vmatpush1.bf16.msra.mxu0 %v3465
  %3891 = vmatprep.subr.bf16.mxu0 %v3482
  %3892 = vmatpush1.bf16.msra.mxu0 %v3481
  %3893 = vmatprep.subr.bf16.mxu0 %v3498
  %3894 = vmatpush1.bf16.msra.mxu0 %v3497
  %3895 = vmatprep.subr.bf16.mxu0 %v3514
  %3896 = vmatpush1.bf16.msra.mxu0 %v3513
  %3897 = vmatprep.subr.bf16.mxu0 0
  %3898 = vmatpush1.bf16.msra.mxu0 0
  %3899 = vmatprep.subr.bf16.mxu0 0
  %3900 = vmatpush1.bf16.msra.mxu0 0
  %3901 = vmatprep.subr.bf16.mxu0 0
  %3902 = vmatpush1.bf16.msra.mxu0 0
  %3903 = vmatprep.subr.bf16.mxu0 0
  %3904 = vmatpush1.bf16.msra.mxu0 0
  %3905 = vmatprep.subr.bf16.mxu0 0
  %3906 = vmatpush1.bf16.msra.mxu0 0
  %3907 = vmatprep.subr.bf16.mxu0 0
  %3908 = vmatpush1.bf16.msra.mxu0 0
  %3909 = vmatprep.subr.bf16.mxu0 0
  %3910 = vmatpush1.bf16.msra.mxu0 0
  %3911 = vmatprep.subr.bf16.mxu0 0
  %3912 = vmatpush1.bf16.msra.mxu0 0
  %3913 = vmatprep.subr.bf16.mxu0 0
  %3914 = vmatpush1.bf16.msra.mxu0 0
  %3915 = vmatprep.subr.bf16.mxu0 0
  %3916 = vmatpush1.bf16.msra.mxu0 0
  %3917 = vmatprep.subr.bf16.mxu0 0
  %3918 = vmatpush1.bf16.msra.mxu0 0
  %3919 = vmatprep.subr.bf16.mxu0 0
  %3920 = vmatpush1.bf16.msra.mxu0 0
  %3921 = vmatprep.mubr.bf16.mxu0 0
  %3922 = vmatmul.mubr.bf16.gmra.mrb[0].mxu0 %v3586
  %v3923 = vpop.f32.mrb[0].mxu0
  %v3924 = vadd.f32 %v3220, %v3923
  %v3925 = vpop.f32.mrb[0].mxu0
  %v3926 = vadd.f32 %v3224, %v3925
  %v3927 = vpop.f32.mrb[0].mxu0
  %v3928 = vadd.f32 %v3220, %v3927
  %v3929 = vpop.f32.mrb[0].mxu0
  %v3930 = vadd.f32 %v3224, %v3929
  %3931 = vmatprep.mubr.bf16.mxu0 0
  %3932 = vmatmul.mubr.bf16.gmra.mrb[0].mxu0 %v3589
  %v3933 = vpop.f32.mrb[0].mxu0
  %v3934 = vadd.f32 %v3220, %v3933
  %v3935 = vpop.f32.mrb[0].mxu0
  %v3936 = vadd.f32 %v3224, %v3935
  %v3937 = vpop.f32.mrb[0].mxu0
  %v3938 = vadd.f32 %v3220, %v3937
  %v3939 = vpop.f32.mrb[0].mxu0
  %v3940 = vadd.f32 %v3224, %v3939
  %3941 = vmatprep.mubr.bf16.mxu0 0
  %3942 = vmatmul.mubr.bf16.gmra.mrb[0].mxu0 %v3592
  %v3943 = vpop.f32.mrb[0].mxu0
  %v3944 = vadd.f32 %v3220, %v3943
  %v3945 = vpop.f32.mrb[0].mxu0
  %v3946 = vadd.f32 %v3224, %v3945
  %v3947 = vpop.f32.mrb[0].mxu0
  %v3948 = vadd.f32 %v3220, %v3947
  %v3949 = vpop.f32.mrb[0].mxu0
  %v3950 = vadd.f32 %v3224, %v3949
  %3951 = vmatprep.mubr.bf16.mxu0 0
  %3952 = vmatmul.mubr.bf16.gmra.mrb[0].mxu0 %v3595
  %v3953 = vpop.f32.mrb[0].mxu0
  %v3954 = vadd.f32 %v3220, %v3953
  %v3955 = vpop.f32.mrb[0].mxu0
  %v3956 = vadd.f32 %v3224, %v3955
  %v3957 = vpop.f32.mrb[0].mxu0
  %v3958 = vadd.f32 %v3220, %v3957
  %v3959 = vpop.f32.mrb[0].mxu0
  %v3960 = vadd.f32 %v3224, %v3959
  %3961 = vdwg.mxu0
  %3962 = vmatprep.subr.bf16.mxu0 %v3468
  %3963 = vmatpush1.bf16.msra.mxu0 %v3467
  %3964 = vmatprep.subr.bf16.mxu0 %v3484
  %3965 = vmatpush1.bf16.msra.mxu0 %v3483
  %3966 = vmatprep.subr.bf16.mxu0 %v3500
  %3967 = vmatpush1.bf16.msra.mxu0 %v3499
  %3968 = vmatprep.subr.bf16.mxu0 %v3516
  %3969 = vmatpush1.bf16.msra.mxu0 %v3515
  %3970 = vmatprep.subr.bf16.mxu0 0
  %3971 = vmatpush1.bf16.msra.mxu0 0
  %3972 = vmatprep.subr.bf16.mxu0 0
  %3973 = vmatpush1.bf16.msra.mxu0 0
  %3974 = vmatprep.subr.bf16.mxu0 0
  %3975 = vmatpush1.bf16.msra.mxu0 0
  %3976 = vmatprep.subr.bf16.mxu0 0
  %3977 = vmatpush1.bf16.msra.mxu0 0
  %3978 = vmatprep.subr.bf16.mxu0 0
  %3979 = vmatpush1.bf16.msra.mxu0 0
  %3980 = vmatprep.subr.bf16.mxu0 0
  %3981 = vmatpush1.bf16.msra.mxu0 0
  %3982 = vmatprep.subr.bf16.mxu0 0
  %3983 = vmatpush1.bf16.msra.mxu0 0
  %3984 = vmatprep.subr.bf16.mxu0 0
  %3985 = vmatpush1.bf16.msra.mxu0 0
  %3986 = vmatprep.subr.bf16.mxu0 0
  %3987 = vmatpush1.bf16.msra.mxu0 0
  %3988 = vmatprep.subr.bf16.mxu0 0
  %3989 = vmatpush1.bf16.msra.mxu0 0
  %3990 = vmatprep.subr.bf16.mxu0 0
  %3991 = vmatpush1.bf16.msra.mxu0 0
  %3992 = vmatprep.subr.bf16.mxu0 0
  %3993 = vmatpush1.bf16.msra.mxu0 0
  %3994 = vmatprep.mubr.bf16.mxu0 0
  %3995 = vmatmul.mubr.bf16.gmra.mrb[0].mxu0 %v3586
  %v3996 = vpop.f32.mrb[0].mxu0
  %v3997 = vadd.f32 %v3228, %v3996
  %v3998 = vpop.f32.mrb[0].mxu0
  %v3999 = vadd.f32 %v3232, %v3998
  %v4000 = vpop.f32.mrb[0].mxu0
  %v4001 = vadd.f32 %v3228, %v4000
  %v4002 = vpop.f32.mrb[0].mxu0
  %v4003 = vadd.f32 %v3232, %v4002
  %4004 = vmatprep.mubr.bf16.mxu0 0
  %4005 = vmatmul.mubr.bf16.gmra.mrb[0].mxu0 %v3589
  %v4006 = vpop.f32.mrb[0].mxu0
  %v4007 = vadd.f32 %v3228, %v4006
  %v4008 = vpop.f32.mrb[0].mxu0
  %v4009 = vadd.f32 %v3232, %v4008
  %v4010 = vpop.f32.mrb[0].mxu0
  %v4011 = vadd.f32 %v3228, %v4010
  %v4012 = vpop.f32.mrb[0].mxu0
  %v4013 = vadd.f32 %v3232, %v4012
  %4014 = vmatprep.mubr.bf16.mxu0 0
  %4015 = vmatmul.mubr.bf16.gmra.mrb[0].mxu0 %v3592
  %v4016 = vpop.f32.mrb[0].mxu0
  %v4017 = vadd.f32 %v3228, %v4016
  %v4018 = vpop.f32.mrb[0].mxu0
  %v4019 = vadd.f32 %v3232, %v4018
  %v4020 = vpop.f32.mrb[0].mxu0
  %v4021 = vadd.f32 %v3228, %v4020
  %v4022 = vpop.f32.mrb[0].mxu0
  %v4023 = vadd.f32 %v3232, %v4022
  %4024 = vmatprep.mubr.bf16.mxu0 0
  %4025 = vmatmul.mubr.bf16.gmra.mrb[0].mxu0 %v3595
  %v4026 = vpop.f32.mrb[0].mxu0
  %v4027 = vadd.f32 %v3228, %v4026
  %v4028 = vpop.f32.mrb[0].mxu0
  %v4029 = vadd.f32 %v3232, %v4028
  %v4030 = vpop.f32.mrb[0].mxu0
  %v4031 = vadd.f32 %v3228, %v4030
  %v4032 = vpop.f32.mrb[0].mxu0
  %v4033 = vadd.f32 %v3232, %v4032
  %4034 = vdwg.mxu0
  %4035 = vmatprep.subr.bf16.mxu0 %v3470
  %4036 = vmatpush1.bf16.msra.mxu0 %v3469
  %4037 = vmatprep.subr.bf16.mxu0 %v3486
  %4038 = vmatpush1.bf16.msra.mxu0 %v3485
  %4039 = vmatprep.subr.bf16.mxu0 %v3502
  %4040 = vmatpush1.bf16.msra.mxu0 %v3501
  %4041 = vmatprep.subr.bf16.mxu0 %v3518
  %4042 = vmatpush1.bf16.msra.mxu0 %v3517
  %4043 = vmatprep.subr.bf16.mxu0 0
  %4044 = vmatpush1.bf16.msra.mxu0 0
  %4045 = vmatprep.subr.bf16.mxu0 0
  %4046 = vmatpush1.bf16.msra.mxu0 0
  %4047 = vmatprep.subr.bf16.mxu0 0
  %4048 = vmatpush1.bf16.msra.mxu0 0
  %4049 = vmatprep.subr.bf16.mxu0 0
  %4050 = vmatpush1.bf16.msra.mxu0 0
  %4051 = vmatprep.subr.bf16.mxu0 0
  %4052 = vmatpush1.bf16.msra.mxu0 0
  %4053 = vmatprep.subr.bf16.mxu0 0
  %4054 = vmatpush1.bf16.msra.mxu0 0
  %4055 = vmatprep.subr.bf16.mxu0 0
  %4056 = vmatpush1.bf16.msra.mxu0 0
  %4057 = vmatprep.subr.bf16.mxu0 0
  %4058 = vmatpush1.bf16.msra.mxu0 0
  %4059 = vmatprep.subr.bf16.mxu0 0
  %4060 = vmatpush1.bf16.msra.mxu0 0
  %4061 = vmatprep.subr.bf16.mxu0 0
  %4062 = vmatpush1.bf16.msra.mxu0 0
  %4063 = vmatprep.subr.bf16.mxu0 0
  %4064 = vmatpush1.bf16.msra.mxu0 0
  %4065 = vmatprep.subr.bf16.mxu0 0
  %4066 = vmatpush1.bf16.msra.mxu0 0
  %4067 = vmatprep.mubr.bf16.mxu0 0
  %4068 = vmatmul.mubr.bf16.gmra.mrb[0].mxu0 %v3586
  %v4069 = vpop.f32.mrb[0].mxu0
  %v4070 = vadd.f32 %v3236, %v4069
  %v4071 = vpop.f32.mrb[0].mxu0
  %v4072 = vadd.f32 %v3240, %v4071
  %v4073 = vpop.f32.mrb[0].mxu0
  %v4074 = vadd.f32 %v3236, %v4073
  %v4075 = vpop.f32.mrb[0].mxu0
  %v4076 = vadd.f32 %v3240, %v4075
  %4077 = vmatprep.mubr.bf16.mxu0 0
  %4078 = vmatmul.mubr.bf16.gmra.mrb[0].mxu0 %v3589
  %v4079 = vpop.f32.mrb[0].mxu0
  %v4080 = vadd.f32 %v3236, %v4079
  %v4081 = vpop.f32.mrb[0].mxu0
  %v4082 = vadd.f32 %v3240, %v4081
  %v4083 = vpop.f32.mrb[0].mxu0
  %v4084 = vadd.f32 %v3236, %v4083
  %v4085 = vpop.f32.mrb[0].mxu0
  %v4086 = vadd.f32 %v3240, %v4085
  %4087 = vmatprep.mubr.bf16.mxu0 0
  %4088 = vmatmul.mubr.bf16.gmra.mrb[0].mxu0 %v3592
  %v4089 = vpop.f32.mrb[0].mxu0
  %v4090 = vadd.f32 %v3236, %v4089
  %v4091 = vpop.f32.mrb[0].mxu0
  %v4092 = vadd.f32 %v3240, %v4091
  %v4093 = vpop.f32.mrb[0].mxu0
  %v4094 = vadd.f32 %v3236, %v4093
  %v4095 = vpop.f32.mrb[0].mxu0
  %v4096 = vadd.f32 %v3240, %v4095
  %4097 = vmatprep.mubr.bf16.mxu0 0
  %4098 = vmatmul.mubr.bf16.gmra.mrb[0].mxu0 %v3595
  %v4099 = vpop.f32.mrb[0].mxu0
  %v4100 = vadd.f32 %v3236, %v4099
  %v4101 = vpop.f32.mrb[0].mxu0
  %v4102 = vadd.f32 %v3240, %v4101
  %v4103 = vpop.f32.mrb[0].mxu0
  %v4104 = vadd.f32 %v3236, %v4103
  %v4105 = vpop.f32.mrb[0].mxu0
  %v4106 = vadd.f32 %v3240, %v4105
  %4107 = vdwg.mxu0
  %4108 = vmatprep.subr.bf16.mxu0 %v3472
  %4109 = vmatpush1.bf16.msra.mxu0 %v3471
  %4110 = vmatprep.subr.bf16.mxu0 %v3488
  %4111 = vmatpush1.bf16.msra.mxu0 %v3487
  %4112 = vmatprep.subr.bf16.mxu0 %v3504
  %4113 = vmatpush1.bf16.msra.mxu0 %v3503
  %4114 = vmatprep.subr.bf16.mxu0 %v3520
  %4115 = vmatpush1.bf16.msra.mxu0 %v3519
  %4116 = vmatprep.subr.bf16.mxu0 0
  %4117 = vmatpush1.bf16.msra.mxu0 0
  %4118 = vmatprep.subr.bf16.mxu0 0
  %4119 = vmatpush1.bf16.msra.mxu0 0
  %4120 = vmatprep.subr.bf16.mxu0 0
  %4121 = vmatpush1.bf16.msra.mxu0 0
  %4122 = vmatprep.subr.bf16.mxu0 0
  %4123 = vmatpush1.bf16.msra.mxu0 0
  %4124 = vmatprep.subr.bf16.mxu0 0
  %4125 = vmatpush1.bf16.msra.mxu0 0
  %4126 = vmatprep.subr.bf16.mxu0 0
  %4127 = vmatpush1.bf16.msra.mxu0 0
  %4128 = vmatprep.subr.bf16.mxu0 0
  %4129 = vmatpush1.bf16.msra.mxu0 0
  %4130 = vmatprep.subr.bf16.mxu0 0
  %4131 = vmatpush1.bf16.msra.mxu0 0
  %4132 = vmatprep.subr.bf16.mxu0 0
  %4133 = vmatpush1.bf16.msra.mxu0 0
  %4134 = vmatprep.subr.bf16.mxu0 0
  %4135 = vmatpush1.bf16.msra.mxu0 0
  %4136 = vmatprep.subr.bf16.mxu0 0
  %4137 = vmatpush1.bf16.msra.mxu0 0
  %4138 = vmatprep.subr.bf16.mxu0 0
  %4139 = vmatpush1.bf16.msra.mxu0 0
  %4140 = vmatprep.mubr.bf16.mxu0 0
  %4141 = vmatmul.mubr.bf16.gmra.mrb[0].mxu0 %v3586
  %v4142 = vpop.f32.mrb[0].mxu0
  %v4143 = vadd.f32 %v3244, %v4142
  %v4144 = vpop.f32.mrb[0].mxu0
  %v4145 = vadd.f32 %v3248, %v4144
  %v4146 = vpop.f32.mrb[0].mxu0
  %v4147 = vadd.f32 %v3244, %v4146
  %v4148 = vpop.f32.mrb[0].mxu0
  %v4149 = vadd.f32 %v3248, %v4148
  %4150 = vmatprep.mubr.bf16.mxu0 0
  %4151 = vmatmul.mubr.bf16.gmra.mrb[0].mxu0 %v3589
  %v4152 = vpop.f32.mrb[0].mxu0
  %v4153 = vadd.f32 %v3244, %v4152
  %v4154 = vpop.f32.mrb[0].mxu0
  %v4155 = vadd.f32 %v3248, %v4154
  %v4156 = vpop.f32.mrb[0].mxu0
  %v4157 = vadd.f32 %v3244, %v4156
  %v4158 = vpop.f32.mrb[0].mxu0
  %v4159 = vadd.f32 %v3248, %v4158
  %4160 = vmatprep.mubr.bf16.mxu0 0
  %4161 = vmatmul.mubr.bf16.gmra.mrb[0].mxu0 %v3592
  %v4162 = vpop.f32.mrb[0].mxu0
  %v4163 = vadd.f32 %v3244, %v4162
  %v4164 = vpop.f32.mrb[0].mxu0
  %v4165 = vadd.f32 %v3248, %v4164
  %v4166 = vpop.f32.mrb[0].mxu0
  %v4167 = vadd.f32 %v3244, %v4166
  %v4168 = vpop.f32.mrb[0].mxu0
  %v4169 = vadd.f32 %v3248, %v4168
  %4170 = vmatprep.mubr.bf16.mxu0 0
  %4171 = vmatmul.mubr.bf16.gmra.mrb[0].mxu0 %v3595
  %v4172 = vpop.f32.mrb[0].mxu0
  %v4173 = vadd.f32 %v3244, %v4172
  %v4174 = vpop.f32.mrb[0].mxu0
  %v4175 = vadd.f32 %v3248, %v4174
  %v4176 = vpop.f32.mrb[0].mxu0
  %v4177 = vadd.f32 %v3244, %v4176
  %v4178 = vpop.f32.mrb[0].mxu0
  %v4179 = vadd.f32 %v3248, %v4178
  %4180 = vdwg.mxu0
  %v4181 = vmax.f32 %v3632, 0.0
  %v4182 = vmax.f32 %v3634, 0.0
  %v4183 = vmax.f32 %v3705, 0.0
  %v4184 = vmax.f32 %v3707, 0.0
  %v4185 = vmax.f32 %v3778, 0.0
  %v4186 = vmax.f32 %v3780, 0.0
  %v4187 = vmax.f32 %v3851, 0.0
  %v4188 = vmax.f32 %v3853, 0.0
  %v4189 = vmax.f32 %v3924, 0.0
  %v4190 = vmax.f32 %v3926, 0.0
  %v4191 = vmax.f32 %v3997, 0.0
  %v4192 = vmax.f32 %v3999, 0.0
  %v4193 = vmax.f32 %v4070, 0.0
  %v4194 = vmax.f32 %v4072, 0.0
  %v4195 = vmax.f32 %v4143, 0.0
  %v4196 = vmax.f32 %v4145, 0.0
  %v4197 = vmax.f32 %v3636, 0.0
  %v4198 = vmax.f32 %v3638, 0.0
  %v4199 = vmax.f32 %v3709, 0.0
  %v4200 = vmax.f32 %v3711, 0.0
  %v4201 = vmax.f32 %v3782, 0.0
  %v4202 = vmax.f32 %v3784, 0.0
  %v4203 = vmax.f32 %v3855, 0.0
  %v4204 = vmax.f32 %v3857, 0.0
  %v4205 = vmax.f32 %v3928, 0.0
  %v4206 = vmax.f32 %v3930, 0.0
  %v4207 = vmax.f32 %v4001, 0.0
  %v4208 = vmax.f32 %v4003, 0.0
  %v4209 = vmax.f32 %v4074, 0.0
  %v4210 = vmax.f32 %v4076, 0.0
  %v4211 = vmax.f32 %v4147, 0.0
  %v4212 = vmax.f32 %v4149, 0.0
  %v4213 = vmax.f32 %v3642, 0.0
  %v4214 = vmax.f32 %v3644, 0.0
  %v4215 = vmax.f32 %v3715, 0.0
  %v4216 = vmax.f32 %v3717, 0.0
  %v4217 = vmax.f32 %v3788, 0.0
  %v4218 = vmax.f32 %v3790, 0.0
  %v4219 = vmax.f32 %v3861, 0.0
  %v4220 = vmax.f32 %v3863, 0.0
  %v4221 = vmax.f32 %v3934, 0.0
  %v4222 = vmax.f32 %v3936, 0.0
  %v4223 = vmax.f32 %v4007, 0.0
  %v4224 = vmax.f32 %v4009, 0.0
  %v4225 = vmax.f32 %v4080, 0.0
  %v4226 = vmax.f32 %v4082, 0.0
  %v4227 = vmax.f32 %v4153, 0.0
  %v4228 = vmax.f32 %v4155, 0.0
  %v4229 = vmax.f32 %v3646, 0.0
  %v4230 = vmax.f32 %v3648, 0.0
  %v4231 = vmax.f32 %v3719, 0.0
  %v4232 = vmax.f32 %v3721, 0.0
  %v4233 = vmax.f32 %v3792, 0.0
  %v4234 = vmax.f32 %v3794, 0.0
  %v4235 = vmax.f32 %v3865, 0.0
  %v4236 = vmax.f32 %v3867, 0.0
  %v4237 = vmax.f32 %v3938, 0.0
  %v4238 = vmax.f32 %v3940, 0.0
  %v4239 = vmax.f32 %v4011, 0.0
  %v4240 = vmax.f32 %v4013, 0.0
  %v4241 = vmax.f32 %v4084, 0.0
  %v4242 = vmax.f32 %v4086, 0.0
  %v4243 = vmax.f32 %v4157, 0.0
  %v4244 = vmax.f32 %v4159, 0.0
  %v4245 = vmax.f32 %v3652, 0.0
  %v4246 = vmax.f32 %v3654, 0.0
  %v4247 = vmax.f32 %v3725, 0.0
  %v4248 = vmax.f32 %v3727, 0.0
  %v4249 = vmax.f32 %v3798, 0.0
  %v4250 = vmax.f32 %v3800, 0.0
  %v4251 = vmax.f32 %v3871, 0.0
  %v4252 = vmax.f32 %v3873, 0.0
  %v4253 = vmax.f32 %v3944, 0.0
  %v4254 = vmax.f32 %v3946, 0.0
  %v4255 = vmax.f32 %v4017, 0.0
  %v4256 = vmax.f32 %v4019, 0.0
  %v4257 = vmax.f32 %v4090, 0.0
  %v4258 = vmax.f32 %v4092, 0.0
  %v4259 = vmax.f32 %v4163, 0.0
  %v4260 = vmax.f32 %v4165, 0.0
  %v4261 = vmax.f32 %v3656, 0.0
  %v4262 = vmax.f32 %v3658, 0.0
  %v4263 = vmax.f32 %v3729, 0.0
  %v4264 = vmax.f32 %v3731, 0.0
  %v4265 = vmax.f32 %v3802, 0.0
  %v4266 = vmax.f32 %v3804, 0.0
  %v4267 = vmax.f32 %v3875, 0.0
  %v4268 = vmax.f32 %v3877, 0.0
  %v4269 = vmax.f32 %v3948, 0.0
  %v4270 = vmax.f32 %v3950, 0.0
  %v4271 = vmax.f32 %v4021, 0.0
  %v4272 = vmax.f32 %v4023, 0.0
  %v4273 = vmax.f32 %v4094, 0.0
  %v4274 = vmax.f32 %v4096, 0.0
  %v4275 = vmax.f32 %v4167, 0.0
  %v4276 = vmax.f32 %v4169, 0.0
  %v4277 = vmax.f32 %v3662, 0.0
  %v4278 = vmax.f32 %v3664, 0.0
  %v4279 = vmax.f32 %v3735, 0.0
  %v4280 = vmax.f32 %v3737, 0.0
  %v4281 = vmax.f32 %v3808, 0.0
  %v4282 = vmax.f32 %v3810, 0.0
  %v4283 = vmax.f32 %v3881, 0.0
  %v4284 = vmax.f32 %v3883, 0.0
  %v4285 = vmax.f32 %v3954, 0.0
  %v4286 = vmax.f32 %v3956, 0.0
  %v4287 = vmax.f32 %v4027, 0.0
  %v4288 = vmax.f32 %v4029, 0.0
  %v4289 = vmax.f32 %v4100, 0.0
  %v4290 = vmax.f32 %v4102, 0.0
  %v4291 = vmax.f32 %v4173, 0.0
  %v4292 = vmax.f32 %v4175, 0.0
  %v4293 = vmax.f32 %v3666, 0.0
  %v4294 = vmax.f32 %v3668, 0.0
  %v4295 = vmax.f32 %v3739, 0.0
  %v4296 = vmax.f32 %v3741, 0.0
  %v4297 = vmax.f32 %v3812, 0.0
  %v4298 = vmax.f32 %v3814, 0.0
  %v4299 = vmax.f32 %v3885, 0.0
  %v4300 = vmax.f32 %v3887, 0.0
  %v4301 = vmax.f32 %v3958, 0.0
  %v4302 = vmax.f32 %v3960, 0.0
  %v4303 = vmax.f32 %v4031, 0.0
  %v4304 = vmax.f32 %v4033, 0.0
  %v4305 = vmax.f32 %v4104, 0.0
  %v4306 = vmax.f32 %v4106, 0.0
  %v4307 = vmax.f32 %v4177, 0.0
  %v4308 = vmax.f32 %v4179, 0.0
  %v4309 = vpack.c.bf16 %v4197, %v4181
  %v4310 = vpack.c.bf16 %v4198, %v4182
  %v4311 = vpack.c.bf16 %v4199, %v4183
  %v4312 = vpack.c.bf16 %v4200, %v4184
  %v4313 = vpack.c.bf16 %v4201, %v4185
  %v4314 = vpack.c.bf16 %v4202, %v4186
  %v4315 = vpack.c.bf16 %v4203, %v4187
  %v4316 = vpack.c.bf16 %v4204, %v4188
  %v4317 = vpack.c.bf16 %v4205, %v4189
  %v4318 = vpack.c.bf16 %v4206, %v4190
  %v4319 = vpack.c.bf16 %v4207, %v4191
  %v4320 = vpack.c.bf16 %v4208, %v4192
  %v4321 = vpack.c.bf16 %v4209, %v4193
  %v4322 = vpack.c.bf16 %v4210, %v4194
  %v4323 = vpack.c.bf16 %v4211, %v4195
  %v4324 = vpack.c.bf16 %v4212, %v4196
  %v4325 = vpack.c.bf16 %v4229, %v4213
  %v4326 = vpack.c.bf16 %v4230, %v4214
  %v4327 = vpack.c.bf16 %v4231, %v4215
  %v4328 = vpack.c.bf16 %v4232, %v4216
  %v4329 = vpack.c.bf16 %v4233, %v4217
  %v4330 = vpack.c.bf16 %v4234, %v4218
  %v4331 = vpack.c.bf16 %v4235, %v4219
  %v4332 = vpack.c.bf16 %v4236, %v4220
  %v4333 = vpack.c.bf16 %v4237, %v4221
  %v4334 = vpack.c.bf16 %v4238, %v4222
  %v4335 = vpack.c.bf16 %v4239, %v4223
  %v4336 = vpack.c.bf16 %v4240, %v4224
  %v4337 = vpack.c.bf16 %v4241, %v4225
  %v4338 = vpack.c.bf16 %v4242, %v4226
  %v4339 = vpack.c.bf16 %v4243, %v4227
  %v4340 = vpack.c.bf16 %v4244, %v4228
  %v4341 = vpack.c.bf16 %v4261, %v4245
  %v4342 = vpack.c.bf16 %v4262, %v4246
  %v4343 = vpack.c.bf16 %v4263, %v4247
  %v4344 = vpack.c.bf16 %v4264, %v4248
  %v4345 = vpack.c.bf16 %v4265, %v4249
  %v4346 = vpack.c.bf16 %v4266, %v4250
  %v4347 = vpack.c.bf16 %v4267, %v4251
  %v4348 = vpack.c.bf16 %v4268, %v4252
  %v4349 = vpack.c.bf16 %v4269, %v4253
  %v4350 = vpack.c.bf16 %v4270, %v4254
  %v4351 = vpack.c.bf16 %v4271, %v4255
  %v4352 = vpack.c.bf16 %v4272, %v4256
  %v4353 = vpack.c.bf16 %v4273, %v4257
  %v4354 = vpack.c.bf16 %v4274, %v4258
  %v4355 = vpack.c.bf16 %v4275, %v4259
  %v4356 = vpack.c.bf16 %v4276, %v4260
  %v4357 = vpack.c.bf16 %v4293, %v4277
  %v4358 = vpack.c.bf16 %v4294, %v4278
  %v4359 = vpack.c.bf16 %v4295, %v4279
  %v4360 = vpack.c.bf16 %v4296, %v4280
  %v4361 = vpack.c.bf16 %v4297, %v4281
  %v4362 = vpack.c.bf16 %v4298, %v4282
  %v4363 = vpack.c.bf16 %v4299, %v4283
  %v4364 = vpack.c.bf16 %v4300, %v4284
  %v4365 = vpack.c.bf16 %v4301, %v4285
  %v4366 = vpack.c.bf16 %v4302, %v4286
  %v4367 = vpack.c.bf16 %v4303, %v4287
  %v4368 = vpack.c.bf16 %v4304, %v4288
  %v4369 = vpack.c.bf16 %v4305, %v4289
  %v4370 = vpack.c.bf16 %v4306, %v4290
  %v4371 = vpack.c.bf16 %v4307, %v4291
  %v4372 = vpack.c.bf16 %v4308, %v4292
  %v4373 = vld [vmem:[%s19] sm:$0xf]
  %v4374 = vld [vmem:[%s19 + $0x4] sm:$0xf]
  %v4375 = vld [vmem:[%s19 + $0x8] sm:$0xf]
  %v4376 = vld [vmem:[%s19 + $0xc] sm:$0xf]
  %v4377 = vld [vmem:[%s19 + $0x10] sm:$0xf]
  %v4378 = vld [vmem:[%s19 + $0x14] sm:$0xf]
  %v4379 = vld [vmem:[%s19 + $0x18] sm:$0xf]
  %v4380 = vld [vmem:[%s19 + $0x1c] sm:$0xf]
  %v4381 = vld [vmem:[%s19 + $0x20] sm:$0xf]
  %v4382 = vld [vmem:[%s19 + $0x24] sm:$0xf]
  %v4383 = vld [vmem:[%s19 + $0x28] sm:$0xf]
  %v4384 = vld [vmem:[%s19 + $0x2c] sm:$0xf]
  %v4385 = vld [vmem:[%s19 + $0x30] sm:$0xf]
  %v4386 = vld [vmem:[%s19 + $0x34] sm:$0xf]
  %v4387 = vld [vmem:[%s19 + $0x38] sm:$0xf]
  %v4388 = vld [vmem:[%s19 + $0x3c] sm:$0xf]
  %v4389 = vld [vmem:[%s19 + $0x40] sm:$0xf]
  %v4390 = vld [vmem:[%s19 + $0x44] sm:$0xf]
  %v4391 = vld [vmem:[%s19 + $0x48] sm:$0xf]
  %v4392 = vld [vmem:[%s19 + $0x4c] sm:$0xf]
  %v4393 = vld [vmem:[%s19 + $0x50] sm:$0xf]
  %v4394 = vld [vmem:[%s19 + $0x54] sm:$0xf]
  %v4395 = vld [vmem:[%s19 + $0x58] sm:$0xf]
  %v4396 = vld [vmem:[%s19 + $0x5c] sm:$0xf]
  %v4397 = vld [vmem:[%s19 + $0x60] sm:$0xf]
  %v4398 = vld [vmem:[%s19 + $0x64] sm:$0xf]
  %v4399 = vld [vmem:[%s19 + $0x68] sm:$0xf]
  %v4400 = vld [vmem:[%s19 + $0x6c] sm:$0xf]
  %v4401 = vld [vmem:[%s19 + $0x70] sm:$0xf]
  %v4402 = vld [vmem:[%s19 + $0x74] sm:$0xf]
  %v4403 = vld [vmem:[%s19 + $0x78] sm:$0xf]
  %v4404 = vld [vmem:[%s19 + $0x7c] sm:$0xf]
  %v4405 = vld [vmem:[%s19 + $0x80] sm:$0xf]
  %v4406 = vld [vmem:[%s19 + $0x84] sm:$0xf]
  %v4407 = vld [vmem:[%s19 + $0x88] sm:$0xf]
  %v4408 = vld [vmem:[%s19 + $0x8c] sm:$0xf]
  %v4409 = vld [vmem:[%s19 + $0x90] sm:$0xf]
  %v4410 = vld [vmem:[%s19 + $0x94] sm:$0xf]
  %v4411 = vld [vmem:[%s19 + $0x98] sm:$0xf]
  %v4412 = vld [vmem:[%s19 + $0x9c] sm:$0xf]
  %v4413 = vld [vmem:[%s19 + $0xa0] sm:$0xf]
  %v4414 = vld [vmem:[%s19 + $0xa4] sm:$0xf]
  %v4415 = vld [vmem:[%s19 + $0xa8] sm:$0xf]
  %v4416 = vld [vmem:[%s19 + $0xac] sm:$0xf]
  %v4417 = vld [vmem:[%s19 + $0xb0] sm:$0xf]
  %v4418 = vld [vmem:[%s19 + $0xb4] sm:$0xf]
  %v4419 = vld [vmem:[%s19 + $0xb8] sm:$0xf]
  %v4420 = vld [vmem:[%s19 + $0xbc] sm:$0xf]
  %v4421 = vld [vmem:[%s19 + $0xc0] sm:$0xf]
  %v4422 = vld [vmem:[%s19 + $0xc4] sm:$0xf]
  %v4423 = vld [vmem:[%s19 + $0xc8] sm:$0xf]
  %v4424 = vld [vmem:[%s19 + $0xcc] sm:$0xf]
  %v4425 = vld [vmem:[%s19 + $0xd0] sm:$0xf]
  %v4426 = vld [vmem:[%s19 + $0xd4] sm:$0xf]
  %v4427 = vld [vmem:[%s19 + $0xd8] sm:$0xf]
  %v4428 = vld [vmem:[%s19 + $0xdc] sm:$0xf]
  %v4429 = vld [vmem:[%s19 + $0xe0] sm:$0xf]
  %v4430 = vld [vmem:[%s19 + $0xe4] sm:$0xf]
  %v4431 = vld [vmem:[%s19 + $0xe8] sm:$0xf]
  %v4432 = vld [vmem:[%s19 + $0xec] sm:$0xf]
  %v4433 = vld [vmem:[%s19 + $0xf0] sm:$0xf]
  %v4434 = vld [vmem:[%s19 + $0xf4] sm:$0xf]
  %v4435 = vld [vmem:[%s19 + $0xf8] sm:$0xf]
  %v4436 = vld [vmem:[%s19 + $0xfc] sm:$0xf]
  %v4437 = vld [vmem:[%s19 + $0x100] sm:$0xf]
  %v4438 = vld [vmem:[%s19 + $0x104] sm:$0xf]
  %v4439 = vld [vmem:[%s19 + $0x108] sm:$0xf]
  %v4440 = vld [vmem:[%s19 + $0x10c] sm:$0xf]
  %v4441 = vld [vmem:[%s19 + $0x110] sm:$0xf]
  %v4442 = vld [vmem:[%s19 + $0x114] sm:$0xf]
  %v4443 = vld [vmem:[%s19 + $0x118] sm:$0xf]
  %v4444 = vld [vmem:[%s19 + $0x11c] sm:$0xf]
  %v4445 = vld [vmem:[%s19 + $0x120] sm:$0xf]
  %v4446 = vld [vmem:[%s19 + $0x124] sm:$0xf]
  %v4447 = vld [vmem:[%s19 + $0x128] sm:$0xf]
  %v4448 = vld [vmem:[%s19 + $0x12c] sm:$0xf]
  %v4449 = vld [vmem:[%s19 + $0x130] sm:$0xf]
  %v4450 = vld [vmem:[%s19 + $0x134] sm:$0xf]
  %v4451 = vld [vmem:[%s19 + $0x138] sm:$0xf]
  %v4452 = vld [vmem:[%s19 + $0x13c] sm:$0xf]
  %v4453 = vld [vmem:[%s19 + $0x140] sm:$0xf]
  %v4454 = vld [vmem:[%s19 + $0x144] sm:$0xf]
  %v4455 = vld [vmem:[%s19 + $0x148] sm:$0xf]
  %v4456 = vld [vmem:[%s19 + $0x14c] sm:$0xf]
  %v4457 = vld [vmem:[%s19 + $0x150] sm:$0xf]
  %v4458 = vld [vmem:[%s19 + $0x154] sm:$0xf]
  %v4459 = vld [vmem:[%s19 + $0x158] sm:$0xf]
  %v4460 = vld [vmem:[%s19 + $0x15c] sm:$0xf]
  %v4461 = vld [vmem:[%s19 + $0x160] sm:$0xf]
  %v4462 = vld [vmem:[%s19 + $0x164] sm:$0xf]
  %v4463 = vld [vmem:[%s19 + $0x168] sm:$0xf]
  %v4464 = vld [vmem:[%s19 + $0x16c] sm:$0xf]
  %v4465 = vld [vmem:[%s19 + $0x170] sm:$0xf]
  %v4466 = vld [vmem:[%s19 + $0x174] sm:$0xf]
  %v4467 = vld [vmem:[%s19 + $0x178] sm:$0xf]
  %v4468 = vld [vmem:[%s19 + $0x17c] sm:$0xf]
  %v4469 = vld [vmem:[%s19 + $0x180] sm:$0xf]
  %v4470 = vld [vmem:[%s19 + $0x184] sm:$0xf]
  %v4471 = vld [vmem:[%s19 + $0x188] sm:$0xf]
  %v4472 = vld [vmem:[%s19 + $0x18c] sm:$0xf]
  %v4473 = vld [vmem:[%s19 + $0x190] sm:$0xf]
  %v4474 = vld [vmem:[%s19 + $0x194] sm:$0xf]
  %v4475 = vld [vmem:[%s19 + $0x198] sm:$0xf]
  %v4476 = vld [vmem:[%s19 + $0x19c] sm:$0xf]
  %v4477 = vld [vmem:[%s19 + $0x1a0] sm:$0xf]
  %v4478 = vld [vmem:[%s19 + $0x1a4] sm:$0xf]
  %v4479 = vld [vmem:[%s19 + $0x1a8] sm:$0xf]
  %v4480 = vld [vmem:[%s19 + $0x1ac] sm:$0xf]
  %v4481 = vld [vmem:[%s19 + $0x1b0] sm:$0xf]
  %v4482 = vld [vmem:[%s19 + $0x1b4] sm:$0xf]
  %v4483 = vld [vmem:[%s19 + $0x1b8] sm:$0xf]
  %v4484 = vld [vmem:[%s19 + $0x1bc] sm:$0xf]
  %v4485 = vld [vmem:[%s19 + $0x1c0] sm:$0xf]
  %v4486 = vld [vmem:[%s19 + $0x1c4] sm:$0xf]
  %v4487 = vld [vmem:[%s19 + $0x1c8] sm:$0xf]
  %v4488 = vld [vmem:[%s19 + $0x1cc] sm:$0xf]
  %v4489 = vld [vmem:[%s19 + $0x1d0] sm:$0xf]
  %v4490 = vld [vmem:[%s19 + $0x1d4] sm:$0xf]
  %v4491 = vld [vmem:[%s19 + $0x1d8] sm:$0xf]
  %v4492 = vld [vmem:[%s19 + $0x1dc] sm:$0xf]
  %v4493 = vld [vmem:[%s19 + $0x1e0] sm:$0xf]
  %v4494 = vld [vmem:[%s19 + $0x1e4] sm:$0xf]
  %v4495 = vld [vmem:[%s19 + $0x1e8] sm:$0xf]
  %v4496 = vld [vmem:[%s19 + $0x1ec] sm:$0xf]
  %v4497 = vld [vmem:[%s19 + $0x1f0] sm:$0xf]
  %v4498 = vld [vmem:[%s19 + $0x1f4] sm:$0xf]
  %v4499 = vld [vmem:[%s19 + $0x1f8] sm:$0xf]
  %v4500 = vld [vmem:[%s19 + $0x1fc] sm:$0xf]
  %v4501 = vld [vmem:[%s19 + $0x200] sm:$0xf]
  %v4502 = vld [vmem:[%s19 + $0x204] sm:$0xf]
  %v4503 = vld [vmem:[%s19 + $0x208] sm:$0xf]
  %v4504 = vld [vmem:[%s19 + $0x20c] sm:$0xf]
  %v4505 = vld [vmem:[%s19 + $0x210] sm:$0xf]
  %v4506 = vld [vmem:[%s19 + $0x214] sm:$0xf]
  %v4507 = vld [vmem:[%s19 + $0x218] sm:$0xf]
  %v4508 = vld [vmem:[%s19 + $0x21c] sm:$0xf]
  %v4509 = vld [vmem:[%s19 + $0x220] sm:$0xf]
  %v4510 = vld [vmem:[%s19 + $0x224] sm:$0xf]
  %v4511 = vld [vmem:[%s19 + $0x228] sm:$0xf]
  %v4512 = vld [vmem:[%s19 + $0x22c] sm:$0xf]
  %v4513 = vld [vmem:[%s19 + $0x230] sm:$0xf]
  %v4514 = vld [vmem:[%s19 + $0x234] sm:$0xf]
  %v4515 = vld [vmem:[%s19 + $0x238] sm:$0xf]
  %v4516 = vld [vmem:[%s19 + $0x23c] sm:$0xf]
  %v4517 = vld [vmem:[%s19 + $0x240] sm:$0xf]
  %v4518 = vld [vmem:[%s19 + $0x244] sm:$0xf]
  %v4519 = vld [vmem:[%s19 + $0x248] sm:$0xf]
  %v4520 = vld [vmem:[%s19 + $0x24c] sm:$0xf]
  %v4521 = vld [vmem:[%s19 + $0x250] sm:$0xf]
  %v4522 = vld [vmem:[%s19 + $0x254] sm:$0xf]
  %v4523 = vld [vmem:[%s19 + $0x258] sm:$0xf]
  %v4524 = vld [vmem:[%s19 + $0x25c] sm:$0xf]
  %v4525 = vld [vmem:[%s19 + $0x260] sm:$0xf]
  %v4526 = vld [vmem:[%s19 + $0x264] sm:$0xf]
  %v4527 = vld [vmem:[%s19 + $0x268] sm:$0xf]
  %v4528 = vld [vmem:[%s19 + $0x26c] sm:$0xf]
  %v4529 = vld [vmem:[%s19 + $0x270] sm:$0xf]
  %v4530 = vld [vmem:[%s19 + $0x274] sm:$0xf]
  %v4531 = vld [vmem:[%s19 + $0x278] sm:$0xf]
  %v4532 = vld [vmem:[%s19 + $0x27c] sm:$0xf]
  %v4533 = vld [vmem:[%s19 + $0x280] sm:$0xf]
  %v4534 = vld [vmem:[%s19 + $0x284] sm:$0xf]
  %v4535 = vld [vmem:[%s19 + $0x288] sm:$0xf]
  %v4536 = vld [vmem:[%s19 + $0x28c] sm:$0xf]
  %v4537 = vld [vmem:[%s19 + $0x290] sm:$0xf]
  %v4538 = vld [vmem:[%s19 + $0x294] sm:$0xf]
  %v4539 = vld [vmem:[%s19 + $0x298] sm:$0xf]
  %v4540 = vld [vmem:[%s19 + $0x29c] sm:$0xf]
  %v4541 = vld [vmem:[%s19 + $0x2a0] sm:$0xf]
  %v4542 = vld [vmem:[%s19 + $0x2a4] sm:$0xf]
  %v4543 = vld [vmem:[%s19 + $0x2a8] sm:$0xf]
  %v4544 = vld [vmem:[%s19 + $0x2ac] sm:$0xf]
  %v4545 = vld [vmem:[%s19 + $0x2b0] sm:$0xf]
  %v4546 = vld [vmem:[%s19 + $0x2b4] sm:$0xf]
  %v4547 = vld [vmem:[%s19 + $0x2b8] sm:$0xf]
  %v4548 = vld [vmem:[%s19 + $0x2bc] sm:$0xf]
  %v4549 = vld [vmem:[%s19 + $0x2c0] sm:$0xf]
  %v4550 = vld [vmem:[%s19 + $0x2c4] sm:$0xf]
  %v4551 = vld [vmem:[%s19 + $0x2c8] sm:$0xf]
  %v4552 = vld [vmem:[%s19 + $0x2cc] sm:$0xf]
  %v4553 = vld [vmem:[%s19 + $0x2d0] sm:$0xf]
  %v4554 = vld [vmem:[%s19 + $0x2d4] sm:$0xf]
  %v4555 = vld [vmem:[%s19 + $0x2d8] sm:$0xf]
  %v4556 = vld [vmem:[%s19 + $0x2dc] sm:$0xf]
  %v4557 = vld [vmem:[%s19 + $0x2e0] sm:$0xf]
  %v4558 = vld [vmem:[%s19 + $0x2e4] sm:$0xf]
  %v4559 = vld [vmem:[%s19 + $0x2e8] sm:$0xf]
  %v4560 = vld [vmem:[%s19 + $0x2ec] sm:$0xf]
  %v4561 = vld [vmem:[%s19 + $0x2f0] sm:$0xf]
  %v4562 = vld [vmem:[%s19 + $0x2f4] sm:$0xf]
  %v4563 = vld [vmem:[%s19 + $0x2f8] sm:$0xf]
  %v4564 = vld [vmem:[%s19 + $0x2fc] sm:$0xf]
  %v4565 = vld [vmem:[%s19 + $0x300] sm:$0xf]
  %v4566 = vld [vmem:[%s19 + $0x304] sm:$0xf]
  %v4567 = vld [vmem:[%s19 + $0x308] sm:$0xf]
  %v4568 = vld [vmem:[%s19 + $0x30c] sm:$0xf]
  %v4569 = vld [vmem:[%s19 + $0x310] sm:$0xf]
  %v4570 = vld [vmem:[%s19 + $0x314] sm:$0xf]
  %v4571 = vld [vmem:[%s19 + $0x318] sm:$0xf]
  %v4572 = vld [vmem:[%s19 + $0x31c] sm:$0xf]
  %v4573 = vld [vmem:[%s19 + $0x320] sm:$0xf]
  %v4574 = vld [vmem:[%s19 + $0x324] sm:$0xf]
  %v4575 = vld [vmem:[%s19 + $0x328] sm:$0xf]
  %v4576 = vld [vmem:[%s19 + $0x32c] sm:$0xf]
  %v4577 = vld [vmem:[%s19 + $0x330] sm:$0xf]
  %v4578 = vld [vmem:[%s19 + $0x334] sm:$0xf]
  %v4579 = vld [vmem:[%s19 + $0x338] sm:$0xf]
  %v4580 = vld [vmem:[%s19 + $0x33c] sm:$0xf]
  %v4581 = vld [vmem:[%s19 + $0x340] sm:$0xf]
  %v4582 = vld [vmem:[%s19 + $0x344] sm:$0xf]
  %v4583 = vld [vmem:[%s19 + $0x348] sm:$0xf]
  %v4584 = vld [vmem:[%s19 + $0x34c] sm:$0xf]
  %v4585 = vld [vmem:[%s19 + $0x350] sm:$0xf]
  %v4586 = vld [vmem:[%s19 + $0x354] sm:$0xf]
  %v4587 = vld [vmem:[%s19 + $0x358] sm:$0xf]
  %v4588 = vld [vmem:[%s19 + $0x35c] sm:$0xf]
  %v4589 = vld [vmem:[%s19 + $0x360] sm:$0xf]
  %v4590 = vld [vmem:[%s19 + $0x364] sm:$0xf]
  %v4591 = vld [vmem:[%s19 + $0x368] sm:$0xf]
  %v4592 = vld [vmem:[%s19 + $0x36c] sm:$0xf]
  %v4593 = vld [vmem:[%s19 + $0x370] sm:$0xf]
  %v4594 = vld [vmem:[%s19 + $0x374] sm:$0xf]
  %v4595 = vld [vmem:[%s19 + $0x378] sm:$0xf]
  %v4596 = vld [vmem:[%s19 + $0x37c] sm:$0xf]
  %v4597 = vld [vmem:[%s19 + $0x380] sm:$0xf]
  %v4598 = vld [vmem:[%s19 + $0x384] sm:$0xf]
  %v4599 = vld [vmem:[%s19 + $0x388] sm:$0xf]
  %v4600 = vld [vmem:[%s19 + $0x38c] sm:$0xf]
  %v4601 = vld [vmem:[%s19 + $0x390] sm:$0xf]
  %v4602 = vld [vmem:[%s19 + $0x394] sm:$0xf]
  %v4603 = vld [vmem:[%s19 + $0x398] sm:$0xf]
  %v4604 = vld [vmem:[%s19 + $0x39c] sm:$0xf]
  %v4605 = vld [vmem:[%s19 + $0x3a0] sm:$0xf]
  %v4606 = vld [vmem:[%s19 + $0x3a4] sm:$0xf]
  %v4607 = vld [vmem:[%s19 + $0x3a8] sm:$0xf]
  %v4608 = vld [vmem:[%s19 + $0x3ac] sm:$0xf]
  %v4609 = vld [vmem:[%s19 + $0x3b0] sm:$0xf]
  %v4610 = vld [vmem:[%s19 + $0x3b4] sm:$0xf]
  %v4611 = vld [vmem:[%s19 + $0x3b8] sm:$0xf]
  %v4612 = vld [vmem:[%s19 + $0x3bc] sm:$0xf]
  %v4613 = vld [vmem:[%s19 + $0x3c0] sm:$0xf]
  %v4614 = vld [vmem:[%s19 + $0x3c4] sm:$0xf]
  %v4615 = vld [vmem:[%s19 + $0x3c8] sm:$0xf]
  %v4616 = vld [vmem:[%s19 + $0x3cc] sm:$0xf]
  %v4617 = vld [vmem:[%s19 + $0x3d0] sm:$0xf]
  %v4618 = vld [vmem:[%s19 + $0x3d4] sm:$0xf]
  %v4619 = vld [vmem:[%s19 + $0x3d8] sm:$0xf]
  %v4620 = vld [vmem:[%s19 + $0x3dc] sm:$0xf]
  %v4621 = vld [vmem:[%s19 + $0x3e0] sm:$0xf]
  %v4622 = vld [vmem:[%s19 + $0x3e4] sm:$0xf]
  %v4623 = vld [vmem:[%s19 + $0x3e8] sm:$0xf]
  %v4624 = vld [vmem:[%s19 + $0x3ec] sm:$0xf]
  %v4625 = vld [vmem:[%s19 + $0x3f0] sm:$0xf]
  %v4626 = vld [vmem:[%s19 + $0x3f4] sm:$0xf]
  %v4627 = vld [vmem:[%s19 + $0x3f8] sm:$0xf]
  %v4628 = vld [vmem:[%s19 + $0x3fc] sm:$0xf]
  %v4629 = vld [vmem:[%s20] sm:$0x1]
  %v4631 = vlaneseq
  %v4632 = vshrl.u32 %v4631, 7
  %v4633 = vsub.s32 0, %v4632
  %v4634 = vrot.slane %v4629, %v4633
  %v4892 = vunpack.c.l.b16 %v4373
  %v4893 = vunpack.c.l.b16 %v4374
  %v4894 = vunpack.c.l.b16 %v4375
  %v4895 = vunpack.c.l.b16 %v4376
  %v4896 = vunpack.c.l.b16 %v4377
  %v4897 = vunpack.c.l.b16 %v4378
  %v4898 = vunpack.c.l.b16 %v4379
  %v4899 = vunpack.c.l.b16 %v4380
  %v4900 = vunpack.c.l.b16 %v4381
  %v4901 = vunpack.c.l.b16 %v4382
  %v4902 = vunpack.c.l.b16 %v4383
  %v4903 = vunpack.c.l.b16 %v4384
  %v4904 = vunpack.c.l.b16 %v4385
  %v4905 = vunpack.c.l.b16 %v4386
  %v4906 = vunpack.c.l.b16 %v4387
  %v4907 = vunpack.c.l.b16 %v4388
  %v4908 = vunpack.c.l.b16 %v4389
  %v4909 = vunpack.c.l.b16 %v4390
  %v4910 = vunpack.c.l.b16 %v4391
  %v4911 = vunpack.c.l.b16 %v4392
  %v4912 = vunpack.c.l.b16 %v4393
  %v4913 = vunpack.c.l.b16 %v4394
  %v4914 = vunpack.c.l.b16 %v4395
  %v4915 = vunpack.c.l.b16 %v4396
  %v4916 = vunpack.c.l.b16 %v4397
  %v4917 = vunpack.c.l.b16 %v4398
  %v4918 = vunpack.c.l.b16 %v4399
  %v4919 = vunpack.c.l.b16 %v4400
  %v4920 = vunpack.c.l.b16 %v4401
  %v4921 = vunpack.c.l.b16 %v4402
  %v4922 = vunpack.c.l.b16 %v4403
  %v4923 = vunpack.c.l.b16 %v4404
  %v4924 = vunpack.c.l.b16 %v4405
  %v4925 = vunpack.c.l.b16 %v4406
  %v4926 = vunpack.c.l.b16 %v4407
  %v4927 = vunpack.c.l.b16 %v4408
  %v4928 = vunpack.c.l.b16 %v4409
  %v4929 = vunpack.c.l.b16 %v4410
  %v4930 = vunpack.c.l.b16 %v4411
  %v4931 = vunpack.c.l.b16 %v4412
  %v4932 = vunpack.c.l.b16 %v4413
  %v4933 = vunpack.c.l.b16 %v4414
  %v4934 = vunpack.c.l.b16 %v4415
  %v4935 = vunpack.c.l.b16 %v4416
  %v4936 = vunpack.c.l.b16 %v4417
  %v4937 = vunpack.c.l.b16 %v4418
  %v4938 = vunpack.c.l.b16 %v4419
  %v4939 = vunpack.c.l.b16 %v4420
  %v4940 = vunpack.c.l.b16 %v4421
  %v4941 = vunpack.c.l.b16 %v4422
  %v4942 = vunpack.c.l.b16 %v4423
  %v4943 = vunpack.c.l.b16 %v4424
  %v4944 = vunpack.c.l.b16 %v4425
  %v4945 = vunpack.c.l.b16 %v4426
  %v4946 = vunpack.c.l.b16 %v4427
  %v4947 = vunpack.c.l.b16 %v4428
  %v4948 = vunpack.c.l.b16 %v4429
  %v4949 = vunpack.c.l.b16 %v4430
  %v4950 = vunpack.c.l.b16 %v4431
  %v4951 = vunpack.c.l.b16 %v4432
  %v4952 = vunpack.c.l.b16 %v4433
  %v4953 = vunpack.c.l.b16 %v4434
  %v4954 = vunpack.c.l.b16 %v4435
  %v4955 = vunpack.c.l.b16 %v4436
  %v4956 = vunpack.c.l.b16 %v4437
  %v4957 = vunpack.c.l.b16 %v4438
  %v4958 = vunpack.c.l.b16 %v4439
  %v4959 = vunpack.c.l.b16 %v4440
  %v4960 = vunpack.c.l.b16 %v4441
  %v4961 = vunpack.c.l.b16 %v4442
  %v4962 = vunpack.c.l.b16 %v4443
  %v4963 = vunpack.c.l.b16 %v4444
  %v4964 = vunpack.c.l.b16 %v4445
  %v4965 = vunpack.c.l.b16 %v4446
  %v4966 = vunpack.c.l.b16 %v4447
  %v4967 = vunpack.c.l.b16 %v4448
  %v4968 = vunpack.c.l.b16 %v4449
  %v4969 = vunpack.c.l.b16 %v4450
  %v4970 = vunpack.c.l.b16 %v4451
  %v4971 = vunpack.c.l.b16 %v4452
  %v4972 = vunpack.c.l.b16 %v4453
  %v4973 = vunpack.c.l.b16 %v4454
  %v4974 = vunpack.c.l.b16 %v4455
  %v4975 = vunpack.c.l.b16 %v4456
  %v4976 = vunpack.c.l.b16 %v4457
  %v4977 = vunpack.c.l.b16 %v4458
  %v4978 = vunpack.c.l.b16 %v4459
  %v4979 = vunpack.c.l.b16 %v4460
  %v4980 = vunpack.c.l.b16 %v4461
  %v4981 = vunpack.c.l.b16 %v4462
  %v4982 = vunpack.c.l.b16 %v4463
  %v4983 = vunpack.c.l.b16 %v4464
  %v4984 = vunpack.c.l.b16 %v4465
  %v4985 = vunpack.c.l.b16 %v4466
  %v4986 = vunpack.c.l.b16 %v4467
  %v4987 = vunpack.c.l.b16 %v4468
  %v4988 = vunpack.c.l.b16 %v4469
  %v4989 = vunpack.c.l.b16 %v4470
  %v4990 = vunpack.c.l.b16 %v4471
  %v4991 = vunpack.c.l.b16 %v4472
  %v4992 = vunpack.c.l.b16 %v4473
  %v4993 = vunpack.c.l.b16 %v4474
  %v4994 = vunpack.c.l.b16 %v4475
  %v4995 = vunpack.c.l.b16 %v4476
  %v4996 = vunpack.c.l.b16 %v4477
  %v4997 = vunpack.c.l.b16 %v4478
  %v4998 = vunpack.c.l.b16 %v4479
  %v4999 = vunpack.c.l.b16 %v4480
  %v5000 = vunpack.c.l.b16 %v4481
  %v5001 = vunpack.c.l.b16 %v4482
  %v5002 = vunpack.c.l.b16 %v4483
  %v5003 = vunpack.c.l.b16 %v4484
  %v5004 = vunpack.c.l.b16 %v4485
  %v5005 = vunpack.c.l.b16 %v4486
  %v5006 = vunpack.c.l.b16 %v4487
  %v5007 = vunpack.c.l.b16 %v4488
  %v5008 = vunpack.c.l.b16 %v4489
  %v5009 = vunpack.c.l.b16 %v4490
  %v5010 = vunpack.c.l.b16 %v4491
  %v5011 = vunpack.c.l.b16 %v4492
  %v5012 = vunpack.c.l.b16 %v4493
  %v5013 = vunpack.c.l.b16 %v4494
  %v5014 = vunpack.c.l.b16 %v4495
  %v5015 = vunpack.c.l.b16 %v4496
  %v5016 = vunpack.c.l.b16 %v4497
  %v5017 = vunpack.c.l.b16 %v4498
  %v5018 = vunpack.c.l.b16 %v4499
  %v5019 = vunpack.c.l.b16 %v4500
  %v5020 = vunpack.c.l.b16 %v4501
  %v5021 = vunpack.c.l.b16 %v4502
  %v5022 = vunpack.c.l.b16 %v4503
  %v5023 = vunpack.c.l.b16 %v4504
  %v5024 = vunpack.c.l.b16 %v4505
  %v5025 = vunpack.c.l.b16 %v4506
  %v5026 = vunpack.c.l.b16 %v4507
  %v5027 = vunpack.c.l.b16 %v4508
  %v5028 = vunpack.c.l.b16 %v4509
  %v5029 = vunpack.c.l.b16 %v4510
  %v5030 = vunpack.c.l.b16 %v4511
  %v5031 = vunpack.c.l.b16 %v4512
  %v5032 = vunpack.c.l.b16 %v4513
  %v5033 = vunpack.c.l.b16 %v4514
  %v5034 = vunpack.c.l.b16 %v4515
  %v5035 = vunpack.c.l.b16 %v4516
  %v5036 = vunpack.c.l.b16 %v4517
  %v5037 = vunpack.c.l.b16 %v4518
  %v5038 = vunpack.c.l.b16 %v4519
  %v5039 = vunpack.c.l.b16 %v4520
  %v5040 = vunpack.c.l.b16 %v4521
  %v5041 = vunpack.c.l.b16 %v4522
  %v5042 = vunpack.c.l.b16 %v4523
  %v5043 = vunpack.c.l.b16 %v4524
  %v5044 = vunpack.c.l.b16 %v4525
  %v5045 = vunpack.c.l.b16 %v4526
  %v5046 = vunpack.c.l.b16 %v4527
  %v5047 = vunpack.c.l.b16 %v4528
  %v5048 = vunpack.c.l.b16 %v4529
  %v5049 = vunpack.c.l.b16 %v4530
  %v5050 = vunpack.c.l.b16 %v4531
  %v5051 = vunpack.c.l.b16 %v4532
  %v5052 = vunpack.c.l.b16 %v4533
  %v5053 = vunpack.c.l.b16 %v4534
  %v5054 = vunpack.c.l.b16 %v4535
  %v5055 = vunpack.c.l.b16 %v4536
  %v5056 = vunpack.c.l.b16 %v4537
  %v5057 = vunpack.c.l.b16 %v4538
  %v5058 = vunpack.c.l.b16 %v4539
  %v5059 = vunpack.c.l.b16 %v4540
  %v5060 = vunpack.c.l.b16 %v4541
  %v5061 = vunpack.c.l.b16 %v4542
  %v5062 = vunpack.c.l.b16 %v4543
  %v5063 = vunpack.c.l.b16 %v4544
  %v5064 = vunpack.c.l.b16 %v4545
  %v5065 = vunpack.c.l.b16 %v4546
  %v5066 = vunpack.c.l.b16 %v4547
  %v5067 = vunpack.c.l.b16 %v4548
  %v5068 = vunpack.c.l.b16 %v4549
  %v5069 = vunpack.c.l.b16 %v4550
  %v5070 = vunpack.c.l.b16 %v4551
  %v5071 = vunpack.c.l.b16 %v4552
  %v5072 = vunpack.c.l.b16 %v4553
  %v5073 = vunpack.c.l.b16 %v4554
  %v5074 = vunpack.c.l.b16 %v4555
  %v5075 = vunpack.c.l.b16 %v4556
  %v5076 = vunpack.c.l.b16 %v4557
  %v5077 = vunpack.c.l.b16 %v4558
  %v5078 = vunpack.c.l.b16 %v4559
  %v5079 = vunpack.c.l.b16 %v4560
  %v5080 = vunpack.c.l.b16 %v4561
  %v5081 = vunpack.c.l.b16 %v4562
  %v5082 = vunpack.c.l.b16 %v4563
  %v5083 = vunpack.c.l.b16 %v4564
  %v5084 = vunpack.c.l.b16 %v4565
  %v5085 = vunpack.c.l.b16 %v4566
  %v5086 = vunpack.c.l.b16 %v4567
  %v5087 = vunpack.c.l.b16 %v4568
  %v5088 = vunpack.c.l.b16 %v4569
  %v5089 = vunpack.c.l.b16 %v4570
  %v5090 = vunpack.c.l.b16 %v4571
  %v5091 = vunpack.c.l.b16 %v4572
  %v5092 = vunpack.c.l.b16 %v4573
  %v5093 = vunpack.c.l.b16 %v4574
  %v5094 = vunpack.c.l.b16 %v4575
  %v5095 = vunpack.c.l.b16 %v4576
  %v5096 = vunpack.c.l.b16 %v4577
  %v5097 = vunpack.c.l.b16 %v4578
  %v5098 = vunpack.c.l.b16 %v4579
  %v5099 = vunpack.c.l.b16 %v4580
  %v5100 = vunpack.c.l.b16 %v4581
  %v5101 = vunpack.c.l.b16 %v4582
  %v5102 = vunpack.c.l.b16 %v4583
  %v5103 = vunpack.c.l.b16 %v4584
  %v5104 = vunpack.c.l.b16 %v4585
  %v5105 = vunpack.c.l.b16 %v4586
  %v5106 = vunpack.c.l.b16 %v4587
  %v5107 = vunpack.c.l.b16 %v4588
  %v5108 = vunpack.c.l.b16 %v4589
  %v5109 = vunpack.c.l.b16 %v4590
  %v5110 = vunpack.c.l.b16 %v4591
  %v5111 = vunpack.c.l.b16 %v4592
  %v5112 = vunpack.c.l.b16 %v4593
  %v5113 = vunpack.c.l.b16 %v4594
  %v5114 = vunpack.c.l.b16 %v4595
  %v5115 = vunpack.c.l.b16 %v4596
  %v5116 = vunpack.c.l.b16 %v4597
  %v5117 = vunpack.c.l.b16 %v4598
  %v5118 = vunpack.c.l.b16 %v4599
  %v5119 = vunpack.c.l.b16 %v4600
  %v5120 = vunpack.c.l.b16 %v4601
  %v5121 = vunpack.c.l.b16 %v4602
  %v5122 = vunpack.c.l.b16 %v4603
  %v5123 = vunpack.c.l.b16 %v4604
  %v5124 = vunpack.c.l.b16 %v4605
  %v5125 = vunpack.c.l.b16 %v4606
  %v5126 = vunpack.c.l.b16 %v4607
  %v5127 = vunpack.c.l.b16 %v4608
  %v5128 = vunpack.c.l.b16 %v4609
  %v5129 = vunpack.c.l.b16 %v4610
  %v5130 = vunpack.c.l.b16 %v4611
  %v5131 = vunpack.c.l.b16 %v4612
  %v5132 = vunpack.c.l.b16 %v4613
  %v5133 = vunpack.c.l.b16 %v4614
  %v5134 = vunpack.c.l.b16 %v4615
  %v5135 = vunpack.c.l.b16 %v4616
  %v5136 = vunpack.c.l.b16 %v4617
  %v5137 = vunpack.c.l.b16 %v4618
  %v5138 = vunpack.c.l.b16 %v4619
  %v5139 = vunpack.c.l.b16 %v4620
  %v5140 = vunpack.c.l.b16 %v4621
  %v5141 = vunpack.c.l.b16 %v4622
  %v5142 = vunpack.c.l.b16 %v4623
  %v5143 = vunpack.c.l.b16 %v4624
  %v5144 = vunpack.c.l.b16 %v4625
  %v5145 = vunpack.c.l.b16 %v4626
  %v5146 = vunpack.c.l.b16 %v4627
  %v5147 = vunpack.c.l.b16 %v4628
  %v5148 = vpack.c.b16 %v4893, %v4892
  %v5149 = vpack.c.b16 %v4895, %v4894
  %v5150 = vpack.c.b16 %v4897, %v4896
  %v5151 = vpack.c.b16 %v4899, %v4898
  %v5152 = vpack.c.b16 %v4901, %v4900
  %v5153 = vpack.c.b16 %v4903, %v4902
  %v5154 = vpack.c.b16 %v4905, %v4904
  %v5155 = vpack.c.b16 %v4907, %v4906
  %v5156 = vpack.c.b16 %v4909, %v4908
  %v5157 = vpack.c.b16 %v4911, %v4910
  %v5158 = vpack.c.b16 %v4913, %v4912
  %v5159 = vpack.c.b16 %v4915, %v4914
  %v5160 = vpack.c.b16 %v4917, %v4916
  %v5161 = vpack.c.b16 %v4919, %v4918
  %v5162 = vpack.c.b16 %v4921, %v4920
  %v5163 = vpack.c.b16 %v4923, %v4922
  %v5164 = vpack.c.b16 %v4925, %v4924
  %v5165 = vpack.c.b16 %v4927, %v4926
  %v5166 = vpack.c.b16 %v4929, %v4928
  %v5167 = vpack.c.b16 %v4931, %v4930
  %v5168 = vpack.c.b16 %v4933, %v4932
  %v5169 = vpack.c.b16 %v4935, %v4934
  %v5170 = vpack.c.b16 %v4937, %v4936
  %v5171 = vpack.c.b16 %v4939, %v4938
  %v5172 = vpack.c.b16 %v4941, %v4940
  %v5173 = vpack.c.b16 %v4943, %v4942
  %v5174 = vpack.c.b16 %v4945, %v4944
  %v5175 = vpack.c.b16 %v4947, %v4946
  %v5176 = vpack.c.b16 %v4949, %v4948
  %v5177 = vpack.c.b16 %v4951, %v4950
  %v5178 = vpack.c.b16 %v4953, %v4952
  %v5179 = vpack.c.b16 %v4955, %v4954
  %v5180 = vpack.c.b16 %v4957, %v4956
  %v5181 = vpack.c.b16 %v4959, %v4958
  %v5182 = vpack.c.b16 %v4961, %v4960
  %v5183 = vpack.c.b16 %v4963, %v4962
  %v5184 = vpack.c.b16 %v4965, %v4964
  %v5185 = vpack.c.b16 %v4967, %v4966
  %v5186 = vpack.c.b16 %v4969, %v4968
  %v5187 = vpack.c.b16 %v4971, %v4970
  %v5188 = vpack.c.b16 %v4973, %v4972
  %v5189 = vpack.c.b16 %v4975, %v4974
  %v5190 = vpack.c.b16 %v4977, %v4976
  %v5191 = vpack.c.b16 %v4979, %v4978
  %v5192 = vpack.c.b16 %v4981, %v4980
  %v5193 = vpack.c.b16 %v4983, %v4982
  %v5194 = vpack.c.b16 %v4985, %v4984
  %v5195 = vpack.c.b16 %v4987, %v4986
  %v5196 = vpack.c.b16 %v4989, %v4988
  %v5197 = vpack.c.b16 %v4991, %v4990
  %v5198 = vpack.c.b16 %v4993, %v4992
  %v5199 = vpack.c.b16 %v4995, %v4994
  %v5200 = vpack.c.b16 %v4997, %v4996
  %v5201 = vpack.c.b16 %v4999, %v4998
  %v5202 = vpack.c.b16 %v5001, %v5000
  %v5203 = vpack.c.b16 %v5003, %v5002
  %v5204 = vpack.c.b16 %v5005, %v5004
  %v5205 = vpack.c.b16 %v5007, %v5006
  %v5206 = vpack.c.b16 %v5009, %v5008
  %v5207 = vpack.c.b16 %v5011, %v5010
  %v5208 = vpack.c.b16 %v5013, %v5012
  %v5209 = vpack.c.b16 %v5015, %v5014
  %v5210 = vpack.c.b16 %v5017, %v5016
  %v5211 = vpack.c.b16 %v5019, %v5018
  %v5212 = vpack.c.b16 %v5021, %v5020
  %v5213 = vpack.c.b16 %v5023, %v5022
  %v5214 = vpack.c.b16 %v5025, %v5024
  %v5215 = vpack.c.b16 %v5027, %v5026
  %v5216 = vpack.c.b16 %v5029, %v5028
  %v5217 = vpack.c.b16 %v5031, %v5030
  %v5218 = vpack.c.b16 %v5033, %v5032
  %v5219 = vpack.c.b16 %v5035, %v5034
  %v5220 = vpack.c.b16 %v5037, %v5036
  %v5221 = vpack.c.b16 %v5039, %v5038
  %v5222 = vpack.c.b16 %v5041, %v5040
  %v5223 = vpack.c.b16 %v5043, %v5042
  %v5224 = vpack.c.b16 %v5045, %v5044
  %v5225 = vpack.c.b16 %v5047, %v5046
  %v5226 = vpack.c.b16 %v5049, %v5048
  %v5227 = vpack.c.b16 %v5051, %v5050
  %v5228 = vpack.c.b16 %v5053, %v5052
  %v5229 = vpack.c.b16 %v5055, %v5054
  %v5230 = vpack.c.b16 %v5057, %v5056
  %v5231 = vpack.c.b16 %v5059, %v5058
  %v5232 = vpack.c.b16 %v5061, %v5060
  %v5233 = vpack.c.b16 %v5063, %v5062
  %v5234 = vpack.c.b16 %v5065, %v5064
  %v5235 = vpack.c.b16 %v5067, %v5066
  %v5236 = vpack.c.b16 %v5069, %v5068
  %v5237 = vpack.c.b16 %v5071, %v5070
  %v5238 = vpack.c.b16 %v5073, %v5072
  %v5239 = vpack.c.b16 %v5075, %v5074
  %v5240 = vpack.c.b16 %v5077, %v5076
  %v5241 = vpack.c.b16 %v5079, %v5078
  %v5242 = vpack.c.b16 %v5081, %v5080
  %v5243 = vpack.c.b16 %v5083, %v5082
  %v5244 = vpack.c.b16 %v5085, %v5084
  %v5245 = vpack.c.b16 %v5087, %v5086
  %v5246 = vpack.c.b16 %v5089, %v5088
  %v5247 = vpack.c.b16 %v5091, %v5090
  %v5248 = vpack.c.b16 %v5093, %v5092
  %v5249 = vpack.c.b16 %v5095, %v5094
  %v5250 = vpack.c.b16 %v5097, %v5096
  %v5251 = vpack.c.b16 %v5099, %v5098
  %v5252 = vpack.c.b16 %v5101, %v5100
  %v5253 = vpack.c.b16 %v5103, %v5102
  %v5254 = vpack.c.b16 %v5105, %v5104
  %v5255 = vpack.c.b16 %v5107, %v5106
  %v5256 = vpack.c.b16 %v5109, %v5108
  %v5257 = vpack.c.b16 %v5111, %v5110
  %v5258 = vpack.c.b16 %v5113, %v5112
  %v5259 = vpack.c.b16 %v5115, %v5114
  %v5260 = vpack.c.b16 %v5117, %v5116
  %v5261 = vpack.c.b16 %v5119, %v5118
  %v5262 = vpack.c.b16 %v5121, %v5120
  %v5263 = vpack.c.b16 %v5123, %v5122
  %v5264 = vpack.c.b16 %v5125, %v5124
  %v5265 = vpack.c.b16 %v5127, %v5126
  %v5266 = vpack.c.b16 %v5129, %v5128
  %v5267 = vpack.c.b16 %v5131, %v5130
  %v5268 = vpack.c.b16 %v5133, %v5132
  %v5269 = vpack.c.b16 %v5135, %v5134
  %v5270 = vpack.c.b16 %v5137, %v5136
  %v5271 = vpack.c.b16 %v5139, %v5138
  %v5272 = vpack.c.b16 %v5141, %v5140
  %v5273 = vpack.c.b16 %v5143, %v5142
  %v5274 = vpack.c.b16 %v5145, %v5144
  %v5275 = vpack.c.b16 %v5147, %v5146
  %5404 = vmatprep.subr.bf16.mxu0 0
  %5405 = vmatpush1.bf16.msra.mxu0 %v5148
  %5406 = vmatprep.subr.bf16.mxu0 0
  %5407 = vmatpush1.bf16.msra.mxu0 %v5149
  %5408 = vmatprep.subr.bf16.mxu0 0
  %5409 = vmatpush1.bf16.msra.mxu0 %v5150
  %5410 = vmatprep.subr.bf16.mxu0 0
  %5411 = vmatpush1.bf16.msra.mxu0 %v5151
  %5412 = vmatprep.subr.bf16.mxu0 0
  %5413 = vmatpush1.bf16.msra.mxu0 %v5152
  %5414 = vmatprep.subr.bf16.mxu0 0
  %5415 = vmatpush1.bf16.msra.mxu0 %v5153
  %5416 = vmatprep.subr.bf16.mxu0 0
  %5417 = vmatpush1.bf16.msra.mxu0 %v5154
  %5418 = vmatprep.subr.bf16.mxu0 0
  %5419 = vmatpush1.bf16.msra.mxu0 %v5155
  %5420 = vmatprep.subr.bf16.mxu0 0
  %5421 = vmatpush1.bf16.msra.mxu0 %v5156
  %5422 = vmatprep.subr.bf16.mxu0 0
  %5423 = vmatpush1.bf16.msra.mxu0 %v5157
  %5424 = vmatprep.subr.bf16.mxu0 0
  %5425 = vmatpush1.bf16.msra.mxu0 %v5158
  %5426 = vmatprep.subr.bf16.mxu0 0
  %5427 = vmatpush1.bf16.msra.mxu0 %v5159
  %5428 = vmatprep.subr.bf16.mxu0 0
  %5429 = vmatpush1.bf16.msra.mxu0 %v5160
  %5430 = vmatprep.subr.bf16.mxu0 0
  %5431 = vmatpush1.bf16.msra.mxu0 %v5161
  %5432 = vmatprep.subr.bf16.mxu0 0
  %5433 = vmatpush1.bf16.msra.mxu0 %v5162
  %5434 = vmatprep.subr.bf16.mxu0 0
  %5435 = vmatpush1.bf16.msra.mxu0 %v5163
  %5436 = vmatprep.mubr.bf16.mxu0 %v4310
  %5437 = vmatmul.mubr.bf16.gmra.mrb[0].mxu0 %v4309
  %v5438 = vpop.f32.mrb[0].mxu0
  %v5439 = vadd.f32 %v4634, %v5438
  %v5440 = vpop.f32.mrb[0].mxu0
  %v5441 = vpop.f32.mrb[0].mxu0
  %v5442 = vadd.f32 %v4634, %v5441
  %v5443 = vpop.f32.mrb[0].mxu0
  %5444 = vmatprep.mubr.bf16.mxu0 %v4326
  %5445 = vmatmul.mubr.bf16.gmra.mrb[0].mxu0 %v4325
  %v5446 = vpop.f32.mrb[0].mxu0
  %v5447 = vadd.f32 %v4634, %v5446
  %v5448 = vpop.f32.mrb[0].mxu0
  %v5449 = vpop.f32.mrb[0].mxu0
  %v5450 = vadd.f32 %v4634, %v5449
  %v5451 = vpop.f32.mrb[0].mxu0
  %5452 = vmatprep.mubr.bf16.mxu0 %v4342
  %5453 = vmatmul.mubr.bf16.gmra.mrb[0].mxu0 %v4341
  %v5454 = vpop.f32.mrb[0].mxu0
  %v5455 = vadd.f32 %v4634, %v5454
  %v5456 = vpop.f32.mrb[0].mxu0
  %v5457 = vpop.f32.mrb[0].mxu0
  %v5458 = vadd.f32 %v4634, %v5457
  %v5459 = vpop.f32.mrb[0].mxu0
  %5460 = vmatprep.mubr.bf16.mxu0 %v4358
  %5461 = vmatmul.mubr.bf16.gmra.mrb[0].mxu0 %v4357
  %v5462 = vpop.f32.mrb[0].mxu0
  %v5463 = vadd.f32 %v4634, %v5462
  %v5464 = vpop.f32.mrb[0].mxu0
  %v5465 = vpop.f32.mrb[0].mxu0
  %v5466 = vadd.f32 %v4634, %v5465
  %v5467 = vpop.f32.mrb[0].mxu0
  %5468 = vdwg.mxu0
  %5469 = vmatprep.subr.bf16.mxu0 0
  %5470 = vmatpush1.bf16.msra.mxu0 %v5164
  %5471 = vmatprep.subr.bf16.mxu0 0
  %5472 = vmatpush1.bf16.msra.mxu0 %v5165
  %5473 = vmatprep.subr.bf16.mxu0 0
  %5474 = vmatpush1.bf16.msra.mxu0 %v5166
  %5475 = vmatprep.subr.bf16.mxu0 0
  %5476 = vmatpush1.bf16.msra.mxu0 %v5167
  %5477 = vmatprep.subr.bf16.mxu0 0
  %5478 = vmatpush1.bf16.msra.mxu0 %v5168
  %5479 = vmatprep.subr.bf16.mxu0 0
  %5480 = vmatpush1.bf16.msra.mxu0 %v5169
  %5481 = vmatprep.subr.bf16.mxu0 0
  %5482 = vmatpush1.bf16.msra.mxu0 %v5170
  %5483 = vmatprep.subr.bf16.mxu0 0
  %5484 = vmatpush1.bf16.msra.mxu0 %v5171
  %5485 = vmatprep.subr.bf16.mxu0 0
  %5486 = vmatpush1.bf16.msra.mxu0 %v5172
  %5487 = vmatprep.subr.bf16.mxu0 0
  %5488 = vmatpush1.bf16.msra.mxu0 %v5173
  %5489 = vmatprep.subr.bf16.mxu0 0
  %5490 = vmatpush1.bf16.msra.mxu0 %v5174
  %5491 = vmatprep.subr.bf16.mxu0 0
  %5492 = vmatpush1.bf16.msra.mxu0 %v5175
  %5493 = vmatprep.subr.bf16.mxu0 0
  %5494 = vmatpush1.bf16.msra.mxu0 %v5176
  %5495 = vmatprep.subr.bf16.mxu0 0
  %5496 = vmatpush1.bf16.msra.mxu0 %v5177
  %5497 = vmatprep.subr.bf16.mxu0 0
  %5498 = vmatpush1.bf16.msra.mxu0 %v5178
  %5499 = vmatprep.subr.bf16.mxu0 0
  %5500 = vmatpush1.bf16.msra.mxu0 %v5179
  %5501 = vmatprep.mubr.bf16.mxu0 %v4312
  %5502 = vmatmul.mubr.bf16.gmra.mrb[0].mxu0 %v4311
  %v5503 = vpop.f32.mrb[0].mxu0
  %v5504 = vadd.f32 %v5439, %v5503
  %v5505 = vpop.f32.mrb[0].mxu0
  %v5506 = vpop.f32.mrb[0].mxu0
  %v5507 = vadd.f32 %v5442, %v5506
  %v5508 = vpop.f32.mrb[0].mxu0
  %5509 = vmatprep.mubr.bf16.mxu0 %v4328
  %5510 = vmatmul.mubr.bf16.gmra.mrb[0].mxu0 %v4327
  %v5511 = vpop.f32.mrb[0].mxu0
  %v5512 = vadd.f32 %v5447, %v5511
  %v5513 = vpop.f32.mrb[0].mxu0
  %v5514 = vpop.f32.mrb[0].mxu0
  %v5515 = vadd.f32 %v5450, %v5514
  %v5516 = vpop.f32.mrb[0].mxu0
  %5517 = vmatprep.mubr.bf16.mxu0 %v4344
  %5518 = vmatmul.mubr.bf16.gmra.mrb[0].mxu0 %v4343
  %v5519 = vpop.f32.mrb[0].mxu0
  %v5520 = vadd.f32 %v5455, %v5519
  %v5521 = vpop.f32.mrb[0].mxu0
  %v5522 = vpop.f32.mrb[0].mxu0
  %v5523 = vadd.f32 %v5458, %v5522
  %v5524 = vpop.f32.mrb[0].mxu0
  %5525 = vmatprep.mubr.bf16.mxu0 %v4360
  %5526 = vmatmul.mubr.bf16.gmra.mrb[0].mxu0 %v4359
  %v5527 = vpop.f32.mrb[0].mxu0
  %v5528 = vadd.f32 %v5463, %v5527
  %v5529 = vpop.f32.mrb[0].mxu0
  %v5530 = vpop.f32.mrb[0].mxu0
  %v5531 = vadd.f32 %v5466, %v5530
  %v5532 = vpop.f32.mrb[0].mxu0
  %5533 = vdwg.mxu0
  %5534 = vmatprep.subr.bf16.mxu0 0
  %5535 = vmatpush1.bf16.msra.mxu0 %v5180
  %5536 = vmatprep.subr.bf16.mxu0 0
  %5537 = vmatpush1.bf16.msra.mxu0 %v5181
  %5538 = vmatprep.subr.bf16.mxu0 0
  %5539 = vmatpush1.bf16.msra.mxu0 %v5182
  %5540 = vmatprep.subr.bf16.mxu0 0
  %5541 = vmatpush1.bf16.msra.mxu0 %v5183
  %5542 = vmatprep.subr.bf16.mxu0 0
  %5543 = vmatpush1.bf16.msra.mxu0 %v5184
  %5544 = vmatprep.subr.bf16.mxu0 0
  %5545 = vmatpush1.bf16.msra.mxu0 %v5185
  %5546 = vmatprep.subr.bf16.mxu0 0
  %5547 = vmatpush1.bf16.msra.mxu0 %v5186
  %5548 = vmatprep.subr.bf16.mxu0 0
  %5549 = vmatpush1.bf16.msra.mxu0 %v5187
  %5550 = vmatprep.subr.bf16.mxu0 0
  %5551 = vmatpush1.bf16.msra.mxu0 %v5188
  %5552 = vmatprep.subr.bf16.mxu0 0
  %5553 = vmatpush1.bf16.msra.mxu0 %v5189
  %5554 = vmatprep.subr.bf16.mxu0 0
  %5555 = vmatpush1.bf16.msra.mxu0 %v5190
  %5556 = vmatprep.subr.bf16.mxu0 0
  %5557 = vmatpush1.bf16.msra.mxu0 %v5191
  %5558 = vmatprep.subr.bf16.mxu0 0
  %5559 = vmatpush1.bf16.msra.mxu0 %v5192
  %5560 = vmatprep.subr.bf16.mxu0 0
  %5561 = vmatpush1.bf16.msra.mxu0 %v5193
  %5562 = vmatprep.subr.bf16.mxu0 0
  %5563 = vmatpush1.bf16.msra.mxu0 %v5194
  %5564 = vmatprep.subr.bf16.mxu0 0
  %5565 = vmatpush1.bf16.msra.mxu0 %v5195
  %5566 = vmatprep.mubr.bf16.mxu0 %v4314
  %5567 = vmatmul.mubr.bf16.gmra.mrb[0].mxu0 %v4313
  %v5568 = vpop.f32.mrb[0].mxu0
  %v5569 = vadd.f32 %v5504, %v5568
  %v5570 = vpop.f32.mrb[0].mxu0
  %v5571 = vpop.f32.mrb[0].mxu0
  %v5572 = vadd.f32 %v5507, %v5571
  %v5573 = vpop.f32.mrb[0].mxu0
  %5574 = vmatprep.mubr.bf16.mxu0 %v4330
  %5575 = vmatmul.mubr.bf16.gmra.mrb[0].mxu0 %v4329
  %v5576 = vpop.f32.mrb[0].mxu0
  %v5577 = vadd.f32 %v5512, %v5576
  %v5578 = vpop.f32.mrb[0].mxu0
  %v5579 = vpop.f32.mrb[0].mxu0
  %v5580 = vadd.f32 %v5515, %v5579
  %v5581 = vpop.f32.mrb[0].mxu0
  %5582 = vmatprep.mubr.bf16.mxu0 %v4346
  %5583 = vmatmul.mubr.bf16.gmra.mrb[0].mxu0 %v4345
  %v5584 = vpop.f32.mrb[0].mxu0
  %v5585 = vadd.f32 %v5520, %v5584
  %v5586 = vpop.f32.mrb[0].mxu0
  %v5587 = vpop.f32.mrb[0].mxu0
  %v5588 = vadd.f32 %v5523, %v5587
  %v5589 = vpop.f32.mrb[0].mxu0
  %5590 = vmatprep.mubr.bf16.mxu0 %v4362
  %5591 = vmatmul.mubr.bf16.gmra.mrb[0].mxu0 %v4361
  %v5592 = vpop.f32.mrb[0].mxu0
  %v5593 = vadd.f32 %v5528, %v5592
  %v5594 = vpop.f32.mrb[0].mxu0
  %v5595 = vpop.f32.mrb[0].mxu0
  %v5596 = vadd.f32 %v5531, %v5595
  %v5597 = vpop.f32.mrb[0].mxu0
  %5598 = vdwg.mxu0
  %5599 = vmatprep.subr.bf16.mxu0 0
  %5600 = vmatpush1.bf16.msra.mxu0 %v5196
  %5601 = vmatprep.subr.bf16.mxu0 0
  %5602 = vmatpush1.bf16.msra.mxu0 %v5197
  %5603 = vmatprep.subr.bf16.mxu0 0
  %5604 = vmatpush1.bf16.msra.mxu0 %v5198
  %5605 = vmatprep.subr.bf16.mxu0 0
  %5606 = vmatpush1.bf16.msra.mxu0 %v5199
  %5607 = vmatprep.subr.bf16.mxu0 0
  %5608 = vmatpush1.bf16.msra.mxu0 %v5200
  %5609 = vmatprep.subr.bf16.mxu0 0
  %5610 = vmatpush1.bf16.msra.mxu0 %v5201
  %5611 = vmatprep.subr.bf16.mxu0 0
  %5612 = vmatpush1.bf16.msra.mxu0 %v5202
  %5613 = vmatprep.subr.bf16.mxu0 0
  %5614 = vmatpush1.bf16.msra.mxu0 %v5203
  %5615 = vmatprep.subr.bf16.mxu0 0
  %5616 = vmatpush1.bf16.msra.mxu0 %v5204
  %5617 = vmatprep.subr.bf16.mxu0 0
  %5618 = vmatpush1.bf16.msra.mxu0 %v5205
  %5619 = vmatprep.subr.bf16.mxu0 0
  %5620 = vmatpush1.bf16.msra.mxu0 %v5206
  %5621 = vmatprep.subr.bf16.mxu0 0
  %5622 = vmatpush1.bf16.msra.mxu0 %v5207
  %5623 = vmatprep.subr.bf16.mxu0 0
  %5624 = vmatpush1.bf16.msra.mxu0 %v5208
  %5625 = vmatprep.subr.bf16.mxu0 0
  %5626 = vmatpush1.bf16.msra.mxu0 %v5209
  %5627 = vmatprep.subr.bf16.mxu0 0
  %5628 = vmatpush1.bf16.msra.mxu0 %v5210
  %5629 = vmatprep.subr.bf16.mxu0 0
  %5630 = vmatpush1.bf16.msra.mxu0 %v5211
  %5631 = vmatprep.mubr.bf16.mxu0 %v4316
  %5632 = vmatmul.mubr.bf16.gmra.mrb[0].mxu0 %v4315
  %v5633 = vpop.f32.mrb[0].mxu0
  %v5634 = vadd.f32 %v5569, %v5633
  %v5635 = vpop.f32.mrb[0].mxu0
  %v5636 = vpop.f32.mrb[0].mxu0
  %v5637 = vadd.f32 %v5572, %v5636
  %v5638 = vpop.f32.mrb[0].mxu0
  %5639 = vmatprep.mubr.bf16.mxu0 %v4332
  %5640 = vmatmul.mubr.bf16.gmra.mrb[0].mxu0 %v4331
  %v5641 = vpop.f32.mrb[0].mxu0
  %v5642 = vadd.f32 %v5577, %v5641
  %v5643 = vpop.f32.mrb[0].mxu0
  %v5644 = vpop.f32.mrb[0].mxu0
  %v5645 = vadd.f32 %v5580, %v5644
  %v5646 = vpop.f32.mrb[0].mxu0
  %5647 = vmatprep.mubr.bf16.mxu0 %v4348
  %5648 = vmatmul.mubr.bf16.gmra.mrb[0].mxu0 %v4347
  %v5649 = vpop.f32.mrb[0].mxu0
  %v5650 = vadd.f32 %v5585, %v5649
  %v5651 = vpop.f32.mrb[0].mxu0
  %v5652 = vpop.f32.mrb[0].mxu0
  %v5653 = vadd.f32 %v5588, %v5652
  %v5654 = vpop.f32.mrb[0].mxu0
  %5655 = vmatprep.mubr.bf16.mxu0 %v4364
  %5656 = vmatmul.mubr.bf16.gmra.mrb[0].mxu0 %v4363
  %v5657 = vpop.f32.mrb[0].mxu0
  %v5658 = vadd.f32 %v5593, %v5657
  %v5659 = vpop.f32.mrb[0].mxu0
  %v5660 = vpop.f32.mrb[0].mxu0
  %v5661 = vadd.f32 %v5596, %v5660
  %v5662 = vpop.f32.mrb[0].mxu0
  %5663 = vdwg.mxu0
  %5664 = vmatprep.subr.bf16.mxu0 0
  %5665 = vmatpush1.bf16.msra.mxu0 %v5212
  %5666 = vmatprep.subr.bf16.mxu0 0
  %5667 = vmatpush1.bf16.msra.mxu0 %v5213
  %5668 = vmatprep.subr.bf16.mxu0 0
  %5669 = vmatpush1.bf16.msra.mxu0 %v5214
  %5670 = vmatprep.subr.bf16.mxu0 0
  %5671 = vmatpush1.bf16.msra.mxu0 %v5215
  %5672 = vmatprep.subr.bf16.mxu0 0
  %5673 = vmatpush1.bf16.msra.mxu0 %v5216
  %5674 = vmatprep.subr.bf16.mxu0 0
  %5675 = vmatpush1.bf16.msra.mxu0 %v5217
  %5676 = vmatprep.subr.bf16.mxu0 0
  %5677 = vmatpush1.bf16.msra.mxu0 %v5218
  %5678 = vmatprep.subr.bf16.mxu0 0
  %5679 = vmatpush1.bf16.msra.mxu0 %v5219
  %5680 = vmatprep.subr.bf16.mxu0 0
  %5681 = vmatpush1.bf16.msra.mxu0 %v5220
  %5682 = vmatprep.subr.bf16.mxu0 0
  %5683 = vmatpush1.bf16.msra.mxu0 %v5221
  %5684 = vmatprep.subr.bf16.mxu0 0
  %5685 = vmatpush1.bf16.msra.mxu0 %v5222
  %5686 = vmatprep.subr.bf16.mxu0 0
  %5687 = vmatpush1.bf16.msra.mxu0 %v5223
  %5688 = vmatprep.subr.bf16.mxu0 0
  %5689 = vmatpush1.bf16.msra.mxu0 %v5224
  %5690 = vmatprep.subr.bf16.mxu0 0
  %5691 = vmatpush1.bf16.msra.mxu0 %v5225
  %5692 = vmatprep.subr.bf16.mxu0 0
  %5693 = vmatpush1.bf16.msra.mxu0 %v5226
  %5694 = vmatprep.subr.bf16.mxu0 0
  %5695 = vmatpush1.bf16.msra.mxu0 %v5227
  %5696 = vmatprep.mubr.bf16.mxu0 %v4318
  %5697 = vmatmul.mubr.bf16.gmra.mrb[0].mxu0 %v4317
  %v5698 = vpop.f32.mrb[0].mxu0
  %v5699 = vadd.f32 %v5634, %v5698
  %v5700 = vpop.f32.mrb[0].mxu0
  %v5701 = vpop.f32.mrb[0].mxu0
  %v5702 = vadd.f32 %v5637, %v5701
  %v5703 = vpop.f32.mrb[0].mxu0
  %5704 = vmatprep.mubr.bf16.mxu0 %v4334
  %5705 = vmatmul.mubr.bf16.gmra.mrb[0].mxu0 %v4333
  %v5706 = vpop.f32.mrb[0].mxu0
  %v5707 = vadd.f32 %v5642, %v5706
  %v5708 = vpop.f32.mrb[0].mxu0
  %v5709 = vpop.f32.mrb[0].mxu0
  %v5710 = vadd.f32 %v5645, %v5709
  %v5711 = vpop.f32.mrb[0].mxu0
  %5712 = vmatprep.mubr.bf16.mxu0 %v4350
  %5713 = vmatmul.mubr.bf16.gmra.mrb[0].mxu0 %v4349
  %v5714 = vpop.f32.mrb[0].mxu0
  %v5715 = vadd.f32 %v5650, %v5714
  %v5716 = vpop.f32.mrb[0].mxu0
  %v5717 = vpop.f32.mrb[0].mxu0
  %v5718 = vadd.f32 %v5653, %v5717
  %v5719 = vpop.f32.mrb[0].mxu0
  %5720 = vmatprep.mubr.bf16.mxu0 %v4366
  %5721 = vmatmul.mubr.bf16.gmra.mrb[0].mxu0 %v4365
  %v5722 = vpop.f32.mrb[0].mxu0
  %v5723 = vadd.f32 %v5658, %v5722
  %v5724 = vpop.f32.mrb[0].mxu0
  %v5725 = vpop.f32.mrb[0].mxu0
  %v5726 = vadd.f32 %v5661, %v5725
  %v5727 = vpop.f32.mrb[0].mxu0
  %5728 = vdwg.mxu0
  %5729 = vmatprep.subr.bf16.mxu0 0
  %5730 = vmatpush1.bf16.msra.mxu0 %v5228
  %5731 = vmatprep.subr.bf16.mxu0 0
  %5732 = vmatpush1.bf16.msra.mxu0 %v5229
  %5733 = vmatprep.subr.bf16.mxu0 0
  %5734 = vmatpush1.bf16.msra.mxu0 %v5230
  %5735 = vmatprep.subr.bf16.mxu0 0
  %5736 = vmatpush1.bf16.msra.mxu0 %v5231
  %5737 = vmatprep.subr.bf16.mxu0 0
  %5738 = vmatpush1.bf16.msra.mxu0 %v5232
  %5739 = vmatprep.subr.bf16.mxu0 0
  %5740 = vmatpush1.bf16.msra.mxu0 %v5233
  %5741 = vmatprep.subr.bf16.mxu0 0
  %5742 = vmatpush1.bf16.msra.mxu0 %v5234
  %5743 = vmatprep.subr.bf16.mxu0 0
  %5744 = vmatpush1.bf16.msra.mxu0 %v5235
  %5745 = vmatprep.subr.bf16.mxu0 0
  %5746 = vmatpush1.bf16.msra.mxu0 %v5236
  %5747 = vmatprep.subr.bf16.mxu0 0
  %5748 = vmatpush1.bf16.msra.mxu0 %v5237
  %5749 = vmatprep.subr.bf16.mxu0 0
  %5750 = vmatpush1.bf16.msra.mxu0 %v5238
  %5751 = vmatprep.subr.bf16.mxu0 0
  %5752 = vmatpush1.bf16.msra.mxu0 %v5239
  %5753 = vmatprep.subr.bf16.mxu0 0
  %5754 = vmatpush1.bf16.msra.mxu0 %v5240
  %5755 = vmatprep.subr.bf16.mxu0 0
  %5756 = vmatpush1.bf16.msra.mxu0 %v5241
  %5757 = vmatprep.subr.bf16.mxu0 0
  %5758 = vmatpush1.bf16.msra.mxu0 %v5242
  %5759 = vmatprep.subr.bf16.mxu0 0
  %5760 = vmatpush1.bf16.msra.mxu0 %v5243
  %5761 = vmatprep.mubr.bf16.mxu0 %v4320
  %5762 = vmatmul.mubr.bf16.gmra.mrb[0].mxu0 %v4319
  %v5763 = vpop.f32.mrb[0].mxu0
  %v5764 = vadd.f32 %v5699, %v5763
  %v5765 = vpop.f32.mrb[0].mxu0
  %v5766 = vpop.f32.mrb[0].mxu0
  %v5767 = vadd.f32 %v5702, %v5766
  %v5768 = vpop.f32.mrb[0].mxu0
  %5769 = vmatprep.mubr.bf16.mxu0 %v4336
  %5770 = vmatmul.mubr.bf16.gmra.mrb[0].mxu0 %v4335
  %v5771 = vpop.f32.mrb[0].mxu0
  %v5772 = vadd.f32 %v5707, %v5771
  %v5773 = vpop.f32.mrb[0].mxu0
  %v5774 = vpop.f32.mrb[0].mxu0
  %v5775 = vadd.f32 %v5710, %v5774
  %v5776 = vpop.f32.mrb[0].mxu0
  %5777 = vmatprep.mubr.bf16.mxu0 %v4352
  %5778 = vmatmul.mubr.bf16.gmra.mrb[0].mxu0 %v4351
  %v5779 = vpop.f32.mrb[0].mxu0
  %v5780 = vadd.f32 %v5715, %v5779
  %v5781 = vpop.f32.mrb[0].mxu0
  %v5782 = vpop.f32.mrb[0].mxu0
  %v5783 = vadd.f32 %v5718, %v5782
  %v5784 = vpop.f32.mrb[0].mxu0
  %5785 = vmatprep.mubr.bf16.mxu0 %v4368
  %5786 = vmatmul.mubr.bf16.gmra.mrb[0].mxu0 %v4367
  %v5787 = vpop.f32.mrb[0].mxu0
  %v5788 = vadd.f32 %v5723, %v5787
  %v5789 = vpop.f32.mrb[0].mxu0
  %v5790 = vpop.f32.mrb[0].mxu0
  %v5791 = vadd.f32 %v5726, %v5790
  %v5792 = vpop.f32.mrb[0].mxu0
  %5793 = vdwg.mxu0
  %5794 = vmatprep.subr.bf16.mxu0 0
  %5795 = vmatpush1.bf16.msra.mxu0 %v5244
  %5796 = vmatprep.subr.bf16.mxu0 0
  %5797 = vmatpush1.bf16.msra.mxu0 %v5245
  %5798 = vmatprep.subr.bf16.mxu0 0
  %5799 = vmatpush1.bf16.msra.mxu0 %v5246
  %5800 = vmatprep.subr.bf16.mxu0 0
  %5801 = vmatpush1.bf16.msra.mxu0 %v5247
  %5802 = vmatprep.subr.bf16.mxu0 0
  %5803 = vmatpush1.bf16.msra.mxu0 %v5248
  %5804 = vmatprep.subr.bf16.mxu0 0
  %5805 = vmatpush1.bf16.msra.mxu0 %v5249
  %5806 = vmatprep.subr.bf16.mxu0 0
  %5807 = vmatpush1.bf16.msra.mxu0 %v5250
  %5808 = vmatprep.subr.bf16.mxu0 0
  %5809 = vmatpush1.bf16.msra.mxu0 %v5251
  %5810 = vmatprep.subr.bf16.mxu0 0
  %5811 = vmatpush1.bf16.msra.mxu0 %v5252
  %5812 = vmatprep.subr.bf16.mxu0 0
  %5813 = vmatpush1.bf16.msra.mxu0 %v5253
  %5814 = vmatprep.subr.bf16.mxu0 0
  %5815 = vmatpush1.bf16.msra.mxu0 %v5254
  %5816 = vmatprep.subr.bf16.mxu0 0
  %5817 = vmatpush1.bf16.msra.mxu0 %v5255
  %5818 = vmatprep.subr.bf16.mxu0 0
  %5819 = vmatpush1.bf16.msra.mxu0 %v5256
  %5820 = vmatprep.subr.bf16.mxu0 0
  %5821 = vmatpush1.bf16.msra.mxu0 %v5257
  %5822 = vmatprep.subr.bf16.mxu0 0
  %5823 = vmatpush1.bf16.msra.mxu0 %v5258
  %5824 = vmatprep.subr.bf16.mxu0 0
  %5825 = vmatpush1.bf16.msra.mxu0 %v5259
  %5826 = vmatprep.mubr.bf16.mxu0 %v4322
  %5827 = vmatmul.mubr.bf16.gmra.mrb[0].mxu0 %v4321
  %v5828 = vpop.f32.mrb[0].mxu0
  %v5829 = vadd.f32 %v5764, %v5828
  %v5830 = vpop.f32.mrb[0].mxu0
  %v5831 = vpop.f32.mrb[0].mxu0
  %v5832 = vadd.f32 %v5767, %v5831
  %v5833 = vpop.f32.mrb[0].mxu0
  %5834 = vmatprep.mubr.bf16.mxu0 %v4338
  %5835 = vmatmul.mubr.bf16.gmra.mrb[0].mxu0 %v4337
  %v5836 = vpop.f32.mrb[0].mxu0
  %v5837 = vadd.f32 %v5772, %v5836
  %v5838 = vpop.f32.mrb[0].mxu0
  %v5839 = vpop.f32.mrb[0].mxu0
  %v5840 = vadd.f32 %v5775, %v5839
  %v5841 = vpop.f32.mrb[0].mxu0
  %5842 = vmatprep.mubr.bf16.mxu0 %v4354
  %5843 = vmatmul.mubr.bf16.gmra.mrb[0].mxu0 %v4353
  %v5844 = vpop.f32.mrb[0].mxu0
  %v5845 = vadd.f32 %v5780, %v5844
  %v5846 = vpop.f32.mrb[0].mxu0
  %v5847 = vpop.f32.mrb[0].mxu0
  %v5848 = vadd.f32 %v5783, %v5847
  %v5849 = vpop.f32.mrb[0].mxu0
  %5850 = vmatprep.mubr.bf16.mxu0 %v4370
  %5851 = vmatmul.mubr.bf16.gmra.mrb[0].mxu0 %v4369
  %v5852 = vpop.f32.mrb[0].mxu0
  %v5853 = vadd.f32 %v5788, %v5852
  %v5854 = vpop.f32.mrb[0].mxu0
  %v5855 = vpop.f32.mrb[0].mxu0
  %v5856 = vadd.f32 %v5791, %v5855
  %v5857 = vpop.f32.mrb[0].mxu0
  %5858 = vdwg.mxu0
  %5859 = vmatprep.subr.bf16.mxu0 0
  %5860 = vmatpush1.bf16.msra.mxu0 %v5260
  %5861 = vmatprep.subr.bf16.mxu0 0
  %5862 = vmatpush1.bf16.msra.mxu0 %v5261
  %5863 = vmatprep.subr.bf16.mxu0 0
  %5864 = vmatpush1.bf16.msra.mxu0 %v5262
  %5865 = vmatprep.subr.bf16.mxu0 0
  %5866 = vmatpush1.bf16.msra.mxu0 %v5263
  %5867 = vmatprep.subr.bf16.mxu0 0
  %5868 = vmatpush1.bf16.msra.mxu0 %v5264
  %5869 = vmatprep.subr.bf16.mxu0 0
  %5870 = vmatpush1.bf16.msra.mxu0 %v5265
  %5871 = vmatprep.subr.bf16.mxu0 0
  %5872 = vmatpush1.bf16.msra.mxu0 %v5266
  %5873 = vmatprep.subr.bf16.mxu0 0
  %5874 = vmatpush1.bf16.msra.mxu0 %v5267
  %5875 = vmatprep.subr.bf16.mxu0 0
  %5876 = vmatpush1.bf16.msra.mxu0 %v5268
  %5877 = vmatprep.subr.bf16.mxu0 0
  %5878 = vmatpush1.bf16.msra.mxu0 %v5269
  %5879 = vmatprep.subr.bf16.mxu0 0
  %5880 = vmatpush1.bf16.msra.mxu0 %v5270
  %5881 = vmatprep.subr.bf16.mxu0 0
  %5882 = vmatpush1.bf16.msra.mxu0 %v5271
  %5883 = vmatprep.subr.bf16.mxu0 0
  %5884 = vmatpush1.bf16.msra.mxu0 %v5272
  %5885 = vmatprep.subr.bf16.mxu0 0
  %5886 = vmatpush1.bf16.msra.mxu0 %v5273
  %5887 = vmatprep.subr.bf16.mxu0 0
  %5888 = vmatpush1.bf16.msra.mxu0 %v5274
  %5889 = vmatprep.subr.bf16.mxu0 0
  %5890 = vmatpush1.bf16.msra.mxu0 %v5275
  %5891 = vmatprep.mubr.bf16.mxu0 %v4324
  %5892 = vmatmul.mubr.bf16.gmra.mrb[0].mxu0 %v4323
  %v5893 = vpop.f32.mrb[0].mxu0
  %v5894 = vadd.f32 %v5829, %v5893
  %v5895 = vpop.f32.mrb[0].mxu0
  %v5896 = vpop.f32.mrb[0].mxu0
  %v5897 = vadd.f32 %v5832, %v5896
  %v5898 = vpop.f32.mrb[0].mxu0
  %5899 = vmatprep.mubr.bf16.mxu0 %v4340
  %5900 = vmatmul.mubr.bf16.gmra.mrb[0].mxu0 %v4339
  %v5901 = vpop.f32.mrb[0].mxu0
  %v5902 = vadd.f32 %v5837, %v5901
  %v5903 = vpop.f32.mrb[0].mxu0
  %v5904 = vpop.f32.mrb[0].mxu0
  %v5905 = vadd.f32 %v5840, %v5904
  %v5906 = vpop.f32.mrb[0].mxu0
  %5907 = vmatprep.mubr.bf16.mxu0 %v4356
  %5908 = vmatmul.mubr.bf16.gmra.mrb[0].mxu0 %v4355
  %v5909 = vpop.f32.mrb[0].mxu0
  %v5910 = vadd.f32 %v5845, %v5909
  %v5911 = vpop.f32.mrb[0].mxu0
  %v5912 = vpop.f32.mrb[0].mxu0
  %v5913 = vadd.f32 %v5848, %v5912
  %v5914 = vpop.f32.mrb[0].mxu0
  %5915 = vmatprep.mubr.bf16.mxu0 %v4372
  %5916 = vmatmul.mubr.bf16.gmra.mrb[0].mxu0 %v4371
  %v5917 = vpop.f32.mrb[0].mxu0
  %v5918 = vadd.f32 %v5853, %v5917
  %v5919 = vpop.f32.mrb[0].mxu0
  %v5920 = vpop.f32.mrb[0].mxu0
  %v5921 = vadd.f32 %v5856, %v5920
  %v5922 = vpop.f32.mrb[0].mxu0
  %5923 = vdwg.mxu0
  %v5924 = vadd.f32 %v3105, %v5894
  %v5925 = vadd.f32 %v3106, %v5897
  %v5926 = vadd.f32 %v3107, %v5902
  %v5927 = vadd.f32 %v3108, %v5905
  %v5928 = vadd.f32 %v3109, %v5910
  %v5929 = vadd.f32 %v3110, %v5913
  %v5930 = vadd.f32 %v3111, %v5918
  %v5931 = vadd.f32 %v3112, %v5921
  %v5932 = vld [vmem:[%s21] sm:$0x1]
  %v5933 = vld [vmem:[%s22] sm:$0x1]
  %v5934 = vsel %vm261, %v5924, 0.0
  %5935 = vadd.xlane.f32.xlu0 %v5934
  %v5936 = vpop.xlane.xlu0 %5935
  %v5937 = vsel %vm261, %v5925, 0.0
  %5938 = vadd.xlane.f32.xlu0 %v5937
  %v5939 = vpop.xlane.xlu0 %5938
  %v5940 = vsel %vm261, %v5926, 0.0
  %5941 = vadd.xlane.f32.xlu0 %v5940
  %v5942 = vpop.xlane.xlu0 %5941
  %v5943 = vsel %vm261, %v5927, 0.0
  %5944 = vadd.xlane.f32.xlu0 %v5943
  %v5945 = vpop.xlane.xlu0 %5944
  %v5946 = vsel %vm261, %v5928, 0.0
  %5947 = vadd.xlane.f32.xlu0 %v5946
  %v5948 = vpop.xlane.xlu0 %5947
  %v5949 = vsel %vm261, %v5929, 0.0
  %5950 = vadd.xlane.f32.xlu0 %v5949
  %v5951 = vpop.xlane.xlu0 %5950
  %v5952 = vsel %vm261, %v5930, 0.0
  %5953 = vadd.xlane.f32.xlu0 %v5952
  %v5954 = vpop.xlane.xlu0 %5953
  %v5955 = vsel %vm261, %v5931, 0.0
  %5956 = vadd.xlane.f32.xlu0 %v5955
  %v5957 = vpop.xlane.xlu0 %5956
  %v5958 = vmul.f32 %v5936, %v3004
  %v5959 = vmul.f32 %v5939, %v3004
  %v5960 = vmul.f32 %v5942, %v3004
  %v5961 = vmul.f32 %v5945, %v3004
  %v5962 = vmul.f32 %v5948, %v3004
  %v5963 = vmul.f32 %v5951, %v3004
  %v5964 = vmul.f32 %v5954, %v3004
  %v5965 = vmul.f32 %v5957, %v3004
  %v5966 = vsub.f32 %v5924, %v5958
  %v5967 = vsub.f32 %v5925, %v5959
  %v5968 = vsub.f32 %v5926, %v5960
  %v5969 = vsub.f32 %v5927, %v5961
  %v5970 = vsub.f32 %v5928, %v5962
  %v5971 = vsub.f32 %v5929, %v5963
  %v5972 = vsub.f32 %v5930, %v5964
  %v5973 = vsub.f32 %v5931, %v5965
  %v5974 = vmul.f32 %v5966, %v5966
  %v5975 = vmul.f32 %v5967, %v5967
  %v5976 = vmul.f32 %v5968, %v5968
  %v5977 = vmul.f32 %v5969, %v5969
  %v5978 = vmul.f32 %v5970, %v5970
  %v5979 = vmul.f32 %v5971, %v5971
  %v5980 = vmul.f32 %v5972, %v5972
  %v5981 = vmul.f32 %v5973, %v5973
  %v5982 = vsel %vm261, %v5974, 0.0
  %5983 = vadd.xlane.f32.xlu0 %v5982
  %v5984 = vpop.xlane.xlu0 %5983
  %v5985 = vsel %vm261, %v5975, 0.0
  %5986 = vadd.xlane.f32.xlu0 %v5985
  %v5987 = vpop.xlane.xlu0 %5986
  %v5988 = vsel %vm261, %v5976, 0.0
  %5989 = vadd.xlane.f32.xlu0 %v5988
  %v5990 = vpop.xlane.xlu0 %5989
  %v5991 = vsel %vm261, %v5977, 0.0
  %5992 = vadd.xlane.f32.xlu0 %v5991
  %v5993 = vpop.xlane.xlu0 %5992
  %v5994 = vsel %vm261, %v5978, 0.0
  %5995 = vadd.xlane.f32.xlu0 %v5994
  %v5996 = vpop.xlane.xlu0 %5995
  %v5997 = vsel %vm261, %v5979, 0.0
  %5998 = vadd.xlane.f32.xlu0 %v5997
  %v5999 = vpop.xlane.xlu0 %5998
  %v6000 = vsel %vm261, %v5980, 0.0
  %6001 = vadd.xlane.f32.xlu0 %v6000
  %v6002 = vpop.xlane.xlu0 %6001
  %v6003 = vsel %vm261, %v5981, 0.0
  %6004 = vadd.xlane.f32.xlu0 %v6003
  %v6005 = vpop.xlane.xlu0 %6004
  %v6006 = vmul.f32 %v5984, %v3004
  %v6007 = vmul.f32 %v5987, %v3004
  %v6008 = vmul.f32 %v5990, %v3004
  %v6009 = vmul.f32 %v5993, %v3004
  %v6010 = vmul.f32 %v5996, %v3004
  %v6011 = vmul.f32 %v5999, %v3004
  %v6012 = vmul.f32 %v6002, %v3004
  %v6013 = vmul.f32 %v6005, %v3004
  %v6014 = vadd.f32 %v6006, 1e-05
  %v6015 = vadd.f32 %v6007, 1e-05
  %v6016 = vadd.f32 %v6008, 1e-05
  %v6017 = vadd.f32 %v6009, 1e-05
  %v6018 = vadd.f32 %v6010, 1e-05
  %v6019 = vadd.f32 %v6011, 1e-05
  %v6020 = vadd.f32 %v6012, 1e-05
  %v6021 = vadd.f32 %v6013, 1e-05
  %v6022 = vrsqrt.pop %v6014
  %v6023 = vrsqrt.pop %v6015
  %v6024 = vrsqrt.pop %v6016
  %v6025 = vrsqrt.pop %v6017
  %v6026 = vrsqrt.pop %v6018
  %v6027 = vrsqrt.pop %v6019
  %v6028 = vrsqrt.pop %v6020
  %v6029 = vrsqrt.pop %v6021
  %v6030 = vmul.f32 %v5966, %v6022
  %v6031 = vmul.f32 %v5967, %v6023
  %v6032 = vmul.f32 %v5968, %v6024
  %v6033 = vmul.f32 %v5969, %v6025
  %v6034 = vmul.f32 %v5970, %v6026
  %v6035 = vmul.f32 %v5971, %v6027
  %v6036 = vmul.f32 %v5972, %v6028
  %v6037 = vmul.f32 %v5973, %v6029
  %v6039 = vlaneseq
  %v6040 = vshrl.u32 %v6039, 7
  %v6041 = vsub.s32 0, %v6040
  %v6042 = vrot.slane %v5932, %v6041
  %v6044 = vmul.f32 %v6030, %v6042
  %v6045 = vmul.f32 %v6031, %v6042
  %v6046 = vmul.f32 %v6032, %v6042
  %v6047 = vmul.f32 %v6033, %v6042
  %v6048 = vmul.f32 %v6034, %v6042
  %v6049 = vmul.f32 %v6035, %v6042
  %v6050 = vmul.f32 %v6036, %v6042
  %v6051 = vmul.f32 %v6037, %v6042
  %v6053 = vlaneseq
  %v6054 = vshrl.u32 %v6053, 7
  %v6055 = vsub.s32 0, %v6054
  %v6056 = vrot.slane %v5933, %v6055
  %v6058 = vadd.f32 %v6044, %v6056
  %v6059 = vadd.f32 %v6045, %v6056
  %v6060 = vadd.f32 %v6046, %v6056
  %v6061 = vadd.f32 %v6047, %v6056
  %v6062 = vadd.f32 %v6048, %v6056
  %v6063 = vadd.f32 %v6049, %v6056
  %v6064 = vadd.f32 %v6050, %v6056
  %v6065 = vadd.f32 %v6051, %v6056
  %6066 = vxpose.xlu0.b32.start [1/16] %v6058, 128
  %6067 = vxpose.xlu0.b32.cont [2/16] %v6059, 128
  %6068 = vxpose.xlu0.b32.cont [3/16] %v6060, 128
  %6069 = vxpose.xlu0.b32.cont [4/16] %v6061, 128
  %6070 = vxpose.xlu0.b32.cont [5/16] %v6062, 128
  %6071 = vxpose.xlu0.b32.cont [6/16] %v6063, 128
  %6072 = vxpose.xlu0.b32.cont [7/16] %v6064, 128
  %6073 = vxpose.xlu0.b32.cont [8/16] %v6065, 128
  %6074 = vxpose.xlu0.b32.cont [9/16] 0.0, 128
  %6075 = vxpose.xlu0.b32.cont [10/16] 0.0, 128
  %6076 = vxpose.xlu0.b32.cont [11/16] 0.0, 128
  %6077 = vxpose.xlu0.b32.cont [12/16] 0.0, 128
  %6078 = vxpose.xlu0.b32.cont [13/16] 0.0, 128
  %6079 = vxpose.xlu0.b32.cont [14/16] 0.0, 128
  %6080 = vxpose.xlu0.b32.cont [15/16] 0.0, 128
  %6081 = vxpose.xlu0.b32.end [16/16] 0.0, 128
  %v6082 = vpop.trf.xlu0
  %v6083 = vpop.trf.xlu0
  %v6084 = vpop.trf.xlu0
  %v6085 = vpop.trf.xlu0
  %v6086 = vpop.trf.xlu0
  %v6087 = vpop.trf.xlu0
  %v6088 = vpop.trf.xlu0
  %v6089 = vpop.trf.xlu0
  %v6090 = vpop.trf.xlu0
  %v6091 = vpop.trf.xlu0
  %v6092 = vpop.trf.xlu0
  %v6093 = vpop.trf.xlu0
  %v6094 = vpop.trf.xlu0
  %v6095 = vpop.trf.xlu0
  %v6096 = vpop.trf.xlu0
  %v6097 = vpop.trf.xlu0
  %v6098 = vpack.c.bf16 %v6059, %v6058
  %v6099 = vpack.c.bf16 %v6061, %v6060
  %v6100 = vpack.c.bf16 %v6063, %v6062
  %v6101 = vpack.c.bf16 %v6065, %v6064
  %v6102 = vpack.c.bf16 %v6083, %v6082
  %v6103 = vpack.c.bf16 %v6085, %v6084
  %v6104 = vpack.c.bf16 %v6087, %v6086
  %v6105 = vpack.c.bf16 %v6089, %v6088
  %s6106 = scalar_lea.vmem %s7, 128
  %v6107 = vld [vmem:[%s6106] sm:$0xf]
  %v6108 = vld [vmem:[%s6106 + $0x4] sm:$0xf]
  %v6109 = vld [vmem:[%s6106 + $0x8] sm:$0xf]
  %v6110 = vld [vmem:[%s6106 + $0xc] sm:$0xf]
  %v6111 = vld [vmem:[%s6106 + $0x10] sm:$0xf]
  %v6112 = vld [vmem:[%s6106 + $0x14] sm:$0xf]
  %v6113 = vld [vmem:[%s6106 + $0x18] sm:$0xf]
  %v6114 = vld [vmem:[%s6106 + $0x1c] sm:$0xf]
  %s6115 = scalar_lea.vmem %s8, 4
  %v6116 = vld [vmem:[%s6115] sm:$0x1]
  %v6118 = vlaneseq
  %v6119 = vshrl.u32 %v6118, 7
  %v6120 = vsub.s32 0, %v6119
  %v6121 = vrot.slane %v6116, %v6120
  %v6131 = vunpack.c.l.b16 %v6107
  %v6132 = vunpack.c.l.b16 %v6108
  %v6133 = vunpack.c.l.b16 %v6109
  %v6134 = vunpack.c.l.b16 %v6110
  %v6135 = vunpack.c.l.b16 %v6111
  %v6136 = vunpack.c.l.b16 %v6112
  %v6137 = vunpack.c.l.b16 %v6113
  %v6138 = vunpack.c.l.b16 %v6114
  %v6139 = vpack.c.b16 %v6132, %v6131
  %v6140 = vpack.c.b16 %v6134, %v6133
  %v6141 = vpack.c.b16 %v6136, %v6135
  %v6142 = vpack.c.b16 %v6138, %v6137
  %v6148 = vsel %vm261, %v6098, 0
  %v6151 = vsel %vm261, %v6099, 0
  %v6154 = vsel %vm261, %v6100, 0
  %v6157 = vsel %vm261, %v6101, 0
  %6159 = vmatprep.subr.bf16.mxu0 0
  %6160 = vmatpush1.bf16.msra.mxu0 %v6139
  %6161 = vmatprep.subr.bf16.mxu0 0
  %6162 = vmatpush1.bf16.msra.mxu0 %v6140
  %6163 = vmatprep.subr.bf16.mxu0 0
  %6164 = vmatpush1.bf16.msra.mxu0 %v6141
  %6165 = vmatprep.subr.bf16.mxu0 0
  %6166 = vmatpush1.bf16.msra.mxu0 %v6142
  %6167 = vmatprep.subr.bf16.mxu0 0
  %6168 = vmatpush1.bf16.msra.mxu0 0
  %6169 = vmatprep.subr.bf16.mxu0 0
  %6170 = vmatpush1.bf16.msra.mxu0 0
  %6171 = vmatprep.subr.bf16.mxu0 0
  %6172 = vmatpush1.bf16.msra.mxu0 0
  %6173 = vmatprep.subr.bf16.mxu0 0
  %6174 = vmatpush1.bf16.msra.mxu0 0
  %6175 = vmatprep.subr.bf16.mxu0 0
  %6176 = vmatpush1.bf16.msra.mxu0 0
  %6177 = vmatprep.subr.bf16.mxu0 0
  %6178 = vmatpush1.bf16.msra.mxu0 0
  %6179 = vmatprep.subr.bf16.mxu0 0
  %6180 = vmatpush1.bf16.msra.mxu0 0
  %6181 = vmatprep.subr.bf16.mxu0 0
  %6182 = vmatpush1.bf16.msra.mxu0 0
  %6183 = vmatprep.subr.bf16.mxu0 0
  %6184 = vmatpush1.bf16.msra.mxu0 0
  %6185 = vmatprep.subr.bf16.mxu0 0
  %6186 = vmatpush1.bf16.msra.mxu0 0
  %6187 = vmatprep.subr.bf16.mxu0 0
  %6188 = vmatpush1.bf16.msra.mxu0 0
  %6189 = vmatprep.subr.bf16.mxu0 0
  %6190 = vmatpush1.bf16.msra.mxu0 0
  %6191 = vmatprep.mubr.bf16.mxu0 0
  %6192 = vmatmul.mubr.bf16.gmra.mrb[0].mxu0 %v6148
  %v6193 = vpop.f32.mrb[0].mxu0
  %v6194 = vadd.f32 %v6121, %v6193
  %v6195 = vpop.f32.mrb[0].mxu0
  %v6196 = vpop.f32.mrb[0].mxu0
  %v6197 = vadd.f32 %v6121, %v6196
  %v6198 = vpop.f32.mrb[0].mxu0
  %6199 = vmatprep.mubr.bf16.mxu0 0
  %6200 = vmatmul.mubr.bf16.gmra.mrb[0].mxu0 %v6151
  %v6201 = vpop.f32.mrb[0].mxu0
  %v6202 = vadd.f32 %v6121, %v6201
  %v6203 = vpop.f32.mrb[0].mxu0
  %v6204 = vpop.f32.mrb[0].mxu0
  %v6205 = vadd.f32 %v6121, %v6204
  %v6206 = vpop.f32.mrb[0].mxu0
  %6207 = vmatprep.mubr.bf16.mxu0 0
  %6208 = vmatmul.mubr.bf16.gmra.mrb[0].mxu0 %v6154
  %v6209 = vpop.f32.mrb[0].mxu0
  %v6210 = vadd.f32 %v6121, %v6209
  %v6211 = vpop.f32.mrb[0].mxu0
  %v6212 = vpop.f32.mrb[0].mxu0
  %v6213 = vadd.f32 %v6121, %v6212
  %v6214 = vpop.f32.mrb[0].mxu0
  %6215 = vmatprep.mubr.bf16.mxu0 0
  %6216 = vmatmul.mubr.bf16.gmra.mrb[0].mxu0 %v6157
  %v6217 = vpop.f32.mrb[0].mxu0
  %v6218 = vadd.f32 %v6121, %v6217
  %v6219 = vpop.f32.mrb[0].mxu0
  %v6220 = vpop.f32.mrb[0].mxu0
  %v6221 = vadd.f32 %v6121, %v6220
  %v6222 = vpop.f32.mrb[0].mxu0
  %6223 = vdwg.mxu0
  %s6224 = scalar_lea.vmem %s9, 32
  %v6225 = vld [vmem:[%s6224] sm:$0xf]
  %v6226 = vld [vmem:[%s6224 + $0x4] sm:$0xf]
  %s6227 = scalar_lea.vmem %s10, 64
  %v6228 = vld [vmem:[%s6227] sm:$0xff]
  %v6229 = vld [vmem:[%s6227 + $0x8] sm:$0xff]
  %6231 = vset.pattern.permute.xlu0 0
  %6232 = vperm.xlu0 %6231, %v6228
  %v6233 = vpop.permute.xlu0 %6232
  %6236 = vset.pattern.permute.xlu0 0
  %6237 = vperm.xlu0 %6236, %v6229
  %v6238 = vpop.permute.xlu0 %6237
  %v6242 = vunpack.c.l.b16 %v6225
  %v6243 = vunpack.c.l.b16 %v6226
  %v6244 = vpack.c.b16 %v6243, %v6242
  %v6246 = vsel %vm261, %v6244, 0
  %6248 = vmatprep.subr.bf16.mxu0 0
  %6249 = vmatpush1.bf16.msra.mxu0 %v6102
  %6250 = vmatprep.subr.bf16.mxu0 0
  %6251 = vmatpush1.bf16.msra.mxu0 %v6103
  %6252 = vmatprep.subr.bf16.mxu0 0
  %6253 = vmatpush1.bf16.msra.mxu0 %v6104
  %6254 = vmatprep.subr.bf16.mxu0 0
  %6255 = vmatpush1.bf16.msra.mxu0 %v6105
  %6256 = vmatprep.subr.bf16.mxu0 0
  %6257 = vmatpush1.bf16.msra.mxu0 0
  %6258 = vmatprep.subr.bf16.mxu0 0
  %6259 = vmatpush1.bf16.msra.mxu0 0
  %6260 = vmatprep.subr.bf16.mxu0 0
  %6261 = vmatpush1.bf16.msra.mxu0 0
  %6262 = vmatprep.subr.bf16.mxu0 0
  %6263 = vmatpush1.bf16.msra.mxu0 0
  %6264 = vmatprep.subr.bf16.mxu0 0
  %6265 = vmatpush1.bf16.msra.mxu0 0
  %6266 = vmatprep.subr.bf16.mxu0 0
  %6267 = vmatpush1.bf16.msra.mxu0 0
  %6268 = vmatprep.subr.bf16.mxu0 0
  %6269 = vmatpush1.bf16.msra.mxu0 0
  %6270 = vmatprep.subr.bf16.mxu0 0
  %6271 = vmatpush1.bf16.msra.mxu0 0
  %6272 = vmatprep.subr.bf16.mxu0 0
  %6273 = vmatpush1.bf16.msra.mxu0 0
  %6274 = vmatprep.subr.bf16.mxu0 0
  %6275 = vmatpush1.bf16.msra.mxu0 0
  %6276 = vmatprep.subr.bf16.mxu0 0
  %6277 = vmatpush1.bf16.msra.mxu0 0
  %6278 = vmatprep.subr.bf16.mxu0 0
  %6279 = vmatpush1.bf16.msra.mxu0 0
  %6280 = vmatprep.mubr.bf16.mxu0 0
  %6281 = vmatmul.mubr.bf16.gmra.mrb[0].mxu0 %v6246
  %v6282 = vpop.f32.mrb[0].mxu0
  %v6283 = vadd.f32 %v6233, %v6282
  %v6284 = vpop.f32.mrb[0].mxu0
  %v6285 = vpop.f32.mrb[0].mxu0
  %v6286 = vadd.f32 %v6238, %v6285
  %v6287 = vpop.f32.mrb[0].mxu0
  %6288 = vdwg.mxu0
  %s6289 = scalar_lea.vmem %s11, 128
  %v6290 = vld [vmem:[%s6289] sm:$0xf]
  %v6291 = vld [vmem:[%s6289 + $0x4] sm:$0xf]
  %v6292 = vld [vmem:[%s6289 + $0x8] sm:$0xf]
  %v6293 = vld [vmem:[%s6289 + $0xc] sm:$0xf]
  %v6294 = vld [vmem:[%s6289 + $0x10] sm:$0xf]
  %v6295 = vld [vmem:[%s6289 + $0x14] sm:$0xf]
  %v6296 = vld [vmem:[%s6289 + $0x18] sm:$0xf]
  %v6297 = vld [vmem:[%s6289 + $0x1c] sm:$0xf]
  %s6298 = scalar_lea.vmem %s12, 4
  %v6299 = vld [vmem:[%s6298] sm:$0x1]
  %v6301 = vlaneseq
  %v6302 = vshrl.u32 %v6301, 7
  %v6303 = vsub.s32 0, %v6302
  %v6304 = vrot.slane %v6299, %v6303
  %v6314 = vunpack.c.l.b16 %v6290
  %v6315 = vunpack.c.l.b16 %v6291
  %v6316 = vunpack.c.l.b16 %v6292
  %v6317 = vunpack.c.l.b16 %v6293
  %v6318 = vunpack.c.l.b16 %v6294
  %v6319 = vunpack.c.l.b16 %v6295
  %v6320 = vunpack.c.l.b16 %v6296
  %v6321 = vunpack.c.l.b16 %v6297
  %v6322 = vpack.c.b16 %v6315, %v6314
  %v6323 = vpack.c.b16 %v6317, %v6316
  %v6324 = vpack.c.b16 %v6319, %v6318
  %v6325 = vpack.c.b16 %v6321, %v6320
  %6330 = vmatprep.subr.bf16.mxu0 0
  %6331 = vmatpush1.bf16.msra.mxu0 %v6322
  %6332 = vmatprep.subr.bf16.mxu0 0
  %6333 = vmatpush1.bf16.msra.mxu0 %v6323
  %6334 = vmatprep.subr.bf16.mxu0 0
  %6335 = vmatpush1.bf16.msra.mxu0 %v6324
  %6336 = vmatprep.subr.bf16.mxu0 0
  %6337 = vmatpush1.bf16.msra.mxu0 %v6325
  %6338 = vmatprep.subr.bf16.mxu0 0
  %6339 = vmatpush1.bf16.msra.mxu0 0
  %6340 = vmatprep.subr.bf16.mxu0 0
  %6341 = vmatpush1.bf16.msra.mxu0 0
  %6342 = vmatprep.subr.bf16.mxu0 0
  %6343 = vmatpush1.bf16.msra.mxu0 0
  %6344 = vmatprep.subr.bf16.mxu0 0
  %6345 = vmatpush1.bf16.msra.mxu0 0
  %6346 = vmatprep.subr.bf16.mxu0 0
  %6347 = vmatpush1.bf16.msra.mxu0 0
  %6348 = vmatprep.subr.bf16.mxu0 0
  %6349 = vmatpush1.bf16.msra.mxu0 0
  %6350 = vmatprep.subr.bf16.mxu0 0
  %6351 = vmatpush1.bf16.msra.mxu0 0
  %6352 = vmatprep.subr.bf16.mxu0 0
  %6353 = vmatpush1.bf16.msra.mxu0 0
  %6354 = vmatprep.subr.bf16.mxu0 0
  %6355 = vmatpush1.bf16.msra.mxu0 0
  %6356 = vmatprep.subr.bf16.mxu0 0
  %6357 = vmatpush1.bf16.msra.mxu0 0
  %6358 = vmatprep.subr.bf16.mxu0 0
  %6359 = vmatpush1.bf16.msra.mxu0 0
  %6360 = vmatprep.subr.bf16.mxu0 0
  %6361 = vmatpush1.bf16.msra.mxu0 0
  %6362 = vmatprep.mubr.bf16.mxu0 0
  %6363 = vmatmul.mubr.bf16.gmra.mrb[0].mxu0 %v6148
  %v6364 = vpop.f32.mrb[0].mxu0
  %v6365 = vadd.f32 %v6304, %v6364
  %v6366 = vpop.f32.mrb[0].mxu0
  %v6367 = vpop.f32.mrb[0].mxu0
  %v6368 = vadd.f32 %v6304, %v6367
  %v6369 = vpop.f32.mrb[0].mxu0
  %6370 = vmatprep.mubr.bf16.mxu0 0
  %6371 = vmatmul.mubr.bf16.gmra.mrb[0].mxu0 %v6151
  %v6372 = vpop.f32.mrb[0].mxu0
  %v6373 = vadd.f32 %v6304, %v6372
  %v6374 = vpop.f32.mrb[0].mxu0
  %v6375 = vpop.f32.mrb[0].mxu0
  %v6376 = vadd.f32 %v6304, %v6375
  %v6377 = vpop.f32.mrb[0].mxu0
  %6378 = vmatprep.mubr.bf16.mxu0 0
  %6379 = vmatmul.mubr.bf16.gmra.mrb[0].mxu0 %v6154
  %v6380 = vpop.f32.mrb[0].mxu0
  %v6381 = vadd.f32 %v6304, %v6380
  %v6382 = vpop.f32.mrb[0].mxu0
  %v6383 = vpop.f32.mrb[0].mxu0
  %v6384 = vadd.f32 %v6304, %v6383
  %v6385 = vpop.f32.mrb[0].mxu0
  %6386 = vmatprep.mubr.bf16.mxu0 0
  %6387 = vmatmul.mubr.bf16.gmra.mrb[0].mxu0 %v6157
  %v6388 = vpop.f32.mrb[0].mxu0
  %v6389 = vadd.f32 %v6304, %v6388
  %v6390 = vpop.f32.mrb[0].mxu0
  %v6391 = vpop.f32.mrb[0].mxu0
  %v6392 = vadd.f32 %v6304, %v6391
  %v6393 = vpop.f32.mrb[0].mxu0
  %6394 = vdwg.mxu0
  %v6395 = vpack.c.bf16 %v6197, %v6194
  %v6396 = vpack.c.bf16 %v6205, %v6202
  %v6397 = vpack.c.bf16 %v6213, %v6210
  %v6398 = vpack.c.bf16 %v6221, %v6218
  %v6399 = vpack.c.bf16 %v6286, %v6283
  %v6401 = vsel %vm183, %v6395, 0
  %v6404 = vsel %vm183, %v6396, 0
  %v6407 = vsel %vm183, %v6397, 0
  %v6410 = vsel %vm183, %v6398, 0
  %6412 = vmatprep.subr.bf16.mxu0 0
  %6413 = vmatpush1.bf16.msra.mxu0 %v6399
  %6414 = vmatprep.subr.bf16.mxu0 0
  %6415 = vmatpush1.bf16.msra.mxu0 0
  %6416 = vmatprep.subr.bf16.mxu0 0
  %6417 = vmatpush1.bf16.msra.mxu0 0
  %6418 = vmatprep.subr.bf16.mxu0 0
  %6419 = vmatpush1.bf16.msra.mxu0 0
  %6420 = vmatprep.subr.bf16.mxu0 0
  %6421 = vmatpush1.bf16.msra.mxu0 0
  %6422 = vmatprep.subr.bf16.mxu0 0
  %6423 = vmatpush1.bf16.msra.mxu0 0
  %6424 = vmatprep.subr.bf16.mxu0 0
  %6425 = vmatpush1.bf16.msra.mxu0 0
  %6426 = vmatprep.subr.bf16.mxu0 0
  %6427 = vmatpush1.bf16.msra.mxu0 0
  %6428 = vmatprep.subr.bf16.mxu0 0
  %6429 = vmatpush1.bf16.msra.mxu0 0
  %6430 = vmatprep.subr.bf16.mxu0 0
  %6431 = vmatpush1.bf16.msra.mxu0 0
  %6432 = vmatprep.subr.bf16.mxu0 0
  %6433 = vmatpush1.bf16.msra.mxu0 0
  %6434 = vmatprep.subr.bf16.mxu0 0
  %6435 = vmatpush1.bf16.msra.mxu0 0
  %6436 = vmatprep.subr.bf16.mxu0 0
  %6437 = vmatpush1.bf16.msra.mxu0 0
  %6438 = vmatprep.subr.bf16.mxu0 0
  %6439 = vmatpush1.bf16.msra.mxu0 0
  %6440 = vmatprep.subr.bf16.mxu0 0
  %6441 = vmatpush1.bf16.msra.mxu0 0
  %6442 = vmatprep.subr.bf16.mxu0 0
  %6443 = vmatpush1.bf16.msra.mxu0 0
  %6444 = vmatprep.mubr.bf16.mxu0 0
  %6445 = vmatmul.mubr.bf16.gmra.mrb[0].mxu0 %v6401
  %v6446 = vpop.f32.mrb[0].mxu0
  %v6447 = vadd.f32 0.0, %v6446
  %v6448 = vpop.f32.mrb[0].mxu0
  %v6449 = vpop.f32.mrb[0].mxu0
  %v6450 = vadd.f32 0.0, %v6449
  %v6451 = vpop.f32.mrb[0].mxu0
  %6452 = vmatprep.mubr.bf16.mxu0 0
  %6453 = vmatmul.mubr.bf16.gmra.mrb[0].mxu0 %v6404
  %v6454 = vpop.f32.mrb[0].mxu0
  %v6455 = vadd.f32 0.0, %v6454
  %v6456 = vpop.f32.mrb[0].mxu0
  %v6457 = vpop.f32.mrb[0].mxu0
  %v6458 = vadd.f32 0.0, %v6457
  %v6459 = vpop.f32.mrb[0].mxu0
  %6460 = vmatprep.mubr.bf16.mxu0 0
  %6461 = vmatmul.mubr.bf16.gmra.mrb[0].mxu0 %v6407
  %v6462 = vpop.f32.mrb[0].mxu0
  %v6463 = vadd.f32 0.0, %v6462
  %v6464 = vpop.f32.mrb[0].mxu0
  %v6465 = vpop.f32.mrb[0].mxu0
  %v6466 = vadd.f32 0.0, %v6465
  %v6467 = vpop.f32.mrb[0].mxu0
  %6468 = vmatprep.mubr.bf16.mxu0 0
  %6469 = vmatmul.mubr.bf16.gmra.mrb[0].mxu0 %v6410
  %v6470 = vpop.f32.mrb[0].mxu0
  %v6471 = vadd.f32 0.0, %v6470
  %v6472 = vpop.f32.mrb[0].mxu0
  %v6473 = vpop.f32.mrb[0].mxu0
  %v6474 = vadd.f32 0.0, %v6473
  %v6475 = vpop.f32.mrb[0].mxu0
  %6476 = vdwg.mxu0
  %v6477 = vsel %vm261, %v6447, -inf
  %6478 = vmax.xlane.f32.xlu0 %v6477
  %v6479 = vpop.xlane.xlu0 %6478
  %v6480 = vsel %vm261, %v6450, -inf
  %6481 = vmax.xlane.f32.xlu0 %v6480
  %v6482 = vpop.xlane.xlu0 %6481
  %v6483 = vsel %vm261, %v6455, -inf
  %6484 = vmax.xlane.f32.xlu0 %v6483
  %v6485 = vpop.xlane.xlu0 %6484
  %v6486 = vsel %vm261, %v6458, -inf
  %6487 = vmax.xlane.f32.xlu0 %v6486
  %v6488 = vpop.xlane.xlu0 %6487
  %v6489 = vsel %vm261, %v6463, -inf
  %6490 = vmax.xlane.f32.xlu0 %v6489
  %v6491 = vpop.xlane.xlu0 %6490
  %v6492 = vsel %vm261, %v6466, -inf
  %6493 = vmax.xlane.f32.xlu0 %v6492
  %v6494 = vpop.xlane.xlu0 %6493
  %v6495 = vsel %vm261, %v6471, -inf
  %6496 = vmax.xlane.f32.xlu0 %v6495
  %v6497 = vpop.xlane.xlu0 %6496
  %v6498 = vsel %vm261, %v6474, -inf
  %6499 = vmax.xlane.f32.xlu0 %v6498
  %v6500 = vpop.xlane.xlu0 %6499
  %v6501 = vsub.f32 %v6447, %v6479
  %v6502 = vsub.f32 %v6450, %v6482
  %v6503 = vsub.f32 %v6455, %v6485
  %v6504 = vsub.f32 %v6458, %v6488
  %v6505 = vsub.f32 %v6463, %v6491
  %v6506 = vsub.f32 %v6466, %v6494
  %v6507 = vsub.f32 %v6471, %v6497
  %v6508 = vsub.f32 %v6474, %v6500
  %v6509 = vmul.f32 %v6501, 1.442695
  %v6510 = vpow.pop %v6509
  %v6511 = vmul.f32 %v6502, 1.442695
  %v6512 = vpow.pop %v6511
  %v6513 = vmul.f32 %v6503, 1.442695
  %v6514 = vpow.pop %v6513
  %v6515 = vmul.f32 %v6504, 1.442695
  %v6516 = vpow.pop %v6515
  %v6517 = vmul.f32 %v6505, 1.442695
  %v6518 = vpow.pop %v6517
  %v6519 = vmul.f32 %v6506, 1.442695
  %v6520 = vpow.pop %v6519
  %v6521 = vmul.f32 %v6507, 1.442695
  %v6522 = vpow.pop %v6521
  %v6523 = vmul.f32 %v6508, 1.442695
  %v6524 = vpow.pop %v6523
  %v6525 = vsel %vm261, %v6510, 0.0
  %6526 = vadd.xlane.f32.xlu0 %v6525
  %v6527 = vpop.xlane.xlu0 %6526
  %v6528 = vsel %vm261, %v6512, 0.0
  %6529 = vadd.xlane.f32.xlu0 %v6528
  %v6530 = vpop.xlane.xlu0 %6529
  %v6531 = vsel %vm261, %v6514, 0.0
  %6532 = vadd.xlane.f32.xlu0 %v6531
  %v6533 = vpop.xlane.xlu0 %6532
  %v6534 = vsel %vm261, %v6516, 0.0
  %6535 = vadd.xlane.f32.xlu0 %v6534
  %v6536 = vpop.xlane.xlu0 %6535
  %v6537 = vsel %vm261, %v6518, 0.0
  %6538 = vadd.xlane.f32.xlu0 %v6537
  %v6539 = vpop.xlane.xlu0 %6538
  %v6540 = vsel %vm261, %v6520, 0.0
  %6541 = vadd.xlane.f32.xlu0 %v6540
  %v6542 = vpop.xlane.xlu0 %6541
  %v6543 = vsel %vm261, %v6522, 0.0
  %6544 = vadd.xlane.f32.xlu0 %v6543
  %v6545 = vpop.xlane.xlu0 %6544
  %v6546 = vsel %vm261, %v6524, 0.0
  %6547 = vadd.xlane.f32.xlu0 %v6546
  %v6548 = vpop.xlane.xlu0 %6547
  %v6549 = vrcp.pop %v6527
  %v6550 = vrcp.pop %v6530
  %v6551 = vrcp.pop %v6533
  %v6552 = vrcp.pop %v6536
  %v6553 = vrcp.pop %v6539
  %v6554 = vrcp.pop %v6542
  %v6555 = vrcp.pop %v6545
  %v6556 = vrcp.pop %v6548
  %v6557 = vmul.f32 %v6510, %v6549
  %v6558 = vmul.f32 %v6512, %v6550
  %v6559 = vmul.f32 %v6514, %v6551
  %v6560 = vmul.f32 %v6516, %v6552
  %v6561 = vmul.f32 %v6518, %v6553
  %v6562 = vmul.f32 %v6520, %v6554
  %v6563 = vmul.f32 %v6522, %v6555
  %v6564 = vmul.f32 %v6524, %v6556
  %v6565 = vpack.c.bf16 %v6558, %v6557
  %v6566 = vpack.c.bf16 %v6560, %v6559
  %v6567 = vpack.c.bf16 %v6562, %v6561
  %v6568 = vpack.c.bf16 %v6564, %v6563
  %v6569 = vpack.c.bf16 %v6368, %v6365
  %v6570 = vpack.c.bf16 %v6376, %v6373
  %v6571 = vpack.c.bf16 %v6384, %v6381
  %v6572 = vpack.c.bf16 %v6392, %v6389
  %v6574 = vsel %vm261, %v6565, 0
  %v6577 = vsel %vm261, %v6566, 0
  %v6580 = vsel %vm261, %v6567, 0
  %v6583 = vsel %vm261, %v6568, 0
  %6585 = vmatprep.subr.bf16.mxu0 0
  %6586 = vmatpush1.bf16.msra.mxu0 %v6569
  %6587 = vmatprep.subr.bf16.mxu0 0
  %6588 = vmatpush1.bf16.msra.mxu0 %v6570
  %6589 = vmatprep.subr.bf16.mxu0 0
  %6590 = vmatpush1.bf16.msra.mxu0 %v6571
  %6591 = vmatprep.subr.bf16.mxu0 0
  %6592 = vmatpush1.bf16.msra.mxu0 %v6572
  %6593 = vmatprep.subr.bf16.mxu0 0
  %6594 = vmatpush1.bf16.msra.mxu0 0
  %6595 = vmatprep.subr.bf16.mxu0 0
  %6596 = vmatpush1.bf16.msra.mxu0 0
  %6597 = vmatprep.subr.bf16.mxu0 0
  %6598 = vmatpush1.bf16.msra.mxu0 0
  %6599 = vmatprep.subr.bf16.mxu0 0
  %6600 = vmatpush1.bf16.msra.mxu0 0
  %6601 = vmatprep.subr.bf16.mxu0 0
  %6602 = vmatpush1.bf16.msra.mxu0 0
  %6603 = vmatprep.subr.bf16.mxu0 0
  %6604 = vmatpush1.bf16.msra.mxu0 0
  %6605 = vmatprep.subr.bf16.mxu0 0
  %6606 = vmatpush1.bf16.msra.mxu0 0
  %6607 = vmatprep.subr.bf16.mxu0 0
  %6608 = vmatpush1.bf16.msra.mxu0 0
  %6609 = vmatprep.subr.bf16.mxu0 0
  %6610 = vmatpush1.bf16.msra.mxu0 0
  %6611 = vmatprep.subr.bf16.mxu0 0
  %6612 = vmatpush1.bf16.msra.mxu0 0
  %6613 = vmatprep.subr.bf16.mxu0 0
  %6614 = vmatpush1.bf16.msra.mxu0 0
  %6615 = vmatprep.subr.bf16.mxu0 0
  %6616 = vmatpush1.bf16.msra.mxu0 0
  %6617 = vmatprep.mubr.bf16.mxu0 0
  %6618 = vmatmul.mubr.bf16.gmra.mrb[0].mxu0 %v6574
  %v6619 = vpop.f32.mrb[0].mxu0
  %v6620 = vadd.f32 0.0, %v6619
  %v6621 = vpop.f32.mrb[0].mxu0
  %v6622 = vpop.f32.mrb[0].mxu0
  %v6623 = vadd.f32 0.0, %v6622
  %v6624 = vpop.f32.mrb[0].mxu0
  %6625 = vmatprep.mubr.bf16.mxu0 0
  %6626 = vmatmul.mubr.bf16.gmra.mrb[0].mxu0 %v6577
  %v6627 = vpop.f32.mrb[0].mxu0
  %v6628 = vadd.f32 0.0, %v6627
  %v6629 = vpop.f32.mrb[0].mxu0
  %v6630 = vpop.f32.mrb[0].mxu0
  %v6631 = vadd.f32 0.0, %v6630
  %v6632 = vpop.f32.mrb[0].mxu0
  %6633 = vmatprep.mubr.bf16.mxu0 0
  %6634 = vmatmul.mubr.bf16.gmra.mrb[0].mxu0 %v6580
  %v6635 = vpop.f32.mrb[0].mxu0
  %v6636 = vadd.f32 0.0, %v6635
  %v6637 = vpop.f32.mrb[0].mxu0
  %v6638 = vpop.f32.mrb[0].mxu0
  %v6639 = vadd.f32 0.0, %v6638
  %v6640 = vpop.f32.mrb[0].mxu0
  %6641 = vmatprep.mubr.bf16.mxu0 0
  %6642 = vmatmul.mubr.bf16.gmra.mrb[0].mxu0 %v6583
  %v6643 = vpop.f32.mrb[0].mxu0
  %v6644 = vadd.f32 0.0, %v6643
  %v6645 = vpop.f32.mrb[0].mxu0
  %v6646 = vpop.f32.mrb[0].mxu0
  %v6647 = vadd.f32 0.0, %v6646
  %v6648 = vpop.f32.mrb[0].mxu0
  %6649 = vdwg.mxu0
  %v6650 = vpack.c.bf16 %v6623, %v6620
  %v6651 = vpack.c.bf16 %v6631, %v6628
  %v6652 = vpack.c.bf16 %v6639, %v6636
  %v6653 = vpack.c.bf16 %v6647, %v6644
  %s6654 = scalar_lea.vmem %s13, 32
  %v6655 = vld [vmem:[%s6654] sm:$0xf]
  %v6656 = vld [vmem:[%s6654 + $0x4] sm:$0xf]
  %s6657 = scalar_lea.vmem %s7, 160
  %v6658 = vld [vmem:[%s6657] sm:$0xf]
  %v6659 = vld [vmem:[%s6657 + $0x4] sm:$0xf]
  %v6660 = vld [vmem:[%s6657 + $0x8] sm:$0xf]
  %v6661 = vld [vmem:[%s6657 + $0xc] sm:$0xf]
  %v6662 = vld [vmem:[%s6657 + $0x10] sm:$0xf]
  %v6663 = vld [vmem:[%s6657 + $0x14] sm:$0xf]
  %v6664 = vld [vmem:[%s6657 + $0x18] sm:$0xf]
  %v6665 = vld [vmem:[%s6657 + $0x1c] sm:$0xf]
  %s6666 = scalar_lea.vmem %s8, 5
  %v6667 = vld [vmem:[%s6666] sm:$0x1]
  %v6669 = vlaneseq
  %v6670 = vshrl.u32 %v6669, 7
  %v6671 = vsub.s32 0, %v6670
  %v6672 = vrot.slane %v6667, %v6671
  %v6682 = vunpack.c.l.b16 %v6658
  %v6683 = vunpack.c.l.b16 %v6659
  %v6684 = vunpack.c.l.b16 %v6660
  %v6685 = vunpack.c.l.b16 %v6661
  %v6686 = vunpack.c.l.b16 %v6662
  %v6687 = vunpack.c.l.b16 %v6663
  %v6688 = vunpack.c.l.b16 %v6664
  %v6689 = vunpack.c.l.b16 %v6665
  %v6690 = vpack.c.b16 %v6683, %v6682
  %v6691 = vpack.c.b16 %v6685, %v6684
  %v6692 = vpack.c.b16 %v6687, %v6686
  %v6693 = vpack.c.b16 %v6689, %v6688
  %6698 = vmatprep.subr.bf16.mxu0 0
  %6699 = vmatpush1.bf16.msra.mxu0 %v6690
  %6700 = vmatprep.subr.bf16.mxu0 0
  %6701 = vmatpush1.bf16.msra.mxu0 %v6691
  %6702 = vmatprep.subr.bf16.mxu0 0
  %6703 = vmatpush1.bf16.msra.mxu0 %v6692
  %6704 = vmatprep.subr.bf16.mxu0 0
  %6705 = vmatpush1.bf16.msra.mxu0 %v6693
  %6706 = vmatprep.subr.bf16.mxu0 0
  %6707 = vmatpush1.bf16.msra.mxu0 0
  %6708 = vmatprep.subr.bf16.mxu0 0
  %6709 = vmatpush1.bf16.msra.mxu0 0
  %6710 = vmatprep.subr.bf16.mxu0 0
  %6711 = vmatpush1.bf16.msra.mxu0 0
  %6712 = vmatprep.subr.bf16.mxu0 0
  %6713 = vmatpush1.bf16.msra.mxu0 0
  %6714 = vmatprep.subr.bf16.mxu0 0
  %6715 = vmatpush1.bf16.msra.mxu0 0
  %6716 = vmatprep.subr.bf16.mxu0 0
  %6717 = vmatpush1.bf16.msra.mxu0 0
  %6718 = vmatprep.subr.bf16.mxu0 0
  %6719 = vmatpush1.bf16.msra.mxu0 0
  %6720 = vmatprep.subr.bf16.mxu0 0
  %6721 = vmatpush1.bf16.msra.mxu0 0
  %6722 = vmatprep.subr.bf16.mxu0 0
  %6723 = vmatpush1.bf16.msra.mxu0 0
  %6724 = vmatprep.subr.bf16.mxu0 0
  %6725 = vmatpush1.bf16.msra.mxu0 0
  %6726 = vmatprep.subr.bf16.mxu0 0
  %6727 = vmatpush1.bf16.msra.mxu0 0
  %6728 = vmatprep.subr.bf16.mxu0 0
  %6729 = vmatpush1.bf16.msra.mxu0 0
  %6730 = vmatprep.mubr.bf16.mxu0 0
  %6731 = vmatmul.mubr.bf16.gmra.mrb[0].mxu0 %v6148
  %v6732 = vpop.f32.mrb[0].mxu0
  %v6733 = vadd.f32 %v6672, %v6732
  %v6734 = vpop.f32.mrb[0].mxu0
  %v6735 = vpop.f32.mrb[0].mxu0
  %v6736 = vadd.f32 %v6672, %v6735
  %v6737 = vpop.f32.mrb[0].mxu0
  %6738 = vmatprep.mubr.bf16.mxu0 0
  %6739 = vmatmul.mubr.bf16.gmra.mrb[0].mxu0 %v6151
  %v6740 = vpop.f32.mrb[0].mxu0
  %v6741 = vadd.f32 %v6672, %v6740
  %v6742 = vpop.f32.mrb[0].mxu0
  %v6743 = vpop.f32.mrb[0].mxu0
  %v6744 = vadd.f32 %v6672, %v6743
  %v6745 = vpop.f32.mrb[0].mxu0
  %6746 = vmatprep.mubr.bf16.mxu0 0
  %6747 = vmatmul.mubr.bf16.gmra.mrb[0].mxu0 %v6154
  %v6748 = vpop.f32.mrb[0].mxu0
  %v6749 = vadd.f32 %v6672, %v6748
  %v6750 = vpop.f32.mrb[0].mxu0
  %v6751 = vpop.f32.mrb[0].mxu0
  %v6752 = vadd.f32 %v6672, %v6751
  %v6753 = vpop.f32.mrb[0].mxu0
  %6754 = vmatprep.mubr.bf16.mxu0 0
  %6755 = vmatmul.mubr.bf16.gmra.mrb[0].mxu0 %v6157
  %v6756 = vpop.f32.mrb[0].mxu0
  %v6757 = vadd.f32 %v6672, %v6756
  %v6758 = vpop.f32.mrb[0].mxu0
  %v6759 = vpop.f32.mrb[0].mxu0
  %v6760 = vadd.f32 %v6672, %v6759
  %v6761 = vpop.f32.mrb[0].mxu0
  %6762 = vdwg.mxu0
  %s6763 = scalar_lea.vmem %s9, 40
  %v6764 = vld [vmem:[%s6763] sm:$0xf]
  %v6765 = vld [vmem:[%s6763 + $0x4] sm:$0xf]
  %s6766 = scalar_lea.vmem %s10, 80
  %v6767 = vld [vmem:[%s6766] sm:$0xff]
  %v6768 = vld [vmem:[%s6766 + $0x8] sm:$0xff]
  %6770 = vset.pattern.permute.xlu0 0
  %6771 = vperm.xlu0 %6770, %v6767
  %v6772 = vpop.permute.xlu0 %6771
  %6775 = vset.pattern.permute.xlu0 0
  %6776 = vperm.xlu0 %6775, %v6768
  %v6777 = vpop.permute.xlu0 %6776
  %v6781 = vunpack.c.l.b16 %v6764
  %v6782 = vunpack.c.l.b16 %v6765
  %v6783 = vpack.c.b16 %v6782, %v6781
  %v6785 = vsel %vm261, %v6783, 0
  %6787 = vmatprep.subr.bf16.mxu0 0
  %6788 = vmatpush1.bf16.msra.mxu0 %v6102
  %6789 = vmatprep.subr.bf16.mxu0 0
  %6790 = vmatpush1.bf16.msra.mxu0 %v6103
  %6791 = vmatprep.subr.bf16.mxu0 0
  %6792 = vmatpush1.bf16.msra.mxu0 %v6104
  %6793 = vmatprep.subr.bf16.mxu0 0
  %6794 = vmatpush1.bf16.msra.mxu0 %v6105
  %6795 = vmatprep.subr.bf16.mxu0 0
  %6796 = vmatpush1.bf16.msra.mxu0 0
  %6797 = vmatprep.subr.bf16.mxu0 0
  %6798 = vmatpush1.bf16.msra.mxu0 0
  %6799 = vmatprep.subr.bf16.mxu0 0
  %6800 = vmatpush1.bf16.msra.mxu0 0
  %6801 = vmatprep.subr.bf16.mxu0 0
  %6802 = vmatpush1.bf16.msra.mxu0 0
  %6803 = vmatprep.subr.bf16.mxu0 0
  %6804 = vmatpush1.bf16.msra.mxu0 0
  %6805 = vmatprep.subr.bf16.mxu0 0
  %6806 = vmatpush1.bf16.msra.mxu0 0
  %6807 = vmatprep.subr.bf16.mxu0 0
  %6808 = vmatpush1.bf16.msra.mxu0 0
  %6809 = vmatprep.subr.bf16.mxu0 0
  %6810 = vmatpush1.bf16.msra.mxu0 0
  %6811 = vmatprep.subr.bf16.mxu0 0
  %6812 = vmatpush1.bf16.msra.mxu0 0
  %6813 = vmatprep.subr.bf16.mxu0 0
  %6814 = vmatpush1.bf16.msra.mxu0 0
  %6815 = vmatprep.subr.bf16.mxu0 0
  %6816 = vmatpush1.bf16.msra.mxu0 0
  %6817 = vmatprep.subr.bf16.mxu0 0
  %6818 = vmatpush1.bf16.msra.mxu0 0
  %6819 = vmatprep.mubr.bf16.mxu0 0
  %6820 = vmatmul.mubr.bf16.gmra.mrb[0].mxu0 %v6785
  %v6821 = vpop.f32.mrb[0].mxu0
  %v6822 = vadd.f32 %v6772, %v6821
  %v6823 = vpop.f32.mrb[0].mxu0
  %v6824 = vpop.f32.mrb[0].mxu0
  %v6825 = vadd.f32 %v6777, %v6824
  %v6826 = vpop.f32.mrb[0].mxu0
  %6827 = vdwg.mxu0
  %s6828 = scalar_lea.vmem %s11, 160
  %v6829 = vld [vmem:[%s6828] sm:$0xf]
  %v6830 = vld [vmem:[%s6828 + $0x4] sm:$0xf]
  %v6831 = vld [vmem:[%s6828 + $0x8] sm:$0xf]
  %v6832 = vld [vmem:[%s6828 + $0xc] sm:$0xf]
  %v6833 = vld [vmem:[%s6828 + $0x10] sm:$0xf]
  %v6834 = vld [vmem:[%s6828 + $0x14] sm:$0xf]
  %v6835 = vld [vmem:[%s6828 + $0x18] sm:$0xf]
  %v6836 = vld [vmem:[%s6828 + $0x1c] sm:$0xf]
  %s6837 = scalar_lea.vmem %s12, 5
  %v6838 = vld [vmem:[%s6837] sm:$0x1]
  %v6840 = vlaneseq
  %v6841 = vshrl.u32 %v6840, 7
  %v6842 = vsub.s32 0, %v6841
  %v6843 = vrot.slane %v6838, %v6842
  %v6853 = vunpack.c.l.b16 %v6829
  %v6854 = vunpack.c.l.b16 %v6830
  %v6855 = vunpack.c.l.b16 %v6831
  %v6856 = vunpack.c.l.b16 %v6832
  %v6857 = vunpack.c.l.b16 %v6833
  %v6858 = vunpack.c.l.b16 %v6834
  %v6859 = vunpack.c.l.b16 %v6835
  %v6860 = vunpack.c.l.b16 %v6836
  %v6861 = vpack.c.b16 %v6854, %v6853
  %v6862 = vpack.c.b16 %v6856, %v6855
  %v6863 = vpack.c.b16 %v6858, %v6857
  %v6864 = vpack.c.b16 %v6860, %v6859
  %6869 = vmatprep.subr.bf16.mxu0 0
  %6870 = vmatpush1.bf16.msra.mxu0 %v6861
  %6871 = vmatprep.subr.bf16.mxu0 0
  %6872 = vmatpush1.bf16.msra.mxu0 %v6862
  %6873 = vmatprep.subr.bf16.mxu0 0
  %6874 = vmatpush1.bf16.msra.mxu0 %v6863
  %6875 = vmatprep.subr.bf16.mxu0 0
  %6876 = vmatpush1.bf16.msra.mxu0 %v6864
  %6877 = vmatprep.subr.bf16.mxu0 0
  %6878 = vmatpush1.bf16.msra.mxu0 0
  %6879 = vmatprep.subr.bf16.mxu0 0
  %6880 = vmatpush1.bf16.msra.mxu0 0
  %6881 = vmatprep.subr.bf16.mxu0 0
  %6882 = vmatpush1.bf16.msra.mxu0 0
  %6883 = vmatprep.subr.bf16.mxu0 0
  %6884 = vmatpush1.bf16.msra.mxu0 0
  %6885 = vmatprep.subr.bf16.mxu0 0
  %6886 = vmatpush1.bf16.msra.mxu0 0
  %6887 = vmatprep.subr.bf16.mxu0 0
  %6888 = vmatpush1.bf16.msra.mxu0 0
  %6889 = vmatprep.subr.bf16.mxu0 0
  %6890 = vmatpush1.bf16.msra.mxu0 0
  %6891 = vmatprep.subr.bf16.mxu0 0
  %6892 = vmatpush1.bf16.msra.mxu0 0
  %6893 = vmatprep.subr.bf16.mxu0 0
  %6894 = vmatpush1.bf16.msra.mxu0 0
  %6895 = vmatprep.subr.bf16.mxu0 0
  %6896 = vmatpush1.bf16.msra.mxu0 0
  %6897 = vmatprep.subr.bf16.mxu0 0
  %6898 = vmatpush1.bf16.msra.mxu0 0
  %6899 = vmatprep.subr.bf16.mxu0 0
  %6900 = vmatpush1.bf16.msra.mxu0 0
  %6901 = vmatprep.mubr.bf16.mxu0 0
  %6902 = vmatmul.mubr.bf16.gmra.mrb[0].mxu0 %v6148
  %v6903 = vpop.f32.mrb[0].mxu0
  %v6904 = vadd.f32 %v6843, %v6903
  %v6905 = vpop.f32.mrb[0].mxu0
  %v6906 = vpop.f32.mrb[0].mxu0
  %v6907 = vadd.f32 %v6843, %v6906
  %v6908 = vpop.f32.mrb[0].mxu0
  %6909 = vmatprep.mubr.bf16.mxu0 0
  %6910 = vmatmul.mubr.bf16.gmra.mrb[0].mxu0 %v6151
  %v6911 = vpop.f32.mrb[0].mxu0
  %v6912 = vadd.f32 %v6843, %v6911
  %v6913 = vpop.f32.mrb[0].mxu0
  %v6914 = vpop.f32.mrb[0].mxu0
  %v6915 = vadd.f32 %v6843, %v6914
  %v6916 = vpop.f32.mrb[0].mxu0
  %6917 = vmatprep.mubr.bf16.mxu0 0
  %6918 = vmatmul.mubr.bf16.gmra.mrb[0].mxu0 %v6154
  %v6919 = vpop.f32.mrb[0].mxu0
  %v6920 = vadd.f32 %v6843, %v6919
  %v6921 = vpop.f32.mrb[0].mxu0
  %v6922 = vpop.f32.mrb[0].mxu0
  %v6923 = vadd.f32 %v6843, %v6922
  %v6924 = vpop.f32.mrb[0].mxu0
  %6925 = vmatprep.mubr.bf16.mxu0 0
  %6926 = vmatmul.mubr.bf16.gmra.mrb[0].mxu0 %v6157
  %v6927 = vpop.f32.mrb[0].mxu0
  %v6928 = vadd.f32 %v6843, %v6927
  %v6929 = vpop.f32.mrb[0].mxu0
  %v6930 = vpop.f32.mrb[0].mxu0
  %v6931 = vadd.f32 %v6843, %v6930
  %v6932 = vpop.f32.mrb[0].mxu0
  %6933 = vdwg.mxu0
  %v6934 = vpack.c.bf16 %v6736, %v6733
  %v6935 = vpack.c.bf16 %v6744, %v6741
  %v6936 = vpack.c.bf16 %v6752, %v6749
  %v6937 = vpack.c.bf16 %v6760, %v6757
  %v6938 = vpack.c.bf16 %v6825, %v6822
  %v6940 = vsel %vm183, %v6934, 0
  %v6943 = vsel %vm183, %v6935, 0
  %v6946 = vsel %vm183, %v6936, 0
  %v6949 = vsel %vm183, %v6937, 0
  %6951 = vmatprep.subr.bf16.mxu0 0
  %6952 = vmatpush1.bf16.msra.mxu0 %v6938
  %6953 = vmatprep.subr.bf16.mxu0 0
  %6954 = vmatpush1.bf16.msra.mxu0 0
  %6955 = vmatprep.subr.bf16.mxu0 0
  %6956 = vmatpush1.bf16.msra.mxu0 0
  %6957 = vmatprep.subr.bf16.mxu0 0
  %6958 = vmatpush1.bf16.msra.mxu0 0
  %6959 = vmatprep.subr.bf16.mxu0 0
  %6960 = vmatpush1.bf16.msra.mxu0 0
  %6961 = vmatprep.subr.bf16.mxu0 0
  %6962 = vmatpush1.bf16.msra.mxu0 0
  %6963 = vmatprep.subr.bf16.mxu0 0
  %6964 = vmatpush1.bf16.msra.mxu0 0
  %6965 = vmatprep.subr.bf16.mxu0 0
  %6966 = vmatpush1.bf16.msra.mxu0 0
  %6967 = vmatprep.subr.bf16.mxu0 0
  %6968 = vmatpush1.bf16.msra.mxu0 0
  %6969 = vmatprep.subr.bf16.mxu0 0
  %6970 = vmatpush1.bf16.msra.mxu0 0
  %6971 = vmatprep.subr.bf16.mxu0 0
  %6972 = vmatpush1.bf16.msra.mxu0 0
  %6973 = vmatprep.subr.bf16.mxu0 0
  %6974 = vmatpush1.bf16.msra.mxu0 0
  %6975 = vmatprep.subr.bf16.mxu0 0
  %6976 = vmatpush1.bf16.msra.mxu0 0
  %6977 = vmatprep.subr.bf16.mxu0 0
  %6978 = vmatpush1.bf16.msra.mxu0 0
  %6979 = vmatprep.subr.bf16.mxu0 0
  %6980 = vmatpush1.bf16.msra.mxu0 0
  %6981 = vmatprep.subr.bf16.mxu0 0
  %6982 = vmatpush1.bf16.msra.mxu0 0
  %6983 = vmatprep.mubr.bf16.mxu0 0
  %6984 = vmatmul.mubr.bf16.gmra.mrb[0].mxu0 %v6940
  %v6985 = vpop.f32.mrb[0].mxu0
  %v6986 = vadd.f32 0.0, %v6985
  %v6987 = vpop.f32.mrb[0].mxu0
  %v6988 = vpop.f32.mrb[0].mxu0
  %v6989 = vadd.f32 0.0, %v6988
  %v6990 = vpop.f32.mrb[0].mxu0
  %6991 = vmatprep.mubr.bf16.mxu0 0
  %6992 = vmatmul.mubr.bf16.gmra.mrb[0].mxu0 %v6943
  %v6993 = vpop.f32.mrb[0].mxu0
  %v6994 = vadd.f32 0.0, %v6993
  %v6995 = vpop.f32.mrb[0].mxu0
  %v6996 = vpop.f32.mrb[0].mxu0
  %v6997 = vadd.f32 0.0, %v6996
  %v6998 = vpop.f32.mrb[0].mxu0
  %6999 = vmatprep.mubr.bf16.mxu0 0
  %7000 = vmatmul.mubr.bf16.gmra.mrb[0].mxu0 %v6946
  %v7001 = vpop.f32.mrb[0].mxu0
  %v7002 = vadd.f32 0.0, %v7001
  %v7003 = vpop.f32.mrb[0].mxu0
  %v7004 = vpop.f32.mrb[0].mxu0
  %v7005 = vadd.f32 0.0, %v7004
  %v7006 = vpop.f32.mrb[0].mxu0
  %7007 = vmatprep.mubr.bf16.mxu0 0
  %7008 = vmatmul.mubr.bf16.gmra.mrb[0].mxu0 %v6949
  %v7009 = vpop.f32.mrb[0].mxu0
  %v7010 = vadd.f32 0.0, %v7009
  %v7011 = vpop.f32.mrb[0].mxu0
  %v7012 = vpop.f32.mrb[0].mxu0
  %v7013 = vadd.f32 0.0, %v7012
  %v7014 = vpop.f32.mrb[0].mxu0
  %7015 = vdwg.mxu0
  %v7016 = vsel %vm261, %v6986, -inf
  %7017 = vmax.xlane.f32.xlu0 %v7016
  %v7018 = vpop.xlane.xlu0 %7017
  %v7019 = vsel %vm261, %v6989, -inf
  %7020 = vmax.xlane.f32.xlu0 %v7019
  %v7021 = vpop.xlane.xlu0 %7020
  %v7022 = vsel %vm261, %v6994, -inf
  %7023 = vmax.xlane.f32.xlu0 %v7022
  %v7024 = vpop.xlane.xlu0 %7023
  %v7025 = vsel %vm261, %v6997, -inf
  %7026 = vmax.xlane.f32.xlu0 %v7025
  %v7027 = vpop.xlane.xlu0 %7026
  %v7028 = vsel %vm261, %v7002, -inf
  %7029 = vmax.xlane.f32.xlu0 %v7028
  %v7030 = vpop.xlane.xlu0 %7029
  %v7031 = vsel %vm261, %v7005, -inf
  %7032 = vmax.xlane.f32.xlu0 %v7031
  %v7033 = vpop.xlane.xlu0 %7032
  %v7034 = vsel %vm261, %v7010, -inf
  %7035 = vmax.xlane.f32.xlu0 %v7034
  %v7036 = vpop.xlane.xlu0 %7035
  %v7037 = vsel %vm261, %v7013, -inf
  %7038 = vmax.xlane.f32.xlu0 %v7037
  %v7039 = vpop.xlane.xlu0 %7038
  %v7040 = vsub.f32 %v6986, %v7018
  %v7041 = vsub.f32 %v6989, %v7021
  %v7042 = vsub.f32 %v6994, %v7024
  %v7043 = vsub.f32 %v6997, %v7027
  %v7044 = vsub.f32 %v7002, %v7030
  %v7045 = vsub.f32 %v7005, %v7033
  %v7046 = vsub.f32 %v7010, %v7036
  %v7047 = vsub.f32 %v7013, %v7039
  %v7048 = vmul.f32 %v7040, 1.442695
  %v7049 = vpow.pop %v7048
  %v7050 = vmul.f32 %v7041, 1.442695
  %v7051 = vpow.pop %v7050
  %v7052 = vmul.f32 %v7042, 1.442695
  %v7053 = vpow.pop %v7052
  %v7054 = vmul.f32 %v7043, 1.442695
  %v7055 = vpow.pop %v7054
  %v7056 = vmul.f32 %v7044, 1.442695
  %v7057 = vpow.pop %v7056
  %v7058 = vmul.f32 %v7045, 1.442695
  %v7059 = vpow.pop %v7058
  %v7060 = vmul.f32 %v7046, 1.442695
  %v7061 = vpow.pop %v7060
  %v7062 = vmul.f32 %v7047, 1.442695
  %v7063 = vpow.pop %v7062
  %v7064 = vsel %vm261, %v7049, 0.0
  %7065 = vadd.xlane.f32.xlu0 %v7064
  %v7066 = vpop.xlane.xlu0 %7065
  %v7067 = vsel %vm261, %v7051, 0.0
  %7068 = vadd.xlane.f32.xlu0 %v7067
  %v7069 = vpop.xlane.xlu0 %7068
  %v7070 = vsel %vm261, %v7053, 0.0
  %7071 = vadd.xlane.f32.xlu0 %v7070
  %v7072 = vpop.xlane.xlu0 %7071
  %v7073 = vsel %vm261, %v7055, 0.0
  %7074 = vadd.xlane.f32.xlu0 %v7073
  %v7075 = vpop.xlane.xlu0 %7074
  %v7076 = vsel %vm261, %v7057, 0.0
  %7077 = vadd.xlane.f32.xlu0 %v7076
  %v7078 = vpop.xlane.xlu0 %7077
  %v7079 = vsel %vm261, %v7059, 0.0
  %7080 = vadd.xlane.f32.xlu0 %v7079
  %v7081 = vpop.xlane.xlu0 %7080
  %v7082 = vsel %vm261, %v7061, 0.0
  %7083 = vadd.xlane.f32.xlu0 %v7082
  %v7084 = vpop.xlane.xlu0 %7083
  %v7085 = vsel %vm261, %v7063, 0.0
  %7086 = vadd.xlane.f32.xlu0 %v7085
  %v7087 = vpop.xlane.xlu0 %7086
  %v7088 = vrcp.pop %v7066
  %v7089 = vrcp.pop %v7069
  %v7090 = vrcp.pop %v7072
  %v7091 = vrcp.pop %v7075
  %v7092 = vrcp.pop %v7078
  %v7093 = vrcp.pop %v7081
  %v7094 = vrcp.pop %v7084
  %v7095 = vrcp.pop %v7087
  %v7096 = vmul.f32 %v7049, %v7088
  %v7097 = vmul.f32 %v7051, %v7089
  %v7098 = vmul.f32 %v7053, %v7090
  %v7099 = vmul.f32 %v7055, %v7091
  %v7100 = vmul.f32 %v7057, %v7092
  %v7101 = vmul.f32 %v7059, %v7093
  %v7102 = vmul.f32 %v7061, %v7094
  %v7103 = vmul.f32 %v7063, %v7095
  %v7104 = vpack.c.bf16 %v7097, %v7096
  %v7105 = vpack.c.bf16 %v7099, %v7098
  %v7106 = vpack.c.bf16 %v7101, %v7100
  %v7107 = vpack.c.bf16 %v7103, %v7102
  %v7108 = vpack.c.bf16 %v6907, %v6904
  %v7109 = vpack.c.bf16 %v6915, %v6912
  %v7110 = vpack.c.bf16 %v6923, %v6920
  %v7111 = vpack.c.bf16 %v6931, %v6928
  %v7113 = vsel %vm261, %v7104, 0
  %v7116 = vsel %vm261, %v7105, 0
  %v7119 = vsel %vm261, %v7106, 0
  %v7122 = vsel %vm261, %v7107, 0
  %7124 = vmatprep.subr.bf16.mxu0 0
  %7125 = vmatpush1.bf16.msra.mxu0 %v7108
  %7126 = vmatprep.subr.bf16.mxu0 0
  %7127 = vmatpush1.bf16.msra.mxu0 %v7109
  %7128 = vmatprep.subr.bf16.mxu0 0
  %7129 = vmatpush1.bf16.msra.mxu0 %v7110
  %7130 = vmatprep.subr.bf16.mxu0 0
  %7131 = vmatpush1.bf16.msra.mxu0 %v7111
  %7132 = vmatprep.subr.bf16.mxu0 0
  %7133 = vmatpush1.bf16.msra.mxu0 0
  %7134 = vmatprep.subr.bf16.mxu0 0
  %7135 = vmatpush1.bf16.msra.mxu0 0
  %7136 = vmatprep.subr.bf16.mxu0 0
  %7137 = vmatpush1.bf16.msra.mxu0 0
  %7138 = vmatprep.subr.bf16.mxu0 0
  %7139 = vmatpush1.bf16.msra.mxu0 0
  %7140 = vmatprep.subr.bf16.mxu0 0
  %7141 = vmatpush1.bf16.msra.mxu0 0
  %7142 = vmatprep.subr.bf16.mxu0 0
  %7143 = vmatpush1.bf16.msra.mxu0 0
  %7144 = vmatprep.subr.bf16.mxu0 0
  %7145 = vmatpush1.bf16.msra.mxu0 0
  %7146 = vmatprep.subr.bf16.mxu0 0
  %7147 = vmatpush1.bf16.msra.mxu0 0
  %7148 = vmatprep.subr.bf16.mxu0 0
  %7149 = vmatpush1.bf16.msra.mxu0 0
  %7150 = vmatprep.subr.bf16.mxu0 0
  %7151 = vmatpush1.bf16.msra.mxu0 0
  %7152 = vmatprep.subr.bf16.mxu0 0
  %7153 = vmatpush1.bf16.msra.mxu0 0
  %7154 = vmatprep.subr.bf16.mxu0 0
  %7155 = vmatpush1.bf16.msra.mxu0 0
  %7156 = vmatprep.mubr.bf16.mxu0 0
  %7157 = vmatmul.mubr.bf16.gmra.mrb[0].mxu0 %v7113
  %v7158 = vpop.f32.mrb[0].mxu0
  %v7159 = vadd.f32 0.0, %v7158
  %v7160 = vpop.f32.mrb[0].mxu0
  %v7161 = vpop.f32.mrb[0].mxu0
  %v7162 = vadd.f32 0.0, %v7161
  %v7163 = vpop.f32.mrb[0].mxu0
  %7164 = vmatprep.mubr.bf16.mxu0 0
  %7165 = vmatmul.mubr.bf16.gmra.mrb[0].mxu0 %v7116
  %v7166 = vpop.f32.mrb[0].mxu0
  %v7167 = vadd.f32 0.0, %v7166
  %v7168 = vpop.f32.mrb[0].mxu0
  %v7169 = vpop.f32.mrb[0].mxu0
  %v7170 = vadd.f32 0.0, %v7169
  %v7171 = vpop.f32.mrb[0].mxu0
  %7172 = vmatprep.mubr.bf16.mxu0 0
  %7173 = vmatmul.mubr.bf16.gmra.mrb[0].mxu0 %v7119
  %v7174 = vpop.f32.mrb[0].mxu0
  %v7175 = vadd.f32 0.0, %v7174
  %v7176 = vpop.f32.mrb[0].mxu0
  %v7177 = vpop.f32.mrb[0].mxu0
  %v7178 = vadd.f32 0.0, %v7177
  %v7179 = vpop.f32.mrb[0].mxu0
  %7180 = vmatprep.mubr.bf16.mxu0 0
  %7181 = vmatmul.mubr.bf16.gmra.mrb[0].mxu0 %v7122
  %v7182 = vpop.f32.mrb[0].mxu0
  %v7183 = vadd.f32 0.0, %v7182
  %v7184 = vpop.f32.mrb[0].mxu0
  %v7185 = vpop.f32.mrb[0].mxu0
  %v7186 = vadd.f32 0.0, %v7185
  %v7187 = vpop.f32.mrb[0].mxu0
  %7188 = vdwg.mxu0
  %v7189 = vpack.c.bf16 %v7162, %v7159
  %v7190 = vpack.c.bf16 %v7170, %v7167
  %v7191 = vpack.c.bf16 %v7178, %v7175
  %v7192 = vpack.c.bf16 %v7186, %v7183
  %s7193 = scalar_lea.vmem %s13, 40
  %v7194 = vld [vmem:[%s7193] sm:$0xf]
  %v7195 = vld [vmem:[%s7193 + $0x4] sm:$0xf]
  %v7198 = vunpack.c.l.b16 %v7194
  %v7199 = vunpack.c.l.b16 %v7195
  %v7200 = vpack.c.b16 %v7199, %v7198
  %v7203 = vsel %vm183, %v7189, 0
  %v7206 = vsel %vm183, %v7190, 0
  %v7209 = vsel %vm183, %v7191, 0
  %v7212 = vsel %vm183, %v7192, 0
  %7214 = vmatprep.subr.bf16.mxu0 0
  %7215 = vmatpush1.bf16.msra.mxu0 %v7200
  %7216 = vmatprep.subr.bf16.mxu0 0
  %7217 = vmatpush1.bf16.msra.mxu0 0
  %7218 = vmatprep.subr.bf16.mxu0 0
  %7219 = vmatpush1.bf16.msra.mxu0 0
  %7220 = vmatprep.subr.bf16.mxu0 0
  %7221 = vmatpush1.bf16.msra.mxu0 0
  %7222 = vmatprep.subr.bf16.mxu0 0
  %7223 = vmatpush1.bf16.msra.mxu0 0
  %7224 = vmatprep.subr.bf16.mxu0 0
  %7225 = vmatpush1.bf16.msra.mxu0 0
  %7226 = vmatprep.subr.bf16.mxu0 0
  %7227 = vmatpush1.bf16.msra.mxu0 0
  %7228 = vmatprep.subr.bf16.mxu0 0
  %7229 = vmatpush1.bf16.msra.mxu0 0
  %7230 = vmatprep.subr.bf16.mxu0 0
  %7231 = vmatpush1.bf16.msra.mxu0 0
  %7232 = vmatprep.subr.bf16.mxu0 0
  %7233 = vmatpush1.bf16.msra.mxu0 0
  %7234 = vmatprep.subr.bf16.mxu0 0
  %7235 = vmatpush1.bf16.msra.mxu0 0
  %7236 = vmatprep.subr.bf16.mxu0 0
  %7237 = vmatpush1.bf16.msra.mxu0 0
  %7238 = vmatprep.subr.bf16.mxu0 0
  %7239 = vmatpush1.bf16.msra.mxu0 0
  %7240 = vmatprep.subr.bf16.mxu0 0
  %7241 = vmatpush1.bf16.msra.mxu0 0
  %7242 = vmatprep.subr.bf16.mxu0 0
  %7243 = vmatpush1.bf16.msra.mxu0 0
  %7244 = vmatprep.subr.bf16.mxu0 0
  %7245 = vmatpush1.bf16.msra.mxu0 0
  %7246 = vmatprep.mubr.bf16.mxu0 0
  %7247 = vmatmul.mubr.bf16.gmra.mrb[0].mxu0 %v7203
  %v7248 = vpop.f32.mrb[0].mxu0
  %v7249 = vadd.f32 0.0, %v7248
  %v7250 = vpop.f32.mrb[0].mxu0
  %v7251 = vpop.f32.mrb[0].mxu0
  %v7252 = vadd.f32 0.0, %v7251
  %v7253 = vpop.f32.mrb[0].mxu0
  %7254 = vmatprep.mubr.bf16.mxu0 0
  %7255 = vmatmul.mubr.bf16.gmra.mrb[0].mxu0 %v7206
  %v7256 = vpop.f32.mrb[0].mxu0
  %v7257 = vadd.f32 0.0, %v7256
  %v7258 = vpop.f32.mrb[0].mxu0
  %v7259 = vpop.f32.mrb[0].mxu0
  %v7260 = vadd.f32 0.0, %v7259
  %v7261 = vpop.f32.mrb[0].mxu0
  %7262 = vmatprep.mubr.bf16.mxu0 0
  %7263 = vmatmul.mubr.bf16.gmra.mrb[0].mxu0 %v7209
  %v7264 = vpop.f32.mrb[0].mxu0
  %v7265 = vadd.f32 0.0, %v7264
  %v7266 = vpop.f32.mrb[0].mxu0
  %v7267 = vpop.f32.mrb[0].mxu0
  %v7268 = vadd.f32 0.0, %v7267
  %v7269 = vpop.f32.mrb[0].mxu0
  %7270 = vmatprep.mubr.bf16.mxu0 0
  %7271 = vmatmul.mubr.bf16.gmra.mrb[0].mxu0 %v7212
  %v7272 = vpop.f32.mrb[0].mxu0
  %v7273 = vadd.f32 0.0, %v7272
  %v7274 = vpop.f32.mrb[0].mxu0
  %v7275 = vpop.f32.mrb[0].mxu0
  %v7276 = vadd.f32 0.0, %v7275
  %v7277 = vpop.f32.mrb[0].mxu0
  %7278 = vdwg.mxu0
  %v7281 = vunpack.c.l.b16 %v6655
  %v7282 = vunpack.c.l.b16 %v6656
  %v7283 = vpack.c.b16 %v7282, %v7281
  %v7286 = vsel %vm183, %v6650, 0
  %v7289 = vsel %vm183, %v6651, 0
  %v7292 = vsel %vm183, %v6652, 0
  %v7295 = vsel %vm183, %v6653, 0
  %7297 = vmatprep.subr.bf16.mxu0 0
  %7298 = vmatpush1.bf16.msra.mxu0 %v7283
  %7299 = vmatprep.subr.bf16.mxu0 0
  %7300 = vmatpush1.bf16.msra.mxu0 0
  %7301 = vmatprep.subr.bf16.mxu0 0
  %7302 = vmatpush1.bf16.msra.mxu0 0
  %7303 = vmatprep.subr.bf16.mxu0 0
  %7304 = vmatpush1.bf16.msra.mxu0 0
  %7305 = vmatprep.subr.bf16.mxu0 0
  %7306 = vmatpush1.bf16.msra.mxu0 0
  %7307 = vmatprep.subr.bf16.mxu0 0
  %7308 = vmatpush1.bf16.msra.mxu0 0
  %7309 = vmatprep.subr.bf16.mxu0 0
  %7310 = vmatpush1.bf16.msra.mxu0 0
  %7311 = vmatprep.subr.bf16.mxu0 0
  %7312 = vmatpush1.bf16.msra.mxu0 0
  %7313 = vmatprep.subr.bf16.mxu0 0
  %7314 = vmatpush1.bf16.msra.mxu0 0
  %7315 = vmatprep.subr.bf16.mxu0 0
  %7316 = vmatpush1.bf16.msra.mxu0 0
  %7317 = vmatprep.subr.bf16.mxu0 0
  %7318 = vmatpush1.bf16.msra.mxu0 0
  %7319 = vmatprep.subr.bf16.mxu0 0
  %7320 = vmatpush1.bf16.msra.mxu0 0
  %7321 = vmatprep.subr.bf16.mxu0 0
  %7322 = vmatpush1.bf16.msra.mxu0 0
  %7323 = vmatprep.subr.bf16.mxu0 0
  %7324 = vmatpush1.bf16.msra.mxu0 0
  %7325 = vmatprep.subr.bf16.mxu0 0
  %7326 = vmatpush1.bf16.msra.mxu0 0
  %7327 = vmatprep.subr.bf16.mxu0 0
  %7328 = vmatpush1.bf16.msra.mxu0 0
  %7329 = vmatprep.mubr.bf16.mxu0 0
  %7330 = vmatmul.mubr.bf16.gmra.mrb[0].mxu0 %v7286
  %v7331 = vpop.f32.mrb[0].mxu0
  %v7332 = vadd.f32 %v7249, %v7331
  %v7333 = vpop.f32.mrb[0].mxu0
  %v7334 = vpop.f32.mrb[0].mxu0
  %v7335 = vadd.f32 %v7252, %v7334
  %v7336 = vpop.f32.mrb[0].mxu0
  %7337 = vmatprep.mubr.bf16.mxu0 0
  %7338 = vmatmul.mubr.bf16.gmra.mrb[0].mxu0 %v7289
  %v7339 = vpop.f32.mrb[0].mxu0
  %v7340 = vadd.f32 %v7257, %v7339
  %v7341 = vpop.f32.mrb[0].mxu0
  %v7342 = vpop.f32.mrb[0].mxu0
  %v7343 = vadd.f32 %v7260, %v7342
  %v7344 = vpop.f32.mrb[0].mxu0
  %7345 = vmatprep.mubr.bf16.mxu0 0
  %7346 = vmatmul.mubr.bf16.gmra.mrb[0].mxu0 %v7292
  %v7347 = vpop.f32.mrb[0].mxu0
  %v7348 = vadd.f32 %v7265, %v7347
  %v7349 = vpop.f32.mrb[0].mxu0
  %v7350 = vpop.f32.mrb[0].mxu0
  %v7351 = vadd.f32 %v7268, %v7350
  %v7352 = vpop.f32.mrb[0].mxu0
  %7353 = vmatprep.mubr.bf16.mxu0 0
  %7354 = vmatmul.mubr.bf16.gmra.mrb[0].mxu0 %v7295
  %v7355 = vpop.f32.mrb[0].mxu0
  %v7356 = vadd.f32 %v7273, %v7355
  %v7357 = vpop.f32.mrb[0].mxu0
  %v7358 = vpop.f32.mrb[0].mxu0
  %v7359 = vadd.f32 %v7276, %v7358
  %v7360 = vpop.f32.mrb[0].mxu0
  %7361 = vdwg.mxu0
  %s7362 = scalar_lea.vmem %s7, 192
  %v7363 = vld [vmem:[%s7362] sm:$0xf]
  %v7364 = vld [vmem:[%s7362 + $0x4] sm:$0xf]
  %v7365 = vld [vmem:[%s7362 + $0x8] sm:$0xf]
  %v7366 = vld [vmem:[%s7362 + $0xc] sm:$0xf]
  %v7367 = vld [vmem:[%s7362 + $0x10] sm:$0xf]
  %v7368 = vld [vmem:[%s7362 + $0x14] sm:$0xf]
  %v7369 = vld [vmem:[%s7362 + $0x18] sm:$0xf]
  %v7370 = vld [vmem:[%s7362 + $0x1c] sm:$0xf]
  %s7371 = scalar_lea.vmem %s8, 6
  %v7372 = vld [vmem:[%s7371] sm:$0x1]
  %v7374 = vlaneseq
  %v7375 = vshrl.u32 %v7374, 7
  %v7376 = vsub.s32 0, %v7375
  %v7377 = vrot.slane %v7372, %v7376
  %v7387 = vunpack.c.l.b16 %v7363
  %v7388 = vunpack.c.l.b16 %v7364
  %v7389 = vunpack.c.l.b16 %v7365
  %v7390 = vunpack.c.l.b16 %v7366
  %v7391 = vunpack.c.l.b16 %v7367
  %v7392 = vunpack.c.l.b16 %v7368
  %v7393 = vunpack.c.l.b16 %v7369
  %v7394 = vunpack.c.l.b16 %v7370
  %v7395 = vpack.c.b16 %v7388, %v7387
  %v7396 = vpack.c.b16 %v7390, %v7389
  %v7397 = vpack.c.b16 %v7392, %v7391
  %v7398 = vpack.c.b16 %v7394, %v7393
  %7403 = vmatprep.subr.bf16.mxu0 0
  %7404 = vmatpush1.bf16.msra.mxu0 %v7395
  %7405 = vmatprep.subr.bf16.mxu0 0
  %7406 = vmatpush1.bf16.msra.mxu0 %v7396
  %7407 = vmatprep.subr.bf16.mxu0 0
  %7408 = vmatpush1.bf16.msra.mxu0 %v7397
  %7409 = vmatprep.subr.bf16.mxu0 0
  %7410 = vmatpush1.bf16.msra.mxu0 %v7398
  %7411 = vmatprep.subr.bf16.mxu0 0
  %7412 = vmatpush1.bf16.msra.mxu0 0
  %7413 = vmatprep.subr.bf16.mxu0 0
  %7414 = vmatpush1.bf16.msra.mxu0 0
  %7415 = vmatprep.subr.bf16.mxu0 0
  %7416 = vmatpush1.bf16.msra.mxu0 0
  %7417 = vmatprep.subr.bf16.mxu0 0
  %7418 = vmatpush1.bf16.msra.mxu0 0
  %7419 = vmatprep.subr.bf16.mxu0 0
  %7420 = vmatpush1.bf16.msra.mxu0 0
  %7421 = vmatprep.subr.bf16.mxu0 0
  %7422 = vmatpush1.bf16.msra.mxu0 0
  %7423 = vmatprep.subr.bf16.mxu0 0
  %7424 = vmatpush1.bf16.msra.mxu0 0
  %7425 = vmatprep.subr.bf16.mxu0 0
  %7426 = vmatpush1.bf16.msra.mxu0 0
  %7427 = vmatprep.subr.bf16.mxu0 0
  %7428 = vmatpush1.bf16.msra.mxu0 0
  %7429 = vmatprep.subr.bf16.mxu0 0
  %7430 = vmatpush1.bf16.msra.mxu0 0
  %7431 = vmatprep.subr.bf16.mxu0 0
  %7432 = vmatpush1.bf16.msra.mxu0 0
  %7433 = vmatprep.subr.bf16.mxu0 0
  %7434 = vmatpush1.bf16.msra.mxu0 0
  %7435 = vmatprep.mubr.bf16.mxu0 0
  %7436 = vmatmul.mubr.bf16.gmra.mrb[0].mxu0 %v6148
  %v7437 = vpop.f32.mrb[0].mxu0
  %v7438 = vadd.f32 %v7377, %v7437
  %v7439 = vpop.f32.mrb[0].mxu0
  %v7440 = vpop.f32.mrb[0].mxu0
  %v7441 = vadd.f32 %v7377, %v7440
  %v7442 = vpop.f32.mrb[0].mxu0
  %7443 = vmatprep.mubr.bf16.mxu0 0
  %7444 = vmatmul.mubr.bf16.gmra.mrb[0].mxu0 %v6151
  %v7445 = vpop.f32.mrb[0].mxu0
  %v7446 = vadd.f32 %v7377, %v7445
  %v7447 = vpop.f32.mrb[0].mxu0
  %v7448 = vpop.f32.mrb[0].mxu0
  %v7449 = vadd.f32 %v7377, %v7448
  %v7450 = vpop.f32.mrb[0].mxu0
  %7451 = vmatprep.mubr.bf16.mxu0 0
  %7452 = vmatmul.mubr.bf16.gmra.mrb[0].mxu0 %v6154
  %v7453 = vpop.f32.mrb[0].mxu0
  %v7454 = vadd.f32 %v7377, %v7453
  %v7455 = vpop.f32.mrb[0].mxu0
  %v7456 = vpop.f32.mrb[0].mxu0
  %v7457 = vadd.f32 %v7377, %v7456
  %v7458 = vpop.f32.mrb[0].mxu0
  %7459 = vmatprep.mubr.bf16.mxu0 0
  %7460 = vmatmul.mubr.bf16.gmra.mrb[0].mxu0 %v6157
  %v7461 = vpop.f32.mrb[0].mxu0
  %v7462 = vadd.f32 %v7377, %v7461
  %v7463 = vpop.f32.mrb[0].mxu0
  %v7464 = vpop.f32.mrb[0].mxu0
  %v7465 = vadd.f32 %v7377, %v7464
  %v7466 = vpop.f32.mrb[0].mxu0
  %7467 = vdwg.mxu0
  %s7468 = scalar_lea.vmem %s9, 48
  %v7469 = vld [vmem:[%s7468] sm:$0xf]
  %v7470 = vld [vmem:[%s7468 + $0x4] sm:$0xf]
  %s7471 = scalar_lea.vmem %s10, 96
  %v7472 = vld [vmem:[%s7471] sm:$0xff]
  %v7473 = vld [vmem:[%s7471 + $0x8] sm:$0xff]
  %7475 = vset.pattern.permute.xlu0 0
  %7476 = vperm.xlu0 %7475, %v7472
  %v7477 = vpop.permute.xlu0 %7476
  %7480 = vset.pattern.permute.xlu0 0
  %7481 = vperm.xlu0 %7480, %v7473
  %v7482 = vpop.permute.xlu0 %7481
  %v7486 = vunpack.c.l.b16 %v7469
  %v7487 = vunpack.c.l.b16 %v7470
  %v7488 = vpack.c.b16 %v7487, %v7486
  %v7490 = vsel %vm261, %v7488, 0
  %7492 = vmatprep.subr.bf16.mxu0 0
  %7493 = vmatpush1.bf16.msra.mxu0 %v6102
  %7494 = vmatprep.subr.bf16.mxu0 0
  %7495 = vmatpush1.bf16.msra.mxu0 %v6103
  %7496 = vmatprep.subr.bf16.mxu0 0
  %7497 = vmatpush1.bf16.msra.mxu0 %v6104
  %7498 = vmatprep.subr.bf16.mxu0 0
  %7499 = vmatpush1.bf16.msra.mxu0 %v6105
  %7500 = vmatprep.subr.bf16.mxu0 0
  %7501 = vmatpush1.bf16.msra.mxu0 0
  %7502 = vmatprep.subr.bf16.mxu0 0
  %7503 = vmatpush1.bf16.msra.mxu0 0
  %7504 = vmatprep.subr.bf16.mxu0 0
  %7505 = vmatpush1.bf16.msra.mxu0 0
  %7506 = vmatprep.subr.bf16.mxu0 0
  %7507 = vmatpush1.bf16.msra.mxu0 0
  %7508 = vmatprep.subr.bf16.mxu0 0
  %7509 = vmatpush1.bf16.msra.mxu0 0
  %7510 = vmatprep.subr.bf16.mxu0 0
  %7511 = vmatpush1.bf16.msra.mxu0 0
  %7512 = vmatprep.subr.bf16.mxu0 0
  %7513 = vmatpush1.bf16.msra.mxu0 0
  %7514 = vmatprep.subr.bf16.mxu0 0
  %7515 = vmatpush1.bf16.msra.mxu0 0
  %7516 = vmatprep.subr.bf16.mxu0 0
  %7517 = vmatpush1.bf16.msra.mxu0 0
  %7518 = vmatprep.subr.bf16.mxu0 0
  %7519 = vmatpush1.bf16.msra.mxu0 0
  %7520 = vmatprep.subr.bf16.mxu0 0
  %7521 = vmatpush1.bf16.msra.mxu0 0
  %7522 = vmatprep.subr.bf16.mxu0 0
  %7523 = vmatpush1.bf16.msra.mxu0 0
  %7524 = vmatprep.mubr.bf16.mxu0 0
  %7525 = vmatmul.mubr.bf16.gmra.mrb[0].mxu0 %v7490
  %v7526 = vpop.f32.mrb[0].mxu0
  %v7527 = vadd.f32 %v7477, %v7526
  %v7528 = vpop.f32.mrb[0].mxu0
  %v7529 = vpop.f32.mrb[0].mxu0
  %v7530 = vadd.f32 %v7482, %v7529
  %v7531 = vpop.f32.mrb[0].mxu0
  %7532 = vdwg.mxu0
  %s7533 = scalar_lea.vmem %s11, 192
  %v7534 = vld [vmem:[%s7533] sm:$0xf]
  %v7535 = vld [vmem:[%s7533 + $0x4] sm:$0xf]
  %v7536 = vld [vmem:[%s7533 + $0x8] sm:$0xf]
  %v7537 = vld [vmem:[%s7533 + $0xc] sm:$0xf]
  %v7538 = vld [vmem:[%s7533 + $0x10] sm:$0xf]
  %v7539 = vld [vmem:[%s7533 + $0x14] sm:$0xf]
  %v7540 = vld [vmem:[%s7533 + $0x18] sm:$0xf]
  %v7541 = vld [vmem:[%s7533 + $0x1c] sm:$0xf]
  %s7542 = scalar_lea.vmem %s12, 6
  %v7543 = vld [vmem:[%s7542] sm:$0x1]
  %v7545 = vlaneseq
  %v7546 = vshrl.u32 %v7545, 7
  %v7547 = vsub.s32 0, %v7546
  %v7548 = vrot.slane %v7543, %v7547
  %v7558 = vunpack.c.l.b16 %v7534
  %v7559 = vunpack.c.l.b16 %v7535
  %v7560 = vunpack.c.l.b16 %v7536
  %v7561 = vunpack.c.l.b16 %v7537
  %v7562 = vunpack.c.l.b16 %v7538
  %v7563 = vunpack.c.l.b16 %v7539
  %v7564 = vunpack.c.l.b16 %v7540
  %v7565 = vunpack.c.l.b16 %v7541
  %v7566 = vpack.c.b16 %v7559, %v7558
  %v7567 = vpack.c.b16 %v7561, %v7560
  %v7568 = vpack.c.b16 %v7563, %v7562
  %v7569 = vpack.c.b16 %v7565, %v7564
  %7574 = vmatprep.subr.bf16.mxu0 0
  %7575 = vmatpush1.bf16.msra.mxu0 %v7566
  %7576 = vmatprep.subr.bf16.mxu0 0
  %7577 = vmatpush1.bf16.msra.mxu0 %v7567
  %7578 = vmatprep.subr.bf16.mxu0 0
  %7579 = vmatpush1.bf16.msra.mxu0 %v7568
  %7580 = vmatprep.subr.bf16.mxu0 0
  %7581 = vmatpush1.bf16.msra.mxu0 %v7569
  %7582 = vmatprep.subr.bf16.mxu0 0
  %7583 = vmatpush1.bf16.msra.mxu0 0
  %7584 = vmatprep.subr.bf16.mxu0 0
  %7585 = vmatpush1.bf16.msra.mxu0 0
  %7586 = vmatprep.subr.bf16.mxu0 0
  %7587 = vmatpush1.bf16.msra.mxu0 0
  %7588 = vmatprep.subr.bf16.mxu0 0
  %7589 = vmatpush1.bf16.msra.mxu0 0
  %7590 = vmatprep.subr.bf16.mxu0 0
  %7591 = vmatpush1.bf16.msra.mxu0 0
  %7592 = vmatprep.subr.bf16.mxu0 0
  %7593 = vmatpush1.bf16.msra.mxu0 0
  %7594 = vmatprep.subr.bf16.mxu0 0
  %7595 = vmatpush1.bf16.msra.mxu0 0
  %7596 = vmatprep.subr.bf16.mxu0 0
  %7597 = vmatpush1.bf16.msra.mxu0 0
  %7598 = vmatprep.subr.bf16.mxu0 0
  %7599 = vmatpush1.bf16.msra.mxu0 0
  %7600 = vmatprep.subr.bf16.mxu0 0
  %7601 = vmatpush1.bf16.msra.mxu0 0
  %7602 = vmatprep.subr.bf16.mxu0 0
  %7603 = vmatpush1.bf16.msra.mxu0 0
  %7604 = vmatprep.subr.bf16.mxu0 0
  %7605 = vmatpush1.bf16.msra.mxu0 0
  %7606 = vmatprep.mubr.bf16.mxu0 0
  %7607 = vmatmul.mubr.bf16.gmra.mrb[0].mxu0 %v6148
  %v7608 = vpop.f32.mrb[0].mxu0
  %v7609 = vadd.f32 %v7548, %v7608
  %v7610 = vpop.f32.mrb[0].mxu0
  %v7611 = vpop.f32.mrb[0].mxu0
  %v7612 = vadd.f32 %v7548, %v7611
  %v7613 = vpop.f32.mrb[0].mxu0
  %7614 = vmatprep.mubr.bf16.mxu0 0
  %7615 = vmatmul.mubr.bf16.gmra.mrb[0].mxu0 %v6151
  %v7616 = vpop.f32.mrb[0].mxu0
  %v7617 = vadd.f32 %v7548, %v7616
  %v7618 = vpop.f32.mrb[0].mxu0
  %v7619 = vpop.f32.mrb[0].mxu0
  %v7620 = vadd.f32 %v7548, %v7619
  %v7621 = vpop.f32.mrb[0].mxu0
  %7622 = vmatprep.mubr.bf16.mxu0 0
  %7623 = vmatmul.mubr.bf16.gmra.mrb[0].mxu0 %v6154
  %v7624 = vpop.f32.mrb[0].mxu0
  %v7625 = vadd.f32 %v7548, %v7624
  %v7626 = vpop.f32.mrb[0].mxu0
  %v7627 = vpop.f32.mrb[0].mxu0
  %v7628 = vadd.f32 %v7548, %v7627
  %v7629 = vpop.f32.mrb[0].mxu0
  %7630 = vmatprep.mubr.bf16.mxu0 0
  %7631 = vmatmul.mubr.bf16.gmra.mrb[0].mxu0 %v6157
  %v7632 = vpop.f32.mrb[0].mxu0
  %v7633 = vadd.f32 %v7548, %v7632
  %v7634 = vpop.f32.mrb[0].mxu0
  %v7635 = vpop.f32.mrb[0].mxu0
  %v7636 = vadd.f32 %v7548, %v7635
  %v7637 = vpop.f32.mrb[0].mxu0
  %7638 = vdwg.mxu0
  %v7639 = vpack.c.bf16 %v7441, %v7438
  %v7640 = vpack.c.bf16 %v7449, %v7446
  %v7641 = vpack.c.bf16 %v7457, %v7454
  %v7642 = vpack.c.bf16 %v7465, %v7462
  %v7643 = vpack.c.bf16 %v7530, %v7527
  %v7645 = vsel %vm183, %v7639, 0
  %v7648 = vsel %vm183, %v7640, 0
  %v7651 = vsel %vm183, %v7641, 0
  %v7654 = vsel %vm183, %v7642, 0
  %7656 = vmatprep.subr.bf16.mxu0 0
  %7657 = vmatpush1.bf16.msra.mxu0 %v7643
  %7658 = vmatprep.subr.bf16.mxu0 0
  %7659 = vmatpush1.bf16.msra.mxu0 0
  %7660 = vmatprep.subr.bf16.mxu0 0
  %7661 = vmatpush1.bf16.msra.mxu0 0
  %7662 = vmatprep.subr.bf16.mxu0 0
  %7663 = vmatpush1.bf16.msra.mxu0 0
  %7664 = vmatprep.subr.bf16.mxu0 0
  %7665 = vmatpush1.bf16.msra.mxu0 0
  %7666 = vmatprep.subr.bf16.mxu0 0
  %7667 = vmatpush1.bf16.msra.mxu0 0
  %7668 = vmatprep.subr.bf16.mxu0 0
  %7669 = vmatpush1.bf16.msra.mxu0 0
  %7670 = vmatprep.subr.bf16.mxu0 0
  %7671 = vmatpush1.bf16.msra.mxu0 0
  %7672 = vmatprep.subr.bf16.mxu0 0
  %7673 = vmatpush1.bf16.msra.mxu0 0
  %7674 = vmatprep.subr.bf16.mxu0 0
  %7675 = vmatpush1.bf16.msra.mxu0 0
  %7676 = vmatprep.subr.bf16.mxu0 0
  %7677 = vmatpush1.bf16.msra.mxu0 0
  %7678 = vmatprep.subr.bf16.mxu0 0
  %7679 = vmatpush1.bf16.msra.mxu0 0
  %7680 = vmatprep.subr.bf16.mxu0 0
  %7681 = vmatpush1.bf16.msra.mxu0 0
  %7682 = vmatprep.subr.bf16.mxu0 0
  %7683 = vmatpush1.bf16.msra.mxu0 0
  %7684 = vmatprep.subr.bf16.mxu0 0
  %7685 = vmatpush1.bf16.msra.mxu0 0
  %7686 = vmatprep.subr.bf16.mxu0 0
  %7687 = vmatpush1.bf16.msra.mxu0 0
  %7688 = vmatprep.mubr.bf16.mxu0 0
  %7689 = vmatmul.mubr.bf16.gmra.mrb[0].mxu0 %v7645
  %v7690 = vpop.f32.mrb[0].mxu0
  %v7691 = vadd.f32 0.0, %v7690
  %v7692 = vpop.f32.mrb[0].mxu0
  %v7693 = vpop.f32.mrb[0].mxu0
  %v7694 = vadd.f32 0.0, %v7693
  %v7695 = vpop.f32.mrb[0].mxu0
  %7696 = vmatprep.mubr.bf16.mxu0 0
  %7697 = vmatmul.mubr.bf16.gmra.mrb[0].mxu0 %v7648
  %v7698 = vpop.f32.mrb[0].mxu0
  %v7699 = vadd.f32 0.0, %v7698
  %v7700 = vpop.f32.mrb[0].mxu0
  %v7701 = vpop.f32.mrb[0].mxu0
  %v7702 = vadd.f32 0.0, %v7701
  %v7703 = vpop.f32.mrb[0].mxu0
  %7704 = vmatprep.mubr.bf16.mxu0 0
  %7705 = vmatmul.mubr.bf16.gmra.mrb[0].mxu0 %v7651
  %v7706 = vpop.f32.mrb[0].mxu0
  %v7707 = vadd.f32 0.0, %v7706
  %v7708 = vpop.f32.mrb[0].mxu0
  %v7709 = vpop.f32.mrb[0].mxu0
  %v7710 = vadd.f32 0.0, %v7709
  %v7711 = vpop.f32.mrb[0].mxu0
  %7712 = vmatprep.mubr.bf16.mxu0 0
  %7713 = vmatmul.mubr.bf16.gmra.mrb[0].mxu0 %v7654
  %v7714 = vpop.f32.mrb[0].mxu0
  %v7715 = vadd.f32 0.0, %v7714
  %v7716 = vpop.f32.mrb[0].mxu0
  %v7717 = vpop.f32.mrb[0].mxu0
  %v7718 = vadd.f32 0.0, %v7717
  %v7719 = vpop.f32.mrb[0].mxu0
  %7720 = vdwg.mxu0
  %v7721 = vsel %vm261, %v7691, -inf
  %7722 = vmax.xlane.f32.xlu0 %v7721
  %v7723 = vpop.xlane.xlu0 %7722
  %v7724 = vsel %vm261, %v7694, -inf
  %7725 = vmax.xlane.f32.xlu0 %v7724
  %v7726 = vpop.xlane.xlu0 %7725
  %v7727 = vsel %vm261, %v7699, -inf
  %7728 = vmax.xlane.f32.xlu0 %v7727
  %v7729 = vpop.xlane.xlu0 %7728
  %v7730 = vsel %vm261, %v7702, -inf
  %7731 = vmax.xlane.f32.xlu0 %v7730
  %v7732 = vpop.xlane.xlu0 %7731
  %v7733 = vsel %vm261, %v7707, -inf
  %7734 = vmax.xlane.f32.xlu0 %v7733
  %v7735 = vpop.xlane.xlu0 %7734
  %v7736 = vsel %vm261, %v7710, -inf
  %7737 = vmax.xlane.f32.xlu0 %v7736
  %v7738 = vpop.xlane.xlu0 %7737
  %v7739 = vsel %vm261, %v7715, -inf
  %7740 = vmax.xlane.f32.xlu0 %v7739
  %v7741 = vpop.xlane.xlu0 %7740
  %v7742 = vsel %vm261, %v7718, -inf
  %7743 = vmax.xlane.f32.xlu0 %v7742
  %v7744 = vpop.xlane.xlu0 %7743
  %v7745 = vsub.f32 %v7691, %v7723
  %v7746 = vsub.f32 %v7694, %v7726
  %v7747 = vsub.f32 %v7699, %v7729
  %v7748 = vsub.f32 %v7702, %v7732
  %v7749 = vsub.f32 %v7707, %v7735
  %v7750 = vsub.f32 %v7710, %v7738
  %v7751 = vsub.f32 %v7715, %v7741
  %v7752 = vsub.f32 %v7718, %v7744
  %v7753 = vmul.f32 %v7745, 1.442695
  %v7754 = vpow.pop %v7753
  %v7755 = vmul.f32 %v7746, 1.442695
  %v7756 = vpow.pop %v7755
  %v7757 = vmul.f32 %v7747, 1.442695
  %v7758 = vpow.pop %v7757
  %v7759 = vmul.f32 %v7748, 1.442695
  %v7760 = vpow.pop %v7759
  %v7761 = vmul.f32 %v7749, 1.442695
  %v7762 = vpow.pop %v7761
  %v7763 = vmul.f32 %v7750, 1.442695
  %v7764 = vpow.pop %v7763
  %v7765 = vmul.f32 %v7751, 1.442695
  %v7766 = vpow.pop %v7765
  %v7767 = vmul.f32 %v7752, 1.442695
  %v7768 = vpow.pop %v7767
  %v7769 = vsel %vm261, %v7754, 0.0
  %7770 = vadd.xlane.f32.xlu0 %v7769
  %v7771 = vpop.xlane.xlu0 %7770
  %v7772 = vsel %vm261, %v7756, 0.0
  %7773 = vadd.xlane.f32.xlu0 %v7772
  %v7774 = vpop.xlane.xlu0 %7773
  %v7775 = vsel %vm261, %v7758, 0.0
  %7776 = vadd.xlane.f32.xlu0 %v7775
  %v7777 = vpop.xlane.xlu0 %7776
  %v7778 = vsel %vm261, %v7760, 0.0
  %7779 = vadd.xlane.f32.xlu0 %v7778
  %v7780 = vpop.xlane.xlu0 %7779
  %v7781 = vsel %vm261, %v7762, 0.0
  %7782 = vadd.xlane.f32.xlu0 %v7781
  %v7783 = vpop.xlane.xlu0 %7782
  %v7784 = vsel %vm261, %v7764, 0.0
  %7785 = vadd.xlane.f32.xlu0 %v7784
  %v7786 = vpop.xlane.xlu0 %7785
  %v7787 = vsel %vm261, %v7766, 0.0
  %7788 = vadd.xlane.f32.xlu0 %v7787
  %v7789 = vpop.xlane.xlu0 %7788
  %v7790 = vsel %vm261, %v7768, 0.0
  %7791 = vadd.xlane.f32.xlu0 %v7790
  %v7792 = vpop.xlane.xlu0 %7791
  %v7793 = vrcp.pop %v7771
  %v7794 = vrcp.pop %v7774
  %v7795 = vrcp.pop %v7777
  %v7796 = vrcp.pop %v7780
  %v7797 = vrcp.pop %v7783
  %v7798 = vrcp.pop %v7786
  %v7799 = vrcp.pop %v7789
  %v7800 = vrcp.pop %v7792
  %v7801 = vmul.f32 %v7754, %v7793
  %v7802 = vmul.f32 %v7756, %v7794
  %v7803 = vmul.f32 %v7758, %v7795
  %v7804 = vmul.f32 %v7760, %v7796
  %v7805 = vmul.f32 %v7762, %v7797
  %v7806 = vmul.f32 %v7764, %v7798
  %v7807 = vmul.f32 %v7766, %v7799
  %v7808 = vmul.f32 %v7768, %v7800
  %v7809 = vpack.c.bf16 %v7802, %v7801
  %v7810 = vpack.c.bf16 %v7804, %v7803
  %v7811 = vpack.c.bf16 %v7806, %v7805
  %v7812 = vpack.c.bf16 %v7808, %v7807
  %v7813 = vpack.c.bf16 %v7612, %v7609
  %v7814 = vpack.c.bf16 %v7620, %v7617
  %v7815 = vpack.c.bf16 %v7628, %v7625
  %v7816 = vpack.c.bf16 %v7636, %v7633
  %v7818 = vsel %vm261, %v7809, 0
  %v7821 = vsel %vm261, %v7810, 0
  %v7824 = vsel %vm261, %v7811, 0
  %v7827 = vsel %vm261, %v7812, 0
  %7829 = vmatprep.subr.bf16.mxu0 0
  %7830 = vmatpush1.bf16.msra.mxu0 %v7813
  %7831 = vmatprep.subr.bf16.mxu0 0
  %7832 = vmatpush1.bf16.msra.mxu0 %v7814
  %7833 = vmatprep.subr.bf16.mxu0 0
  %7834 = vmatpush1.bf16.msra.mxu0 %v7815
  %7835 = vmatprep.subr.bf16.mxu0 0
  %7836 = vmatpush1.bf16.msra.mxu0 %v7816
  %7837 = vmatprep.subr.bf16.mxu0 0
  %7838 = vmatpush1.bf16.msra.mxu0 0
  %7839 = vmatprep.subr.bf16.mxu0 0
  %7840 = vmatpush1.bf16.msra.mxu0 0
  %7841 = vmatprep.subr.bf16.mxu0 0
  %7842 = vmatpush1.bf16.msra.mxu0 0
  %7843 = vmatprep.subr.bf16.mxu0 0
  %7844 = vmatpush1.bf16.msra.mxu0 0
  %7845 = vmatprep.subr.bf16.mxu0 0
  %7846 = vmatpush1.bf16.msra.mxu0 0
  %7847 = vmatprep.subr.bf16.mxu0 0
  %7848 = vmatpush1.bf16.msra.mxu0 0
  %7849 = vmatprep.subr.bf16.mxu0 0
  %7850 = vmatpush1.bf16.msra.mxu0 0
  %7851 = vmatprep.subr.bf16.mxu0 0
  %7852 = vmatpush1.bf16.msra.mxu0 0
  %7853 = vmatprep.subr.bf16.mxu0 0
  %7854 = vmatpush1.bf16.msra.mxu0 0
  %7855 = vmatprep.subr.bf16.mxu0 0
  %7856 = vmatpush1.bf16.msra.mxu0 0
  %7857 = vmatprep.subr.bf16.mxu0 0
  %7858 = vmatpush1.bf16.msra.mxu0 0
  %7859 = vmatprep.subr.bf16.mxu0 0
  %7860 = vmatpush1.bf16.msra.mxu0 0
  %7861 = vmatprep.mubr.bf16.mxu0 0
  %7862 = vmatmul.mubr.bf16.gmra.mrb[0].mxu0 %v7818
  %v7863 = vpop.f32.mrb[0].mxu0
  %v7864 = vadd.f32 0.0, %v7863
  %v7865 = vpop.f32.mrb[0].mxu0
  %v7866 = vpop.f32.mrb[0].mxu0
  %v7867 = vadd.f32 0.0, %v7866
  %v7868 = vpop.f32.mrb[0].mxu0
  %7869 = vmatprep.mubr.bf16.mxu0 0
  %7870 = vmatmul.mubr.bf16.gmra.mrb[0].mxu0 %v7821
  %v7871 = vpop.f32.mrb[0].mxu0
  %v7872 = vadd.f32 0.0, %v7871
  %v7873 = vpop.f32.mrb[0].mxu0
  %v7874 = vpop.f32.mrb[0].mxu0
  %v7875 = vadd.f32 0.0, %v7874
  %v7876 = vpop.f32.mrb[0].mxu0
  %7877 = vmatprep.mubr.bf16.mxu0 0
  %7878 = vmatmul.mubr.bf16.gmra.mrb[0].mxu0 %v7824
  %v7879 = vpop.f32.mrb[0].mxu0
  %v7880 = vadd.f32 0.0, %v7879
  %v7881 = vpop.f32.mrb[0].mxu0
  %v7882 = vpop.f32.mrb[0].mxu0
  %v7883 = vadd.f32 0.0, %v7882
  %v7884 = vpop.f32.mrb[0].mxu0
  %7885 = vmatprep.mubr.bf16.mxu0 0
  %7886 = vmatmul.mubr.bf16.gmra.mrb[0].mxu0 %v7827
  %v7887 = vpop.f32.mrb[0].mxu0
  %v7888 = vadd.f32 0.0, %v7887
  %v7889 = vpop.f32.mrb[0].mxu0
  %v7890 = vpop.f32.mrb[0].mxu0
  %v7891 = vadd.f32 0.0, %v7890
  %v7892 = vpop.f32.mrb[0].mxu0
  %7893 = vdwg.mxu0
  %v7894 = vpack.c.bf16 %v7867, %v7864
  %v7895 = vpack.c.bf16 %v7875, %v7872
  %v7896 = vpack.c.bf16 %v7883, %v7880
  %v7897 = vpack.c.bf16 %v7891, %v7888
  %s7898 = scalar_lea.vmem %s13, 48
  %v7899 = vld [vmem:[%s7898] sm:$0xf]
  %v7900 = vld [vmem:[%s7898 + $0x4] sm:$0xf]
  %v7903 = vunpack.c.l.b16 %v7899
  %v7904 = vunpack.c.l.b16 %v7900
  %v7905 = vpack.c.b16 %v7904, %v7903
  %v7908 = vsel %vm183, %v7894, 0
  %v7911 = vsel %vm183, %v7895, 0
  %v7914 = vsel %vm183, %v7896, 0
  %v7917 = vsel %vm183, %v7897, 0
  %7919 = vmatprep.subr.bf16.mxu0 0
  %7920 = vmatpush1.bf16.msra.mxu0 %v7905
  %7921 = vmatprep.subr.bf16.mxu0 0
  %7922 = vmatpush1.bf16.msra.mxu0 0
  %7923 = vmatprep.subr.bf16.mxu0 0
  %7924 = vmatpush1.bf16.msra.mxu0 0
  %7925 = vmatprep.subr.bf16.mxu0 0
  %7926 = vmatpush1.bf16.msra.mxu0 0
  %7927 = vmatprep.subr.bf16.mxu0 0
  %7928 = vmatpush1.bf16.msra.mxu0 0
  %7929 = vmatprep.subr.bf16.mxu0 0
  %7930 = vmatpush1.bf16.msra.mxu0 0
  %7931 = vmatprep.subr.bf16.mxu0 0
  %7932 = vmatpush1.bf16.msra.mxu0 0
  %7933 = vmatprep.subr.bf16.mxu0 0
  %7934 = vmatpush1.bf16.msra.mxu0 0
  %7935 = vmatprep.subr.bf16.mxu0 0
  %7936 = vmatpush1.bf16.msra.mxu0 0
  %7937 = vmatprep.subr.bf16.mxu0 0
  %7938 = vmatpush1.bf16.msra.mxu0 0
  %7939 = vmatprep.subr.bf16.mxu0 0
  %7940 = vmatpush1.bf16.msra.mxu0 0
  %7941 = vmatprep.subr.bf16.mxu0 0
  %7942 = vmatpush1.bf16.msra.mxu0 0
  %7943 = vmatprep.subr.bf16.mxu0 0
  %7944 = vmatpush1.bf16.msra.mxu0 0
  %7945 = vmatprep.subr.bf16.mxu0 0
  %7946 = vmatpush1.bf16.msra.mxu0 0
  %7947 = vmatprep.subr.bf16.mxu0 0
  %7948 = vmatpush1.bf16.msra.mxu0 0
  %7949 = vmatprep.subr.bf16.mxu0 0
  %7950 = vmatpush1.bf16.msra.mxu0 0
  %7951 = vmatprep.mubr.bf16.mxu0 0
  %7952 = vmatmul.mubr.bf16.gmra.mrb[0].mxu0 %v7908
  %v7953 = vpop.f32.mrb[0].mxu0
  %v7954 = vadd.f32 0.0, %v7953
  %v7955 = vpop.f32.mrb[0].mxu0
  %v7956 = vpop.f32.mrb[0].mxu0
  %v7957 = vadd.f32 0.0, %v7956
  %v7958 = vpop.f32.mrb[0].mxu0
  %7959 = vmatprep.mubr.bf16.mxu0 0
  %7960 = vmatmul.mubr.bf16.gmra.mrb[0].mxu0 %v7911
  %v7961 = vpop.f32.mrb[0].mxu0
  %v7962 = vadd.f32 0.0, %v7961
  %v7963 = vpop.f32.mrb[0].mxu0
  %v7964 = vpop.f32.mrb[0].mxu0
  %v7965 = vadd.f32 0.0, %v7964
  %v7966 = vpop.f32.mrb[0].mxu0
  %7967 = vmatprep.mubr.bf16.mxu0 0
  %7968 = vmatmul.mubr.bf16.gmra.mrb[0].mxu0 %v7914
  %v7969 = vpop.f32.mrb[0].mxu0
  %v7970 = vadd.f32 0.0, %v7969
  %v7971 = vpop.f32.mrb[0].mxu0
  %v7972 = vpop.f32.mrb[0].mxu0
  %v7973 = vadd.f32 0.0, %v7972
  %v7974 = vpop.f32.mrb[0].mxu0
  %7975 = vmatprep.mubr.bf16.mxu0 0
  %7976 = vmatmul.mubr.bf16.gmra.mrb[0].mxu0 %v7917
  %v7977 = vpop.f32.mrb[0].mxu0
  %v7978 = vadd.f32 0.0, %v7977
  %v7979 = vpop.f32.mrb[0].mxu0
  %v7980 = vpop.f32.mrb[0].mxu0
  %v7981 = vadd.f32 0.0, %v7980
  %v7982 = vpop.f32.mrb[0].mxu0
  %7983 = vdwg.mxu0
  %v7984 = vadd.f32 %v7332, %v7954
  %v7985 = vadd.f32 %v7335, %v7957
  %v7986 = vadd.f32 %v7340, %v7962
  %v7987 = vadd.f32 %v7343, %v7965
  %v7988 = vadd.f32 %v7348, %v7970
  %v7989 = vadd.f32 %v7351, %v7973
  %v7990 = vadd.f32 %v7356, %v7978
  %v7991 = vadd.f32 %v7359, %v7981
  %s7992 = scalar_lea.vmem %s7, 224
  %v7993 = vld [vmem:[%s7992] sm:$0xf]
  %v7994 = vld [vmem:[%s7992 + $0x4] sm:$0xf]
  %v7995 = vld [vmem:[%s7992 + $0x8] sm:$0xf]
  %v7996 = vld [vmem:[%s7992 + $0xc] sm:$0xf]
  %v7997 = vld [vmem:[%s7992 + $0x10] sm:$0xf]
  %v7998 = vld [vmem:[%s7992 + $0x14] sm:$0xf]
  %v7999 = vld [vmem:[%s7992 + $0x18] sm:$0xf]
  %v8000 = vld [vmem:[%s7992 + $0x1c] sm:$0xf]
  %s8001 = scalar_lea.vmem %s8, 7
  %v8002 = vld [vmem:[%s8001] sm:$0x1]
  %v8004 = vlaneseq
  %v8005 = vshrl.u32 %v8004, 7
  %v8006 = vsub.s32 0, %v8005
  %v8007 = vrot.slane %v8002, %v8006
  %v8017 = vunpack.c.l.b16 %v7993
  %v8018 = vunpack.c.l.b16 %v7994
  %v8019 = vunpack.c.l.b16 %v7995
  %v8020 = vunpack.c.l.b16 %v7996
  %v8021 = vunpack.c.l.b16 %v7997
  %v8022 = vunpack.c.l.b16 %v7998
  %v8023 = vunpack.c.l.b16 %v7999
  %v8024 = vunpack.c.l.b16 %v8000
  %v8025 = vpack.c.b16 %v8018, %v8017
  %v8026 = vpack.c.b16 %v8020, %v8019
  %v8027 = vpack.c.b16 %v8022, %v8021
  %v8028 = vpack.c.b16 %v8024, %v8023
  %8033 = vmatprep.subr.bf16.mxu0 0
  %8034 = vmatpush1.bf16.msra.mxu0 %v8025
  %8035 = vmatprep.subr.bf16.mxu0 0
  %8036 = vmatpush1.bf16.msra.mxu0 %v8026
  %8037 = vmatprep.subr.bf16.mxu0 0
  %8038 = vmatpush1.bf16.msra.mxu0 %v8027
  %8039 = vmatprep.subr.bf16.mxu0 0
  %8040 = vmatpush1.bf16.msra.mxu0 %v8028
  %8041 = vmatprep.subr.bf16.mxu0 0
  %8042 = vmatpush1.bf16.msra.mxu0 0
  %8043 = vmatprep.subr.bf16.mxu0 0
  %8044 = vmatpush1.bf16.msra.mxu0 0
  %8045 = vmatprep.subr.bf16.mxu0 0
  %8046 = vmatpush1.bf16.msra.mxu0 0
  %8047 = vmatprep.subr.bf16.mxu0 0
  %8048 = vmatpush1.bf16.msra.mxu0 0
  %8049 = vmatprep.subr.bf16.mxu0 0
  %8050 = vmatpush1.bf16.msra.mxu0 0
  %8051 = vmatprep.subr.bf16.mxu0 0
  %8052 = vmatpush1.bf16.msra.mxu0 0
  %8053 = vmatprep.subr.bf16.mxu0 0
  %8054 = vmatpush1.bf16.msra.mxu0 0
  %8055 = vmatprep.subr.bf16.mxu0 0
  %8056 = vmatpush1.bf16.msra.mxu0 0
  %8057 = vmatprep.subr.bf16.mxu0 0
  %8058 = vmatpush1.bf16.msra.mxu0 0
  %8059 = vmatprep.subr.bf16.mxu0 0
  %8060 = vmatpush1.bf16.msra.mxu0 0
  %8061 = vmatprep.subr.bf16.mxu0 0
  %8062 = vmatpush1.bf16.msra.mxu0 0
  %8063 = vmatprep.subr.bf16.mxu0 0
  %8064 = vmatpush1.bf16.msra.mxu0 0
  %8065 = vmatprep.mubr.bf16.mxu0 0
  %8066 = vmatmul.mubr.bf16.gmra.mrb[0].mxu0 %v6148
  %v8067 = vpop.f32.mrb[0].mxu0
  %v8068 = vadd.f32 %v8007, %v8067
  %v8069 = vpop.f32.mrb[0].mxu0
  %v8070 = vpop.f32.mrb[0].mxu0
  %v8071 = vadd.f32 %v8007, %v8070
  %v8072 = vpop.f32.mrb[0].mxu0
  %8073 = vmatprep.mubr.bf16.mxu0 0
  %8074 = vmatmul.mubr.bf16.gmra.mrb[0].mxu0 %v6151
  %v8075 = vpop.f32.mrb[0].mxu0
  %v8076 = vadd.f32 %v8007, %v8075
  %v8077 = vpop.f32.mrb[0].mxu0
  %v8078 = vpop.f32.mrb[0].mxu0
  %v8079 = vadd.f32 %v8007, %v8078
  %v8080 = vpop.f32.mrb[0].mxu0
  %8081 = vmatprep.mubr.bf16.mxu0 0
  %8082 = vmatmul.mubr.bf16.gmra.mrb[0].mxu0 %v6154
  %v8083 = vpop.f32.mrb[0].mxu0
  %v8084 = vadd.f32 %v8007, %v8083
  %v8085 = vpop.f32.mrb[0].mxu0
  %v8086 = vpop.f32.mrb[0].mxu0
  %v8087 = vadd.f32 %v8007, %v8086
  %v8088 = vpop.f32.mrb[0].mxu0
  %8089 = vmatprep.mubr.bf16.mxu0 0
  %8090 = vmatmul.mubr.bf16.gmra.mrb[0].mxu0 %v6157
  %v8091 = vpop.f32.mrb[0].mxu0
  %v8092 = vadd.f32 %v8007, %v8091
  %v8093 = vpop.f32.mrb[0].mxu0
  %v8094 = vpop.f32.mrb[0].mxu0
  %v8095 = vadd.f32 %v8007, %v8094
  %v8096 = vpop.f32.mrb[0].mxu0
  %8097 = vdwg.mxu0
  %s8098 = scalar_lea.vmem %s9, 56
  %v8099 = vld [vmem:[%s8098] sm:$0xf]
  %v8100 = vld [vmem:[%s8098 + $0x4] sm:$0xf]
  %s8101 = scalar_lea.vmem %s10, 112
  %v8102 = vld [vmem:[%s8101] sm:$0xff]
  %v8103 = vld [vmem:[%s8101 + $0x8] sm:$0xff]
  %8105 = vset.pattern.permute.xlu0 0
  %8106 = vperm.xlu0 %8105, %v8102
  %v8107 = vpop.permute.xlu0 %8106
  %8110 = vset.pattern.permute.xlu0 0
  %8111 = vperm.xlu0 %8110, %v8103
  %v8112 = vpop.permute.xlu0 %8111
  %v8116 = vunpack.c.l.b16 %v8099
  %v8117 = vunpack.c.l.b16 %v8100
  %v8118 = vpack.c.b16 %v8117, %v8116
  %v8120 = vsel %vm261, %v8118, 0
  %8122 = vmatprep.subr.bf16.mxu0 0
  %8123 = vmatpush1.bf16.msra.mxu0 %v6102
  %8124 = vmatprep.subr.bf16.mxu0 0
  %8125 = vmatpush1.bf16.msra.mxu0 %v6103
  %8126 = vmatprep.subr.bf16.mxu0 0
  %8127 = vmatpush1.bf16.msra.mxu0 %v6104
  %8128 = vmatprep.subr.bf16.mxu0 0
  %8129 = vmatpush1.bf16.msra.mxu0 %v6105
  %8130 = vmatprep.subr.bf16.mxu0 0
  %8131 = vmatpush1.bf16.msra.mxu0 0
  %8132 = vmatprep.subr.bf16.mxu0 0
  %8133 = vmatpush1.bf16.msra.mxu0 0
  %8134 = vmatprep.subr.bf16.mxu0 0
  %8135 = vmatpush1.bf16.msra.mxu0 0
  %8136 = vmatprep.subr.bf16.mxu0 0
  %8137 = vmatpush1.bf16.msra.mxu0 0
  %8138 = vmatprep.subr.bf16.mxu0 0
  %8139 = vmatpush1.bf16.msra.mxu0 0
  %8140 = vmatprep.subr.bf16.mxu0 0
  %8141 = vmatpush1.bf16.msra.mxu0 0
  %8142 = vmatprep.subr.bf16.mxu0 0
  %8143 = vmatpush1.bf16.msra.mxu0 0
  %8144 = vmatprep.subr.bf16.mxu0 0
  %8145 = vmatpush1.bf16.msra.mxu0 0
  %8146 = vmatprep.subr.bf16.mxu0 0
  %8147 = vmatpush1.bf16.msra.mxu0 0
  %8148 = vmatprep.subr.bf16.mxu0 0
  %8149 = vmatpush1.bf16.msra.mxu0 0
  %8150 = vmatprep.subr.bf16.mxu0 0
  %8151 = vmatpush1.bf16.msra.mxu0 0
  %8152 = vmatprep.subr.bf16.mxu0 0
  %8153 = vmatpush1.bf16.msra.mxu0 0
  %8154 = vmatprep.mubr.bf16.mxu0 0
  %8155 = vmatmul.mubr.bf16.gmra.mrb[0].mxu0 %v8120
  %v8156 = vpop.f32.mrb[0].mxu0
  %v8157 = vadd.f32 %v8107, %v8156
  %v8158 = vpop.f32.mrb[0].mxu0
  %v8159 = vpop.f32.mrb[0].mxu0
  %v8160 = vadd.f32 %v8112, %v8159
  %v8161 = vpop.f32.mrb[0].mxu0
  %8162 = vdwg.mxu0
  %s8163 = scalar_lea.vmem %s11, 224
  %v8164 = vld [vmem:[%s8163] sm:$0xf]
  %v8165 = vld [vmem:[%s8163 + $0x4] sm:$0xf]
  %v8166 = vld [vmem:[%s8163 + $0x8] sm:$0xf]
  %v8167 = vld [vmem:[%s8163 + $0xc] sm:$0xf]
  %v8168 = vld [vmem:[%s8163 + $0x10] sm:$0xf]
  %v8169 = vld [vmem:[%s8163 + $0x14] sm:$0xf]
  %v8170 = vld [vmem:[%s8163 + $0x18] sm:$0xf]
  %v8171 = vld [vmem:[%s8163 + $0x1c] sm:$0xf]
  %s8172 = scalar_lea.vmem %s12, 7
  %v8173 = vld [vmem:[%s8172] sm:$0x1]
  %v8175 = vlaneseq
  %v8176 = vshrl.u32 %v8175, 7
  %v8177 = vsub.s32 0, %v8176
  %v8178 = vrot.slane %v8173, %v8177
  %v8188 = vunpack.c.l.b16 %v8164
  %v8189 = vunpack.c.l.b16 %v8165
  %v8190 = vunpack.c.l.b16 %v8166
  %v8191 = vunpack.c.l.b16 %v8167
  %v8192 = vunpack.c.l.b16 %v8168
  %v8193 = vunpack.c.l.b16 %v8169
  %v8194 = vunpack.c.l.b16 %v8170
  %v8195 = vunpack.c.l.b16 %v8171
  %v8196 = vpack.c.b16 %v8189, %v8188
  %v8197 = vpack.c.b16 %v8191, %v8190
  %v8198 = vpack.c.b16 %v8193, %v8192
  %v8199 = vpack.c.b16 %v8195, %v8194
  %8204 = vmatprep.subr.bf16.mxu0 0
  %8205 = vmatpush1.bf16.msra.mxu0 %v8196
  %8206 = vmatprep.subr.bf16.mxu0 0
  %8207 = vmatpush1.bf16.msra.mxu0 %v8197
  %8208 = vmatprep.subr.bf16.mxu0 0
  %8209 = vmatpush1.bf16.msra.mxu0 %v8198
  %8210 = vmatprep.subr.bf16.mxu0 0
  %8211 = vmatpush1.bf16.msra.mxu0 %v8199
  %8212 = vmatprep.subr.bf16.mxu0 0
  %8213 = vmatpush1.bf16.msra.mxu0 0
  %8214 = vmatprep.subr.bf16.mxu0 0
  %8215 = vmatpush1.bf16.msra.mxu0 0
  %8216 = vmatprep.subr.bf16.mxu0 0
  %8217 = vmatpush1.bf16.msra.mxu0 0
  %8218 = vmatprep.subr.bf16.mxu0 0
  %8219 = vmatpush1.bf16.msra.mxu0 0
  %8220 = vmatprep.subr.bf16.mxu0 0
  %8221 = vmatpush1.bf16.msra.mxu0 0
  %8222 = vmatprep.subr.bf16.mxu0 0
  %8223 = vmatpush1.bf16.msra.mxu0 0
  %8224 = vmatprep.subr.bf16.mxu0 0
  %8225 = vmatpush1.bf16.msra.mxu0 0
  %8226 = vmatprep.subr.bf16.mxu0 0
  %8227 = vmatpush1.bf16.msra.mxu0 0
  %8228 = vmatprep.subr.bf16.mxu0 0
  %8229 = vmatpush1.bf16.msra.mxu0 0
  %8230 = vmatprep.subr.bf16.mxu0 0
  %8231 = vmatpush1.bf16.msra.mxu0 0
  %8232 = vmatprep.subr.bf16.mxu0 0
  %8233 = vmatpush1.bf16.msra.mxu0 0
  %8234 = vmatprep.subr.bf16.mxu0 0
  %8235 = vmatpush1.bf16.msra.mxu0 0
  %8236 = vmatprep.mubr.bf16.mxu0 0
  %8237 = vmatmul.mubr.bf16.gmra.mrb[0].mxu0 %v6148
  %v8238 = vpop.f32.mrb[0].mxu0
  %v8239 = vadd.f32 %v8178, %v8238
  %v8240 = vpop.f32.mrb[0].mxu0
  %v8241 = vpop.f32.mrb[0].mxu0
  %v8242 = vadd.f32 %v8178, %v8241
  %v8243 = vpop.f32.mrb[0].mxu0
  %8244 = vmatprep.mubr.bf16.mxu0 0
  %8245 = vmatmul.mubr.bf16.gmra.mrb[0].mxu0 %v6151
  %v8246 = vpop.f32.mrb[0].mxu0
  %v8247 = vadd.f32 %v8178, %v8246
  %v8248 = vpop.f32.mrb[0].mxu0
  %v8249 = vpop.f32.mrb[0].mxu0
  %v8250 = vadd.f32 %v8178, %v8249
  %v8251 = vpop.f32.mrb[0].mxu0
  %8252 = vmatprep.mubr.bf16.mxu0 0
  %8253 = vmatmul.mubr.bf16.gmra.mrb[0].mxu0 %v6154
  %v8254 = vpop.f32.mrb[0].mxu0
  %v8255 = vadd.f32 %v8178, %v8254
  %v8256 = vpop.f32.mrb[0].mxu0
  %v8257 = vpop.f32.mrb[0].mxu0
  %v8258 = vadd.f32 %v8178, %v8257
  %v8259 = vpop.f32.mrb[0].mxu0
  %8260 = vmatprep.mubr.bf16.mxu0 0
  %8261 = vmatmul.mubr.bf16.gmra.mrb[0].mxu0 %v6157
  %v8262 = vpop.f32.mrb[0].mxu0
  %v8263 = vadd.f32 %v8178, %v8262
  %v8264 = vpop.f32.mrb[0].mxu0
  %v8265 = vpop.f32.mrb[0].mxu0
  %v8266 = vadd.f32 %v8178, %v8265
  %v8267 = vpop.f32.mrb[0].mxu0
  %8268 = vdwg.mxu0
  %v8269 = vpack.c.bf16 %v8071, %v8068
  %v8270 = vpack.c.bf16 %v8079, %v8076
  %v8271 = vpack.c.bf16 %v8087, %v8084
  %v8272 = vpack.c.bf16 %v8095, %v8092
  %v8273 = vpack.c.bf16 %v8160, %v8157
  %v8275 = vsel %vm183, %v8269, 0
  %v8278 = vsel %vm183, %v8270, 0
  %v8281 = vsel %vm183, %v8271, 0
  %v8284 = vsel %vm183, %v8272, 0
  %8286 = vmatprep.subr.bf16.mxu0 0
  %8287 = vmatpush1.bf16.msra.mxu0 %v8273
  %8288 = vmatprep.subr.bf16.mxu0 0
  %8289 = vmatpush1.bf16.msra.mxu0 0
  %8290 = vmatprep.subr.bf16.mxu0 0
  %8291 = vmatpush1.bf16.msra.mxu0 0
  %8292 = vmatprep.subr.bf16.mxu0 0
  %8293 = vmatpush1.bf16.msra.mxu0 0
  %8294 = vmatprep.subr.bf16.mxu0 0
  %8295 = vmatpush1.bf16.msra.mxu0 0
  %8296 = vmatprep.subr.bf16.mxu0 0
  %8297 = vmatpush1.bf16.msra.mxu0 0
  %8298 = vmatprep.subr.bf16.mxu0 0
  %8299 = vmatpush1.bf16.msra.mxu0 0
  %8300 = vmatprep.subr.bf16.mxu0 0
  %8301 = vmatpush1.bf16.msra.mxu0 0
  %8302 = vmatprep.subr.bf16.mxu0 0
  %8303 = vmatpush1.bf16.msra.mxu0 0
  %8304 = vmatprep.subr.bf16.mxu0 0
  %8305 = vmatpush1.bf16.msra.mxu0 0
  %8306 = vmatprep.subr.bf16.mxu0 0
  %8307 = vmatpush1.bf16.msra.mxu0 0
  %8308 = vmatprep.subr.bf16.mxu0 0
  %8309 = vmatpush1.bf16.msra.mxu0 0
  %8310 = vmatprep.subr.bf16.mxu0 0
  %8311 = vmatpush1.bf16.msra.mxu0 0
  %8312 = vmatprep.subr.bf16.mxu0 0
  %8313 = vmatpush1.bf16.msra.mxu0 0
  %8314 = vmatprep.subr.bf16.mxu0 0
  %8315 = vmatpush1.bf16.msra.mxu0 0
  %8316 = vmatprep.subr.bf16.mxu0 0
  %8317 = vmatpush1.bf16.msra.mxu0 0
  %8318 = vmatprep.mubr.bf16.mxu0 0
  %8319 = vmatmul.mubr.bf16.gmra.mrb[0].mxu0 %v8275
  %v8320 = vpop.f32.mrb[0].mxu0
  %v8321 = vadd.f32 0.0, %v8320
  %v8322 = vpop.f32.mrb[0].mxu0
  %v8323 = vpop.f32.mrb[0].mxu0
  %v8324 = vadd.f32 0.0, %v8323
  %v8325 = vpop.f32.mrb[0].mxu0
  %8326 = vmatprep.mubr.bf16.mxu0 0
  %8327 = vmatmul.mubr.bf16.gmra.mrb[0].mxu0 %v8278
  %v8328 = vpop.f32.mrb[0].mxu0
  %v8329 = vadd.f32 0.0, %v8328
  %v8330 = vpop.f32.mrb[0].mxu0
  %v8331 = vpop.f32.mrb[0].mxu0
  %v8332 = vadd.f32 0.0, %v8331
  %v8333 = vpop.f32.mrb[0].mxu0
  %8334 = vmatprep.mubr.bf16.mxu0 0
  %8335 = vmatmul.mubr.bf16.gmra.mrb[0].mxu0 %v8281
  %v8336 = vpop.f32.mrb[0].mxu0
  %v8337 = vadd.f32 0.0, %v8336
  %v8338 = vpop.f32.mrb[0].mxu0
  %v8339 = vpop.f32.mrb[0].mxu0
  %v8340 = vadd.f32 0.0, %v8339
  %v8341 = vpop.f32.mrb[0].mxu0
  %8342 = vmatprep.mubr.bf16.mxu0 0
  %8343 = vmatmul.mubr.bf16.gmra.mrb[0].mxu0 %v8284
  %v8344 = vpop.f32.mrb[0].mxu0
  %v8345 = vadd.f32 0.0, %v8344
  %v8346 = vpop.f32.mrb[0].mxu0
  %v8347 = vpop.f32.mrb[0].mxu0
  %v8348 = vadd.f32 0.0, %v8347
  %v8349 = vpop.f32.mrb[0].mxu0
  %8350 = vdwg.mxu0
  %v8351 = vsel %vm261, %v8321, -inf
  %8352 = vmax.xlane.f32.xlu0 %v8351
  %v8353 = vpop.xlane.xlu0 %8352
  %v8354 = vsel %vm261, %v8324, -inf
  %8355 = vmax.xlane.f32.xlu0 %v8354
  %v8356 = vpop.xlane.xlu0 %8355
  %v8357 = vsel %vm261, %v8329, -inf
  %8358 = vmax.xlane.f32.xlu0 %v8357
  %v8359 = vpop.xlane.xlu0 %8358
  %v8360 = vsel %vm261, %v8332, -inf
  %8361 = vmax.xlane.f32.xlu0 %v8360
  %v8362 = vpop.xlane.xlu0 %8361
  %v8363 = vsel %vm261, %v8337, -inf
  %8364 = vmax.xlane.f32.xlu0 %v8363
  %v8365 = vpop.xlane.xlu0 %8364
  %v8366 = vsel %vm261, %v8340, -inf
  %8367 = vmax.xlane.f32.xlu0 %v8366
  %v8368 = vpop.xlane.xlu0 %8367
  %v8369 = vsel %vm261, %v8345, -inf
  %8370 = vmax.xlane.f32.xlu0 %v8369
  %v8371 = vpop.xlane.xlu0 %8370
  %v8372 = vsel %vm261, %v8348, -inf
  %8373 = vmax.xlane.f32.xlu0 %v8372
  %v8374 = vpop.xlane.xlu0 %8373
  %v8375 = vsub.f32 %v8321, %v8353
  %v8376 = vsub.f32 %v8324, %v8356
  %v8377 = vsub.f32 %v8329, %v8359
  %v8378 = vsub.f32 %v8332, %v8362
  %v8379 = vsub.f32 %v8337, %v8365
  %v8380 = vsub.f32 %v8340, %v8368
  %v8381 = vsub.f32 %v8345, %v8371
  %v8382 = vsub.f32 %v8348, %v8374
  %v8383 = vmul.f32 %v8375, 1.442695
  %v8384 = vpow.pop %v8383
  %v8385 = vmul.f32 %v8376, 1.442695
  %v8386 = vpow.pop %v8385
  %v8387 = vmul.f32 %v8377, 1.442695
  %v8388 = vpow.pop %v8387
  %v8389 = vmul.f32 %v8378, 1.442695
  %v8390 = vpow.pop %v8389
  %v8391 = vmul.f32 %v8379, 1.442695
  %v8392 = vpow.pop %v8391
  %v8393 = vmul.f32 %v8380, 1.442695
  %v8394 = vpow.pop %v8393
  %v8395 = vmul.f32 %v8381, 1.442695
  %v8396 = vpow.pop %v8395
  %v8397 = vmul.f32 %v8382, 1.442695
  %v8398 = vpow.pop %v8397
  %v8399 = vsel %vm261, %v8384, 0.0
  %8400 = vadd.xlane.f32.xlu0 %v8399
  %v8401 = vpop.xlane.xlu0 %8400
  %v8402 = vsel %vm261, %v8386, 0.0
  %8403 = vadd.xlane.f32.xlu0 %v8402
  %v8404 = vpop.xlane.xlu0 %8403
  %v8405 = vsel %vm261, %v8388, 0.0
  %8406 = vadd.xlane.f32.xlu0 %v8405
  %v8407 = vpop.xlane.xlu0 %8406
  %v8408 = vsel %vm261, %v8390, 0.0
  %8409 = vadd.xlane.f32.xlu0 %v8408
  %v8410 = vpop.xlane.xlu0 %8409
  %v8411 = vsel %vm261, %v8392, 0.0
  %8412 = vadd.xlane.f32.xlu0 %v8411
  %v8413 = vpop.xlane.xlu0 %8412
  %v8414 = vsel %vm261, %v8394, 0.0
  %8415 = vadd.xlane.f32.xlu0 %v8414
  %v8416 = vpop.xlane.xlu0 %8415
  %v8417 = vsel %vm261, %v8396, 0.0
  %8418 = vadd.xlane.f32.xlu0 %v8417
  %v8419 = vpop.xlane.xlu0 %8418
  %v8420 = vsel %vm261, %v8398, 0.0
  %8421 = vadd.xlane.f32.xlu0 %v8420
  %v8422 = vpop.xlane.xlu0 %8421
  %v8423 = vrcp.pop %v8401
  %v8424 = vrcp.pop %v8404
  %v8425 = vrcp.pop %v8407
  %v8426 = vrcp.pop %v8410
  %v8427 = vrcp.pop %v8413
  %v8428 = vrcp.pop %v8416
  %v8429 = vrcp.pop %v8419
  %v8430 = vrcp.pop %v8422
  %v8431 = vmul.f32 %v8384, %v8423
  %v8432 = vmul.f32 %v8386, %v8424
  %v8433 = vmul.f32 %v8388, %v8425
  %v8434 = vmul.f32 %v8390, %v8426
  %v8435 = vmul.f32 %v8392, %v8427
  %v8436 = vmul.f32 %v8394, %v8428
  %v8437 = vmul.f32 %v8396, %v8429
  %v8438 = vmul.f32 %v8398, %v8430
  %v8439 = vpack.c.bf16 %v8432, %v8431
  %v8440 = vpack.c.bf16 %v8434, %v8433
  %v8441 = vpack.c.bf16 %v8436, %v8435
  %v8442 = vpack.c.bf16 %v8438, %v8437
  %v8443 = vpack.c.bf16 %v8242, %v8239
  %v8444 = vpack.c.bf16 %v8250, %v8247
  %v8445 = vpack.c.bf16 %v8258, %v8255
  %v8446 = vpack.c.bf16 %v8266, %v8263
  %v8448 = vsel %vm261, %v8439, 0
  %v8451 = vsel %vm261, %v8440, 0
  %v8454 = vsel %vm261, %v8441, 0
  %v8457 = vsel %vm261, %v8442, 0
  %8459 = vmatprep.subr.bf16.mxu0 0
  %8460 = vmatpush1.bf16.msra.mxu0 %v8443
  %8461 = vmatprep.subr.bf16.mxu0 0
  %8462 = vmatpush1.bf16.msra.mxu0 %v8444
  %8463 = vmatprep.subr.bf16.mxu0 0
  %8464 = vmatpush1.bf16.msra.mxu0 %v8445
  %8465 = vmatprep.subr.bf16.mxu0 0
  %8466 = vmatpush1.bf16.msra.mxu0 %v8446
  %8467 = vmatprep.subr.bf16.mxu0 0
  %8468 = vmatpush1.bf16.msra.mxu0 0
  %8469 = vmatprep.subr.bf16.mxu0 0
  %8470 = vmatpush1.bf16.msra.mxu0 0
  %8471 = vmatprep.subr.bf16.mxu0 0
  %8472 = vmatpush1.bf16.msra.mxu0 0
  %8473 = vmatprep.subr.bf16.mxu0 0
  %8474 = vmatpush1.bf16.msra.mxu0 0
  %8475 = vmatprep.subr.bf16.mxu0 0
  %8476 = vmatpush1.bf16.msra.mxu0 0
  %8477 = vmatprep.subr.bf16.mxu0 0
  %8478 = vmatpush1.bf16.msra.mxu0 0
  %8479 = vmatprep.subr.bf16.mxu0 0
  %8480 = vmatpush1.bf16.msra.mxu0 0
  %8481 = vmatprep.subr.bf16.mxu0 0
  %8482 = vmatpush1.bf16.msra.mxu0 0
  %8483 = vmatprep.subr.bf16.mxu0 0
  %8484 = vmatpush1.bf16.msra.mxu0 0
  %8485 = vmatprep.subr.bf16.mxu0 0
  %8486 = vmatpush1.bf16.msra.mxu0 0
  %8487 = vmatprep.subr.bf16.mxu0 0
  %8488 = vmatpush1.bf16.msra.mxu0 0
  %8489 = vmatprep.subr.bf16.mxu0 0
  %8490 = vmatpush1.bf16.msra.mxu0 0
  %8491 = vmatprep.mubr.bf16.mxu0 0
  %8492 = vmatmul.mubr.bf16.gmra.mrb[0].mxu0 %v8448
  %v8493 = vpop.f32.mrb[0].mxu0
  %v8494 = vadd.f32 0.0, %v8493
  %v8495 = vpop.f32.mrb[0].mxu0
  %v8496 = vpop.f32.mrb[0].mxu0
  %v8497 = vadd.f32 0.0, %v8496
  %v8498 = vpop.f32.mrb[0].mxu0
  %8499 = vmatprep.mubr.bf16.mxu0 0
  %8500 = vmatmul.mubr.bf16.gmra.mrb[0].mxu0 %v8451
  %v8501 = vpop.f32.mrb[0].mxu0
  %v8502 = vadd.f32 0.0, %v8501
  %v8503 = vpop.f32.mrb[0].mxu0
  %v8504 = vpop.f32.mrb[0].mxu0
  %v8505 = vadd.f32 0.0, %v8504
  %v8506 = vpop.f32.mrb[0].mxu0
  %8507 = vmatprep.mubr.bf16.mxu0 0
  %8508 = vmatmul.mubr.bf16.gmra.mrb[0].mxu0 %v8454
  %v8509 = vpop.f32.mrb[0].mxu0
  %v8510 = vadd.f32 0.0, %v8509
  %v8511 = vpop.f32.mrb[0].mxu0
  %v8512 = vpop.f32.mrb[0].mxu0
  %v8513 = vadd.f32 0.0, %v8512
  %v8514 = vpop.f32.mrb[0].mxu0
  %8515 = vmatprep.mubr.bf16.mxu0 0
  %8516 = vmatmul.mubr.bf16.gmra.mrb[0].mxu0 %v8457
  %v8517 = vpop.f32.mrb[0].mxu0
  %v8518 = vadd.f32 0.0, %v8517
  %v8519 = vpop.f32.mrb[0].mxu0
  %v8520 = vpop.f32.mrb[0].mxu0
  %v8521 = vadd.f32 0.0, %v8520
  %v8522 = vpop.f32.mrb[0].mxu0
  %8523 = vdwg.mxu0
  %v8524 = vpack.c.bf16 %v8497, %v8494
  %v8525 = vpack.c.bf16 %v8505, %v8502
  %v8526 = vpack.c.bf16 %v8513, %v8510
  %v8527 = vpack.c.bf16 %v8521, %v8518
  %s8528 = scalar_lea.vmem %s13, 56
  %v8529 = vld [vmem:[%s8528] sm:$0xf]
  %v8530 = vld [vmem:[%s8528 + $0x4] sm:$0xf]
  %v8533 = vunpack.c.l.b16 %v8529
  %v8534 = vunpack.c.l.b16 %v8530
  %v8535 = vpack.c.b16 %v8534, %v8533
  %v8538 = vsel %vm183, %v8524, 0
  %v8541 = vsel %vm183, %v8525, 0
  %v8544 = vsel %vm183, %v8526, 0
  %v8547 = vsel %vm183, %v8527, 0
  %8549 = vmatprep.subr.bf16.mxu0 0
  %8550 = vmatpush1.bf16.msra.mxu0 %v8535
  %8551 = vmatprep.subr.bf16.mxu0 0
  %8552 = vmatpush1.bf16.msra.mxu0 0
  %8553 = vmatprep.subr.bf16.mxu0 0
  %8554 = vmatpush1.bf16.msra.mxu0 0
  %8555 = vmatprep.subr.bf16.mxu0 0
  %8556 = vmatpush1.bf16.msra.mxu0 0
  %8557 = vmatprep.subr.bf16.mxu0 0
  %8558 = vmatpush1.bf16.msra.mxu0 0
  %8559 = vmatprep.subr.bf16.mxu0 0
  %8560 = vmatpush1.bf16.msra.mxu0 0
  %8561 = vmatprep.subr.bf16.mxu0 0
  %8562 = vmatpush1.bf16.msra.mxu0 0
  %8563 = vmatprep.subr.bf16.mxu0 0
  %8564 = vmatpush1.bf16.msra.mxu0 0
  %8565 = vmatprep.subr.bf16.mxu0 0
  %8566 = vmatpush1.bf16.msra.mxu0 0
  %8567 = vmatprep.subr.bf16.mxu0 0
  %8568 = vmatpush1.bf16.msra.mxu0 0
  %8569 = vmatprep.subr.bf16.mxu0 0
  %8570 = vmatpush1.bf16.msra.mxu0 0
  %8571 = vmatprep.subr.bf16.mxu0 0
  %8572 = vmatpush1.bf16.msra.mxu0 0
  %8573 = vmatprep.subr.bf16.mxu0 0
  %8574 = vmatpush1.bf16.msra.mxu0 0
  %8575 = vmatprep.subr.bf16.mxu0 0
  %8576 = vmatpush1.bf16.msra.mxu0 0
  %8577 = vmatprep.subr.bf16.mxu0 0
  %8578 = vmatpush1.bf16.msra.mxu0 0
  %8579 = vmatprep.subr.bf16.mxu0 0
  %8580 = vmatpush1.bf16.msra.mxu0 0
  %8581 = vmatprep.mubr.bf16.mxu0 0
  %8582 = vmatmul.mubr.bf16.gmra.mrb[0].mxu0 %v8538
  %v8583 = vpop.f32.mrb[0].mxu0
  %v8584 = vadd.f32 0.0, %v8583
  %v8585 = vpop.f32.mrb[0].mxu0
  %v8586 = vpop.f32.mrb[0].mxu0
  %v8587 = vadd.f32 0.0, %v8586
  %v8588 = vpop.f32.mrb[0].mxu0
  %8589 = vmatprep.mubr.bf16.mxu0 0
  %8590 = vmatmul.mubr.bf16.gmra.mrb[0].mxu0 %v8541
  %v8591 = vpop.f32.mrb[0].mxu0
  %v8592 = vadd.f32 0.0, %v8591
  %v8593 = vpop.f32.mrb[0].mxu0
  %v8594 = vpop.f32.mrb[0].mxu0
  %v8595 = vadd.f32 0.0, %v8594
  %v8596 = vpop.f32.mrb[0].mxu0
  %8597 = vmatprep.mubr.bf16.mxu0 0
  %8598 = vmatmul.mubr.bf16.gmra.mrb[0].mxu0 %v8544
  %v8599 = vpop.f32.mrb[0].mxu0
  %v8600 = vadd.f32 0.0, %v8599
  %v8601 = vpop.f32.mrb[0].mxu0
  %v8602 = vpop.f32.mrb[0].mxu0
  %v8603 = vadd.f32 0.0, %v8602
  %v8604 = vpop.f32.mrb[0].mxu0
  %8605 = vmatprep.mubr.bf16.mxu0 0
  %8606 = vmatmul.mubr.bf16.gmra.mrb[0].mxu0 %v8547
  %v8607 = vpop.f32.mrb[0].mxu0
  %v8608 = vadd.f32 0.0, %v8607
  %v8609 = vpop.f32.mrb[0].mxu0
  %v8610 = vpop.f32.mrb[0].mxu0
  %v8611 = vadd.f32 0.0, %v8610
  %v8612 = vpop.f32.mrb[0].mxu0
  %8613 = vdwg.mxu0
  %v8614 = vadd.f32 %v7984, %v8584
  %v8615 = vadd.f32 %v7985, %v8587
  %v8616 = vadd.f32 %v7986, %v8592
  %v8617 = vadd.f32 %v7987, %v8595
  %v8618 = vadd.f32 %v7988, %v8600
  %v8619 = vadd.f32 %v7989, %v8603
  %v8620 = vadd.f32 %v7990, %v8608
  %v8621 = vadd.f32 %v7991, %v8611
  %s8622 = scalar_lea.vmem %s14, 1
  %v8623 = vld [vmem:[%s8622] sm:$0x1]
  %v8625 = vlaneseq
  %v8626 = vshrl.u32 %v8625, 7
  %v8627 = vsub.s32 0, %v8626
  %v8628 = vrot.slane %v8623, %v8627
  %v8630 = vadd.f32 %v8614, %v8628
  %v8631 = vadd.f32 %v8615, %v8628
  %v8632 = vadd.f32 %v8616, %v8628
  %v8633 = vadd.f32 %v8617, %v8628
  %v8634 = vadd.f32 %v8618, %v8628
  %v8635 = vadd.f32 %v8619, %v8628
  %v8636 = vadd.f32 %v8620, %v8628
  %v8637 = vadd.f32 %v8621, %v8628
  %v8638 = vadd.f32 %v6058, %v8630
  %v8639 = vadd.f32 %v6059, %v8631
  %v8640 = vadd.f32 %v6060, %v8632
  %v8641 = vadd.f32 %v6061, %v8633
  %v8642 = vadd.f32 %v6062, %v8634
  %v8643 = vadd.f32 %v6063, %v8635
  %v8644 = vadd.f32 %v6064, %v8636
  %v8645 = vadd.f32 %v6065, %v8637
  %s8646 = scalar_lea.vmem %s15, 1
  %v8647 = vld [vmem:[%s8646] sm:$0x1]
  %s8648 = scalar_lea.vmem %s16, 1
  %v8649 = vld [vmem:[%s8648] sm:$0x1]
  %v8650 = vsel %vm261, %v8638, 0.0
  %8651 = vadd.xlane.f32.xlu0 %v8650
  %v8652 = vpop.xlane.xlu0 %8651
  %v8653 = vsel %vm261, %v8639, 0.0
  %8654 = vadd.xlane.f32.xlu0 %v8653
  %v8655 = vpop.xlane.xlu0 %8654
  %v8656 = vsel %vm261, %v8640, 0.0
  %8657 = vadd.xlane.f32.xlu0 %v8656
  %v8658 = vpop.xlane.xlu0 %8657
  %v8659 = vsel %vm261, %v8641, 0.0
  %8660 = vadd.xlane.f32.xlu0 %v8659
  %v8661 = vpop.xlane.xlu0 %8660
  %v8662 = vsel %vm261, %v8642, 0.0
  %8663 = vadd.xlane.f32.xlu0 %v8662
  %v8664 = vpop.xlane.xlu0 %8663
  %v8665 = vsel %vm261, %v8643, 0.0
  %8666 = vadd.xlane.f32.xlu0 %v8665
  %v8667 = vpop.xlane.xlu0 %8666
  %v8668 = vsel %vm261, %v8644, 0.0
  %8669 = vadd.xlane.f32.xlu0 %v8668
  %v8670 = vpop.xlane.xlu0 %8669
  %v8671 = vsel %vm261, %v8645, 0.0
  %8672 = vadd.xlane.f32.xlu0 %v8671
  %v8673 = vpop.xlane.xlu0 %8672
  %v8674 = vmul.f32 %v8652, %v3004
  %v8675 = vmul.f32 %v8655, %v3004
  %v8676 = vmul.f32 %v8658, %v3004
  %v8677 = vmul.f32 %v8661, %v3004
  %v8678 = vmul.f32 %v8664, %v3004
  %v8679 = vmul.f32 %v8667, %v3004
  %v8680 = vmul.f32 %v8670, %v3004
  %v8681 = vmul.f32 %v8673, %v3004
  %v8682 = vsub.f32 %v8638, %v8674
  %v8683 = vsub.f32 %v8639, %v8675
  %v8684 = vsub.f32 %v8640, %v8676
  %v8685 = vsub.f32 %v8641, %v8677
  %v8686 = vsub.f32 %v8642, %v8678
  %v8687 = vsub.f32 %v8643, %v8679
  %v8688 = vsub.f32 %v8644, %v8680
  %v8689 = vsub.f32 %v8645, %v8681
  %v8690 = vmul.f32 %v8682, %v8682
  %v8691 = vmul.f32 %v8683, %v8683
  %v8692 = vmul.f32 %v8684, %v8684
  %v8693 = vmul.f32 %v8685, %v8685
  %v8694 = vmul.f32 %v8686, %v8686
  %v8695 = vmul.f32 %v8687, %v8687
  %v8696 = vmul.f32 %v8688, %v8688
  %v8697 = vmul.f32 %v8689, %v8689
  %v8698 = vsel %vm261, %v8690, 0.0
  %8699 = vadd.xlane.f32.xlu0 %v8698
  %v8700 = vpop.xlane.xlu0 %8699
  %v8701 = vsel %vm261, %v8691, 0.0
  %8702 = vadd.xlane.f32.xlu0 %v8701
  %v8703 = vpop.xlane.xlu0 %8702
  %v8704 = vsel %vm261, %v8692, 0.0
  %8705 = vadd.xlane.f32.xlu0 %v8704
  %v8706 = vpop.xlane.xlu0 %8705
  %v8707 = vsel %vm261, %v8693, 0.0
  %8708 = vadd.xlane.f32.xlu0 %v8707
  %v8709 = vpop.xlane.xlu0 %8708
  %v8710 = vsel %vm261, %v8694, 0.0
  %8711 = vadd.xlane.f32.xlu0 %v8710
  %v8712 = vpop.xlane.xlu0 %8711
  %v8713 = vsel %vm261, %v8695, 0.0
  %8714 = vadd.xlane.f32.xlu0 %v8713
  %v8715 = vpop.xlane.xlu0 %8714
  %v8716 = vsel %vm261, %v8696, 0.0
  %8717 = vadd.xlane.f32.xlu0 %v8716
  %v8718 = vpop.xlane.xlu0 %8717
  %v8719 = vsel %vm261, %v8697, 0.0
  %8720 = vadd.xlane.f32.xlu0 %v8719
  %v8721 = vpop.xlane.xlu0 %8720
  %v8722 = vmul.f32 %v8700, %v3004
  %v8723 = vmul.f32 %v8703, %v3004
  %v8724 = vmul.f32 %v8706, %v3004
  %v8725 = vmul.f32 %v8709, %v3004
  %v8726 = vmul.f32 %v8712, %v3004
  %v8727 = vmul.f32 %v8715, %v3004
  %v8728 = vmul.f32 %v8718, %v3004
  %v8729 = vmul.f32 %v8721, %v3004
  %v8730 = vadd.f32 %v8722, 1e-05
  %v8731 = vadd.f32 %v8723, 1e-05
  %v8732 = vadd.f32 %v8724, 1e-05
  %v8733 = vadd.f32 %v8725, 1e-05
  %v8734 = vadd.f32 %v8726, 1e-05
  %v8735 = vadd.f32 %v8727, 1e-05
  %v8736 = vadd.f32 %v8728, 1e-05
  %v8737 = vadd.f32 %v8729, 1e-05
  %v8738 = vrsqrt.pop %v8730
  %v8739 = vrsqrt.pop %v8731
  %v8740 = vrsqrt.pop %v8732
  %v8741 = vrsqrt.pop %v8733
  %v8742 = vrsqrt.pop %v8734
  %v8743 = vrsqrt.pop %v8735
  %v8744 = vrsqrt.pop %v8736
  %v8745 = vrsqrt.pop %v8737
  %v8746 = vmul.f32 %v8682, %v8738
  %v8747 = vmul.f32 %v8683, %v8739
  %v8748 = vmul.f32 %v8684, %v8740
  %v8749 = vmul.f32 %v8685, %v8741
  %v8750 = vmul.f32 %v8686, %v8742
  %v8751 = vmul.f32 %v8687, %v8743
  %v8752 = vmul.f32 %v8688, %v8744
  %v8753 = vmul.f32 %v8689, %v8745
  %v8755 = vlaneseq
  %v8756 = vshrl.u32 %v8755, 7
  %v8757 = vsub.s32 0, %v8756
  %v8758 = vrot.slane %v8647, %v8757
  %v8760 = vmul.f32 %v8746, %v8758
  %v8761 = vmul.f32 %v8747, %v8758
  %v8762 = vmul.f32 %v8748, %v8758
  %v8763 = vmul.f32 %v8749, %v8758
  %v8764 = vmul.f32 %v8750, %v8758
  %v8765 = vmul.f32 %v8751, %v8758
  %v8766 = vmul.f32 %v8752, %v8758
  %v8767 = vmul.f32 %v8753, %v8758
  %v8769 = vlaneseq
  %v8770 = vshrl.u32 %v8769, 7
  %v8771 = vsub.s32 0, %v8770
  %v8772 = vrot.slane %v8649, %v8771
  %v8774 = vadd.f32 %v8760, %v8772
  %v8775 = vadd.f32 %v8761, %v8772
  %v8776 = vadd.f32 %v8762, %v8772
  %v8777 = vadd.f32 %v8763, %v8772
  %v8778 = vadd.f32 %v8764, %v8772
  %v8779 = vadd.f32 %v8765, %v8772
  %v8780 = vadd.f32 %v8766, %v8772
  %v8781 = vadd.f32 %v8767, %v8772
  %v8782 = vpack.c.bf16 %v8775, %v8774
  %v8783 = vpack.c.bf16 %v8777, %v8776
  %v8784 = vpack.c.bf16 %v8779, %v8778
  %v8785 = vpack.c.bf16 %v8781, %v8780
  %s8786 = scalar_lea.vmem %s17, 512
  %v8787 = vld [vmem:[%s8786] sm:$0xff]
  %v8788 = vld [vmem:[%s8786 + $0x8] sm:$0xff]
  %v8789 = vld [vmem:[%s8786 + $0x10] sm:$0xff]
  %v8790 = vld [vmem:[%s8786 + $0x18] sm:$0xff]
  %v8791 = vld [vmem:[%s8786 + $0x20] sm:$0xff]
  %v8792 = vld [vmem:[%s8786 + $0x28] sm:$0xff]
  %v8793 = vld [vmem:[%s8786 + $0x30] sm:$0xff]
  %v8794 = vld [vmem:[%s8786 + $0x38] sm:$0xff]
  %v8795 = vld [vmem:[%s8786 + $0x40] sm:$0xff]
  %v8796 = vld [vmem:[%s8786 + $0x48] sm:$0xff]
  %v8797 = vld [vmem:[%s8786 + $0x50] sm:$0xff]
  %v8798 = vld [vmem:[%s8786 + $0x58] sm:$0xff]
  %v8799 = vld [vmem:[%s8786 + $0x60] sm:$0xff]
  %v8800 = vld [vmem:[%s8786 + $0x68] sm:$0xff]
  %v8801 = vld [vmem:[%s8786 + $0x70] sm:$0xff]
  %v8802 = vld [vmem:[%s8786 + $0x78] sm:$0xff]
  %v8803 = vld [vmem:[%s8786 + $0x80] sm:$0xff]
  %v8804 = vld [vmem:[%s8786 + $0x88] sm:$0xff]
  %v8805 = vld [vmem:[%s8786 + $0x90] sm:$0xff]
  %v8806 = vld [vmem:[%s8786 + $0x98] sm:$0xff]
  %v8807 = vld [vmem:[%s8786 + $0xa0] sm:$0xff]
  %v8808 = vld [vmem:[%s8786 + $0xa8] sm:$0xff]
  %v8809 = vld [vmem:[%s8786 + $0xb0] sm:$0xff]
  %v8810 = vld [vmem:[%s8786 + $0xb8] sm:$0xff]
  %v8811 = vld [vmem:[%s8786 + $0xc0] sm:$0xff]
  %v8812 = vld [vmem:[%s8786 + $0xc8] sm:$0xff]
  %v8813 = vld [vmem:[%s8786 + $0xd0] sm:$0xff]
  %v8814 = vld [vmem:[%s8786 + $0xd8] sm:$0xff]
  %v8815 = vld [vmem:[%s8786 + $0xe0] sm:$0xff]
  %v8816 = vld [vmem:[%s8786 + $0xe8] sm:$0xff]
  %v8817 = vld [vmem:[%s8786 + $0xf0] sm:$0xff]
  %v8818 = vld [vmem:[%s8786 + $0xf8] sm:$0xff]
  %v8819 = vld [vmem:[%s8786 + $0x100] sm:$0xff]
  %v8820 = vld [vmem:[%s8786 + $0x108] sm:$0xff]
  %v8821 = vld [vmem:[%s8786 + $0x110] sm:$0xff]
  %v8822 = vld [vmem:[%s8786 + $0x118] sm:$0xff]
  %v8823 = vld [vmem:[%s8786 + $0x120] sm:$0xff]
  %v8824 = vld [vmem:[%s8786 + $0x128] sm:$0xff]
  %v8825 = vld [vmem:[%s8786 + $0x130] sm:$0xff]
  %v8826 = vld [vmem:[%s8786 + $0x138] sm:$0xff]
  %v8827 = vld [vmem:[%s8786 + $0x140] sm:$0xff]
  %v8828 = vld [vmem:[%s8786 + $0x148] sm:$0xff]
  %v8829 = vld [vmem:[%s8786 + $0x150] sm:$0xff]
  %v8830 = vld [vmem:[%s8786 + $0x158] sm:$0xff]
  %v8831 = vld [vmem:[%s8786 + $0x160] sm:$0xff]
  %v8832 = vld [vmem:[%s8786 + $0x168] sm:$0xff]
  %v8833 = vld [vmem:[%s8786 + $0x170] sm:$0xff]
  %v8834 = vld [vmem:[%s8786 + $0x178] sm:$0xff]
  %v8835 = vld [vmem:[%s8786 + $0x180] sm:$0xff]
  %v8836 = vld [vmem:[%s8786 + $0x188] sm:$0xff]
  %v8837 = vld [vmem:[%s8786 + $0x190] sm:$0xff]
  %v8838 = vld [vmem:[%s8786 + $0x198] sm:$0xff]
  %v8839 = vld [vmem:[%s8786 + $0x1a0] sm:$0xff]
  %v8840 = vld [vmem:[%s8786 + $0x1a8] sm:$0xff]
  %v8841 = vld [vmem:[%s8786 + $0x1b0] sm:$0xff]
  %v8842 = vld [vmem:[%s8786 + $0x1b8] sm:$0xff]
  %v8843 = vld [vmem:[%s8786 + $0x1c0] sm:$0xff]
  %v8844 = vld [vmem:[%s8786 + $0x1c8] sm:$0xff]
  %v8845 = vld [vmem:[%s8786 + $0x1d0] sm:$0xff]
  %v8846 = vld [vmem:[%s8786 + $0x1d8] sm:$0xff]
  %v8847 = vld [vmem:[%s8786 + $0x1e0] sm:$0xff]
  %v8848 = vld [vmem:[%s8786 + $0x1e8] sm:$0xff]
  %v8849 = vld [vmem:[%s8786 + $0x1f0] sm:$0xff]
  %v8850 = vld [vmem:[%s8786 + $0x1f8] sm:$0xff]
  %s8851 = scalar_lea.vmem %s18, 16
  %v8852 = vld [vmem:[%s8851] sm:$0xff]
  %v8853 = vld [vmem:[%s8851 + $0x8] sm:$0xff]
  %v8856 = vlaneseq
  %v8857 = vshrl.u32 %v8856, 7
  %v8858 = vsub.s32 0, %v8857
  %v8859 = vrot.slane %v8852, %v8858
  %v8860 = vlaneseq
  %v8861 = vshrl.u32 %v8860, 7
  %v8862 = vsub.s32 1, %v8861
  %v8863 = vrot.slane %v8852, %v8862
  %v8864 = vlaneseq
  %v8865 = vshrl.u32 %v8864, 7
  %v8866 = vsub.s32 2, %v8865
  %v8867 = vrot.slane %v8852, %v8866
  %v8868 = vlaneseq
  %v8869 = vshrl.u32 %v8868, 7
  %v8870 = vsub.s32 3, %v8869
  %v8871 = vrot.slane %v8852, %v8870
  %v8872 = vlaneseq
  %v8873 = vshrl.u32 %v8872, 7
  %v8874 = vsub.s32 4, %v8873
  %v8875 = vrot.slane %v8852, %v8874
  %v8876 = vlaneseq
  %v8877 = vshrl.u32 %v8876, 7
  %v8878 = vsub.s32 5, %v8877
  %v8879 = vrot.slane %v8852, %v8878
  %v8880 = vlaneseq
  %v8881 = vshrl.u32 %v8880, 7
  %v8882 = vsub.s32 6, %v8881
  %v8883 = vrot.slane %v8852, %v8882
  %v8884 = vlaneseq
  %v8885 = vshrl.u32 %v8884, 7
  %v8886 = vsub.s32 7, %v8885
  %v8887 = vrot.slane %v8852, %v8886
  %v8888 = vlaneseq
  %v8889 = vshrl.u32 %v8888, 7
  %v8890 = vsub.s32 0, %v8889
  %v8891 = vrot.slane %v8853, %v8890
  %v8892 = vlaneseq
  %v8893 = vshrl.u32 %v8892, 7
  %v8894 = vsub.s32 1, %v8893
  %v8895 = vrot.slane %v8853, %v8894
  %v8896 = vlaneseq
  %v8897 = vshrl.u32 %v8896, 7
  %v8898 = vsub.s32 2, %v8897
  %v8899 = vrot.slane %v8853, %v8898
  %v8900 = vlaneseq
  %v8901 = vshrl.u32 %v8900, 7
  %v8902 = vsub.s32 3, %v8901
  %v8903 = vrot.slane %v8853, %v8902
  %v8904 = vlaneseq
  %v8905 = vshrl.u32 %v8904, 7
  %v8906 = vsub.s32 4, %v8905
  %v8907 = vrot.slane %v8853, %v8906
  %v8908 = vlaneseq
  %v8909 = vshrl.u32 %v8908, 7
  %v8910 = vsub.s32 5, %v8909
  %v8911 = vrot.slane %v8853, %v8910
  %v8912 = vlaneseq
  %v8913 = vshrl.u32 %v8912, 7
  %v8914 = vsub.s32 6, %v8913
  %v8915 = vrot.slane %v8853, %v8914
  %v8916 = vlaneseq
  %v8917 = vshrl.u32 %v8916, 7
  %v8918 = vsub.s32 7, %v8917
  %v8919 = vrot.slane %v8853, %v8918
  %v9000 = vunpack.c.l.b16 %v8787
  %v9001 = vunpack.c.h.b16 %v8787
  %v9002 = vunpack.c.l.b16 %v8788
  %v9003 = vunpack.c.h.b16 %v8788
  %v9004 = vunpack.c.l.b16 %v8789
  %v9005 = vunpack.c.h.b16 %v8789
  %v9006 = vunpack.c.l.b16 %v8790
  %v9007 = vunpack.c.h.b16 %v8790
  %v9008 = vunpack.c.l.b16 %v8791
  %v9009 = vunpack.c.h.b16 %v8791
  %v9010 = vunpack.c.l.b16 %v8792
  %v9011 = vunpack.c.h.b16 %v8792
  %v9012 = vunpack.c.l.b16 %v8793
  %v9013 = vunpack.c.h.b16 %v8793
  %v9014 = vunpack.c.l.b16 %v8794
  %v9015 = vunpack.c.h.b16 %v8794
  %v9016 = vunpack.c.l.b16 %v8795
  %v9017 = vunpack.c.h.b16 %v8795
  %v9018 = vunpack.c.l.b16 %v8796
  %v9019 = vunpack.c.h.b16 %v8796
  %v9020 = vunpack.c.l.b16 %v8797
  %v9021 = vunpack.c.h.b16 %v8797
  %v9022 = vunpack.c.l.b16 %v8798
  %v9023 = vunpack.c.h.b16 %v8798
  %v9024 = vunpack.c.l.b16 %v8799
  %v9025 = vunpack.c.h.b16 %v8799
  %v9026 = vunpack.c.l.b16 %v8800
  %v9027 = vunpack.c.h.b16 %v8800
  %v9028 = vunpack.c.l.b16 %v8801
  %v9029 = vunpack.c.h.b16 %v8801
  %v9030 = vunpack.c.l.b16 %v8802
  %v9031 = vunpack.c.h.b16 %v8802
  %v9032 = vunpack.c.l.b16 %v8803
  %v9033 = vunpack.c.h.b16 %v8803
  %v9034 = vunpack.c.l.b16 %v8804
  %v9035 = vunpack.c.h.b16 %v8804
  %v9036 = vunpack.c.l.b16 %v8805
  %v9037 = vunpack.c.h.b16 %v8805
  %v9038 = vunpack.c.l.b16 %v8806
  %v9039 = vunpack.c.h.b16 %v8806
  %v9040 = vunpack.c.l.b16 %v8807
  %v9041 = vunpack.c.h.b16 %v8807
  %v9042 = vunpack.c.l.b16 %v8808
  %v9043 = vunpack.c.h.b16 %v8808
  %v9044 = vunpack.c.l.b16 %v8809
  %v9045 = vunpack.c.h.b16 %v8809
  %v9046 = vunpack.c.l.b16 %v8810
  %v9047 = vunpack.c.h.b16 %v8810
  %v9048 = vunpack.c.l.b16 %v8811
  %v9049 = vunpack.c.h.b16 %v8811
  %v9050 = vunpack.c.l.b16 %v8812
  %v9051 = vunpack.c.h.b16 %v8812
  %v9052 = vunpack.c.l.b16 %v8813
  %v9053 = vunpack.c.h.b16 %v8813
  %v9054 = vunpack.c.l.b16 %v8814
  %v9055 = vunpack.c.h.b16 %v8814
  %v9056 = vunpack.c.l.b16 %v8815
  %v9057 = vunpack.c.h.b16 %v8815
  %v9058 = vunpack.c.l.b16 %v8816
  %v9059 = vunpack.c.h.b16 %v8816
  %v9060 = vunpack.c.l.b16 %v8817
  %v9061 = vunpack.c.h.b16 %v8817
  %v9062 = vunpack.c.l.b16 %v8818
  %v9063 = vunpack.c.h.b16 %v8818
  %v9064 = vunpack.c.l.b16 %v8819
  %v9065 = vunpack.c.h.b16 %v8819
  %v9066 = vunpack.c.l.b16 %v8820
  %v9067 = vunpack.c.h.b16 %v8820
  %v9068 = vunpack.c.l.b16 %v8821
  %v9069 = vunpack.c.h.b16 %v8821
  %v9070 = vunpack.c.l.b16 %v8822
  %v9071 = vunpack.c.h.b16 %v8822
  %v9072 = vunpack.c.l.b16 %v8823
  %v9073 = vunpack.c.h.b16 %v8823
  %v9074 = vunpack.c.l.b16 %v8824
  %v9075 = vunpack.c.h.b16 %v8824
  %v9076 = vunpack.c.l.b16 %v8825
  %v9077 = vunpack.c.h.b16 %v8825
  %v9078 = vunpack.c.l.b16 %v8826
  %v9079 = vunpack.c.h.b16 %v8826
  %v9080 = vunpack.c.l.b16 %v8827
  %v9081 = vunpack.c.h.b16 %v8827
  %v9082 = vunpack.c.l.b16 %v8828
  %v9083 = vunpack.c.h.b16 %v8828
  %v9084 = vunpack.c.l.b16 %v8829
  %v9085 = vunpack.c.h.b16 %v8829
  %v9086 = vunpack.c.l.b16 %v8830
  %v9087 = vunpack.c.h.b16 %v8830
  %v9088 = vunpack.c.l.b16 %v8831
  %v9089 = vunpack.c.h.b16 %v8831
  %v9090 = vunpack.c.l.b16 %v8832
  %v9091 = vunpack.c.h.b16 %v8832
  %v9092 = vunpack.c.l.b16 %v8833
  %v9093 = vunpack.c.h.b16 %v8833
  %v9094 = vunpack.c.l.b16 %v8834
  %v9095 = vunpack.c.h.b16 %v8834
  %v9096 = vunpack.c.l.b16 %v8835
  %v9097 = vunpack.c.h.b16 %v8835
  %v9098 = vunpack.c.l.b16 %v8836
  %v9099 = vunpack.c.h.b16 %v8836
  %v9100 = vunpack.c.l.b16 %v8837
  %v9101 = vunpack.c.h.b16 %v8837
  %v9102 = vunpack.c.l.b16 %v8838
  %v9103 = vunpack.c.h.b16 %v8838
  %v9104 = vunpack.c.l.b16 %v8839
  %v9105 = vunpack.c.h.b16 %v8839
  %v9106 = vunpack.c.l.b16 %v8840
  %v9107 = vunpack.c.h.b16 %v8840
  %v9108 = vunpack.c.l.b16 %v8841
  %v9109 = vunpack.c.h.b16 %v8841
  %v9110 = vunpack.c.l.b16 %v8842
  %v9111 = vunpack.c.h.b16 %v8842
  %v9112 = vunpack.c.l.b16 %v8843
  %v9113 = vunpack.c.h.b16 %v8843
  %v9114 = vunpack.c.l.b16 %v8844
  %v9115 = vunpack.c.h.b16 %v8844
  %v9116 = vunpack.c.l.b16 %v8845
  %v9117 = vunpack.c.h.b16 %v8845
  %v9118 = vunpack.c.l.b16 %v8846
  %v9119 = vunpack.c.h.b16 %v8846
  %v9120 = vunpack.c.l.b16 %v8847
  %v9121 = vunpack.c.h.b16 %v8847
  %v9122 = vunpack.c.l.b16 %v8848
  %v9123 = vunpack.c.h.b16 %v8848
  %v9124 = vunpack.c.l.b16 %v8849
  %v9125 = vunpack.c.h.b16 %v8849
  %v9126 = vunpack.c.l.b16 %v8850
  %v9127 = vunpack.c.h.b16 %v8850
  %v9128 = vpack.c.b16 %v9016, %v9000
  %v9129 = vpack.c.b16 %v9017, %v9001
  %v9130 = vpack.c.b16 %v9018, %v9002
  %v9131 = vpack.c.b16 %v9019, %v9003
  %v9132 = vpack.c.b16 %v9020, %v9004
  %v9133 = vpack.c.b16 %v9021, %v9005
  %v9134 = vpack.c.b16 %v9022, %v9006
  %v9135 = vpack.c.b16 %v9023, %v9007
  %v9136 = vpack.c.b16 %v9024, %v9008
  %v9137 = vpack.c.b16 %v9025, %v9009
  %v9138 = vpack.c.b16 %v9026, %v9010
  %v9139 = vpack.c.b16 %v9027, %v9011
  %v9140 = vpack.c.b16 %v9028, %v9012
  %v9141 = vpack.c.b16 %v9029, %v9013
  %v9142 = vpack.c.b16 %v9030, %v9014
  %v9143 = vpack.c.b16 %v9031, %v9015
  %v9144 = vpack.c.b16 %v9048, %v9032
  %v9145 = vpack.c.b16 %v9049, %v9033
  %v9146 = vpack.c.b16 %v9050, %v9034
  %v9147 = vpack.c.b16 %v9051, %v9035
  %v9148 = vpack.c.b16 %v9052, %v9036
  %v9149 = vpack.c.b16 %v9053, %v9037
  %v9150 = vpack.c.b16 %v9054, %v9038
  %v9151 = vpack.c.b16 %v9055, %v9039
  %v9152 = vpack.c.b16 %v9056, %v9040
  %v9153 = vpack.c.b16 %v9057, %v9041
  %v9154 = vpack.c.b16 %v9058, %v9042
  %v9155 = vpack.c.b16 %v9059, %v9043
  %v9156 = vpack.c.b16 %v9060, %v9044
  %v9157 = vpack.c.b16 %v9061, %v9045
  %v9158 = vpack.c.b16 %v9062, %v9046
  %v9159 = vpack.c.b16 %v9063, %v9047
  %v9160 = vpack.c.b16 %v9080, %v9064
  %v9161 = vpack.c.b16 %v9081, %v9065
  %v9162 = vpack.c.b16 %v9082, %v9066
  %v9163 = vpack.c.b16 %v9083, %v9067
  %v9164 = vpack.c.b16 %v9084, %v9068
  %v9165 = vpack.c.b16 %v9085, %v9069
  %v9166 = vpack.c.b16 %v9086, %v9070
  %v9167 = vpack.c.b16 %v9087, %v9071
  %v9168 = vpack.c.b16 %v9088, %v9072
  %v9169 = vpack.c.b16 %v9089, %v9073
  %v9170 = vpack.c.b16 %v9090, %v9074
  %v9171 = vpack.c.b16 %v9091, %v9075
  %v9172 = vpack.c.b16 %v9092, %v9076
  %v9173 = vpack.c.b16 %v9093, %v9077
  %v9174 = vpack.c.b16 %v9094, %v9078
  %v9175 = vpack.c.b16 %v9095, %v9079
  %v9176 = vpack.c.b16 %v9112, %v9096
  %v9177 = vpack.c.b16 %v9113, %v9097
  %v9178 = vpack.c.b16 %v9114, %v9098
  %v9179 = vpack.c.b16 %v9115, %v9099
  %v9180 = vpack.c.b16 %v9116, %v9100
  %v9181 = vpack.c.b16 %v9117, %v9101
  %v9182 = vpack.c.b16 %v9118, %v9102
  %v9183 = vpack.c.b16 %v9119, %v9103
  %v9184 = vpack.c.b16 %v9120, %v9104
  %v9185 = vpack.c.b16 %v9121, %v9105
  %v9186 = vpack.c.b16 %v9122, %v9106
  %v9187 = vpack.c.b16 %v9123, %v9107
  %v9188 = vpack.c.b16 %v9124, %v9108
  %v9189 = vpack.c.b16 %v9125, %v9109
  %v9190 = vpack.c.b16 %v9126, %v9110
  %v9191 = vpack.c.b16 %v9127, %v9111
  %v9257 = vsel %vm261, %v8782, 0
  %v9260 = vsel %vm261, %v8783, 0
  %v9263 = vsel %vm261, %v8784, 0
  %v9266 = vsel %vm261, %v8785, 0
  %9268 = vmatprep.subr.bf16.mxu0 %v9129
  %9269 = vmatpush1.bf16.msra.mxu0 %v9128
  %9270 = vmatprep.subr.bf16.mxu0 %v9145
  %9271 = vmatpush1.bf16.msra.mxu0 %v9144
  %9272 = vmatprep.subr.bf16.mxu0 %v9161
  %9273 = vmatpush1.bf16.msra.mxu0 %v9160
  %9274 = vmatprep.subr.bf16.mxu0 %v9177
  %9275 = vmatpush1.bf16.msra.mxu0 %v9176
  %9276 = vmatprep.subr.bf16.mxu0 0
  %9277 = vmatpush1.bf16.msra.mxu0 0
  %9278 = vmatprep.subr.bf16.mxu0 0
  %9279 = vmatpush1.bf16.msra.mxu0 0
  %9280 = vmatprep.subr.bf16.mxu0 0
  %9281 = vmatpush1.bf16.msra.mxu0 0
  %9282 = vmatprep.subr.bf16.mxu0 0
  %9283 = vmatpush1.bf16.msra.mxu0 0
  %9284 = vmatprep.subr.bf16.mxu0 0
  %9285 = vmatpush1.bf16.msra.mxu0 0
  %9286 = vmatprep.subr.bf16.mxu0 0
  %9287 = vmatpush1.bf16.msra.mxu0 0
  %9288 = vmatprep.subr.bf16.mxu0 0
  %9289 = vmatpush1.bf16.msra.mxu0 0
  %9290 = vmatprep.subr.bf16.mxu0 0
  %9291 = vmatpush1.bf16.msra.mxu0 0
  %9292 = vmatprep.subr.bf16.mxu0 0
  %9293 = vmatpush1.bf16.msra.mxu0 0
  %9294 = vmatprep.subr.bf16.mxu0 0
  %9295 = vmatpush1.bf16.msra.mxu0 0
  %9296 = vmatprep.subr.bf16.mxu0 0
  %9297 = vmatpush1.bf16.msra.mxu0 0
  %9298 = vmatprep.subr.bf16.mxu0 0
  %9299 = vmatpush1.bf16.msra.mxu0 0
  %9300 = vmatprep.mubr.bf16.mxu0 0
  %9301 = vmatmul.mubr.bf16.gmra.mrb[0].mxu0 %v9257
  %v9302 = vpop.f32.mrb[0].mxu0
  %v9303 = vadd.f32 %v8859, %v9302
  %v9304 = vpop.f32.mrb[0].mxu0
  %v9305 = vadd.f32 %v8863, %v9304
  %v9306 = vpop.f32.mrb[0].mxu0
  %v9307 = vadd.f32 %v8859, %v9306
  %v9308 = vpop.f32.mrb[0].mxu0
  %v9309 = vadd.f32 %v8863, %v9308
  %9310 = vmatprep.mubr.bf16.mxu0 0
  %9311 = vmatmul.mubr.bf16.gmra.mrb[0].mxu0 %v9260
  %v9312 = vpop.f32.mrb[0].mxu0
  %v9313 = vadd.f32 %v8859, %v9312
  %v9314 = vpop.f32.mrb[0].mxu0
  %v9315 = vadd.f32 %v8863, %v9314
  %v9316 = vpop.f32.mrb[0].mxu0
  %v9317 = vadd.f32 %v8859, %v9316
  %v9318 = vpop.f32.mrb[0].mxu0
  %v9319 = vadd.f32 %v8863, %v9318
  %9320 = vmatprep.mubr.bf16.mxu0 0
  %9321 = vmatmul.mubr.bf16.gmra.mrb[0].mxu0 %v9263
  %v9322 = vpop.f32.mrb[0].mxu0
  %v9323 = vadd.f32 %v8859, %v9322
  %v9324 = vpop.f32.mrb[0].mxu0
  %v9325 = vadd.f32 %v8863, %v9324
  %v9326 = vpop.f32.mrb[0].mxu0
  %v9327 = vadd.f32 %v8859, %v9326
  %v9328 = vpop.f32.mrb[0].mxu0
  %v9329 = vadd.f32 %v8863, %v9328
  %9330 = vmatprep.mubr.bf16.mxu0 0
  %9331 = vmatmul.mubr.bf16.gmra.mrb[0].mxu0 %v9266
  %v9332 = vpop.f32.mrb[0].mxu0
  %v9333 = vadd.f32 %v8859, %v9332
  %v9334 = vpop.f32.mrb[0].mxu0
  %v9335 = vadd.f32 %v8863, %v9334
  %v9336 = vpop.f32.mrb[0].mxu0
  %v9337 = vadd.f32 %v8859, %v9336
  %v9338 = vpop.f32.mrb[0].mxu0
  %v9339 = vadd.f32 %v8863, %v9338
  %9340 = vdwg.mxu0
  %9341 = vmatprep.subr.bf16.mxu0 %v9131
  %9342 = vmatpush1.bf16.msra.mxu0 %v9130
  %9343 = vmatprep.subr.bf16.mxu0 %v9147
  %9344 = vmatpush1.bf16.msra.mxu0 %v9146
  %9345 = vmatprep.subr.bf16.mxu0 %v9163
  %9346 = vmatpush1.bf16.msra.mxu0 %v9162
  %9347 = vmatprep.subr.bf16.mxu0 %v9179
  %9348 = vmatpush1.bf16.msra.mxu0 %v9178
  %9349 = vmatprep.subr.bf16.mxu0 0
  %9350 = vmatpush1.bf16.msra.mxu0 0
  %9351 = vmatprep.subr.bf16.mxu0 0
  %9352 = vmatpush1.bf16.msra.mxu0 0
  %9353 = vmatprep.subr.bf16.mxu0 0
  %9354 = vmatpush1.bf16.msra.mxu0 0
  %9355 = vmatprep.subr.bf16.mxu0 0
  %9356 = vmatpush1.bf16.msra.mxu0 0
  %9357 = vmatprep.subr.bf16.mxu0 0
  %9358 = vmatpush1.bf16.msra.mxu0 0
  %9359 = vmatprep.subr.bf16.mxu0 0
  %9360 = vmatpush1.bf16.msra.mxu0 0
  %9361 = vmatprep.subr.bf16.mxu0 0
  %9362 = vmatpush1.bf16.msra.mxu0 0
  %9363 = vmatprep.subr.bf16.mxu0 0
  %9364 = vmatpush1.bf16.msra.mxu0 0
  %9365 = vmatprep.subr.bf16.mxu0 0
  %9366 = vmatpush1.bf16.msra.mxu0 0
  %9367 = vmatprep.subr.bf16.mxu0 0
  %9368 = vmatpush1.bf16.msra.mxu0 0
  %9369 = vmatprep.subr.bf16.mxu0 0
  %9370 = vmatpush1.bf16.msra.mxu0 0
  %9371 = vmatprep.subr.bf16.mxu0 0
  %9372 = vmatpush1.bf16.msra.mxu0 0
  %9373 = vmatprep.mubr.bf16.mxu0 0
  %9374 = vmatmul.mubr.bf16.gmra.mrb[0].mxu0 %v9257
  %v9375 = vpop.f32.mrb[0].mxu0
  %v9376 = vadd.f32 %v8867, %v9375
  %v9377 = vpop.f32.mrb[0].mxu0
  %v9378 = vadd.f32 %v8871, %v9377
  %v9379 = vpop.f32.mrb[0].mxu0
  %v9380 = vadd.f32 %v8867, %v9379
  %v9381 = vpop.f32.mrb[0].mxu0
  %v9382 = vadd.f32 %v8871, %v9381
  %9383 = vmatprep.mubr.bf16.mxu0 0
  %9384 = vmatmul.mubr.bf16.gmra.mrb[0].mxu0 %v9260
  %v9385 = vpop.f32.mrb[0].mxu0
  %v9386 = vadd.f32 %v8867, %v9385
  %v9387 = vpop.f32.mrb[0].mxu0
  %v9388 = vadd.f32 %v8871, %v9387
  %v9389 = vpop.f32.mrb[0].mxu0
  %v9390 = vadd.f32 %v8867, %v9389
  %v9391 = vpop.f32.mrb[0].mxu0
  %v9392 = vadd.f32 %v8871, %v9391
  %9393 = vmatprep.mubr.bf16.mxu0 0
  %9394 = vmatmul.mubr.bf16.gmra.mrb[0].mxu0 %v9263
  %v9395 = vpop.f32.mrb[0].mxu0
  %v9396 = vadd.f32 %v8867, %v9395
  %v9397 = vpop.f32.mrb[0].mxu0
  %v9398 = vadd.f32 %v8871, %v9397
  %v9399 = vpop.f32.mrb[0].mxu0
  %v9400 = vadd.f32 %v8867, %v9399
  %v9401 = vpop.f32.mrb[0].mxu0
  %v9402 = vadd.f32 %v8871, %v9401
  %9403 = vmatprep.mubr.bf16.mxu0 0
  %9404 = vmatmul.mubr.bf16.gmra.mrb[0].mxu0 %v9266
  %v9405 = vpop.f32.mrb[0].mxu0
  %v9406 = vadd.f32 %v8867, %v9405
  %v9407 = vpop.f32.mrb[0].mxu0
  %v9408 = vadd.f32 %v8871, %v9407
  %v9409 = vpop.f32.mrb[0].mxu0
  %v9410 = vadd.f32 %v8867, %v9409
  %v9411 = vpop.f32.mrb[0].mxu0
  %v9412 = vadd.f32 %v8871, %v9411
  %9413 = vdwg.mxu0
  %9414 = vmatprep.subr.bf16.mxu0 %v9133
  %9415 = vmatpush1.bf16.msra.mxu0 %v9132
  %9416 = vmatprep.subr.bf16.mxu0 %v9149
  %9417 = vmatpush1.bf16.msra.mxu0 %v9148
  %9418 = vmatprep.subr.bf16.mxu0 %v9165
  %9419 = vmatpush1.bf16.msra.mxu0 %v9164
  %9420 = vmatprep.subr.bf16.mxu0 %v9181
  %9421 = vmatpush1.bf16.msra.mxu0 %v9180
  %9422 = vmatprep.subr.bf16.mxu0 0
  %9423 = vmatpush1.bf16.msra.mxu0 0
  %9424 = vmatprep.subr.bf16.mxu0 0
  %9425 = vmatpush1.bf16.msra.mxu0 0
  %9426 = vmatprep.subr.bf16.mxu0 0
  %9427 = vmatpush1.bf16.msra.mxu0 0
  %9428 = vmatprep.subr.bf16.mxu0 0
  %9429 = vmatpush1.bf16.msra.mxu0 0
  %9430 = vmatprep.subr.bf16.mxu0 0
  %9431 = vmatpush1.bf16.msra.mxu0 0
  %9432 = vmatprep.subr.bf16.mxu0 0
  %9433 = vmatpush1.bf16.msra.mxu0 0
  %9434 = vmatprep.subr.bf16.mxu0 0
  %9435 = vmatpush1.bf16.msra.mxu0 0
  %9436 = vmatprep.subr.bf16.mxu0 0
  %9437 = vmatpush1.bf16.msra.mxu0 0
  %9438 = vmatprep.subr.bf16.mxu0 0
  %9439 = vmatpush1.bf16.msra.mxu0 0
  %9440 = vmatprep.subr.bf16.mxu0 0
  %9441 = vmatpush1.bf16.msra.mxu0 0
  %9442 = vmatprep.subr.bf16.mxu0 0
  %9443 = vmatpush1.bf16.msra.mxu0 0
  %9444 = vmatprep.subr.bf16.mxu0 0
  %9445 = vmatpush1.bf16.msra.mxu0 0
  %9446 = vmatprep.mubr.bf16.mxu0 0
  %9447 = vmatmul.mubr.bf16.gmra.mrb[0].mxu0 %v9257
  %v9448 = vpop.f32.mrb[0].mxu0
  %v9449 = vadd.f32 %v8875, %v9448
  %v9450 = vpop.f32.mrb[0].mxu0
  %v9451 = vadd.f32 %v8879, %v9450
  %v9452 = vpop.f32.mrb[0].mxu0
  %v9453 = vadd.f32 %v8875, %v9452
  %v9454 = vpop.f32.mrb[0].mxu0
  %v9455 = vadd.f32 %v8879, %v9454
  %9456 = vmatprep.mubr.bf16.mxu0 0
  %9457 = vmatmul.mubr.bf16.gmra.mrb[0].mxu0 %v9260
  %v9458 = vpop.f32.mrb[0].mxu0
  %v9459 = vadd.f32 %v8875, %v9458
  %v9460 = vpop.f32.mrb[0].mxu0
  %v9461 = vadd.f32 %v8879, %v9460
  %v9462 = vpop.f32.mrb[0].mxu0
  %v9463 = vadd.f32 %v8875, %v9462
  %v9464 = vpop.f32.mrb[0].mxu0
  %v9465 = vadd.f32 %v8879, %v9464
  %9466 = vmatprep.mubr.bf16.mxu0 0
  %9467 = vmatmul.mubr.bf16.gmra.mrb[0].mxu0 %v9263
  %v9468 = vpop.f32.mrb[0].mxu0
  %v9469 = vadd.f32 %v8875, %v9468
  %v9470 = vpop.f32.mrb[0].mxu0
  %v9471 = vadd.f32 %v8879, %v9470
  %v9472 = vpop.f32.mrb[0].mxu0
  %v9473 = vadd.f32 %v8875, %v9472
  %v9474 = vpop.f32.mrb[0].mxu0
  %v9475 = vadd.f32 %v8879, %v9474
  %9476 = vmatprep.mubr.bf16.mxu0 0
  %9477 = vmatmul.mubr.bf16.gmra.mrb[0].mxu0 %v9266
  %v9478 = vpop.f32.mrb[0].mxu0
  %v9479 = vadd.f32 %v8875, %v9478
  %v9480 = vpop.f32.mrb[0].mxu0
  %v9481 = vadd.f32 %v8879, %v9480
  %v9482 = vpop.f32.mrb[0].mxu0
  %v9483 = vadd.f32 %v8875, %v9482
  %v9484 = vpop.f32.mrb[0].mxu0
  %v9485 = vadd.f32 %v8879, %v9484
  %9486 = vdwg.mxu0
  %9487 = vmatprep.subr.bf16.mxu0 %v9135
  %9488 = vmatpush1.bf16.msra.mxu0 %v9134
  %9489 = vmatprep.subr.bf16.mxu0 %v9151
  %9490 = vmatpush1.bf16.msra.mxu0 %v9150
  %9491 = vmatprep.subr.bf16.mxu0 %v9167
  %9492 = vmatpush1.bf16.msra.mxu0 %v9166
  %9493 = vmatprep.subr.bf16.mxu0 %v9183
  %9494 = vmatpush1.bf16.msra.mxu0 %v9182
  %9495 = vmatprep.subr.bf16.mxu0 0
  %9496 = vmatpush1.bf16.msra.mxu0 0
  %9497 = vmatprep.subr.bf16.mxu0 0
  %9498 = vmatpush1.bf16.msra.mxu0 0
  %9499 = vmatprep.subr.bf16.mxu0 0
  %9500 = vmatpush1.bf16.msra.mxu0 0
  %9501 = vmatprep.subr.bf16.mxu0 0
  %9502 = vmatpush1.bf16.msra.mxu0 0
  %9503 = vmatprep.subr.bf16.mxu0 0
  %9504 = vmatpush1.bf16.msra.mxu0 0
  %9505 = vmatprep.subr.bf16.mxu0 0
  %9506 = vmatpush1.bf16.msra.mxu0 0
  %9507 = vmatprep.subr.bf16.mxu0 0
  %9508 = vmatpush1.bf16.msra.mxu0 0
  %9509 = vmatprep.subr.bf16.mxu0 0
  %9510 = vmatpush1.bf16.msra.mxu0 0
  %9511 = vmatprep.subr.bf16.mxu0 0
  %9512 = vmatpush1.bf16.msra.mxu0 0
  %9513 = vmatprep.subr.bf16.mxu0 0
  %9514 = vmatpush1.bf16.msra.mxu0 0
  %9515 = vmatprep.subr.bf16.mxu0 0
  %9516 = vmatpush1.bf16.msra.mxu0 0
  %9517 = vmatprep.subr.bf16.mxu0 0
  %9518 = vmatpush1.bf16.msra.mxu0 0
  %9519 = vmatprep.mubr.bf16.mxu0 0
  %9520 = vmatmul.mubr.bf16.gmra.mrb[0].mxu0 %v9257
  %v9521 = vpop.f32.mrb[0].mxu0
  %v9522 = vadd.f32 %v8883, %v9521
  %v9523 = vpop.f32.mrb[0].mxu0
  %v9524 = vadd.f32 %v8887, %v9523
  %v9525 = vpop.f32.mrb[0].mxu0
  %v9526 = vadd.f32 %v8883, %v9525
  %v9527 = vpop.f32.mrb[0].mxu0
  %v9528 = vadd.f32 %v8887, %v9527
  %9529 = vmatprep.mubr.bf16.mxu0 0
  %9530 = vmatmul.mubr.bf16.gmra.mrb[0].mxu0 %v9260
  %v9531 = vpop.f32.mrb[0].mxu0
  %v9532 = vadd.f32 %v8883, %v9531
  %v9533 = vpop.f32.mrb[0].mxu0
  %v9534 = vadd.f32 %v8887, %v9533
  %v9535 = vpop.f32.mrb[0].mxu0
  %v9536 = vadd.f32 %v8883, %v9535
  %v9537 = vpop.f32.mrb[0].mxu0
  %v9538 = vadd.f32 %v8887, %v9537
  %9539 = vmatprep.mubr.bf16.mxu0 0
  %9540 = vmatmul.mubr.bf16.gmra.mrb[0].mxu0 %v9263
  %v9541 = vpop.f32.mrb[0].mxu0
  %v9542 = vadd.f32 %v8883, %v9541
  %v9543 = vpop.f32.mrb[0].mxu0
  %v9544 = vadd.f32 %v8887, %v9543
  %v9545 = vpop.f32.mrb[0].mxu0
  %v9546 = vadd.f32 %v8883, %v9545
  %v9547 = vpop.f32.mrb[0].mxu0
  %v9548 = vadd.f32 %v8887, %v9547
  %9549 = vmatprep.mubr.bf16.mxu0 0
  %9550 = vmatmul.mubr.bf16.gmra.mrb[0].mxu0 %v9266
  %v9551 = vpop.f32.mrb[0].mxu0
  %v9552 = vadd.f32 %v8883, %v9551
  %v9553 = vpop.f32.mrb[0].mxu0
  %v9554 = vadd.f32 %v8887, %v9553
  %v9555 = vpop.f32.mrb[0].mxu0
  %v9556 = vadd.f32 %v8883, %v9555
  %v9557 = vpop.f32.mrb[0].mxu0
  %v9558 = vadd.f32 %v8887, %v9557
  %9559 = vdwg.mxu0
  %9560 = vmatprep.subr.bf16.mxu0 %v9137
  %9561 = vmatpush1.bf16.msra.mxu0 %v9136
  %9562 = vmatprep.subr.bf16.mxu0 %v9153
  %9563 = vmatpush1.bf16.msra.mxu0 %v9152
  %9564 = vmatprep.subr.bf16.mxu0 %v9169
  %9565 = vmatpush1.bf16.msra.mxu0 %v9168
  %9566 = vmatprep.subr.bf16.mxu0 %v9185
  %9567 = vmatpush1.bf16.msra.mxu0 %v9184
  %9568 = vmatprep.subr.bf16.mxu0 0
  %9569 = vmatpush1.bf16.msra.mxu0 0
  %9570 = vmatprep.subr.bf16.mxu0 0
  %9571 = vmatpush1.bf16.msra.mxu0 0
  %9572 = vmatprep.subr.bf16.mxu0 0
  %9573 = vmatpush1.bf16.msra.mxu0 0
  %9574 = vmatprep.subr.bf16.mxu0 0
  %9575 = vmatpush1.bf16.msra.mxu0 0
  %9576 = vmatprep.subr.bf16.mxu0 0
  %9577 = vmatpush1.bf16.msra.mxu0 0
  %9578 = vmatprep.subr.bf16.mxu0 0
  %9579 = vmatpush1.bf16.msra.mxu0 0
  %9580 = vmatprep.subr.bf16.mxu0 0
  %9581 = vmatpush1.bf16.msra.mxu0 0
  %9582 = vmatprep.subr.bf16.mxu0 0
  %9583 = vmatpush1.bf16.msra.mxu0 0
  %9584 = vmatprep.subr.bf16.mxu0 0
  %9585 = vmatpush1.bf16.msra.mxu0 0
  %9586 = vmatprep.subr.bf16.mxu0 0
  %9587 = vmatpush1.bf16.msra.mxu0 0
  %9588 = vmatprep.subr.bf16.mxu0 0
  %9589 = vmatpush1.bf16.msra.mxu0 0
  %9590 = vmatprep.subr.bf16.mxu0 0
  %9591 = vmatpush1.bf16.msra.mxu0 0
  %9592 = vmatprep.mubr.bf16.mxu0 0
  %9593 = vmatmul.mubr.bf16.gmra.mrb[0].mxu0 %v9257
  %v9594 = vpop.f32.mrb[0].mxu0
  %v9595 = vadd.f32 %v8891, %v9594
  %v9596 = vpop.f32.mrb[0].mxu0
  %v9597 = vadd.f32 %v8895, %v9596
  %v9598 = vpop.f32.mrb[0].mxu0
  %v9599 = vadd.f32 %v8891, %v9598
  %v9600 = vpop.f32.mrb[0].mxu0
  %v9601 = vadd.f32 %v8895, %v9600
  %9602 = vmatprep.mubr.bf16.mxu0 0
  %9603 = vmatmul.mubr.bf16.gmra.mrb[0].mxu0 %v9260
  %v9604 = vpop.f32.mrb[0].mxu0
  %v9605 = vadd.f32 %v8891, %v9604
  %v9606 = vpop.f32.mrb[0].mxu0
  %v9607 = vadd.f32 %v8895, %v9606
  %v9608 = vpop.f32.mrb[0].mxu0
  %v9609 = vadd.f32 %v8891, %v9608
  %v9610 = vpop.f32.mrb[0].mxu0
  %v9611 = vadd.f32 %v8895, %v9610
  %9612 = vmatprep.mubr.bf16.mxu0 0
  %9613 = vmatmul.mubr.bf16.gmra.mrb[0].mxu0 %v9263
  %v9614 = vpop.f32.mrb[0].mxu0
  %v9615 = vadd.f32 %v8891, %v9614
  %v9616 = vpop.f32.mrb[0].mxu0
  %v9617 = vadd.f32 %v8895, %v9616
  %v9618 = vpop.f32.mrb[0].mxu0
  %v9619 = vadd.f32 %v8891, %v9618
  %v9620 = vpop.f32.mrb[0].mxu0
  %v9621 = vadd.f32 %v8895, %v9620
  %9622 = vmatprep.mubr.bf16.mxu0 0
  %9623 = vmatmul.mubr.bf16.gmra.mrb[0].mxu0 %v9266
  %v9624 = vpop.f32.mrb[0].mxu0
  %v9625 = vadd.f32 %v8891, %v9624
  %v9626 = vpop.f32.mrb[0].mxu0
  %v9627 = vadd.f32 %v8895, %v9626
  %v9628 = vpop.f32.mrb[0].mxu0
  %v9629 = vadd.f32 %v8891, %v9628
  %v9630 = vpop.f32.mrb[0].mxu0
  %v9631 = vadd.f32 %v8895, %v9630
  %9632 = vdwg.mxu0
  %9633 = vmatprep.subr.bf16.mxu0 %v9139
  %9634 = vmatpush1.bf16.msra.mxu0 %v9138
  %9635 = vmatprep.subr.bf16.mxu0 %v9155
  %9636 = vmatpush1.bf16.msra.mxu0 %v9154
  %9637 = vmatprep.subr.bf16.mxu0 %v9171
  %9638 = vmatpush1.bf16.msra.mxu0 %v9170
  %9639 = vmatprep.subr.bf16.mxu0 %v9187
  %9640 = vmatpush1.bf16.msra.mxu0 %v9186
  %9641 = vmatprep.subr.bf16.mxu0 0
  %9642 = vmatpush1.bf16.msra.mxu0 0
  %9643 = vmatprep.subr.bf16.mxu0 0
  %9644 = vmatpush1.bf16.msra.mxu0 0
  %9645 = vmatprep.subr.bf16.mxu0 0
  %9646 = vmatpush1.bf16.msra.mxu0 0
  %9647 = vmatprep.subr.bf16.mxu0 0
  %9648 = vmatpush1.bf16.msra.mxu0 0
  %9649 = vmatprep.subr.bf16.mxu0 0
  %9650 = vmatpush1.bf16.msra.mxu0 0
  %9651 = vmatprep.subr.bf16.mxu0 0
  %9652 = vmatpush1.bf16.msra.mxu0 0
  %9653 = vmatprep.subr.bf16.mxu0 0
  %9654 = vmatpush1.bf16.msra.mxu0 0
  %9655 = vmatprep.subr.bf16.mxu0 0
  %9656 = vmatpush1.bf16.msra.mxu0 0
  %9657 = vmatprep.subr.bf16.mxu0 0
  %9658 = vmatpush1.bf16.msra.mxu0 0
  %9659 = vmatprep.subr.bf16.mxu0 0
  %9660 = vmatpush1.bf16.msra.mxu0 0
  %9661 = vmatprep.subr.bf16.mxu0 0
  %9662 = vmatpush1.bf16.msra.mxu0 0
  %9663 = vmatprep.subr.bf16.mxu0 0
  %9664 = vmatpush1.bf16.msra.mxu0 0
  %9665 = vmatprep.mubr.bf16.mxu0 0
  %9666 = vmatmul.mubr.bf16.gmra.mrb[0].mxu0 %v9257
  %v9667 = vpop.f32.mrb[0].mxu0
  %v9668 = vadd.f32 %v8899, %v9667
  %v9669 = vpop.f32.mrb[0].mxu0
  %v9670 = vadd.f32 %v8903, %v9669
  %v9671 = vpop.f32.mrb[0].mxu0
  %v9672 = vadd.f32 %v8899, %v9671
  %v9673 = vpop.f32.mrb[0].mxu0
  %v9674 = vadd.f32 %v8903, %v9673
  %9675 = vmatprep.mubr.bf16.mxu0 0
  %9676 = vmatmul.mubr.bf16.gmra.mrb[0].mxu0 %v9260
  %v9677 = vpop.f32.mrb[0].mxu0
  %v9678 = vadd.f32 %v8899, %v9677
  %v9679 = vpop.f32.mrb[0].mxu0
  %v9680 = vadd.f32 %v8903, %v9679
  %v9681 = vpop.f32.mrb[0].mxu0
  %v9682 = vadd.f32 %v8899, %v9681
  %v9683 = vpop.f32.mrb[0].mxu0
  %v9684 = vadd.f32 %v8903, %v9683
  %9685 = vmatprep.mubr.bf16.mxu0 0
  %9686 = vmatmul.mubr.bf16.gmra.mrb[0].mxu0 %v9263
  %v9687 = vpop.f32.mrb[0].mxu0
  %v9688 = vadd.f32 %v8899, %v9687
  %v9689 = vpop.f32.mrb[0].mxu0
  %v9690 = vadd.f32 %v8903, %v9689
  %v9691 = vpop.f32.mrb[0].mxu0
  %v9692 = vadd.f32 %v8899, %v9691
  %v9693 = vpop.f32.mrb[0].mxu0
  %v9694 = vadd.f32 %v8903, %v9693
  %9695 = vmatprep.mubr.bf16.mxu0 0
  %9696 = vmatmul.mubr.bf16.gmra.mrb[0].mxu0 %v9266
  %v9697 = vpop.f32.mrb[0].mxu0
  %v9698 = vadd.f32 %v8899, %v9697
  %v9699 = vpop.f32.mrb[0].mxu0
  %v9700 = vadd.f32 %v8903, %v9699
  %v9701 = vpop.f32.mrb[0].mxu0
  %v9702 = vadd.f32 %v8899, %v9701
  %v9703 = vpop.f32.mrb[0].mxu0
  %v9704 = vadd.f32 %v8903, %v9703
  %9705 = vdwg.mxu0
  %9706 = vmatprep.subr.bf16.mxu0 %v9141
  %9707 = vmatpush1.bf16.msra.mxu0 %v9140
  %9708 = vmatprep.subr.bf16.mxu0 %v9157
  %9709 = vmatpush1.bf16.msra.mxu0 %v9156
  %9710 = vmatprep.subr.bf16.mxu0 %v9173
  %9711 = vmatpush1.bf16.msra.mxu0 %v9172
  %9712 = vmatprep.subr.bf16.mxu0 %v9189
  %9713 = vmatpush1.bf16.msra.mxu0 %v9188
  %9714 = vmatprep.subr.bf16.mxu0 0
  %9715 = vmatpush1.bf16.msra.mxu0 0
  %9716 = vmatprep.subr.bf16.mxu0 0
  %9717 = vmatpush1.bf16.msra.mxu0 0
  %9718 = vmatprep.subr.bf16.mxu0 0
  %9719 = vmatpush1.bf16.msra.mxu0 0
  %9720 = vmatprep.subr.bf16.mxu0 0
  %9721 = vmatpush1.bf16.msra.mxu0 0
  %9722 = vmatprep.subr.bf16.mxu0 0
  %9723 = vmatpush1.bf16.msra.mxu0 0
  %9724 = vmatprep.subr.bf16.mxu0 0
  %9725 = vmatpush1.bf16.msra.mxu0 0
  %9726 = vmatprep.subr.bf16.mxu0 0
  %9727 = vmatpush1.bf16.msra.mxu0 0
  %9728 = vmatprep.subr.bf16.mxu0 0
  %9729 = vmatpush1.bf16.msra.mxu0 0
  %9730 = vmatprep.subr.bf16.mxu0 0
  %9731 = vmatpush1.bf16.msra.mxu0 0
  %9732 = vmatprep.subr.bf16.mxu0 0
  %9733 = vmatpush1.bf16.msra.mxu0 0
  %9734 = vmatprep.subr.bf16.mxu0 0
  %9735 = vmatpush1.bf16.msra.mxu0 0
  %9736 = vmatprep.subr.bf16.mxu0 0
  %9737 = vmatpush1.bf16.msra.mxu0 0
  %9738 = vmatprep.mubr.bf16.mxu0 0
  %9739 = vmatmul.mubr.bf16.gmra.mrb[0].mxu0 %v9257
  %v9740 = vpop.f32.mrb[0].mxu0
  %v9741 = vadd.f32 %v8907, %v9740
  %v9742 = vpop.f32.mrb[0].mxu0
  %v9743 = vadd.f32 %v8911, %v9742
  %v9744 = vpop.f32.mrb[0].mxu0
  %v9745 = vadd.f32 %v8907, %v9744
  %v9746 = vpop.f32.mrb[0].mxu0
  %v9747 = vadd.f32 %v8911, %v9746
  %9748 = vmatprep.mubr.bf16.mxu0 0
  %9749 = vmatmul.mubr.bf16.gmra.mrb[0].mxu0 %v9260
  %v9750 = vpop.f32.mrb[0].mxu0
  %v9751 = vadd.f32 %v8907, %v9750
  %v9752 = vpop.f32.mrb[0].mxu0
  %v9753 = vadd.f32 %v8911, %v9752
  %v9754 = vpop.f32.mrb[0].mxu0
  %v9755 = vadd.f32 %v8907, %v9754
  %v9756 = vpop.f32.mrb[0].mxu0
  %v9757 = vadd.f32 %v8911, %v9756
  %9758 = vmatprep.mubr.bf16.mxu0 0
  %9759 = vmatmul.mubr.bf16.gmra.mrb[0].mxu0 %v9263
  %v9760 = vpop.f32.mrb[0].mxu0
  %v9761 = vadd.f32 %v8907, %v9760
  %v9762 = vpop.f32.mrb[0].mxu0
  %v9763 = vadd.f32 %v8911, %v9762
  %v9764 = vpop.f32.mrb[0].mxu0
  %v9765 = vadd.f32 %v8907, %v9764
  %v9766 = vpop.f32.mrb[0].mxu0
  %v9767 = vadd.f32 %v8911, %v9766
  %9768 = vmatprep.mubr.bf16.mxu0 0
  %9769 = vmatmul.mubr.bf16.gmra.mrb[0].mxu0 %v9266
  %v9770 = vpop.f32.mrb[0].mxu0
  %v9771 = vadd.f32 %v8907, %v9770
  %v9772 = vpop.f32.mrb[0].mxu0
  %v9773 = vadd.f32 %v8911, %v9772
  %v9774 = vpop.f32.mrb[0].mxu0
  %v9775 = vadd.f32 %v8907, %v9774
  %v9776 = vpop.f32.mrb[0].mxu0
  %v9777 = vadd.f32 %v8911, %v9776
  %9778 = vdwg.mxu0
  %9779 = vmatprep.subr.bf16.mxu0 %v9143
  %9780 = vmatpush1.bf16.msra.mxu0 %v9142
  %9781 = vmatprep.subr.bf16.mxu0 %v9159
  %9782 = vmatpush1.bf16.msra.mxu0 %v9158
  %9783 = vmatprep.subr.bf16.mxu0 %v9175
  %9784 = vmatpush1.bf16.msra.mxu0 %v9174
  %9785 = vmatprep.subr.bf16.mxu0 %v9191
  %9786 = vmatpush1.bf16.msra.mxu0 %v9190
  %9787 = vmatprep.subr.bf16.mxu0 0
  %9788 = vmatpush1.bf16.msra.mxu0 0
  %9789 = vmatprep.subr.bf16.mxu0 0
  %9790 = vmatpush1.bf16.msra.mxu0 0
  %9791 = vmatprep.subr.bf16.mxu0 0
  %9792 = vmatpush1.bf16.msra.mxu0 0
  %9793 = vmatprep.subr.bf16.mxu0 0
  %9794 = vmatpush1.bf16.msra.mxu0 0
  %9795 = vmatprep.subr.bf16.mxu0 0
  %9796 = vmatpush1.bf16.msra.mxu0 0
  %9797 = vmatprep.subr.bf16.mxu0 0
  %9798 = vmatpush1.bf16.msra.mxu0 0
  %9799 = vmatprep.subr.bf16.mxu0 0
  %9800 = vmatpush1.bf16.msra.mxu0 0
  %9801 = vmatprep.subr.bf16.mxu0 0
  %9802 = vmatpush1.bf16.msra.mxu0 0
  %9803 = vmatprep.subr.bf16.mxu0 0
  %9804 = vmatpush1.bf16.msra.mxu0 0
  %9805 = vmatprep.subr.bf16.mxu0 0
  %9806 = vmatpush1.bf16.msra.mxu0 0
  %9807 = vmatprep.subr.bf16.mxu0 0
  %9808 = vmatpush1.bf16.msra.mxu0 0
  %9809 = vmatprep.subr.bf16.mxu0 0
  %9810 = vmatpush1.bf16.msra.mxu0 0
  %9811 = vmatprep.mubr.bf16.mxu0 0
  %9812 = vmatmul.mubr.bf16.gmra.mrb[0].mxu0 %v9257
  %v9813 = vpop.f32.mrb[0].mxu0
  %v9814 = vadd.f32 %v8915, %v9813
  %v9815 = vpop.f32.mrb[0].mxu0
  %v9816 = vadd.f32 %v8919, %v9815
  %v9817 = vpop.f32.mrb[0].mxu0
  %v9818 = vadd.f32 %v8915, %v9817
  %v9819 = vpop.f32.mrb[0].mxu0
  %v9820 = vadd.f32 %v8919, %v9819
  %9821 = vmatprep.mubr.bf16.mxu0 0
  %9822 = vmatmul.mubr.bf16.gmra.mrb[0].mxu0 %v9260
  %v9823 = vpop.f32.mrb[0].mxu0
  %v9824 = vadd.f32 %v8915, %v9823
  %v9825 = vpop.f32.mrb[0].mxu0
  %v9826 = vadd.f32 %v8919, %v9825
  %v9827 = vpop.f32.mrb[0].mxu0
  %v9828 = vadd.f32 %v8915, %v9827
  %v9829 = vpop.f32.mrb[0].mxu0
  %v9830 = vadd.f32 %v8919, %v9829
  %9831 = vmatprep.mubr.bf16.mxu0 0
  %9832 = vmatmul.mubr.bf16.gmra.mrb[0].mxu0 %v9263
  %v9833 = vpop.f32.mrb[0].mxu0
  %v9834 = vadd.f32 %v8915, %v9833
  %v9835 = vpop.f32.mrb[0].mxu0
  %v9836 = vadd.f32 %v8919, %v9835
  %v9837 = vpop.f32.mrb[0].mxu0
  %v9838 = vadd.f32 %v8915, %v9837
  %v9839 = vpop.f32.mrb[0].mxu0
  %v9840 = vadd.f32 %v8919, %v9839
  %9841 = vmatprep.mubr.bf16.mxu0 0
  %9842 = vmatmul.mubr.bf16.gmra.mrb[0].mxu0 %v9266
  %v9843 = vpop.f32.mrb[0].mxu0
  %v9844 = vadd.f32 %v8915, %v9843
  %v9845 = vpop.f32.mrb[0].mxu0
  %v9846 = vadd.f32 %v8919, %v9845
  %v9847 = vpop.f32.mrb[0].mxu0
  %v9848 = vadd.f32 %v8915, %v9847
  %v9849 = vpop.f32.mrb[0].mxu0
  %v9850 = vadd.f32 %v8919, %v9849
  %9851 = vdwg.mxu0
  %v9852 = vmax.f32 %v9303, 0.0
  %v9853 = vmax.f32 %v9305, 0.0
  %v9854 = vmax.f32 %v9376, 0.0
  %v9855 = vmax.f32 %v9378, 0.0
  %v9856 = vmax.f32 %v9449, 0.0
  %v9857 = vmax.f32 %v9451, 0.0
  %v9858 = vmax.f32 %v9522, 0.0
  %v9859 = vmax.f32 %v9524, 0.0
  %v9860 = vmax.f32 %v9595, 0.0
  %v9861 = vmax.f32 %v9597, 0.0
  %v9862 = vmax.f32 %v9668, 0.0
  %v9863 = vmax.f32 %v9670, 0.0
  %v9864 = vmax.f32 %v9741, 0.0
  %v9865 = vmax.f32 %v9743, 0.0
  %v9866 = vmax.f32 %v9814, 0.0
  %v9867 = vmax.f32 %v9816, 0.0
  %v9868 = vmax.f32 %v9307, 0.0
  %v9869 = vmax.f32 %v9309, 0.0
  %v9870 = vmax.f32 %v9380, 0.0
  %v9871 = vmax.f32 %v9382, 0.0
  %v9872 = vmax.f32 %v9453, 0.0
  %v9873 = vmax.f32 %v9455, 0.0
  %v9874 = vmax.f32 %v9526, 0.0
  %v9875 = vmax.f32 %v9528, 0.0
  %v9876 = vmax.f32 %v9599, 0.0
  %v9877 = vmax.f32 %v9601, 0.0
  %v9878 = vmax.f32 %v9672, 0.0
  %v9879 = vmax.f32 %v9674, 0.0
  %v9880 = vmax.f32 %v9745, 0.0
  %v9881 = vmax.f32 %v9747, 0.0
  %v9882 = vmax.f32 %v9818, 0.0
  %v9883 = vmax.f32 %v9820, 0.0
  %v9884 = vmax.f32 %v9313, 0.0
  %v9885 = vmax.f32 %v9315, 0.0
  %v9886 = vmax.f32 %v9386, 0.0
  %v9887 = vmax.f32 %v9388, 0.0
  %v9888 = vmax.f32 %v9459, 0.0
  %v9889 = vmax.f32 %v9461, 0.0
  %v9890 = vmax.f32 %v9532, 0.0
  %v9891 = vmax.f32 %v9534, 0.0
  %v9892 = vmax.f32 %v9605, 0.0
  %v9893 = vmax.f32 %v9607, 0.0
  %v9894 = vmax.f32 %v9678, 0.0
  %v9895 = vmax.f32 %v9680, 0.0
  %v9896 = vmax.f32 %v9751, 0.0
  %v9897 = vmax.f32 %v9753, 0.0
  %v9898 = vmax.f32 %v9824, 0.0
  %v9899 = vmax.f32 %v9826, 0.0
  %v9900 = vmax.f32 %v9317, 0.0
  %v9901 = vmax.f32 %v9319, 0.0
  %v9902 = vmax.f32 %v9390, 0.0
  %v9903 = vmax.f32 %v9392, 0.0
  %v9904 = vmax.f32 %v9463, 0.0
  %v9905 = vmax.f32 %v9465, 0.0
  %v9906 = vmax.f32 %v9536, 0.0
  %v9907 = vmax.f32 %v9538, 0.0
  %v9908 = vmax.f32 %v9609, 0.0
  %v9909 = vmax.f32 %v9611, 0.0
  %v9910 = vmax.f32 %v9682, 0.0
  %v9911 = vmax.f32 %v9684, 0.0
  %v9912 = vmax.f32 %v9755, 0.0
  %v9913 = vmax.f32 %v9757, 0.0
  %v9914 = vmax.f32 %v9828, 0.0
  %v9915 = vmax.f32 %v9830, 0.0
  %v9916 = vmax.f32 %v9323, 0.0
  %v9917 = vmax.f32 %v9325, 0.0
  %v9918 = vmax.f32 %v9396, 0.0
  %v9919 = vmax.f32 %v9398, 0.0
  %v9920 = vmax.f32 %v9469, 0.0
  %v9921 = vmax.f32 %v9471, 0.0
  %v9922 = vmax.f32 %v9542, 0.0
  %v9923 = vmax.f32 %v9544, 0.0
  %v9924 = vmax.f32 %v9615, 0.0
  %v9925 = vmax.f32 %v9617, 0.0
  %v9926 = vmax.f32 %v9688, 0.0
  %v9927 = vmax.f32 %v9690, 0.0
  %v9928 = vmax.f32 %v9761, 0.0
  %v9929 = vmax.f32 %v9763, 0.0
  %v9930 = vmax.f32 %v9834, 0.0
  %v9931 = vmax.f32 %v9836, 0.0
  %v9932 = vmax.f32 %v9327, 0.0
  %v9933 = vmax.f32 %v9329, 0.0
  %v9934 = vmax.f32 %v9400, 0.0
  %v9935 = vmax.f32 %v9402, 0.0
  %v9936 = vmax.f32 %v9473, 0.0
  %v9937 = vmax.f32 %v9475, 0.0
  %v9938 = vmax.f32 %v9546, 0.0
  %v9939 = vmax.f32 %v9548, 0.0
  %v9940 = vmax.f32 %v9619, 0.0
  %v9941 = vmax.f32 %v9621, 0.0
  %v9942 = vmax.f32 %v9692, 0.0
  %v9943 = vmax.f32 %v9694, 0.0
  %v9944 = vmax.f32 %v9765, 0.0
  %v9945 = vmax.f32 %v9767, 0.0
  %v9946 = vmax.f32 %v9838, 0.0
  %v9947 = vmax.f32 %v9840, 0.0
  %v9948 = vmax.f32 %v9333, 0.0
  %v9949 = vmax.f32 %v9335, 0.0
  %v9950 = vmax.f32 %v9406, 0.0
  %v9951 = vmax.f32 %v9408, 0.0
  %v9952 = vmax.f32 %v9479, 0.0
  %v9953 = vmax.f32 %v9481, 0.0
  %v9954 = vmax.f32 %v9552, 0.0
  %v9955 = vmax.f32 %v9554, 0.0
  %v9956 = vmax.f32 %v9625, 0.0
  %v9957 = vmax.f32 %v9627, 0.0
  %v9958 = vmax.f32 %v9698, 0.0
  %v9959 = vmax.f32 %v9700, 0.0
  %v9960 = vmax.f32 %v9771, 0.0
  %v9961 = vmax.f32 %v9773, 0.0
  %v9962 = vmax.f32 %v9844, 0.0
  %v9963 = vmax.f32 %v9846, 0.0
  %v9964 = vmax.f32 %v9337, 0.0
  %v9965 = vmax.f32 %v9339, 0.0
  %v9966 = vmax.f32 %v9410, 0.0
  %v9967 = vmax.f32 %v9412, 0.0
  %v9968 = vmax.f32 %v9483, 0.0
  %v9969 = vmax.f32 %v9485, 0.0
  %v9970 = vmax.f32 %v9556, 0.0
  %v9971 = vmax.f32 %v9558, 0.0
  %v9972 = vmax.f32 %v9629, 0.0
  %v9973 = vmax.f32 %v9631, 0.0
  %v9974 = vmax.f32 %v9702, 0.0
  %v9975 = vmax.f32 %v9704, 0.0
  %v9976 = vmax.f32 %v9775, 0.0
  %v9977 = vmax.f32 %v9777, 0.0
  %v9978 = vmax.f32 %v9848, 0.0
  %v9979 = vmax.f32 %v9850, 0.0
  %v9980 = vpack.c.bf16 %v9868, %v9852
  %v9981 = vpack.c.bf16 %v9869, %v9853
  %v9982 = vpack.c.bf16 %v9870, %v9854
  %v9983 = vpack.c.bf16 %v9871, %v9855
  %v9984 = vpack.c.bf16 %v9872, %v9856
  %v9985 = vpack.c.bf16 %v9873, %v9857
  %v9986 = vpack.c.bf16 %v9874, %v9858
  %v9987 = vpack.c.bf16 %v9875, %v9859
  %v9988 = vpack.c.bf16 %v9876, %v9860
  %v9989 = vpack.c.bf16 %v9877, %v9861
  %v9990 = vpack.c.bf16 %v9878, %v9862
  %v9991 = vpack.c.bf16 %v9879, %v9863
  %v9992 = vpack.c.bf16 %v9880, %v9864
  %v9993 = vpack.c.bf16 %v9881, %v9865
  %v9994 = vpack.c.bf16 %v9882, %v9866
  %v9995 = vpack.c.bf16 %v9883, %v9867
  %v9996 = vpack.c.bf16 %v9900, %v9884
  %v9997 = vpack.c.bf16 %v9901, %v9885
  %v9998 = vpack.c.bf16 %v9902, %v9886
  %v9999 = vpack.c.bf16 %v9903, %v9887
  %v10000 = vpack.c.bf16 %v9904, %v9888
  %v10001 = vpack.c.bf16 %v9905, %v9889
  %v10002 = vpack.c.bf16 %v9906, %v9890
  %v10003 = vpack.c.bf16 %v9907, %v9891
  %v10004 = vpack.c.bf16 %v9908, %v9892
  %v10005 = vpack.c.bf16 %v9909, %v9893
  %v10006 = vpack.c.bf16 %v9910, %v9894
  %v10007 = vpack.c.bf16 %v9911, %v9895
  %v10008 = vpack.c.bf16 %v9912, %v9896
  %v10009 = vpack.c.bf16 %v9913, %v9897
  %v10010 = vpack.c.bf16 %v9914, %v9898
  %v10011 = vpack.c.bf16 %v9915, %v9899
  %v10012 = vpack.c.bf16 %v9932, %v9916
  %v10013 = vpack.c.bf16 %v9933, %v9917
  %v10014 = vpack.c.bf16 %v9934, %v9918
  %v10015 = vpack.c.bf16 %v9935, %v9919
  %v10016 = vpack.c.bf16 %v9936, %v9920
  %v10017 = vpack.c.bf16 %v9937, %v9921
  %v10018 = vpack.c.bf16 %v9938, %v9922
  %v10019 = vpack.c.bf16 %v9939, %v9923
  %v10020 = vpack.c.bf16 %v9940, %v9924
  %v10021 = vpack.c.bf16 %v9941, %v9925
  %v10022 = vpack.c.bf16 %v9942, %v9926
  %v10023 = vpack.c.bf16 %v9943, %v9927
  %v10024 = vpack.c.bf16 %v9944, %v9928
  %v10025 = vpack.c.bf16 %v9945, %v9929
  %v10026 = vpack.c.bf16 %v9946, %v9930
  %v10027 = vpack.c.bf16 %v9947, %v9931
  %v10028 = vpack.c.bf16 %v9964, %v9948
  %v10029 = vpack.c.bf16 %v9965, %v9949
  %v10030 = vpack.c.bf16 %v9966, %v9950
  %v10031 = vpack.c.bf16 %v9967, %v9951
  %v10032 = vpack.c.bf16 %v9968, %v9952
  %v10033 = vpack.c.bf16 %v9969, %v9953
  %v10034 = vpack.c.bf16 %v9970, %v9954
  %v10035 = vpack.c.bf16 %v9971, %v9955
  %v10036 = vpack.c.bf16 %v9972, %v9956
  %v10037 = vpack.c.bf16 %v9973, %v9957
  %v10038 = vpack.c.bf16 %v9974, %v9958
  %v10039 = vpack.c.bf16 %v9975, %v9959
  %v10040 = vpack.c.bf16 %v9976, %v9960
  %v10041 = vpack.c.bf16 %v9977, %v9961
  %v10042 = vpack.c.bf16 %v9978, %v9962
  %v10043 = vpack.c.bf16 %v9979, %v9963
  %s10044 = scalar_lea.vmem %s19, 1024
  %v10045 = vld [vmem:[%s10044] sm:$0xf]
  %v10046 = vld [vmem:[%s10044 + $0x4] sm:$0xf]
  %v10047 = vld [vmem:[%s10044 + $0x8] sm:$0xf]
  %v10048 = vld [vmem:[%s10044 + $0xc] sm:$0xf]
  %v10049 = vld [vmem:[%s10044 + $0x10] sm:$0xf]
  %v10050 = vld [vmem:[%s10044 + $0x14] sm:$0xf]
  %v10051 = vld [vmem:[%s10044 + $0x18] sm:$0xf]
  %v10052 = vld [vmem:[%s10044 + $0x1c] sm:$0xf]
  %v10053 = vld [vmem:[%s10044 + $0x20] sm:$0xf]
  %v10054 = vld [vmem:[%s10044 + $0x24] sm:$0xf]
  %v10055 = vld [vmem:[%s10044 + $0x28] sm:$0xf]
  %v10056 = vld [vmem:[%s10044 + $0x2c] sm:$0xf]
  %v10057 = vld [vmem:[%s10044 + $0x30] sm:$0xf]
  %v10058 = vld [vmem:[%s10044 + $0x34] sm:$0xf]
  %v10059 = vld [vmem:[%s10044 + $0x38] sm:$0xf]
  %v10060 = vld [vmem:[%s10044 + $0x3c] sm:$0xf]
  %v10061 = vld [vmem:[%s10044 + $0x40] sm:$0xf]
  %v10062 = vld [vmem:[%s10044 + $0x44] sm:$0xf]
  %v10063 = vld [vmem:[%s10044 + $0x48] sm:$0xf]
  %v10064 = vld [vmem:[%s10044 + $0x4c] sm:$0xf]
  %v10065 = vld [vmem:[%s10044 + $0x50] sm:$0xf]
  %v10066 = vld [vmem:[%s10044 + $0x54] sm:$0xf]
  %v10067 = vld [vmem:[%s10044 + $0x58] sm:$0xf]
  %v10068 = vld [vmem:[%s10044 + $0x5c] sm:$0xf]
  %v10069 = vld [vmem:[%s10044 + $0x60] sm:$0xf]
  %v10070 = vld [vmem:[%s10044 + $0x64] sm:$0xf]
  %v10071 = vld [vmem:[%s10044 + $0x68] sm:$0xf]
  %v10072 = vld [vmem:[%s10044 + $0x6c] sm:$0xf]
  %v10073 = vld [vmem:[%s10044 + $0x70] sm:$0xf]
  %v10074 = vld [vmem:[%s10044 + $0x74] sm:$0xf]
  %v10075 = vld [vmem:[%s10044 + $0x78] sm:$0xf]
  %v10076 = vld [vmem:[%s10044 + $0x7c] sm:$0xf]
  %v10077 = vld [vmem:[%s10044 + $0x80] sm:$0xf]
  %v10078 = vld [vmem:[%s10044 + $0x84] sm:$0xf]
  %v10079 = vld [vmem:[%s10044 + $0x88] sm:$0xf]
  %v10080 = vld [vmem:[%s10044 + $0x8c] sm:$0xf]
  %v10081 = vld [vmem:[%s10044 + $0x90] sm:$0xf]
  %v10082 = vld [vmem:[%s10044 + $0x94] sm:$0xf]
  %v10083 = vld [vmem:[%s10044 + $0x98] sm:$0xf]
  %v10084 = vld [vmem:[%s10044 + $0x9c] sm:$0xf]
  %v10085 = vld [vmem:[%s10044 + $0xa0] sm:$0xf]
  %v10086 = vld [vmem:[%s10044 + $0xa4] sm:$0xf]
  %v10087 = vld [vmem:[%s10044 + $0xa8] sm:$0xf]
  %v10088 = vld [vmem:[%s10044 + $0xac] sm:$0xf]
  %v10089 = vld [vmem:[%s10044 + $0xb0] sm:$0xf]
  %v10090 = vld [vmem:[%s10044 + $0xb4] sm:$0xf]
  %v10091 = vld [vmem:[%s10044 + $0xb8] sm:$0xf]
  %v10092 = vld [vmem:[%s10044 + $0xbc] sm:$0xf]
  %v10093 = vld [vmem:[%s10044 + $0xc0] sm:$0xf]
  %v10094 = vld [vmem:[%s10044 + $0xc4] sm:$0xf]
  %v10095 = vld [vmem:[%s10044 + $0xc8] sm:$0xf]
  %v10096 = vld [vmem:[%s10044 + $0xcc] sm:$0xf]
  %v10097 = vld [vmem:[%s10044 + $0xd0] sm:$0xf]
  %v10098 = vld [vmem:[%s10044 + $0xd4] sm:$0xf]
  %v10099 = vld [vmem:[%s10044 + $0xd8] sm:$0xf]
  %v10100 = vld [vmem:[%s10044 + $0xdc] sm:$0xf]
  %v10101 = vld [vmem:[%s10044 + $0xe0] sm:$0xf]
  %v10102 = vld [vmem:[%s10044 + $0xe4] sm:$0xf]
  %v10103 = vld [vmem:[%s10044 + $0xe8] sm:$0xf]
  %v10104 = vld [vmem:[%s10044 + $0xec] sm:$0xf]
  %v10105 = vld [vmem:[%s10044 + $0xf0] sm:$0xf]
  %v10106 = vld [vmem:[%s10044 + $0xf4] sm:$0xf]
  %v10107 = vld [vmem:[%s10044 + $0xf8] sm:$0xf]
  %v10108 = vld [vmem:[%s10044 + $0xfc] sm:$0xf]
  %v10109 = vld [vmem:[%s10044 + $0x100] sm:$0xf]
  %v10110 = vld [vmem:[%s10044 + $0x104] sm:$0xf]
  %v10111 = vld [vmem:[%s10044 + $0x108] sm:$0xf]
  %v10112 = vld [vmem:[%s10044 + $0x10c] sm:$0xf]
  %v10113 = vld [vmem:[%s10044 + $0x110] sm:$0xf]
  %v10114 = vld [vmem:[%s10044 + $0x114] sm:$0xf]
  %v10115 = vld [vmem:[%s10044 + $0x118] sm:$0xf]
  %v10116 = vld [vmem:[%s10044 + $0x11c] sm:$0xf]
  %v10117 = vld [vmem:[%s10044 + $0x120] sm:$0xf]
  %v10118 = vld [vmem:[%s10044 + $0x124] sm:$0xf]
  %v10119 = vld [vmem:[%s10044 + $0x128] sm:$0xf]
  %v10120 = vld [vmem:[%s10044 + $0x12c] sm:$0xf]
  %v10121 = vld [vmem:[%s10044 + $0x130] sm:$0xf]
  %v10122 = vld [vmem:[%s10044 + $0x134] sm:$0xf]
  %v10123 = vld [vmem:[%s10044 + $0x138] sm:$0xf]
  %v10124 = vld [vmem:[%s10044 + $0x13c] sm:$0xf]
  %v10125 = vld [vmem:[%s10044 + $0x140] sm:$0xf]
  %v10126 = vld [vmem:[%s10044 + $0x144] sm:$0xf]
  %v10127 = vld [vmem:[%s10044 + $0x148] sm:$0xf]
  %v10128 = vld [vmem:[%s10044 + $0x14c] sm:$0xf]
  %v10129 = vld [vmem:[%s10044 + $0x150] sm:$0xf]
  %v10130 = vld [vmem:[%s10044 + $0x154] sm:$0xf]
  %v10131 = vld [vmem:[%s10044 + $0x158] sm:$0xf]
  %v10132 = vld [vmem:[%s10044 + $0x15c] sm:$0xf]
  %v10133 = vld [vmem:[%s10044 + $0x160] sm:$0xf]
  %v10134 = vld [vmem:[%s10044 + $0x164] sm:$0xf]
  %v10135 = vld [vmem:[%s10044 + $0x168] sm:$0xf]
  %v10136 = vld [vmem:[%s10044 + $0x16c] sm:$0xf]
  %v10137 = vld [vmem:[%s10044 + $0x170] sm:$0xf]
  %v10138 = vld [vmem:[%s10044 + $0x174] sm:$0xf]
  %v10139 = vld [vmem:[%s10044 + $0x178] sm:$0xf]
  %v10140 = vld [vmem:[%s10044 + $0x17c] sm:$0xf]
  %v10141 = vld [vmem:[%s10044 + $0x180] sm:$0xf]
  %v10142 = vld [vmem:[%s10044 + $0x184] sm:$0xf]
  %v10143 = vld [vmem:[%s10044 + $0x188] sm:$0xf]
  %v10144 = vld [vmem:[%s10044 + $0x18c] sm:$0xf]
  %v10145 = vld [vmem:[%s10044 + $0x190] sm:$0xf]
  %v10146 = vld [vmem:[%s10044 + $0x194] sm:$0xf]
  %v10147 = vld [vmem:[%s10044 + $0x198] sm:$0xf]
  %v10148 = vld [vmem:[%s10044 + $0x19c] sm:$0xf]
  %v10149 = vld [vmem:[%s10044 + $0x1a0] sm:$0xf]
  %v10150 = vld [vmem:[%s10044 + $0x1a4] sm:$0xf]
  %v10151 = vld [vmem:[%s10044 + $0x1a8] sm:$0xf]
  %v10152 = vld [vmem:[%s10044 + $0x1ac] sm:$0xf]
  %v10153 = vld [vmem:[%s10044 + $0x1b0] sm:$0xf]
  %v10154 = vld [vmem:[%s10044 + $0x1b4] sm:$0xf]
  %v10155 = vld [vmem:[%s10044 + $0x1b8] sm:$0xf]
  %v10156 = vld [vmem:[%s10044 + $0x1bc] sm:$0xf]
  %v10157 = vld [vmem:[%s10044 + $0x1c0] sm:$0xf]
  %v10158 = vld [vmem:[%s10044 + $0x1c4] sm:$0xf]
  %v10159 = vld [vmem:[%s10044 + $0x1c8] sm:$0xf]
  %v10160 = vld [vmem:[%s10044 + $0x1cc] sm:$0xf]
  %v10161 = vld [vmem:[%s10044 + $0x1d0] sm:$0xf]
  %v10162 = vld [vmem:[%s10044 + $0x1d4] sm:$0xf]
  %v10163 = vld [vmem:[%s10044 + $0x1d8] sm:$0xf]
  %v10164 = vld [vmem:[%s10044 + $0x1dc] sm:$0xf]
  %v10165 = vld [vmem:[%s10044 + $0x1e0] sm:$0xf]
  %v10166 = vld [vmem:[%s10044 + $0x1e4] sm:$0xf]
  %v10167 = vld [vmem:[%s10044 + $0x1e8] sm:$0xf]
  %v10168 = vld [vmem:[%s10044 + $0x1ec] sm:$0xf]
  %v10169 = vld [vmem:[%s10044 + $0x1f0] sm:$0xf]
  %v10170 = vld [vmem:[%s10044 + $0x1f4] sm:$0xf]
  %v10171 = vld [vmem:[%s10044 + $0x1f8] sm:$0xf]
  %v10172 = vld [vmem:[%s10044 + $0x1fc] sm:$0xf]
  %v10173 = vld [vmem:[%s10044 + $0x200] sm:$0xf]
  %v10174 = vld [vmem:[%s10044 + $0x204] sm:$0xf]
  %v10175 = vld [vmem:[%s10044 + $0x208] sm:$0xf]
  %v10176 = vld [vmem:[%s10044 + $0x20c] sm:$0xf]
  %v10177 = vld [vmem:[%s10044 + $0x210] sm:$0xf]
  %v10178 = vld [vmem:[%s10044 + $0x214] sm:$0xf]
  %v10179 = vld [vmem:[%s10044 + $0x218] sm:$0xf]
  %v10180 = vld [vmem:[%s10044 + $0x21c] sm:$0xf]
  %v10181 = vld [vmem:[%s10044 + $0x220] sm:$0xf]
  %v10182 = vld [vmem:[%s10044 + $0x224] sm:$0xf]
  %v10183 = vld [vmem:[%s10044 + $0x228] sm:$0xf]
  %v10184 = vld [vmem:[%s10044 + $0x22c] sm:$0xf]
  %v10185 = vld [vmem:[%s10044 + $0x230] sm:$0xf]
  %v10186 = vld [vmem:[%s10044 + $0x234] sm:$0xf]
  %v10187 = vld [vmem:[%s10044 + $0x238] sm:$0xf]
  %v10188 = vld [vmem:[%s10044 + $0x23c] sm:$0xf]
  %v10189 = vld [vmem:[%s10044 + $0x240] sm:$0xf]
  %v10190 = vld [vmem:[%s10044 + $0x244] sm:$0xf]
  %v10191 = vld [vmem:[%s10044 + $0x248] sm:$0xf]
  %v10192 = vld [vmem:[%s10044 + $0x24c] sm:$0xf]
  %v10193 = vld [vmem:[%s10044 + $0x250] sm:$0xf]
  %v10194 = vld [vmem:[%s10044 + $0x254] sm:$0xf]
  %v10195 = vld [vmem:[%s10044 + $0x258] sm:$0xf]
  %v10196 = vld [vmem:[%s10044 + $0x25c] sm:$0xf]
  %v10197 = vld [vmem:[%s10044 + $0x260] sm:$0xf]
  %v10198 = vld [vmem:[%s10044 + $0x264] sm:$0xf]
  %v10199 = vld [vmem:[%s10044 + $0x268] sm:$0xf]
  %v10200 = vld [vmem:[%s10044 + $0x26c] sm:$0xf]
  %v10201 = vld [vmem:[%s10044 + $0x270] sm:$0xf]
  %v10202 = vld [vmem:[%s10044 + $0x274] sm:$0xf]
  %v10203 = vld [vmem:[%s10044 + $0x278] sm:$0xf]
  %v10204 = vld [vmem:[%s10044 + $0x27c] sm:$0xf]
  %v10205 = vld [vmem:[%s10044 + $0x280] sm:$0xf]
  %v10206 = vld [vmem:[%s10044 + $0x284] sm:$0xf]
  %v10207 = vld [vmem:[%s10044 + $0x288] sm:$0xf]
  %v10208 = vld [vmem:[%s10044 + $0x28c] sm:$0xf]
  %v10209 = vld [vmem:[%s10044 + $0x290] sm:$0xf]
  %v10210 = vld [vmem:[%s10044 + $0x294] sm:$0xf]
  %v10211 = vld [vmem:[%s10044 + $0x298] sm:$0xf]
  %v10212 = vld [vmem:[%s10044 + $0x29c] sm:$0xf]
  %v10213 = vld [vmem:[%s10044 + $0x2a0] sm:$0xf]
  %v10214 = vld [vmem:[%s10044 + $0x2a4] sm:$0xf]
  %v10215 = vld [vmem:[%s10044 + $0x2a8] sm:$0xf]
  %v10216 = vld [vmem:[%s10044 + $0x2ac] sm:$0xf]
  %v10217 = vld [vmem:[%s10044 + $0x2b0] sm:$0xf]
  %v10218 = vld [vmem:[%s10044 + $0x2b4] sm:$0xf]
  %v10219 = vld [vmem:[%s10044 + $0x2b8] sm:$0xf]
  %v10220 = vld [vmem:[%s10044 + $0x2bc] sm:$0xf]
  %v10221 = vld [vmem:[%s10044 + $0x2c0] sm:$0xf]
  %v10222 = vld [vmem:[%s10044 + $0x2c4] sm:$0xf]
  %v10223 = vld [vmem:[%s10044 + $0x2c8] sm:$0xf]
  %v10224 = vld [vmem:[%s10044 + $0x2cc] sm:$0xf]
  %v10225 = vld [vmem:[%s10044 + $0x2d0] sm:$0xf]
  %v10226 = vld [vmem:[%s10044 + $0x2d4] sm:$0xf]
  %v10227 = vld [vmem:[%s10044 + $0x2d8] sm:$0xf]
  %v10228 = vld [vmem:[%s10044 + $0x2dc] sm:$0xf]
  %v10229 = vld [vmem:[%s10044 + $0x2e0] sm:$0xf]
  %v10230 = vld [vmem:[%s10044 + $0x2e4] sm:$0xf]
  %v10231 = vld [vmem:[%s10044 + $0x2e8] sm:$0xf]
  %v10232 = vld [vmem:[%s10044 + $0x2ec] sm:$0xf]
  %v10233 = vld [vmem:[%s10044 + $0x2f0] sm:$0xf]
  %v10234 = vld [vmem:[%s10044 + $0x2f4] sm:$0xf]
  %v10235 = vld [vmem:[%s10044 + $0x2f8] sm:$0xf]
  %v10236 = vld [vmem:[%s10044 + $0x2fc] sm:$0xf]
  %v10237 = vld [vmem:[%s10044 + $0x300] sm:$0xf]
  %v10238 = vld [vmem:[%s10044 + $0x304] sm:$0xf]
  %v10239 = vld [vmem:[%s10044 + $0x308] sm:$0xf]
  %v10240 = vld [vmem:[%s10044 + $0x30c] sm:$0xf]
  %v10241 = vld [vmem:[%s10044 + $0x310] sm:$0xf]
  %v10242 = vld [vmem:[%s10044 + $0x314] sm:$0xf]
  %v10243 = vld [vmem:[%s10044 + $0x318] sm:$0xf]
  %v10244 = vld [vmem:[%s10044 + $0x31c] sm:$0xf]
  %v10245 = vld [vmem:[%s10044 + $0x320] sm:$0xf]
  %v10246 = vld [vmem:[%s10044 + $0x324] sm:$0xf]
  %v10247 = vld [vmem:[%s10044 + $0x328] sm:$0xf]
  %v10248 = vld [vmem:[%s10044 + $0x32c] sm:$0xf]
  %v10249 = vld [vmem:[%s10044 + $0x330] sm:$0xf]
  %v10250 = vld [vmem:[%s10044 + $0x334] sm:$0xf]
  %v10251 = vld [vmem:[%s10044 + $0x338] sm:$0xf]
  %v10252 = vld [vmem:[%s10044 + $0x33c] sm:$0xf]
  %v10253 = vld [vmem:[%s10044 + $0x340] sm:$0xf]
  %v10254 = vld [vmem:[%s10044 + $0x344] sm:$0xf]
  %v10255 = vld [vmem:[%s10044 + $0x348] sm:$0xf]
  %v10256 = vld [vmem:[%s10044 + $0x34c] sm:$0xf]
  %v10257 = vld [vmem:[%s10044 + $0x350] sm:$0xf]
  %v10258 = vld [vmem:[%s10044 + $0x354] sm:$0xf]
  %v10259 = vld [vmem:[%s10044 + $0x358] sm:$0xf]
  %v10260 = vld [vmem:[%s10044 + $0x35c] sm:$0xf]
  %v10261 = vld [vmem:[%s10044 + $0x360] sm:$0xf]
  %v10262 = vld [vmem:[%s10044 + $0x364] sm:$0xf]
  %v10263 = vld [vmem:[%s10044 + $0x368] sm:$0xf]
  %v10264 = vld [vmem:[%s10044 + $0x36c] sm:$0xf]
  %v10265 = vld [vmem:[%s10044 + $0x370] sm:$0xf]
  %v10266 = vld [vmem:[%s10044 + $0x374] sm:$0xf]
  %v10267 = vld [vmem:[%s10044 + $0x378] sm:$0xf]
  %v10268 = vld [vmem:[%s10044 + $0x37c] sm:$0xf]
  %v10269 = vld [vmem:[%s10044 + $0x380] sm:$0xf]
  %v10270 = vld [vmem:[%s10044 + $0x384] sm:$0xf]
  %v10271 = vld [vmem:[%s10044 + $0x388] sm:$0xf]
  %v10272 = vld [vmem:[%s10044 + $0x38c] sm:$0xf]
  %v10273 = vld [vmem:[%s10044 + $0x390] sm:$0xf]
  %v10274 = vld [vmem:[%s10044 + $0x394] sm:$0xf]
  %v10275 = vld [vmem:[%s10044 + $0x398] sm:$0xf]
  %v10276 = vld [vmem:[%s10044 + $0x39c] sm:$0xf]
  %v10277 = vld [vmem:[%s10044 + $0x3a0] sm:$0xf]
  %v10278 = vld [vmem:[%s10044 + $0x3a4] sm:$0xf]
  %v10279 = vld [vmem:[%s10044 + $0x3a8] sm:$0xf]
  %v10280 = vld [vmem:[%s10044 + $0x3ac] sm:$0xf]
  %v10281 = vld [vmem:[%s10044 + $0x3b0] sm:$0xf]
  %v10282 = vld [vmem:[%s10044 + $0x3b4] sm:$0xf]
  %v10283 = vld [vmem:[%s10044 + $0x3b8] sm:$0xf]
  %v10284 = vld [vmem:[%s10044 + $0x3bc] sm:$0xf]
  %v10285 = vld [vmem:[%s10044 + $0x3c0] sm:$0xf]
  %v10286 = vld [vmem:[%s10044 + $0x3c4] sm:$0xf]
  %v10287 = vld [vmem:[%s10044 + $0x3c8] sm:$0xf]
  %v10288 = vld [vmem:[%s10044 + $0x3cc] sm:$0xf]
  %v10289 = vld [vmem:[%s10044 + $0x3d0] sm:$0xf]
  %v10290 = vld [vmem:[%s10044 + $0x3d4] sm:$0xf]
  %v10291 = vld [vmem:[%s10044 + $0x3d8] sm:$0xf]
  %v10292 = vld [vmem:[%s10044 + $0x3dc] sm:$0xf]
  %v10293 = vld [vmem:[%s10044 + $0x3e0] sm:$0xf]
  %v10294 = vld [vmem:[%s10044 + $0x3e4] sm:$0xf]
  %v10295 = vld [vmem:[%s10044 + $0x3e8] sm:$0xf]
  %v10296 = vld [vmem:[%s10044 + $0x3ec] sm:$0xf]
  %v10297 = vld [vmem:[%s10044 + $0x3f0] sm:$0xf]
  %v10298 = vld [vmem:[%s10044 + $0x3f4] sm:$0xf]
  %v10299 = vld [vmem:[%s10044 + $0x3f8] sm:$0xf]
  %v10300 = vld [vmem:[%s10044 + $0x3fc] sm:$0xf]
  %s10301 = scalar_lea.vmem %s20, 1
  %v10302 = vld [vmem:[%s10301] sm:$0x1]
  %v10304 = vlaneseq
  %v10305 = vshrl.u32 %v10304, 7
  %v10306 = vsub.s32 0, %v10305
  %v10307 = vrot.slane %v10302, %v10306
  %v10565 = vunpack.c.l.b16 %v10045
  %v10566 = vunpack.c.l.b16 %v10046
  %v10567 = vunpack.c.l.b16 %v10047
  %v10568 = vunpack.c.l.b16 %v10048
  %v10569 = vunpack.c.l.b16 %v10049
  %v10570 = vunpack.c.l.b16 %v10050
  %v10571 = vunpack.c.l.b16 %v10051
  %v10572 = vunpack.c.l.b16 %v10052
  %v10573 = vunpack.c.l.b16 %v10053
  %v10574 = vunpack.c.l.b16 %v10054
  %v10575 = vunpack.c.l.b16 %v10055
  %v10576 = vunpack.c.l.b16 %v10056
  %v10577 = vunpack.c.l.b16 %v10057
  %v10578 = vunpack.c.l.b16 %v10058
  %v10579 = vunpack.c.l.b16 %v10059
  %v10580 = vunpack.c.l.b16 %v10060
  %v10581 = vunpack.c.l.b16 %v10061
  %v10582 = vunpack.c.l.b16 %v10062
  %v10583 = vunpack.c.l.b16 %v10063
  %v10584 = vunpack.c.l.b16 %v10064
  %v10585 = vunpack.c.l.b16 %v10065
  %v10586 = vunpack.c.l.b16 %v10066
  %v10587 = vunpack.c.l.b16 %v10067
  %v10588 = vunpack.c.l.b16 %v10068
  %v10589 = vunpack.c.l.b16 %v10069
  %v10590 = vunpack.c.l.b16 %v10070
  %v10591 = vunpack.c.l.b16 %v10071
  %v10592 = vunpack.c.l.b16 %v10072
  %v10593 = vunpack.c.l.b16 %v10073
  %v10594 = vunpack.c.l.b16 %v10074
  %v10595 = vunpack.c.l.b16 %v10075
  %v10596 = vunpack.c.l.b16 %v10076
  %v10597 = vunpack.c.l.b16 %v10077
  %v10598 = vunpack.c.l.b16 %v10078
  %v10599 = vunpack.c.l.b16 %v10079
  %v10600 = vunpack.c.l.b16 %v10080
  %v10601 = vunpack.c.l.b16 %v10081
  %v10602 = vunpack.c.l.b16 %v10082
  %v10603 = vunpack.c.l.b16 %v10083
  %v10604 = vunpack.c.l.b16 %v10084
  %v10605 = vunpack.c.l.b16 %v10085
  %v10606 = vunpack.c.l.b16 %v10086
  %v10607 = vunpack.c.l.b16 %v10087
  %v10608 = vunpack.c.l.b16 %v10088
  %v10609 = vunpack.c.l.b16 %v10089
  %v10610 = vunpack.c.l.b16 %v10090
  %v10611 = vunpack.c.l.b16 %v10091
  %v10612 = vunpack.c.l.b16 %v10092
  %v10613 = vunpack.c.l.b16 %v10093
  %v10614 = vunpack.c.l.b16 %v10094
  %v10615 = vunpack.c.l.b16 %v10095
  %v10616 = vunpack.c.l.b16 %v10096
  %v10617 = vunpack.c.l.b16 %v10097
  %v10618 = vunpack.c.l.b16 %v10098
  %v10619 = vunpack.c.l.b16 %v10099
  %v10620 = vunpack.c.l.b16 %v10100
  %v10621 = vunpack.c.l.b16 %v10101
  %v10622 = vunpack.c.l.b16 %v10102
  %v10623 = vunpack.c.l.b16 %v10103
  %v10624 = vunpack.c.l.b16 %v10104
  %v10625 = vunpack.c.l.b16 %v10105
  %v10626 = vunpack.c.l.b16 %v10106
  %v10627 = vunpack.c.l.b16 %v10107
  %v10628 = vunpack.c.l.b16 %v10108
  %v10629 = vunpack.c.l.b16 %v10109
  %v10630 = vunpack.c.l.b16 %v10110
  %v10631 = vunpack.c.l.b16 %v10111
  %v10632 = vunpack.c.l.b16 %v10112
  %v10633 = vunpack.c.l.b16 %v10113
  %v10634 = vunpack.c.l.b16 %v10114
  %v10635 = vunpack.c.l.b16 %v10115
  %v10636 = vunpack.c.l.b16 %v10116
  %v10637 = vunpack.c.l.b16 %v10117
  %v10638 = vunpack.c.l.b16 %v10118
  %v10639 = vunpack.c.l.b16 %v10119
  %v10640 = vunpack.c.l.b16 %v10120
  %v10641 = vunpack.c.l.b16 %v10121
  %v10642 = vunpack.c.l.b16 %v10122
  %v10643 = vunpack.c.l.b16 %v10123
  %v10644 = vunpack.c.l.b16 %v10124
  %v10645 = vunpack.c.l.b16 %v10125
  %v10646 = vunpack.c.l.b16 %v10126
  %v10647 = vunpack.c.l.b16 %v10127
  %v10648 = vunpack.c.l.b16 %v10128
  %v10649 = vunpack.c.l.b16 %v10129
  %v10650 = vunpack.c.l.b16 %v10130
  %v10651 = vunpack.c.l.b16 %v10131
  %v10652 = vunpack.c.l.b16 %v10132
  %v10653 = vunpack.c.l.b16 %v10133
  %v10654 = vunpack.c.l.b16 %v10134
  %v10655 = vunpack.c.l.b16 %v10135
  %v10656 = vunpack.c.l.b16 %v10136
  %v10657 = vunpack.c.l.b16 %v10137
  %v10658 = vunpack.c.l.b16 %v10138
  %v10659 = vunpack.c.l.b16 %v10139
  %v10660 = vunpack.c.l.b16 %v10140
  %v10661 = vunpack.c.l.b16 %v10141
  %v10662 = vunpack.c.l.b16 %v10142
  %v10663 = vunpack.c.l.b16 %v10143
  %v10664 = vunpack.c.l.b16 %v10144
  %v10665 = vunpack.c.l.b16 %v10145
  %v10666 = vunpack.c.l.b16 %v10146
  %v10667 = vunpack.c.l.b16 %v10147
  %v10668 = vunpack.c.l.b16 %v10148
  %v10669 = vunpack.c.l.b16 %v10149
  %v10670 = vunpack.c.l.b16 %v10150
  %v10671 = vunpack.c.l.b16 %v10151
  %v10672 = vunpack.c.l.b16 %v10152
  %v10673 = vunpack.c.l.b16 %v10153
  %v10674 = vunpack.c.l.b16 %v10154
  %v10675 = vunpack.c.l.b16 %v10155
  %v10676 = vunpack.c.l.b16 %v10156
  %v10677 = vunpack.c.l.b16 %v10157
  %v10678 = vunpack.c.l.b16 %v10158
  %v10679 = vunpack.c.l.b16 %v10159
  %v10680 = vunpack.c.l.b16 %v10160
  %v10681 = vunpack.c.l.b16 %v10161
  %v10682 = vunpack.c.l.b16 %v10162
  %v10683 = vunpack.c.l.b16 %v10163
  %v10684 = vunpack.c.l.b16 %v10164
  %v10685 = vunpack.c.l.b16 %v10165
  %v10686 = vunpack.c.l.b16 %v10166
  %v10687 = vunpack.c.l.b16 %v10167
  %v10688 = vunpack.c.l.b16 %v10168
  %v10689 = vunpack.c.l.b16 %v10169
  %v10690 = vunpack.c.l.b16 %v10170
  %v10691 = vunpack.c.l.b16 %v10171
  %v10692 = vunpack.c.l.b16 %v10172
  %v10693 = vunpack.c.l.b16 %v10173
  %v10694 = vunpack.c.l.b16 %v10174
  %v10695 = vunpack.c.l.b16 %v10175
  %v10696 = vunpack.c.l.b16 %v10176
  %v10697 = vunpack.c.l.b16 %v10177
  %v10698 = vunpack.c.l.b16 %v10178
  %v10699 = vunpack.c.l.b16 %v10179
  %v10700 = vunpack.c.l.b16 %v10180
  %v10701 = vunpack.c.l.b16 %v10181
  %v10702 = vunpack.c.l.b16 %v10182
  %v10703 = vunpack.c.l.b16 %v10183
  %v10704 = vunpack.c.l.b16 %v10184
  %v10705 = vunpack.c.l.b16 %v10185
  %v10706 = vunpack.c.l.b16 %v10186
  %v10707 = vunpack.c.l.b16 %v10187
  %v10708 = vunpack.c.l.b16 %v10188
  %v10709 = vunpack.c.l.b16 %v10189
  %v10710 = vunpack.c.l.b16 %v10190
  %v10711 = vunpack.c.l.b16 %v10191
  %v10712 = vunpack.c.l.b16 %v10192
  %v10713 = vunpack.c.l.b16 %v10193
  %v10714 = vunpack.c.l.b16 %v10194
  %v10715 = vunpack.c.l.b16 %v10195
  %v10716 = vunpack.c.l.b16 %v10196
  %v10717 = vunpack.c.l.b16 %v10197
  %v10718 = vunpack.c.l.b16 %v10198
  %v10719 = vunpack.c.l.b16 %v10199
  %v10720 = vunpack.c.l.b16 %v10200
  %v10721 = vunpack.c.l.b16 %v10201
  %v10722 = vunpack.c.l.b16 %v10202
  %v10723 = vunpack.c.l.b16 %v10203
  %v10724 = vunpack.c.l.b16 %v10204
  %v10725 = vunpack.c.l.b16 %v10205
  %v10726 = vunpack.c.l.b16 %v10206
  %v10727 = vunpack.c.l.b16 %v10207
  %v10728 = vunpack.c.l.b16 %v10208
  %v10729 = vunpack.c.l.b16 %v10209
  %v10730 = vunpack.c.l.b16 %v10210
  %v10731 = vunpack.c.l.b16 %v10211
  %v10732 = vunpack.c.l.b16 %v10212
  %v10733 = vunpack.c.l.b16 %v10213
  %v10734 = vunpack.c.l.b16 %v10214
  %v10735 = vunpack.c.l.b16 %v10215
  %v10736 = vunpack.c.l.b16 %v10216
  %v10737 = vunpack.c.l.b16 %v10217
  %v10738 = vunpack.c.l.b16 %v10218
  %v10739 = vunpack.c.l.b16 %v10219
  %v10740 = vunpack.c.l.b16 %v10220
  %v10741 = vunpack.c.l.b16 %v10221
  %v10742 = vunpack.c.l.b16 %v10222
  %v10743 = vunpack.c.l.b16 %v10223
  %v10744 = vunpack.c.l.b16 %v10224
  %v10745 = vunpack.c.l.b16 %v10225
  %v10746 = vunpack.c.l.b16 %v10226
  %v10747 = vunpack.c.l.b16 %v10227
  %v10748 = vunpack.c.l.b16 %v10228
  %v10749 = vunpack.c.l.b16 %v10229
  %v10750 = vunpack.c.l.b16 %v10230
  %v10751 = vunpack.c.l.b16 %v10231
  %v10752 = vunpack.c.l.b16 %v10232
  %v10753 = vunpack.c.l.b16 %v10233
  %v10754 = vunpack.c.l.b16 %v10234
  %v10755 = vunpack.c.l.b16 %v10235
  %v10756 = vunpack.c.l.b16 %v10236
  %v10757 = vunpack.c.l.b16 %v10237
  %v10758 = vunpack.c.l.b16 %v10238
  %v10759 = vunpack.c.l.b16 %v10239
  %v10760 = vunpack.c.l.b16 %v10240
  %v10761 = vunpack.c.l.b16 %v10241
  %v10762 = vunpack.c.l.b16 %v10242
  %v10763 = vunpack.c.l.b16 %v10243
  %v10764 = vunpack.c.l.b16 %v10244
  %v10765 = vunpack.c.l.b16 %v10245
  %v10766 = vunpack.c.l.b16 %v10246
  %v10767 = vunpack.c.l.b16 %v10247
  %v10768 = vunpack.c.l.b16 %v10248
  %v10769 = vunpack.c.l.b16 %v10249
  %v10770 = vunpack.c.l.b16 %v10250
  %v10771 = vunpack.c.l.b16 %v10251
  %v10772 = vunpack.c.l.b16 %v10252
  %v10773 = vunpack.c.l.b16 %v10253
  %v10774 = vunpack.c.l.b16 %v10254
  %v10775 = vunpack.c.l.b16 %v10255
  %v10776 = vunpack.c.l.b16 %v10256
  %v10777 = vunpack.c.l.b16 %v10257
  %v10778 = vunpack.c.l.b16 %v10258
  %v10779 = vunpack.c.l.b16 %v10259
  %v10780 = vunpack.c.l.b16 %v10260
  %v10781 = vunpack.c.l.b16 %v10261
  %v10782 = vunpack.c.l.b16 %v10262
  %v10783 = vunpack.c.l.b16 %v10263
  %v10784 = vunpack.c.l.b16 %v10264
  %v10785 = vunpack.c.l.b16 %v10265
  %v10786 = vunpack.c.l.b16 %v10266
  %v10787 = vunpack.c.l.b16 %v10267
  %v10788 = vunpack.c.l.b16 %v10268
  %v10789 = vunpack.c.l.b16 %v10269
  %v10790 = vunpack.c.l.b16 %v10270
  %v10791 = vunpack.c.l.b16 %v10271
  %v10792 = vunpack.c.l.b16 %v10272
  %v10793 = vunpack.c.l.b16 %v10273
  %v10794 = vunpack.c.l.b16 %v10274
  %v10795 = vunpack.c.l.b16 %v10275
  %v10796 = vunpack.c.l.b16 %v10276
  %v10797 = vunpack.c.l.b16 %v10277
  %v10798 = vunpack.c.l.b16 %v10278
  %v10799 = vunpack.c.l.b16 %v10279
  %v10800 = vunpack.c.l.b16 %v10280
  %v10801 = vunpack.c.l.b16 %v10281
  %v10802 = vunpack.c.l.b16 %v10282
  %v10803 = vunpack.c.l.b16 %v10283
  %v10804 = vunpack.c.l.b16 %v10284
  %v10805 = vunpack.c.l.b16 %v10285
  %v10806 = vunpack.c.l.b16 %v10286
  %v10807 = vunpack.c.l.b16 %v10287
  %v10808 = vunpack.c.l.b16 %v10288
  %v10809 = vunpack.c.l.b16 %v10289
  %v10810 = vunpack.c.l.b16 %v10290
  %v10811 = vunpack.c.l.b16 %v10291
  %v10812 = vunpack.c.l.b16 %v10292
  %v10813 = vunpack.c.l.b16 %v10293
  %v10814 = vunpack.c.l.b16 %v10294
  %v10815 = vunpack.c.l.b16 %v10295
  %v10816 = vunpack.c.l.b16 %v10296
  %v10817 = vunpack.c.l.b16 %v10297
  %v10818 = vunpack.c.l.b16 %v10298
  %v10819 = vunpack.c.l.b16 %v10299
  %v10820 = vunpack.c.l.b16 %v10300
  %v10821 = vpack.c.b16 %v10566, %v10565
  %v10822 = vpack.c.b16 %v10568, %v10567
  %v10823 = vpack.c.b16 %v10570, %v10569
  %v10824 = vpack.c.b16 %v10572, %v10571
  %v10825 = vpack.c.b16 %v10574, %v10573
  %v10826 = vpack.c.b16 %v10576, %v10575
  %v10827 = vpack.c.b16 %v10578, %v10577
  %v10828 = vpack.c.b16 %v10580, %v10579
  %v10829 = vpack.c.b16 %v10582, %v10581
  %v10830 = vpack.c.b16 %v10584, %v10583
  %v10831 = vpack.c.b16 %v10586, %v10585
  %v10832 = vpack.c.b16 %v10588, %v10587
  %v10833 = vpack.c.b16 %v10590, %v10589
  %v10834 = vpack.c.b16 %v10592, %v10591
  %v10835 = vpack.c.b16 %v10594, %v10593
  %v10836 = vpack.c.b16 %v10596, %v10595
  %v10837 = vpack.c.b16 %v10598, %v10597
  %v10838 = vpack.c.b16 %v10600, %v10599
  %v10839 = vpack.c.b16 %v10602, %v10601
  %v10840 = vpack.c.b16 %v10604, %v10603
  %v10841 = vpack.c.b16 %v10606, %v10605
  %v10842 = vpack.c.b16 %v10608, %v10607
  %v10843 = vpack.c.b16 %v10610, %v10609
  %v10844 = vpack.c.b16 %v10612, %v10611
  %v10845 = vpack.c.b16 %v10614, %v10613
  %v10846 = vpack.c.b16 %v10616, %v10615
  %v10847 = vpack.c.b16 %v10618, %v10617
  %v10848 = vpack.c.b16 %v10620, %v10619
  %v10849 = vpack.c.b16 %v10622, %v10621
  %v10850 = vpack.c.b16 %v10624, %v10623
  %v10851 = vpack.c.b16 %v10626, %v10625
  %v10852 = vpack.c.b16 %v10628, %v10627
  %v10853 = vpack.c.b16 %v10630, %v10629
  %v10854 = vpack.c.b16 %v10632, %v10631
  %v10855 = vpack.c.b16 %v10634, %v10633
  %v10856 = vpack.c.b16 %v10636, %v10635
  %v10857 = vpack.c.b16 %v10638, %v10637
  %v10858 = vpack.c.b16 %v10640, %v10639
  %v10859 = vpack.c.b16 %v10642, %v10641
  %v10860 = vpack.c.b16 %v10644, %v10643
  %v10861 = vpack.c.b16 %v10646, %v10645
  %v10862 = vpack.c.b16 %v10648, %v10647
  %v10863 = vpack.c.b16 %v10650, %v10649
  %v10864 = vpack.c.b16 %v10652, %v10651
  %v10865 = vpack.c.b16 %v10654, %v10653
  %v10866 = vpack.c.b16 %v10656, %v10655
  %v10867 = vpack.c.b16 %v10658, %v10657
  %v10868 = vpack.c.b16 %v10660, %v10659
  %v10869 = vpack.c.b16 %v10662, %v10661
  %v10870 = vpack.c.b16 %v10664, %v10663
  %v10871 = vpack.c.b16 %v10666, %v10665
  %v10872 = vpack.c.b16 %v10668, %v10667
  %v10873 = vpack.c.b16 %v10670, %v10669
  %v10874 = vpack.c.b16 %v10672, %v10671
  %v10875 = vpack.c.b16 %v10674, %v10673
  %v10876 = vpack.c.b16 %v10676, %v10675
  %v10877 = vpack.c.b16 %v10678, %v10677
  %v10878 = vpack.c.b16 %v10680, %v10679
  %v10879 = vpack.c.b16 %v10682, %v10681
  %v10880 = vpack.c.b16 %v10684, %v10683
  %v10881 = vpack.c.b16 %v10686, %v10685
  %v10882 = vpack.c.b16 %v10688, %v10687
  %v10883 = vpack.c.b16 %v10690, %v10689
  %v10884 = vpack.c.b16 %v10692, %v10691
  %v10885 = vpack.c.b16 %v10694, %v10693
  %v10886 = vpack.c.b16 %v10696, %v10695
  %v10887 = vpack.c.b16 %v10698, %v10697
  %v10888 = vpack.c.b16 %v10700, %v10699
  %v10889 = vpack.c.b16 %v10702, %v10701
  %v10890 = vpack.c.b16 %v10704, %v10703
  %v10891 = vpack.c.b16 %v10706, %v10705
  %v10892 = vpack.c.b16 %v10708, %v10707
  %v10893 = vpack.c.b16 %v10710, %v10709
  %v10894 = vpack.c.b16 %v10712, %v10711
  %v10895 = vpack.c.b16 %v10714, %v10713
  %v10896 = vpack.c.b16 %v10716, %v10715
  %v10897 = vpack.c.b16 %v10718, %v10717
  %v10898 = vpack.c.b16 %v10720, %v10719
  %v10899 = vpack.c.b16 %v10722, %v10721
  %v10900 = vpack.c.b16 %v10724, %v10723
  %v10901 = vpack.c.b16 %v10726, %v10725
  %v10902 = vpack.c.b16 %v10728, %v10727
  %v10903 = vpack.c.b16 %v10730, %v10729
  %v10904 = vpack.c.b16 %v10732, %v10731
  %v10905 = vpack.c.b16 %v10734, %v10733
  %v10906 = vpack.c.b16 %v10736, %v10735
  %v10907 = vpack.c.b16 %v10738, %v10737
  %v10908 = vpack.c.b16 %v10740, %v10739
  %v10909 = vpack.c.b16 %v10742, %v10741
  %v10910 = vpack.c.b16 %v10744, %v10743
  %v10911 = vpack.c.b16 %v10746, %v10745
  %v10912 = vpack.c.b16 %v10748, %v10747
  %v10913 = vpack.c.b16 %v10750, %v10749
  %v10914 = vpack.c.b16 %v10752, %v10751
  %v10915 = vpack.c.b16 %v10754, %v10753
  %v10916 = vpack.c.b16 %v10756, %v10755
  %v10917 = vpack.c.b16 %v10758, %v10757
  %v10918 = vpack.c.b16 %v10760, %v10759
  %v10919 = vpack.c.b16 %v10762, %v10761
  %v10920 = vpack.c.b16 %v10764, %v10763
  %v10921 = vpack.c.b16 %v10766, %v10765
  %v10922 = vpack.c.b16 %v10768, %v10767
  %v10923 = vpack.c.b16 %v10770, %v10769
  %v10924 = vpack.c.b16 %v10772, %v10771
  %v10925 = vpack.c.b16 %v10774, %v10773
  %v10926 = vpack.c.b16 %v10776, %v10775
  %v10927 = vpack.c.b16 %v10778, %v10777
  %v10928 = vpack.c.b16 %v10780, %v10779
  %v10929 = vpack.c.b16 %v10782, %v10781
  %v10930 = vpack.c.b16 %v10784, %v10783
  %v10931 = vpack.c.b16 %v10786, %v10785
  %v10932 = vpack.c.b16 %v10788, %v10787
  %v10933 = vpack.c.b16 %v10790, %v10789
  %v10934 = vpack.c.b16 %v10792, %v10791
  %v10935 = vpack.c.b16 %v10794, %v10793
  %v10936 = vpack.c.b16 %v10796, %v10795
  %v10937 = vpack.c.b16 %v10798, %v10797
  %v10938 = vpack.c.b16 %v10800, %v10799
  %v10939 = vpack.c.b16 %v10802, %v10801
  %v10940 = vpack.c.b16 %v10804, %v10803
  %v10941 = vpack.c.b16 %v10806, %v10805
  %v10942 = vpack.c.b16 %v10808, %v10807
  %v10943 = vpack.c.b16 %v10810, %v10809
  %v10944 = vpack.c.b16 %v10812, %v10811
  %v10945 = vpack.c.b16 %v10814, %v10813
  %v10946 = vpack.c.b16 %v10816, %v10815
  %v10947 = vpack.c.b16 %v10818, %v10817
  %v10948 = vpack.c.b16 %v10820, %v10819
  %11077 = vmatprep.subr.bf16.mxu0 0
  %11078 = vmatpush1.bf16.msra.mxu0 %v10821
  %11079 = vmatprep.subr.bf16.mxu0 0
  %11080 = vmatpush1.bf16.msra.mxu0 %v10822
  %11081 = vmatprep.subr.bf16.mxu0 0
  %11082 = vmatpush1.bf16.msra.mxu0 %v10823
  %11083 = vmatprep.subr.bf16.mxu0 0
  %11084 = vmatpush1.bf16.msra.mxu0 %v10824
  %11085 = vmatprep.subr.bf16.mxu0 0
  %11086 = vmatpush1.bf16.msra.mxu0 %v10825
  %11087 = vmatprep.subr.bf16.mxu0 0
  %11088 = vmatpush1.bf16.msra.mxu0 %v10826
  %11089 = vmatprep.subr.bf16.mxu0 0
  %11090 = vmatpush1.bf16.msra.mxu0 %v10827
  %11091 = vmatprep.subr.bf16.mxu0 0
  %11092 = vmatpush1.bf16.msra.mxu0 %v10828
  %11093 = vmatprep.subr.bf16.mxu0 0
  %11094 = vmatpush1.bf16.msra.mxu0 %v10829
  %11095 = vmatprep.subr.bf16.mxu0 0
  %11096 = vmatpush1.bf16.msra.mxu0 %v10830
  %11097 = vmatprep.subr.bf16.mxu0 0
  %11098 = vmatpush1.bf16.msra.mxu0 %v10831
  %11099 = vmatprep.subr.bf16.mxu0 0
  %11100 = vmatpush1.bf16.msra.mxu0 %v10832
  %11101 = vmatprep.subr.bf16.mxu0 0
  %11102 = vmatpush1.bf16.msra.mxu0 %v10833
  %11103 = vmatprep.subr.bf16.mxu0 0
  %11104 = vmatpush1.bf16.msra.mxu0 %v10834
  %11105 = vmatprep.subr.bf16.mxu0 0
  %11106 = vmatpush1.bf16.msra.mxu0 %v10835
  %11107 = vmatprep.subr.bf16.mxu0 0
  %11108 = vmatpush1.bf16.msra.mxu0 %v10836
  %11109 = vmatprep.mubr.bf16.mxu0 %v9981
  %11110 = vmatmul.mubr.bf16.gmra.mrb[0].mxu0 %v9980
  %v11111 = vpop.f32.mrb[0].mxu0
  %v11112 = vadd.f32 %v10307, %v11111
  %v11113 = vpop.f32.mrb[0].mxu0
  %v11114 = vpop.f32.mrb[0].mxu0
  %v11115 = vadd.f32 %v10307, %v11114
  %v11116 = vpop.f32.mrb[0].mxu0
  %11117 = vmatprep.mubr.bf16.mxu0 %v9997
  %11118 = vmatmul.mubr.bf16.gmra.mrb[0].mxu0 %v9996
  %v11119 = vpop.f32.mrb[0].mxu0
  %v11120 = vadd.f32 %v10307, %v11119
  %v11121 = vpop.f32.mrb[0].mxu0
  %v11122 = vpop.f32.mrb[0].mxu0
  %v11123 = vadd.f32 %v10307, %v11122
  %v11124 = vpop.f32.mrb[0].mxu0
  %11125 = vmatprep.mubr.bf16.mxu0 %v10013
  %11126 = vmatmul.mubr.bf16.gmra.mrb[0].mxu0 %v10012
  %v11127 = vpop.f32.mrb[0].mxu0
  %v11128 = vadd.f32 %v10307, %v11127
  %v11129 = vpop.f32.mrb[0].mxu0
  %v11130 = vpop.f32.mrb[0].mxu0
  %v11131 = vadd.f32 %v10307, %v11130
  %v11132 = vpop.f32.mrb[0].mxu0
  %11133 = vmatprep.mubr.bf16.mxu0 %v10029
  %11134 = vmatmul.mubr.bf16.gmra.mrb[0].mxu0 %v10028
  %v11135 = vpop.f32.mrb[0].mxu0
  %v11136 = vadd.f32 %v10307, %v11135
  %v11137 = vpop.f32.mrb[0].mxu0
  %v11138 = vpop.f32.mrb[0].mxu0
  %v11139 = vadd.f32 %v10307, %v11138
  %v11140 = vpop.f32.mrb[0].mxu0
  %11141 = vdwg.mxu0
  %11142 = vmatprep.subr.bf16.mxu0 0
  %11143 = vmatpush1.bf16.msra.mxu0 %v10837
  %11144 = vmatprep.subr.bf16.mxu0 0
  %11145 = vmatpush1.bf16.msra.mxu0 %v10838
  %11146 = vmatprep.subr.bf16.mxu0 0
  %11147 = vmatpush1.bf16.msra.mxu0 %v10839
  %11148 = vmatprep.subr.bf16.mxu0 0
  %11149 = vmatpush1.bf16.msra.mxu0 %v10840
  %11150 = vmatprep.subr.bf16.mxu0 0
  %11151 = vmatpush1.bf16.msra.mxu0 %v10841
  %11152 = vmatprep.subr.bf16.mxu0 0
  %11153 = vmatpush1.bf16.msra.mxu0 %v10842
  %11154 = vmatprep.subr.bf16.mxu0 0
  %11155 = vmatpush1.bf16.msra.mxu0 %v10843
  %11156 = vmatprep.subr.bf16.mxu0 0
  %11157 = vmatpush1.bf16.msra.mxu0 %v10844
  %11158 = vmatprep.subr.bf16.mxu0 0
  %11159 = vmatpush1.bf16.msra.mxu0 %v10845
  %11160 = vmatprep.subr.bf16.mxu0 0
  %11161 = vmatpush1.bf16.msra.mxu0 %v10846
  %11162 = vmatprep.subr.bf16.mxu0 0
  %11163 = vmatpush1.bf16.msra.mxu0 %v10847
  %11164 = vmatprep.subr.bf16.mxu0 0
  %11165 = vmatpush1.bf16.msra.mxu0 %v10848
  %11166 = vmatprep.subr.bf16.mxu0 0
  %11167 = vmatpush1.bf16.msra.mxu0 %v10849
  %11168 = vmatprep.subr.bf16.mxu0 0
  %11169 = vmatpush1.bf16.msra.mxu0 %v10850
  %11170 = vmatprep.subr.bf16.mxu0 0
  %11171 = vmatpush1.bf16.msra.mxu0 %v10851
  %11172 = vmatprep.subr.bf16.mxu0 0
  %11173 = vmatpush1.bf16.msra.mxu0 %v10852
  %11174 = vmatprep.mubr.bf16.mxu0 %v9983
  %11175 = vmatmul.mubr.bf16.gmra.mrb[0].mxu0 %v9982
  %v11176 = vpop.f32.mrb[0].mxu0
  %v11177 = vadd.f32 %v11112, %v11176
  %v11178 = vpop.f32.mrb[0].mxu0
  %v11179 = vpop.f32.mrb[0].mxu0
  %v11180 = vadd.f32 %v11115, %v11179
  %v11181 = vpop.f32.mrb[0].mxu0
  %11182 = vmatprep.mubr.bf16.mxu0 %v9999
  %11183 = vmatmul.mubr.bf16.gmra.mrb[0].mxu0 %v9998
  %v11184 = vpop.f32.mrb[0].mxu0
  %v11185 = vadd.f32 %v11120, %v11184
  %v11186 = vpop.f32.mrb[0].mxu0
  %v11187 = vpop.f32.mrb[0].mxu0
  %v11188 = vadd.f32 %v11123, %v11187
  %v11189 = vpop.f32.mrb[0].mxu0
  %11190 = vmatprep.mubr.bf16.mxu0 %v10015
  %11191 = vmatmul.mubr.bf16.gmra.mrb[0].mxu0 %v10014
  %v11192 = vpop.f32.mrb[0].mxu0
  %v11193 = vadd.f32 %v11128, %v11192
  %v11194 = vpop.f32.mrb[0].mxu0
  %v11195 = vpop.f32.mrb[0].mxu0
  %v11196 = vadd.f32 %v11131, %v11195
  %v11197 = vpop.f32.mrb[0].mxu0
  %11198 = vmatprep.mubr.bf16.mxu0 %v10031
  %11199 = vmatmul.mubr.bf16.gmra.mrb[0].mxu0 %v10030
  %v11200 = vpop.f32.mrb[0].mxu0
  %v11201 = vadd.f32 %v11136, %v11200
  %v11202 = vpop.f32.mrb[0].mxu0
  %v11203 = vpop.f32.mrb[0].mxu0
  %v11204 = vadd.f32 %v11139, %v11203
  %v11205 = vpop.f32.mrb[0].mxu0
  %11206 = vdwg.mxu0
  %11207 = vmatprep.subr.bf16.mxu0 0
  %11208 = vmatpush1.bf16.msra.mxu0 %v10853
  %11209 = vmatprep.subr.bf16.mxu0 0
  %11210 = vmatpush1.bf16.msra.mxu0 %v10854
  %11211 = vmatprep.subr.bf16.mxu0 0
  %11212 = vmatpush1.bf16.msra.mxu0 %v10855
  %11213 = vmatprep.subr.bf16.mxu0 0
  %11214 = vmatpush1.bf16.msra.mxu0 %v10856
  %11215 = vmatprep.subr.bf16.mxu0 0
  %11216 = vmatpush1.bf16.msra.mxu0 %v10857
  %11217 = vmatprep.subr.bf16.mxu0 0
  %11218 = vmatpush1.bf16.msra.mxu0 %v10858
  %11219 = vmatprep.subr.bf16.mxu0 0
  %11220 = vmatpush1.bf16.msra.mxu0 %v10859
  %11221 = vmatprep.subr.bf16.mxu0 0
  %11222 = vmatpush1.bf16.msra.mxu0 %v10860
  %11223 = vmatprep.subr.bf16.mxu0 0
  %11224 = vmatpush1.bf16.msra.mxu0 %v10861
  %11225 = vmatprep.subr.bf16.mxu0 0
  %11226 = vmatpush1.bf16.msra.mxu0 %v10862
  %11227 = vmatprep.subr.bf16.mxu0 0
  %11228 = vmatpush1.bf16.msra.mxu0 %v10863
  %11229 = vmatprep.subr.bf16.mxu0 0
  %11230 = vmatpush1.bf16.msra.mxu0 %v10864
  %11231 = vmatprep.subr.bf16.mxu0 0
  %11232 = vmatpush1.bf16.msra.mxu0 %v10865
  %11233 = vmatprep.subr.bf16.mxu0 0
  %11234 = vmatpush1.bf16.msra.mxu0 %v10866
  %11235 = vmatprep.subr.bf16.mxu0 0
  %11236 = vmatpush1.bf16.msra.mxu0 %v10867
  %11237 = vmatprep.subr.bf16.mxu0 0
  %11238 = vmatpush1.bf16.msra.mxu0 %v10868
  %11239 = vmatprep.mubr.bf16.mxu0 %v9985
  %11240 = vmatmul.mubr.bf16.gmra.mrb[0].mxu0 %v9984
  %v11241 = vpop.f32.mrb[0].mxu0
  %v11242 = vadd.f32 %v11177, %v11241
  %v11243 = vpop.f32.mrb[0].mxu0
  %v11244 = vpop.f32.mrb[0].mxu0
  %v11245 = vadd.f32 %v11180, %v11244
  %v11246 = vpop.f32.mrb[0].mxu0
  %11247 = vmatprep.mubr.bf16.mxu0 %v10001
  %11248 = vmatmul.mubr.bf16.gmra.mrb[0].mxu0 %v10000
  %v11249 = vpop.f32.mrb[0].mxu0
  %v11250 = vadd.f32 %v11185, %v11249
  %v11251 = vpop.f32.mrb[0].mxu0
  %v11252 = vpop.f32.mrb[0].mxu0
  %v11253 = vadd.f32 %v11188, %v11252
  %v11254 = vpop.f32.mrb[0].mxu0
  %11255 = vmatprep.mubr.bf16.mxu0 %v10017
  %11256 = vmatmul.mubr.bf16.gmra.mrb[0].mxu0 %v10016
  %v11257 = vpop.f32.mrb[0].mxu0
  %v11258 = vadd.f32 %v11193, %v11257
  %v11259 = vpop.f32.mrb[0].mxu0
  %v11260 = vpop.f32.mrb[0].mxu0
  %v11261 = vadd.f32 %v11196, %v11260
  %v11262 = vpop.f32.mrb[0].mxu0
  %11263 = vmatprep.mubr.bf16.mxu0 %v10033
  %11264 = vmatmul.mubr.bf16.gmra.mrb[0].mxu0 %v10032
  %v11265 = vpop.f32.mrb[0].mxu0
  %v11266 = vadd.f32 %v11201, %v11265
  %v11267 = vpop.f32.mrb[0].mxu0
  %v11268 = vpop.f32.mrb[0].mxu0
  %v11269 = vadd.f32 %v11204, %v11268
  %v11270 = vpop.f32.mrb[0].mxu0
  %11271 = vdwg.mxu0
  %11272 = vmatprep.subr.bf16.mxu0 0
  %11273 = vmatpush1.bf16.msra.mxu0 %v10869
  %11274 = vmatprep.subr.bf16.mxu0 0
  %11275 = vmatpush1.bf16.msra.mxu0 %v10870
  %11276 = vmatprep.subr.bf16.mxu0 0
  %11277 = vmatpush1.bf16.msra.mxu0 %v10871
  %11278 = vmatprep.subr.bf16.mxu0 0
  %11279 = vmatpush1.bf16.msra.mxu0 %v10872
  %11280 = vmatprep.subr.bf16.mxu0 0
  %11281 = vmatpush1.bf16.msra.mxu0 %v10873
  %11282 = vmatprep.subr.bf16.mxu0 0
  %11283 = vmatpush1.bf16.msra.mxu0 %v10874
  %11284 = vmatprep.subr.bf16.mxu0 0
  %11285 = vmatpush1.bf16.msra.mxu0 %v10875
  %11286 = vmatprep.subr.bf16.mxu0 0
  %11287 = vmatpush1.bf16.msra.mxu0 %v10876
  %11288 = vmatprep.subr.bf16.mxu0 0
  %11289 = vmatpush1.bf16.msra.mxu0 %v10877
  %11290 = vmatprep.subr.bf16.mxu0 0
  %11291 = vmatpush1.bf16.msra.mxu0 %v10878
  %11292 = vmatprep.subr.bf16.mxu0 0
  %11293 = vmatpush1.bf16.msra.mxu0 %v10879
  %11294 = vmatprep.subr.bf16.mxu0 0
  %11295 = vmatpush1.bf16.msra.mxu0 %v10880
  %11296 = vmatprep.subr.bf16.mxu0 0
  %11297 = vmatpush1.bf16.msra.mxu0 %v10881
  %11298 = vmatprep.subr.bf16.mxu0 0
  %11299 = vmatpush1.bf16.msra.mxu0 %v10882
  %11300 = vmatprep.subr.bf16.mxu0 0
  %11301 = vmatpush1.bf16.msra.mxu0 %v10883
  %11302 = vmatprep.subr.bf16.mxu0 0
  %11303 = vmatpush1.bf16.msra.mxu0 %v10884
  %11304 = vmatprep.mubr.bf16.mxu0 %v9987
  %11305 = vmatmul.mubr.bf16.gmra.mrb[0].mxu0 %v9986
  %v11306 = vpop.f32.mrb[0].mxu0
  %v11307 = vadd.f32 %v11242, %v11306
  %v11308 = vpop.f32.mrb[0].mxu0
  %v11309 = vpop.f32.mrb[0].mxu0
  %v11310 = vadd.f32 %v11245, %v11309
  %v11311 = vpop.f32.mrb[0].mxu0
  %11312 = vmatprep.mubr.bf16.mxu0 %v10003
  %11313 = vmatmul.mubr.bf16.gmra.mrb[0].mxu0 %v10002
  %v11314 = vpop.f32.mrb[0].mxu0
  %v11315 = vadd.f32 %v11250, %v11314
  %v11316 = vpop.f32.mrb[0].mxu0
  %v11317 = vpop.f32.mrb[0].mxu0
  %v11318 = vadd.f32 %v11253, %v11317
  %v11319 = vpop.f32.mrb[0].mxu0
  %11320 = vmatprep.mubr.bf16.mxu0 %v10019
  %11321 = vmatmul.mubr.bf16.gmra.mrb[0].mxu0 %v10018
  %v11322 = vpop.f32.mrb[0].mxu0
  %v11323 = vadd.f32 %v11258, %v11322
  %v11324 = vpop.f32.mrb[0].mxu0
  %v11325 = vpop.f32.mrb[0].mxu0
  %v11326 = vadd.f32 %v11261, %v11325
  %v11327 = vpop.f32.mrb[0].mxu0
  %11328 = vmatprep.mubr.bf16.mxu0 %v10035
  %11329 = vmatmul.mubr.bf16.gmra.mrb[0].mxu0 %v10034
  %v11330 = vpop.f32.mrb[0].mxu0
  %v11331 = vadd.f32 %v11266, %v11330
  %v11332 = vpop.f32.mrb[0].mxu0
  %v11333 = vpop.f32.mrb[0].mxu0
  %v11334 = vadd.f32 %v11269, %v11333
  %v11335 = vpop.f32.mrb[0].mxu0
  %11336 = vdwg.mxu0
  %11337 = vmatprep.subr.bf16.mxu0 0
  %11338 = vmatpush1.bf16.msra.mxu0 %v10885
  %11339 = vmatprep.subr.bf16.mxu0 0
  %11340 = vmatpush1.bf16.msra.mxu0 %v10886
  %11341 = vmatprep.subr.bf16.mxu0 0
  %11342 = vmatpush1.bf16.msra.mxu0 %v10887
  %11343 = vmatprep.subr.bf16.mxu0 0
  %11344 = vmatpush1.bf16.msra.mxu0 %v10888
  %11345 = vmatprep.subr.bf16.mxu0 0
  %11346 = vmatpush1.bf16.msra.mxu0 %v10889
  %11347 = vmatprep.subr.bf16.mxu0 0
  %11348 = vmatpush1.bf16.msra.mxu0 %v10890
  %11349 = vmatprep.subr.bf16.mxu0 0
  %11350 = vmatpush1.bf16.msra.mxu0 %v10891
  %11351 = vmatprep.subr.bf16.mxu0 0
  %11352 = vmatpush1.bf16.msra.mxu0 %v10892
  %11353 = vmatprep.subr.bf16.mxu0 0
  %11354 = vmatpush1.bf16.msra.mxu0 %v10893
  %11355 = vmatprep.subr.bf16.mxu0 0
  %11356 = vmatpush1.bf16.msra.mxu0 %v10894
  %11357 = vmatprep.subr.bf16.mxu0 0
  %11358 = vmatpush1.bf16.msra.mxu0 %v10895
  %11359 = vmatprep.subr.bf16.mxu0 0
  %11360 = vmatpush1.bf16.msra.mxu0 %v10896
  %11361 = vmatprep.subr.bf16.mxu0 0
  %11362 = vmatpush1.bf16.msra.mxu0 %v10897
  %11363 = vmatprep.subr.bf16.mxu0 0
  %11364 = vmatpush1.bf16.msra.mxu0 %v10898
  %11365 = vmatprep.subr.bf16.mxu0 0
  %11366 = vmatpush1.bf16.msra.mxu0 %v10899
  %11367 = vmatprep.subr.bf16.mxu0 0
  %11368 = vmatpush1.bf16.msra.mxu0 %v10900
  %11369 = vmatprep.mubr.bf16.mxu0 %v9989
  %11370 = vmatmul.mubr.bf16.gmra.mrb[0].mxu0 %v9988
  %v11371 = vpop.f32.mrb[0].mxu0
  %v11372 = vadd.f32 %v11307, %v11371
  %v11373 = vpop.f32.mrb[0].mxu0
  %v11374 = vpop.f32.mrb[0].mxu0
  %v11375 = vadd.f32 %v11310, %v11374
  %v11376 = vpop.f32.mrb[0].mxu0
  %11377 = vmatprep.mubr.bf16.mxu0 %v10005
  %11378 = vmatmul.mubr.bf16.gmra.mrb[0].mxu0 %v10004
  %v11379 = vpop.f32.mrb[0].mxu0
  %v11380 = vadd.f32 %v11315, %v11379
  %v11381 = vpop.f32.mrb[0].mxu0
  %v11382 = vpop.f32.mrb[0].mxu0
  %v11383 = vadd.f32 %v11318, %v11382
  %v11384 = vpop.f32.mrb[0].mxu0
  %11385 = vmatprep.mubr.bf16.mxu0 %v10021
  %11386 = vmatmul.mubr.bf16.gmra.mrb[0].mxu0 %v10020
  %v11387 = vpop.f32.mrb[0].mxu0
  %v11388 = vadd.f32 %v11323, %v11387
  %v11389 = vpop.f32.mrb[0].mxu0
  %v11390 = vpop.f32.mrb[0].mxu0
  %v11391 = vadd.f32 %v11326, %v11390
  %v11392 = vpop.f32.mrb[0].mxu0
  %11393 = vmatprep.mubr.bf16.mxu0 %v10037
  %11394 = vmatmul.mubr.bf16.gmra.mrb[0].mxu0 %v10036
  %v11395 = vpop.f32.mrb[0].mxu0
  %v11396 = vadd.f32 %v11331, %v11395
  %v11397 = vpop.f32.mrb[0].mxu0
  %v11398 = vpop.f32.mrb[0].mxu0
  %v11399 = vadd.f32 %v11334, %v11398
  %v11400 = vpop.f32.mrb[0].mxu0
  %11401 = vdwg.mxu0
  %11402 = vmatprep.subr.bf16.mxu0 0
  %11403 = vmatpush1.bf16.msra.mxu0 %v10901
  %11404 = vmatprep.subr.bf16.mxu0 0
  %11405 = vmatpush1.bf16.msra.mxu0 %v10902
  %11406 = vmatprep.subr.bf16.mxu0 0
  %11407 = vmatpush1.bf16.msra.mxu0 %v10903
  %11408 = vmatprep.subr.bf16.mxu0 0
  %11409 = vmatpush1.bf16.msra.mxu0 %v10904
  %11410 = vmatprep.subr.bf16.mxu0 0
  %11411 = vmatpush1.bf16.msra.mxu0 %v10905
  %11412 = vmatprep.subr.bf16.mxu0 0
  %11413 = vmatpush1.bf16.msra.mxu0 %v10906
  %11414 = vmatprep.subr.bf16.mxu0 0
  %11415 = vmatpush1.bf16.msra.mxu0 %v10907
  %11416 = vmatprep.subr.bf16.mxu0 0
  %11417 = vmatpush1.bf16.msra.mxu0 %v10908
  %11418 = vmatprep.subr.bf16.mxu0 0
  %11419 = vmatpush1.bf16.msra.mxu0 %v10909
  %11420 = vmatprep.subr.bf16.mxu0 0
  %11421 = vmatpush1.bf16.msra.mxu0 %v10910
  %11422 = vmatprep.subr.bf16.mxu0 0
  %11423 = vmatpush1.bf16.msra.mxu0 %v10911
  %11424 = vmatprep.subr.bf16.mxu0 0
  %11425 = vmatpush1.bf16.msra.mxu0 %v10912
  %11426 = vmatprep.subr.bf16.mxu0 0
  %11427 = vmatpush1.bf16.msra.mxu0 %v10913
  %11428 = vmatprep.subr.bf16.mxu0 0
  %11429 = vmatpush1.bf16.msra.mxu0 %v10914
  %11430 = vmatprep.subr.bf16.mxu0 0
  %11431 = vmatpush1.bf16.msra.mxu0 %v10915
  %11432 = vmatprep.subr.bf16.mxu0 0
  %11433 = vmatpush1.bf16.msra.mxu0 %v10916
  %11434 = vmatprep.mubr.bf16.mxu0 %v9991
  %11435 = vmatmul.mubr.bf16.gmra.mrb[0].mxu0 %v9990
  %v11436 = vpop.f32.mrb[0].mxu0
  %v11437 = vadd.f32 %v11372, %v11436
  %v11438 = vpop.f32.mrb[0].mxu0
  %v11439 = vpop.f32.mrb[0].mxu0
  %v11440 = vadd.f32 %v11375, %v11439
  %v11441 = vpop.f32.mrb[0].mxu0
  %11442 = vmatprep.mubr.bf16.mxu0 %v10007
  %11443 = vmatmul.mubr.bf16.gmra.mrb[0].mxu0 %v10006
  %v11444 = vpop.f32.mrb[0].mxu0
  %v11445 = vadd.f32 %v11380, %v11444
  %v11446 = vpop.f32.mrb[0].mxu0
  %v11447 = vpop.f32.mrb[0].mxu0
  %v11448 = vadd.f32 %v11383, %v11447
  %v11449 = vpop.f32.mrb[0].mxu0
  %11450 = vmatprep.mubr.bf16.mxu0 %v10023
  %11451 = vmatmul.mubr.bf16.gmra.mrb[0].mxu0 %v10022
  %v11452 = vpop.f32.mrb[0].mxu0
  %v11453 = vadd.f32 %v11388, %v11452
  %v11454 = vpop.f32.mrb[0].mxu0
  %v11455 = vpop.f32.mrb[0].mxu0
  %v11456 = vadd.f32 %v11391, %v11455
  %v11457 = vpop.f32.mrb[0].mxu0
  %11458 = vmatprep.mubr.bf16.mxu0 %v10039
  %11459 = vmatmul.mubr.bf16.gmra.mrb[0].mxu0 %v10038
  %v11460 = vpop.f32.mrb[0].mxu0
  %v11461 = vadd.f32 %v11396, %v11460
  %v11462 = vpop.f32.mrb[0].mxu0
  %v11463 = vpop.f32.mrb[0].mxu0
  %v11464 = vadd.f32 %v11399, %v11463
  %v11465 = vpop.f32.mrb[0].mxu0
  %11466 = vdwg.mxu0
  %11467 = vmatprep.subr.bf16.mxu0 0
  %11468 = vmatpush1.bf16.msra.mxu0 %v10917
  %11469 = vmatprep.subr.bf16.mxu0 0
  %11470 = vmatpush1.bf16.msra.mxu0 %v10918
  %11471 = vmatprep.subr.bf16.mxu0 0
  %11472 = vmatpush1.bf16.msra.mxu0 %v10919
  %11473 = vmatprep.subr.bf16.mxu0 0
  %11474 = vmatpush1.bf16.msra.mxu0 %v10920
  %11475 = vmatprep.subr.bf16.mxu0 0
  %11476 = vmatpush1.bf16.msra.mxu0 %v10921
  %11477 = vmatprep.subr.bf16.mxu0 0
  %11478 = vmatpush1.bf16.msra.mxu0 %v10922
  %11479 = vmatprep.subr.bf16.mxu0 0
  %11480 = vmatpush1.bf16.msra.mxu0 %v10923
  %11481 = vmatprep.subr.bf16.mxu0 0
  %11482 = vmatpush1.bf16.msra.mxu0 %v10924
  %11483 = vmatprep.subr.bf16.mxu0 0
  %11484 = vmatpush1.bf16.msra.mxu0 %v10925
  %11485 = vmatprep.subr.bf16.mxu0 0
  %11486 = vmatpush1.bf16.msra.mxu0 %v10926
  %11487 = vmatprep.subr.bf16.mxu0 0
  %11488 = vmatpush1.bf16.msra.mxu0 %v10927
  %11489 = vmatprep.subr.bf16.mxu0 0
  %11490 = vmatpush1.bf16.msra.mxu0 %v10928
  %11491 = vmatprep.subr.bf16.mxu0 0
  %11492 = vmatpush1.bf16.msra.mxu0 %v10929
  %11493 = vmatprep.subr.bf16.mxu0 0
  %11494 = vmatpush1.bf16.msra.mxu0 %v10930
  %11495 = vmatprep.subr.bf16.mxu0 0
  %11496 = vmatpush1.bf16.msra.mxu0 %v10931
  %11497 = vmatprep.subr.bf16.mxu0 0
  %11498 = vmatpush1.bf16.msra.mxu0 %v10932
  %11499 = vmatprep.mubr.bf16.mxu0 %v9993
  %11500 = vmatmul.mubr.bf16.gmra.mrb[0].mxu0 %v9992
  %v11501 = vpop.f32.mrb[0].mxu0
  %v11502 = vadd.f32 %v11437, %v11501
  %v11503 = vpop.f32.mrb[0].mxu0
  %v11504 = vpop.f32.mrb[0].mxu0
  %v11505 = vadd.f32 %v11440, %v11504
  %v11506 = vpop.f32.mrb[0].mxu0
  %11507 = vmatprep.mubr.bf16.mxu0 %v10009
  %11508 = vmatmul.mubr.bf16.gmra.mrb[0].mxu0 %v10008
  %v11509 = vpop.f32.mrb[0].mxu0
  %v11510 = vadd.f32 %v11445, %v11509
  %v11511 = vpop.f32.mrb[0].mxu0
  %v11512 = vpop.f32.mrb[0].mxu0
  %v11513 = vadd.f32 %v11448, %v11512
  %v11514 = vpop.f32.mrb[0].mxu0
  %11515 = vmatprep.mubr.bf16.mxu0 %v10025
  %11516 = vmatmul.mubr.bf16.gmra.mrb[0].mxu0 %v10024
  %v11517 = vpop.f32.mrb[0].mxu0
  %v11518 = vadd.f32 %v11453, %v11517
  %v11519 = vpop.f32.mrb[0].mxu0
  %v11520 = vpop.f32.mrb[0].mxu0
  %v11521 = vadd.f32 %v11456, %v11520
  %v11522 = vpop.f32.mrb[0].mxu0
  %11523 = vmatprep.mubr.bf16.mxu0 %v10041
  %11524 = vmatmul.mubr.bf16.gmra.mrb[0].mxu0 %v10040
  %v11525 = vpop.f32.mrb[0].mxu0
  %v11526 = vadd.f32 %v11461, %v11525
  %v11527 = vpop.f32.mrb[0].mxu0
  %v11528 = vpop.f32.mrb[0].mxu0
  %v11529 = vadd.f32 %v11464, %v11528
  %v11530 = vpop.f32.mrb[0].mxu0
  %11531 = vdwg.mxu0
  %11532 = vmatprep.subr.bf16.mxu0 0
  %11533 = vmatpush1.bf16.msra.mxu0 %v10933
  %11534 = vmatprep.subr.bf16.mxu0 0
  %11535 = vmatpush1.bf16.msra.mxu0 %v10934
  %11536 = vmatprep.subr.bf16.mxu0 0
  %11537 = vmatpush1.bf16.msra.mxu0 %v10935
  %11538 = vmatprep.subr.bf16.mxu0 0
  %11539 = vmatpush1.bf16.msra.mxu0 %v10936
  %11540 = vmatprep.subr.bf16.mxu0 0
  %11541 = vmatpush1.bf16.msra.mxu0 %v10937
  %11542 = vmatprep.subr.bf16.mxu0 0
  %11543 = vmatpush1.bf16.msra.mxu0 %v10938
  %11544 = vmatprep.subr.bf16.mxu0 0
  %11545 = vmatpush1.bf16.msra.mxu0 %v10939
  %11546 = vmatprep.subr.bf16.mxu0 0
  %11547 = vmatpush1.bf16.msra.mxu0 %v10940
  %11548 = vmatprep.subr.bf16.mxu0 0
  %11549 = vmatpush1.bf16.msra.mxu0 %v10941
  %11550 = vmatprep.subr.bf16.mxu0 0
  %11551 = vmatpush1.bf16.msra.mxu0 %v10942
  %11552 = vmatprep.subr.bf16.mxu0 0
  %11553 = vmatpush1.bf16.msra.mxu0 %v10943
  %11554 = vmatprep.subr.bf16.mxu0 0
  %11555 = vmatpush1.bf16.msra.mxu0 %v10944
  %11556 = vmatprep.subr.bf16.mxu0 0
  %11557 = vmatpush1.bf16.msra.mxu0 %v10945
  %11558 = vmatprep.subr.bf16.mxu0 0
  %11559 = vmatpush1.bf16.msra.mxu0 %v10946
  %11560 = vmatprep.subr.bf16.mxu0 0
  %11561 = vmatpush1.bf16.msra.mxu0 %v10947
  %11562 = vmatprep.subr.bf16.mxu0 0
  %11563 = vmatpush1.bf16.msra.mxu0 %v10948
  %11564 = vmatprep.mubr.bf16.mxu0 %v9995
  %11565 = vmatmul.mubr.bf16.gmra.mrb[0].mxu0 %v9994
  %v11566 = vpop.f32.mrb[0].mxu0
  %v11567 = vadd.f32 %v11502, %v11566
  %v11568 = vpop.f32.mrb[0].mxu0
  %v11569 = vpop.f32.mrb[0].mxu0
  %v11570 = vadd.f32 %v11505, %v11569
  %v11571 = vpop.f32.mrb[0].mxu0
  %11572 = vmatprep.mubr.bf16.mxu0 %v10011
  %11573 = vmatmul.mubr.bf16.gmra.mrb[0].mxu0 %v10010
  %v11574 = vpop.f32.mrb[0].mxu0
  %v11575 = vadd.f32 %v11510, %v11574
  %v11576 = vpop.f32.mrb[0].mxu0
  %v11577 = vpop.f32.mrb[0].mxu0
  %v11578 = vadd.f32 %v11513, %v11577
  %v11579 = vpop.f32.mrb[0].mxu0
  %11580 = vmatprep.mubr.bf16.mxu0 %v10027
  %11581 = vmatmul.mubr.bf16.gmra.mrb[0].mxu0 %v10026
  %v11582 = vpop.f32.mrb[0].mxu0
  %v11583 = vadd.f32 %v11518, %v11582
  %v11584 = vpop.f32.mrb[0].mxu0
  %v11585 = vpop.f32.mrb[0].mxu0
  %v11586 = vadd.f32 %v11521, %v11585
  %v11587 = vpop.f32.mrb[0].mxu0
  %11588 = vmatprep.mubr.bf16.mxu0 %v10043
  %11589 = vmatmul.mubr.bf16.gmra.mrb[0].mxu0 %v10042
  %v11590 = vpop.f32.mrb[0].mxu0
  %v11591 = vadd.f32 %v11526, %v11590
  %v11592 = vpop.f32.mrb[0].mxu0
  %v11593 = vpop.f32.mrb[0].mxu0
  %v11594 = vadd.f32 %v11529, %v11593
  %v11595 = vpop.f32.mrb[0].mxu0
  %11596 = vdwg.mxu0
  %v11597 = vadd.f32 %v8774, %v11567
  %v11598 = vadd.f32 %v8775, %v11570
  %v11599 = vadd.f32 %v8776, %v11575
  %v11600 = vadd.f32 %v8777, %v11578
  %v11601 = vadd.f32 %v8778, %v11583
  %v11602 = vadd.f32 %v8779, %v11586
  %v11603 = vadd.f32 %v8780, %v11591
  %v11604 = vadd.f32 %v8781, %v11594
  %s11605 = scalar_lea.vmem %s21, 1
  %v11606 = vld [vmem:[%s11605] sm:$0x1]
  %s11607 = scalar_lea.vmem %s22, 1
  %v11608 = vld [vmem:[%s11607] sm:$0x1]
  %v11609 = vsel %vm261, %v11597, 0.0
  %11610 = vadd.xlane.f32.xlu0 %v11609
  %v11611 = vpop.xlane.xlu0 %11610
  %v11612 = vsel %vm261, %v11598, 0.0
  %11613 = vadd.xlane.f32.xlu0 %v11612
  %v11614 = vpop.xlane.xlu0 %11613
  %v11615 = vsel %vm261, %v11599, 0.0
  %11616 = vadd.xlane.f32.xlu0 %v11615
  %v11617 = vpop.xlane.xlu0 %11616
  %v11618 = vsel %vm261, %v11600, 0.0
  %11619 = vadd.xlane.f32.xlu0 %v11618
  %v11620 = vpop.xlane.xlu0 %11619
  %v11621 = vsel %vm261, %v11601, 0.0
  %11622 = vadd.xlane.f32.xlu0 %v11621
  %v11623 = vpop.xlane.xlu0 %11622
  %v11624 = vsel %vm261, %v11602, 0.0
  %11625 = vadd.xlane.f32.xlu0 %v11624
  %v11626 = vpop.xlane.xlu0 %11625
  %v11627 = vsel %vm261, %v11603, 0.0
  %11628 = vadd.xlane.f32.xlu0 %v11627
  %v11629 = vpop.xlane.xlu0 %11628
  %v11630 = vsel %vm261, %v11604, 0.0
  %11631 = vadd.xlane.f32.xlu0 %v11630
  %v11632 = vpop.xlane.xlu0 %11631
  %v11633 = vmul.f32 %v11611, %v3004
  %v11634 = vmul.f32 %v11614, %v3004
  %v11635 = vmul.f32 %v11617, %v3004
  %v11636 = vmul.f32 %v11620, %v3004
  %v11637 = vmul.f32 %v11623, %v3004
  %v11638 = vmul.f32 %v11626, %v3004
  %v11639 = vmul.f32 %v11629, %v3004
  %v11640 = vmul.f32 %v11632, %v3004
  %v11641 = vsub.f32 %v11597, %v11633
  %v11642 = vsub.f32 %v11598, %v11634
  %v11643 = vsub.f32 %v11599, %v11635
  %v11644 = vsub.f32 %v11600, %v11636
  %v11645 = vsub.f32 %v11601, %v11637
  %v11646 = vsub.f32 %v11602, %v11638
  %v11647 = vsub.f32 %v11603, %v11639
  %v11648 = vsub.f32 %v11604, %v11640
  %v11649 = vmul.f32 %v11641, %v11641
  %v11650 = vmul.f32 %v11642, %v11642
  %v11651 = vmul.f32 %v11643, %v11643
  %v11652 = vmul.f32 %v11644, %v11644
  %v11653 = vmul.f32 %v11645, %v11645
  %v11654 = vmul.f32 %v11646, %v11646
  %v11655 = vmul.f32 %v11647, %v11647
  %v11656 = vmul.f32 %v11648, %v11648
  %v11657 = vsel %vm261, %v11649, 0.0
  %11658 = vadd.xlane.f32.xlu0 %v11657
  %v11659 = vpop.xlane.xlu0 %11658
  %v11660 = vsel %vm261, %v11650, 0.0
  %11661 = vadd.xlane.f32.xlu0 %v11660
  %v11662 = vpop.xlane.xlu0 %11661
  %v11663 = vsel %vm261, %v11651, 0.0
  %11664 = vadd.xlane.f32.xlu0 %v11663
  %v11665 = vpop.xlane.xlu0 %11664
  %v11666 = vsel %vm261, %v11652, 0.0
  %11667 = vadd.xlane.f32.xlu0 %v11666
  %v11668 = vpop.xlane.xlu0 %11667
  %v11669 = vsel %vm261, %v11653, 0.0
  %11670 = vadd.xlane.f32.xlu0 %v11669
  %v11671 = vpop.xlane.xlu0 %11670
  %v11672 = vsel %vm261, %v11654, 0.0
  %11673 = vadd.xlane.f32.xlu0 %v11672
  %v11674 = vpop.xlane.xlu0 %11673
  %v11675 = vsel %vm261, %v11655, 0.0
  %11676 = vadd.xlane.f32.xlu0 %v11675
  %v11677 = vpop.xlane.xlu0 %11676
  %v11678 = vsel %vm261, %v11656, 0.0
  %11679 = vadd.xlane.f32.xlu0 %v11678
  %v11680 = vpop.xlane.xlu0 %11679
  %v11681 = vmul.f32 %v11659, %v3004
  %v11682 = vmul.f32 %v11662, %v3004
  %v11683 = vmul.f32 %v11665, %v3004
  %v11684 = vmul.f32 %v11668, %v3004
  %v11685 = vmul.f32 %v11671, %v3004
  %v11686 = vmul.f32 %v11674, %v3004
  %v11687 = vmul.f32 %v11677, %v3004
  %v11688 = vmul.f32 %v11680, %v3004
  %v11689 = vadd.f32 %v11681, 1e-05
  %v11690 = vadd.f32 %v11682, 1e-05
  %v11691 = vadd.f32 %v11683, 1e-05
  %v11692 = vadd.f32 %v11684, 1e-05
  %v11693 = vadd.f32 %v11685, 1e-05
  %v11694 = vadd.f32 %v11686, 1e-05
  %v11695 = vadd.f32 %v11687, 1e-05
  %v11696 = vadd.f32 %v11688, 1e-05
  %v11697 = vrsqrt.pop %v11689
  %v11698 = vrsqrt.pop %v11690
  %v11699 = vrsqrt.pop %v11691
  %v11700 = vrsqrt.pop %v11692
  %v11701 = vrsqrt.pop %v11693
  %v11702 = vrsqrt.pop %v11694
  %v11703 = vrsqrt.pop %v11695
  %v11704 = vrsqrt.pop %v11696
  %v11705 = vmul.f32 %v11641, %v11697
  %v11706 = vmul.f32 %v11642, %v11698
  %v11707 = vmul.f32 %v11643, %v11699
  %v11708 = vmul.f32 %v11644, %v11700
  %v11709 = vmul.f32 %v11645, %v11701
  %v11710 = vmul.f32 %v11646, %v11702
  %v11711 = vmul.f32 %v11647, %v11703
  %v11712 = vmul.f32 %v11648, %v11704
  %v11714 = vlaneseq
  %v11715 = vshrl.u32 %v11714, 7
  %v11716 = vsub.s32 0, %v11715
  %v11717 = vrot.slane %v11606, %v11716
  %v11719 = vmul.f32 %v11705, %v11717
  %v11720 = vmul.f32 %v11706, %v11717
  %v11721 = vmul.f32 %v11707, %v11717
  %v11722 = vmul.f32 %v11708, %v11717
  %v11723 = vmul.f32 %v11709, %v11717
  %v11724 = vmul.f32 %v11710, %v11717
  %v11725 = vmul.f32 %v11711, %v11717
  %v11726 = vmul.f32 %v11712, %v11717
  %v11728 = vlaneseq
  %v11729 = vshrl.u32 %v11728, 7
  %v11730 = vsub.s32 0, %v11729
  %v11731 = vrot.slane %v11608, %v11730
  %v11733 = vadd.f32 %v11719, %v11731
  %v11734 = vadd.f32 %v11720, %v11731
  %v11735 = vadd.f32 %v11721, %v11731
  %v11736 = vadd.f32 %v11722, %v11731
  %v11737 = vadd.f32 %v11723, %v11731
  %v11738 = vadd.f32 %v11724, %v11731
  %v11739 = vadd.f32 %v11725, %v11731
  %v11740 = vadd.f32 %v11726, %v11731
  %11741 = vxpose.xlu0.b32.start [1/16] %v11733, 128
  %11742 = vxpose.xlu0.b32.cont [2/16] %v11734, 128
  %11743 = vxpose.xlu0.b32.cont [3/16] %v11735, 128
  %11744 = vxpose.xlu0.b32.cont [4/16] %v11736, 128
  %11745 = vxpose.xlu0.b32.cont [5/16] %v11737, 128
  %11746 = vxpose.xlu0.b32.cont [6/16] %v11738, 128
  %11747 = vxpose.xlu0.b32.cont [7/16] %v11739, 128
  %11748 = vxpose.xlu0.b32.cont [8/16] %v11740, 128
  %11749 = vxpose.xlu0.b32.cont [9/16] 0.0, 128
  %11750 = vxpose.xlu0.b32.cont [10/16] 0.0, 128
  %11751 = vxpose.xlu0.b32.cont [11/16] 0.0, 128
  %11752 = vxpose.xlu0.b32.cont [12/16] 0.0, 128
  %11753 = vxpose.xlu0.b32.cont [13/16] 0.0, 128
  %11754 = vxpose.xlu0.b32.cont [14/16] 0.0, 128
  %11755 = vxpose.xlu0.b32.cont [15/16] 0.0, 128
  %11756 = vxpose.xlu0.b32.end [16/16] 0.0, 128
  %v11757 = vpop.trf.xlu0
  %v11758 = vpop.trf.xlu0
  %v11759 = vpop.trf.xlu0
  %v11760 = vpop.trf.xlu0
  %v11761 = vpop.trf.xlu0
  %v11762 = vpop.trf.xlu0
  %v11763 = vpop.trf.xlu0
  %v11764 = vpop.trf.xlu0
  %v11765 = vpop.trf.xlu0
  %v11766 = vpop.trf.xlu0
  %v11767 = vpop.trf.xlu0
  %v11768 = vpop.trf.xlu0
  %v11769 = vpop.trf.xlu0
  %v11770 = vpop.trf.xlu0
  %v11771 = vpop.trf.xlu0
  %v11772 = vpop.trf.xlu0
  %v11773 = vld [vmem:[%s23] sm:$0xff]
  %v11774 = vld [vmem:[%s23 + $0x8] sm:$0xff]
  %v11775 = vld [vmem:[%s23 + $0x10] sm:$0xff]
  %v11776 = vld [vmem:[%s23 + $0x18] sm:$0xff]
  %v11777 = vld [vmem:[%s23 + $0x20] sm:$0xff]
  %v11778 = vld [vmem:[%s23 + $0x28] sm:$0xff]
  %v11779 = vld [vmem:[%s23 + $0x30] sm:$0xff]
  %v11780 = vld [vmem:[%s23 + $0x38] sm:$0xff]
  %v11781 = vadd.f32 %v11757, %v11773
  %v11782 = vadd.f32 %v11758, %v11774
  %v11783 = vadd.f32 %v11759, %v11775
  %v11784 = vadd.f32 %v11760, %v11776
  %v11785 = vadd.f32 %v11761, %v11777
  %v11786 = vadd.f32 %v11762, %v11778
  %v11787 = vadd.f32 %v11763, %v11779
  %v11788 = vadd.f32 %v11764, %v11780
  %v11789 = vld [vmem:[%s24] sm:$0xff]
  %v11790 = vld [vmem:[%s24 + $0x8] sm:$0xff]
  %v11791 = vld [vmem:[%s24 + $0x10] sm:$0xff]
  %v11792 = vld [vmem:[%s24 + $0x18] sm:$0xff]
  %v11793 = vld [vmem:[%s24 + $0x20] sm:$0xff]
  %v11794 = vld [vmem:[%s24 + $0x28] sm:$0xff]
  %v11795 = vld [vmem:[%s24 + $0x30] sm:$0xff]
  %v11796 = vld [vmem:[%s24 + $0x38] sm:$0xff]
  %v11797 = vld [vmem:[%s25] sm:$0x1]
  %v11799 = vlaneseq
  %v11800 = vshrl.u32 %v11799, 7
  %v11801 = vsub.s32 0, %v11800
  %v11802 = vrot.slane %v11797, %v11801
  %v11805 = vsel %vm261, %v11781, 0
  %v11808 = vsel %vm261, %v11782, 0
  %v11811 = vsel %vm261, %v11783, 0
  %v11814 = vsel %vm261, %v11784, 0
  %v11817 = vsel %vm261, %v11785, 0
  %v11820 = vsel %vm261, %v11786, 0
  %v11823 = vsel %vm261, %v11787, 0
  %v11826 = vsel %vm261, %v11788, 0
  %11828 = vmatprep.subr.mxu0 0.0
  %11829 = vmatpush1.msra.mxu0 %v11789
  %11830 = vmatprep.subr.mxu0 0.0
  %11831 = vmatpush1.msra.mxu0 %v11790
  %11832 = vmatprep.subr.mxu0 0.0
  %11833 = vmatpush1.msra.mxu0 %v11791
  %11834 = vmatprep.subr.mxu0 0.0
  %11835 = vmatpush1.msra.mxu0 %v11792
  %11836 = vmatprep.subr.mxu0 0.0
  %11837 = vmatpush1.msra.mxu0 %v11793
  %11838 = vmatprep.subr.mxu0 0.0
  %11839 = vmatpush1.msra.mxu0 %v11794
  %11840 = vmatprep.subr.mxu0 0.0
  %11841 = vmatpush1.msra.mxu0 %v11795
  %11842 = vmatprep.subr.mxu0 0.0
  %11843 = vmatpush1.msra.mxu0 %v11796
  %11844 = vmatprep.subr.mxu0 0.0
  %11845 = vmatpush1.msra.mxu0 0.0
  %11846 = vmatprep.subr.mxu0 0.0
  %11847 = vmatpush1.msra.mxu0 0.0
  %11848 = vmatprep.subr.mxu0 0.0
  %11849 = vmatpush1.msra.mxu0 0.0
  %11850 = vmatprep.subr.mxu0 0.0
  %11851 = vmatpush1.msra.mxu0 0.0
  %11852 = vmatprep.subr.mxu0 0.0
  %11853 = vmatpush1.msra.mxu0 0.0
  %11854 = vmatprep.subr.mxu0 0.0
  %11855 = vmatpush1.msra.mxu0 0.0
  %11856 = vmatprep.subr.mxu0 0.0
  %11857 = vmatpush1.msra.mxu0 0.0
  %11858 = vmatprep.subr.mxu0 0.0
  %11859 = vmatpush1.msra.mxu0 0.0
  %11860 = vmatprep.subr.mxu0 0.0
  %11861 = vmatpush1.msra.mxu0 0.0
  %11862 = vmatprep.subr.mxu0 0.0
  %11863 = vmatpush1.msra.mxu0 0.0
  %11864 = vmatprep.subr.mxu0 0.0
  %11865 = vmatpush1.msra.mxu0 0.0
  %11866 = vmatprep.subr.mxu0 0.0
  %11867 = vmatpush1.msra.mxu0 0.0
  %11868 = vmatprep.subr.mxu0 0.0
  %11869 = vmatpush1.msra.mxu0 0.0
  %11870 = vmatprep.subr.mxu0 0.0
  %11871 = vmatpush1.msra.mxu0 0.0
  %11872 = vmatprep.subr.mxu0 0.0
  %11873 = vmatpush1.msra.mxu0 0.0
  %11874 = vmatprep.subr.mxu0 0.0
  %11875 = vmatpush1.msra.mxu0 0.0
  %11876 = vmatprep.subr.mxu0 0.0
  %11877 = vmatpush1.msra.mxu0 0.0
  %11878 = vmatprep.subr.mxu0 0.0
  %11879 = vmatpush1.msra.mxu0 0.0
  %11880 = vmatprep.subr.mxu0 0.0
  %11881 = vmatpush1.msra.mxu0 0.0
  %11882 = vmatprep.subr.mxu0 0.0
  %11883 = vmatpush1.msra.mxu0 0.0
  %11884 = vmatprep.subr.mxu0 0.0
  %11885 = vmatpush1.msra.mxu0 0.0
  %11886 = vmatprep.subr.mxu0 0.0
  %11887 = vmatpush1.msra.mxu0 0.0
  %11888 = vmatprep.subr.mxu0 0.0
  %11889 = vmatpush1.msra.mxu0 0.0
  %11890 = vmatprep.subr.mxu0 0.0
  %11891 = vmatpush1.msra.mxu0 0.0
  %11892 = vmatprep.mubr.f32.mxu0 0.0
  %11893 = vmatmul.mubr.f32.gmra.mrb[0].mxu0 %v11805
  %v11894 = vpop.f32.mrb[0].mxu0
  %v11895 = vadd.f32 %v11802, %v11894
  %v11896 = vpop.f32.mrb[0].mxu0
  %11897 = vmatprep.mubr.f32.mxu0 0.0
  %11898 = vmatmul.mubr.f32.gmra.mrb[0].mxu0 %v11808
  %v11899 = vpop.f32.mrb[0].mxu0
  %v11900 = vadd.f32 %v11802, %v11899
  %v11901 = vpop.f32.mrb[0].mxu0
  %11902 = vmatprep.mubr.f32.mxu0 0.0
  %11903 = vmatmul.mubr.f32.gmra.mrb[0].mxu0 %v11811
  %v11904 = vpop.f32.mrb[0].mxu0
  %v11905 = vadd.f32 %v11802, %v11904
  %v11906 = vpop.f32.mrb[0].mxu0
  %11907 = vmatprep.mubr.f32.mxu0 0.0
  %11908 = vmatmul.mubr.f32.gmra.mrb[0].mxu0 %v11814
  %v11909 = vpop.f32.mrb[0].mxu0
  %v11910 = vadd.f32 %v11802, %v11909
  %v11911 = vpop.f32.mrb[0].mxu0
  %11912 = vmatprep.mubr.f32.mxu0 0.0
  %11913 = vmatmul.mubr.f32.gmra.mrb[0].mxu0 %v11817
  %v11914 = vpop.f32.mrb[0].mxu0
  %v11915 = vadd.f32 %v11802, %v11914
  %v11916 = vpop.f32.mrb[0].mxu0
  %11917 = vmatprep.mubr.f32.mxu0 0.0
  %11918 = vmatmul.mubr.f32.gmra.mrb[0].mxu0 %v11820
  %v11919 = vpop.f32.mrb[0].mxu0
  %v11920 = vadd.f32 %v11802, %v11919
  %v11921 = vpop.f32.mrb[0].mxu0
  %11922 = vmatprep.mubr.f32.mxu0 0.0
  %11923 = vmatmul.mubr.f32.gmra.mrb[0].mxu0 %v11823
  %v11924 = vpop.f32.mrb[0].mxu0
  %v11925 = vadd.f32 %v11802, %v11924
  %v11926 = vpop.f32.mrb[0].mxu0
  %11927 = vmatprep.mubr.f32.mxu0 0.0
  %11928 = vmatmul.mubr.f32.gmra.mrb[0].mxu0 %v11826
  %v11929 = vpop.f32.mrb[0].mxu0
  %v11930 = vadd.f32 %v11802, %v11929
  %v11931 = vpop.f32.mrb[0].mxu0
  %11932 = vdwg.mxu0
  %11933 = vst [vmem:[%s26] sm:$0xff] %v11895
  %11934 = vst [vmem:[%s26 + $0x8] sm:$0xff] %v11900
  %11935 = vst [vmem:[%s26 + $0x10] sm:$0xff] %v11905
  %11936 = vst [vmem:[%s26 + $0x18] sm:$0xff] %v11910
  %11937 = vst [vmem:[%s26 + $0x20] sm:$0xff] %v11915
  %11938 = vst [vmem:[%s26 + $0x28] sm:$0xff] %v11920
  %11939 = vst [vmem:[%s26 + $0x30] sm:$0xff] %v11925
  %11940 = vst [vmem:[%s26 + $0x38] sm:$0xff] %v11930
  // Predicated region
  $region106: #{hierarchical_transformer_generator.1} parent=0 // pred_check
    _
  $region107: #{hierarchical_transformer_generator.1} parent=0 // pred_check_branch
    %11942 = sbr.rel (0) target = $region109
  $region108: #{hierarchical_transformer_generator.1} parent=0 // pred_region
    _
  $region109: #{hierarchical_transformer_generator.1} parent=0 // pred_fallthru
    _
  // Predicated region
  $region110: #{hierarchical_transformer_generator.1} parent=0 // pred_check
    _
  $region111: #{hierarchical_transformer_generator.1} parent=0 // pred_check_branch
    %11944 = sbr.rel (0) target = $region113
  $region112: #{hierarchical_transformer_generator.1} parent=0 // pred_region
    _
  $region113: #{hierarchical_transformer_generator.1} parent=0 // pred_fallthru
    _

</llo_original>
